<compile_context>
chip_gen: v6e
topology: v6e:2x2x1
jax: 0.10.0
libtpu: 0.0.40
codegen_flags: <defaults>
</compile_context>

<pallas_src>
import jax
import jax.numpy as jnp
from jax.experimental import pallas as pl
from jax.experimental.pallas import tpu as pltpu

LANE = 128
_K2_TAPS = [(di, dj) for di in range(5) for dj in range(5)]   # t = di*5 + dj
_K2_PAIRS = 13                                                # 25 taps -> 13 K=128 blocks


# ----------------------------------------------------------------------------
# Kernel 1: conv1 (5x5, 3->64) + bn1 + 2x2 max-pool + relu from pool-grouped
# im2col patches.  One merged MXU dot over the 4 pool-window slabs.
# ----------------------------------------------------------------------------
def _conv1_kernel(p_ref, w_ref, sh_ref, o_ref):
    """p_ref: (4, TM, 128) bf16 pool-grouped patches; w_ref: (128, 128) bf16
    BN-scale-folded weights; sh_ref: (1, 128) f32 shift; o_ref: (TM, 128) f32."""
    tm = o_ref.shape[0]
    p = p_ref[...].reshape(4 * tm, LANE)          # free: TM is a multiple of 16
    a = jnp.dot(p, w_ref[...], preferred_element_type=jnp.float32)
    a = a.reshape(4, tm, LANE)
    # scale is folded into w, so the max over the 4 window positions commutes
    # with the remaining per-channel shift; ReLU last.
    m = jnp.maximum(jnp.maximum(a[0], a[1]), jnp.maximum(a[2], a[3]))
    o_ref[...] = jnp.maximum(m + sh_ref[...], 0.0)


def _pick_tm_conv1(mp):
    # mp = Bp * 144.  All candidates keep VMEM use small; prefer a tile that
    # divides mp exactly and gives an even grid for v7x's two TensorCores.
    if mp <= 1152:
        return mp
    for tm in (1152, 576, 288, 144):
        if mp % tm == 0:
            return tm
    return mp


def conv1_bn_pool_relu(patches, w, shift):
    """patches: (4, Mp, 128) bf16 -> (Mp, 128) f32 = relu(pool(bn(conv1(x))))."""
    _, mp, kpad = patches.shape
    tm = _pick_tm_conv1(mp)
    return pl.pallas_call(
        _conv1_kernel,
        out_shape=jax.ShapeDtypeStruct((mp, LANE), jnp.float32),
        grid=(mp // tm,),
        in_specs=[
            pl.BlockSpec((4, tm, kpad), lambda i: (0, i, 0)),
            pl.BlockSpec((kpad, LANE), lambda i: (0, 0)),
            pl.BlockSpec((1, LANE), lambda i: (0, 0)),
        ],
        out_specs=pl.BlockSpec((tm, LANE), lambda i: (i, 0)),
        compiler_params=pltpu.CompilerParams(
            dimension_semantics=("parallel",)),
    )(patches, w, shift)


# ----------------------------------------------------------------------------
# Kernel 2: conv2 (5x5, 64->50) with in-kernel shifted-slice im2col + bn2 +
# 2x2 max-pool + relu, fused with the whole classifier head.
# ----------------------------------------------------------------------------
def _conv2_mlp_kernel(a1_ref, w2_ref, sh2_ref, wf1_ref, t1_ref, wf2_ref,
                      t2_ref, wf3_ref, t3_ref, o_ref, acc_ref):
    """a1_ref : (TB, 12, 12, 128) f32 NHWC conv1 activation (ch >=64 are zero)
       w2_ref : (13*128, 128) bf16   conv2 weights, 2 taps x 64 cin per block
       sh2_ref: (1, 128) f32         conv2 BN shift
       wf1_ref: (2048, 128) bf16     fc1 (rows in (ph, pw, cpad) order)
       wf2_ref, wf3_ref: (128, 128) bf16;  t*_ref: (1, 128) f32
       o_ref  : (TB, 128) f32        logits (columns >= 10 are zero)
       acc_ref: (TB, 8, 8, 128) f32  conv2 pre-pool accumulator scratch."""
    tb = o_ref.shape[0]
    acc_ref[...] = jnp.zeros_like(acc_ref)

    def tap_slice(t):
        di, dj = _K2_TAPS[t]
        # static shifted-slice window, only the 64 real input channels
        return a1_ref[:, di:di + 8, dj:dj + 8, 0:64]      # (TB, 8, 8, 64) f32

    for pidx in range(_K2_PAIRS):
        xa = tap_slice(2 * pidx)
        # last block's second half has all-zero weight rows, so any finite
        # data there contributes nothing -- reuse xa instead of materializing
        # zeros.
        xb = tap_slice(2 * pidx + 1) if 2 * pidx + 1 < 25 else xa
        x = jnp.concatenate([xa, xb], axis=-1)             # (TB, 8, 8, 128)
        x = x.reshape(tb * 64, LANE).astype(jnp.bfloat16)
        part = jnp.dot(x, w2_ref[pidx * LANE:(pidx + 1) * LANE, :],
                       preferred_element_type=jnp.float32)
        acc_ref[...] += part.reshape(tb, 8, 8, LANE)

    # 2x2 max-pool + BN shift + ReLU.  BN scale is folded into w2 so the max
    # commutes with the per-channel shift (added after the max).  The chunk
    # concatenation order (ph, pw, c) matches wf1's row order.
    sh2 = sh2_ref[...]
    chunks = []
    for ph in range(4):
        for pw in range(4):
            m = jnp.maximum(
                jnp.maximum(acc_ref[:, 2 * ph, 2 * pw, :],
                            acc_ref[:, 2 * ph, 2 * pw + 1, :]),
                jnp.maximum(acc_ref[:, 2 * ph + 1, 2 * pw, :],
                            acc_ref[:, 2 * ph + 1, 2 * pw + 1, :]))
            chunks.append(jnp.maximum(m + sh2, 0.0))        # (TB, 128)
    feat = jnp.concatenate(chunks, axis=-1).astype(jnp.bfloat16)   # (TB, 2048)

    # Classifier head (fc1+bn+relu -> fc2+bn+relu -> fc3), weights resident.
    h = jnp.dot(feat, wf1_ref[...], preferred_element_type=jnp.float32)
    h = jnp.maximum(h + t1_ref[...], 0.0)
    h = jnp.dot(h.astype(jnp.bfloat16), wf2_ref[...],
                preferred_element_type=jnp.float32)
    h = jnp.maximum(h + t2_ref[...], 0.0)
    h = jnp.dot(h.astype(jnp.bfloat16), wf3_ref[...],
                preferred_element_type=jnp.float32)
    o_ref[...] = (h + t3_ref[...]).astype(o_ref.dtype)


def conv2_classifier(a1, w2, sh2, wf1, t1, wf2, t2, wf3, t3, tb):
    bp = a1.shape[0]
    kp = w2.shape[0]
    return pl.pallas_call(
        _conv2_mlp_kernel,
        out_shape=jax.ShapeDtypeStruct((bp, LANE), jnp.float32),
        grid=(bp // tb,),
        in_specs=[
            pl.BlockSpec((tb, 12, 12, LANE), lambda i: (i, 0, 0, 0)),
            pl.BlockSpec((kp, LANE), lambda i: (0, 0)),
            pl.BlockSpec((1, LANE), lambda i: (0, 0)),
            pl.BlockSpec((2048, LANE), lambda i: (0, 0)),
            pl.BlockSpec((1, LANE), lambda i: (0, 0)),
            pl.BlockSpec((LANE, LANE), lambda i: (0, 0)),
            pl.BlockSpec((1, LANE), lambda i: (0, 0)),
            pl.BlockSpec((LANE, LANE), lambda i: (0, 0)),
            pl.BlockSpec((1, LANE), lambda i: (0, 0)),
        ],
        out_specs=pl.BlockSpec((tb, LANE), lambda i: (i, 0)),
        scratch_shapes=[pltpu.VMEM((tb, 8, 8, LANE), jnp.float32)],
        compiler_params=pltpu.CompilerParams(
            dimension_semantics=("parallel",)),
    )(a1, w2, sh2, wf1, t1, wf2, t2, wf3, t3)


# ----------------------------------------------------------------------------
# One-time parameter preparation (hoisted out of the jitted forward)
# ----------------------------------------------------------------------------
def _round_up(x, m):
    return (x + m - 1) // m * m


def _pad_last(a, size):
    pads = [(0, 0)] * (a.ndim - 1) + [(0, size - a.shape[-1])]
    return jnp.pad(a, pads)


def bn_fold(bias, gamma, beta, mean, var, eps=1e-5):
    """Fold preceding bias + eval-mode BatchNorm into (scale, shift)."""
    scale = gamma / jnp.sqrt(var + eps)
    return scale, (bias - mean) * scale + beta


def prepare_params(p):
    """Fold conv/fc biases + eval-mode BatchNorms into the weights, permute,
    pad to 128 lanes and cast.  Runs ONCE; forward() only consumes these."""
    pp = {}

    # conv1: (64,3,5,5) -> (128,128) bf16, K rows in (cin, kh, kw) order.
    s, sh = bn_fold(p["conv1_b"], p["bn1_g"], p["bn1_b"], p["bn1_m"], p["bn1_v"])
    w = p["conv1_w"].reshape(64, 75).T * s[None, :]                # (75, 64)
    w = jnp.pad(w, ((0, LANE - 75), (0, LANE - 64)))
    pp["conv1_w"] = w.astype(jnp.bfloat16)
    pp["conv1_s"] = _pad_last(sh, LANE).reshape(1, LANE).astype(jnp.float32)

    # conv2: (50,64,5,5) -> (13*128, 128) bf16.  Each 128-row block packs two
    # taps' 64 input channels (tap order t = di*5 + dj); the 26th tap is zero.
    s, sh = bn_fold(p["conv2_b"], p["bn2_g"], p["bn2_b"], p["bn2_m"], p["bn2_v"])
    taps = []
    for di in range(5):
        for dj in range(5):
            wt = p["conv2_w"][:, :, di, dj].T * s[None, :]         # (64, 50)
            taps.append(jnp.pad(wt, ((0, 0), (0, LANE - 50))))
    taps.append(jnp.zeros((64, LANE), jnp.float32))
    pp["conv2_w"] = jnp.concatenate(taps, axis=0).astype(jnp.bfloat16)  # (1664,128)
    pp["conv2_s"] = _pad_last(sh, LANE).reshape(1, LANE).astype(jnp.float32)

    # fc1: rows permuted from PyTorch's (C=50,H=4,W=4) flatten order to the
    # kernel's (H, W, Cpad=128) order; BN scale folded into the columns.
    s, sh = bn_fold(p["fc1_b"], p["cbn1_g"], p["cbn1_b"], p["cbn1_m"], p["cbn1_v"])
    w = p["fc1_w"].reshape(100, 50, 4, 4).transpose(0, 2, 3, 1)    # (100,4,4,50)
    w = jnp.pad(w, ((0, 0), (0, 0), (0, 0), (0, LANE - 50)))
    w = w.reshape(100, 4 * 4 * LANE).T * s[None, :]                # (2048, 100)
    pp["fc1_w"] = _pad_last(w, LANE).astype(jnp.bfloat16)
    pp["fc1_s"] = _pad_last(sh, LANE).reshape(1, LANE).astype(jnp.float32)

    # fc2 (+bn), fc3.
    s, sh = bn_fold(p["fc2_b"], p["cbn2_g"], p["cbn2_b"], p["cbn2_m"], p["cbn2_v"])
    w = jnp.pad(p["fc2_w"].T * s[None, :], ((0, LANE - 100), (0, LANE - 100)))
    pp["fc2_w"] = w.astype(jnp.bfloat16)
    pp["fc2_s"] = _pad_last(sh, LANE).reshape(1, LANE).astype(jnp.float32)

    w = jnp.pad(p["fc3_w"].T, ((0, LANE - 100), (0, LANE - 10)))
    pp["fc3_w"] = w.astype(jnp.bfloat16)
    pp["fc3_s"] = _pad_last(p["fc3_b"], LANE).reshape(1, LANE).astype(jnp.float32)
    return pp


# ----------------------------------------------------------------------------
# Glue: conv1 pool-grouped im2col (strided slicing, no 6-D transpose)
# ----------------------------------------------------------------------------
def conv1_patches_pool_grouped(x_nhwc):
    """x_nhwc: (Bp, 28, 28, 3) bf16 -> (4, Bp*144, 128) bf16 pool-grouped
    valid-conv 5x5 patches.  Axis 0 is the (r, s) position inside each 2x2
    pool window; rows are (b, ph, pw); K order is (cin, kh, kw)."""
    b = x_nhwc.shape[0]
    k, hp, wp = 5, 12, 12
    slabs = []
    for r in range(2):
        for s in range(2):
            cols = [x_nhwc[:, r + di:r + di + 2 * hp:2,
                           s + dj:s + dj + 2 * wp:2, :]
                    for di in range(k) for dj in range(k)]         # (b,12,12,3)
            slab = jnp.stack(cols, axis=-1)                        # (b,12,12,3,25)
            slabs.append(slab.reshape(b * hp * wp, 3 * k * k))
    patches = jnp.stack(slabs, axis=0)                             # (4, b*144, 75)
    return jnp.pad(patches, ((0, 0), (0, 0), (0, LANE - 75)))


# ----------------------------------------------------------------------------
# Forward pass
# ----------------------------------------------------------------------------
def forward(x_nchw, pp):
    b = x_nchw.shape[0]
    assert x_nchw.shape[1:] == (3, 28, 28), "architecture hard-codes 3x28x28"
    tb = b if b <= 8 else 8
    bp = _round_up(b, tb)

    x = jnp.transpose(x_nchw, (0, 2, 3, 1)).astype(jnp.bfloat16)   # NHWC
    if bp != b:
        x = jnp.pad(x, ((0, bp - b), (0, 0), (0, 0), (0, 0)))

    # f_conv1 + f_bn1 + f_pool1 + f_relu1 (one fused kernel)
    patches = conv1_patches_pool_grouped(x)                        # (4, Bp*144, 128)
    a1 = conv1_bn_pool_relu(patches, pp["conv1_w"], pp["conv1_s"]) # (Bp*144, 128) f32
    a1 = a1.reshape(bp, 12, 12, LANE)                              # NHWC, ch>=64 zero

    # f_conv2 + f_bn2 (+ f_drop1 id) + f_pool2 + f_relu2 + flatten + classifier
    logits = conv2_classifier(a1, pp["conv2_w"], pp["conv2_s"],
                              pp["fc1_w"], pp["fc1_s"], pp["fc2_w"],
                              pp["fc2_s"], pp["fc3_w"], pp["fc3_s"], tb)
    return logits[:b, :10]


# ----------------------------------------------------------------------------
# Parameters & pure-JAX reference (for self-check)
# ----------------------------------------------------------------------------
def init_params(key):
    ks = jax.random.split(key, 10)
    p = {}
    p["conv1_w"] = jax.random.normal(ks[0], (64, 3, 5, 5), jnp.float32) * 0.05
    p["conv1_b"] = jax.random.normal(ks[1], (64,), jnp.float32) * 0.05
    p["conv2_w"] = jax.random.normal(ks[2], (50, 64, 5, 5), jnp.float32) * 0.05
    p["conv2_b"] = jax.random.normal(ks[3], (50,), jnp.float32) * 0.05
    for name, n in (("bn1", 64), ("bn2", 50), ("cbn1", 100), ("cbn2", 100)):
        p[f"{name}_g"] = jnp.ones((n,), jnp.float32)
        p[f"{name}_b"] = jnp.zeros((n,), jnp.float32)
        p[f"{name}_m"] = jnp.zeros((n,), jnp.float32)
        p[f"{name}_v"] = jnp.ones((n,), jnp.float32)
    p["fc1_w"] = jax.random.normal(ks[4], (100, 800), jnp.float32) * 0.05
    p["fc1_b"] = jax.random.normal(ks[5], (100,), jnp.float32) * 0.05
    p["fc2_w"] = jax.random.normal(ks[6], (100, 100), jnp.float32) * 0.05
    p["fc2_b"] = jax.random.normal(ks[7], (100,), jnp.float32) * 0.05
    p["fc3_w"] = jax.random.normal(ks[8], (10, 100), jnp.float32) * 0.05
    p["fc3_b"] = jax.random.normal(ks[9], (10,), jnp.float32) * 0.05
    return p


def reference_forward(x_nchw, p):
    def bn(y, g, bb, m, v, eps=1e-5):
        shape = (1, -1) + (1,) * (y.ndim - 2)
        return ((y - m.reshape(shape)) / jnp.sqrt(v.reshape(shape) + eps)
                * g.reshape(shape) + bb.reshape(shape))

    dn = ("NCHW", "OIHW", "NCHW")
    y = jax.lax.conv_general_dilated(x_nchw, p["conv1_w"], (1, 1), "VALID",
                                     dimension_numbers=dn)
    y = y + p["conv1_b"].reshape(1, -1, 1, 1)
    y = bn(y, p["bn1_g"], p["bn1_b"], p["bn1_m"], p["bn1_v"])
    y = jax.lax.reduce_window(y, -jnp.inf, jax.lax.max, (1, 1, 2, 2),
                              (1, 1, 2, 2), "VALID")
    y = jnp.maximum(y, 0.0)
    y = jax.lax.conv_general_dilated(y, p["conv2_w"], (1, 1), "VALID",
                                     dimension_numbers=dn)
    y = y + p["conv2_b"].reshape(1, -1, 1, 1)
    y = bn(y, p["bn2_g"], p["bn2_b"], p["bn2_m"], p["bn2_v"])
    y = jax.lax.reduce_window(y, -jnp.inf, jax.lax.max, (1, 1, 2, 2),
                              (1, 1, 2, 2), "VALID")
    y = jnp.maximum(y, 0.0)
    feat = y.reshape(y.shape[0], -1)
    h = feat @ p["fc1_w"].T + p["fc1_b"]
    h = jnp.maximum(bn(h, p["cbn1_g"], p["cbn1_b"], p["cbn1_m"], p["cbn1_v"]), 0.0)
    h = h @ p["fc2_w"].T + p["fc2_b"]
    h = jnp.maximum(bn(h, p["cbn2_g"], p["cbn2_b"], p["cbn2_m"], p["cbn2_v"]), 0.0)
    return h @ p["fc3_w"].T + p["fc3_b"]


def _check(out, ref, tol=0.03):
    rel = float(jnp.linalg.norm(out - ref) / (jnp.linalg.norm(ref) + 1e-6))
    assert rel < tol, f"relative error vs reference too large: {rel}"


if __name__ == "__main__":
    key = jax.random.PRNGKey(0)
    k_params, k_x, k_x2 = jax.random.split(key, 3)
    params = init_params(k_params)
    prepped = prepare_params(params)          # one-time weight folding / packing
    fwd = jax.jit(forward)

    # The architecture hard-codes 3x28x28 inputs (feature_size = 800); batch=2.
    x = jax.random.normal(k_x, (2, 3, 28, 28), jnp.float32)
    out = jax.block_until_ready(fwd(x, prepped))
    assert out.shape == (2, 10), out.shape
    assert bool(jnp.all(jnp.isfinite(out)))
    _check(out, reference_forward(x, params))

    # Larger batch exercises the multi-tile (grid > 1) pipelined path.
    x2 = jax.random.normal(k_x2, (32, 3, 28, 28), jnp.float32)
    out2 = jax.block_until_ready(fwd(x2, prepped))
    assert out2.shape == (32, 10), out2.shape
    assert bool(jnp.all(jnp.isfinite(out2)))
    _check(out2, reference_forward(x2, params))

    print("KERNEL_OK")
</pallas_src>

<mosaic_0001>
module attributes {stable_mosaic.version = 11 : i64} {
  func.func @_conv1_kernel(%arg0: i32, %arg1: memref<4x288x128xbf16, #tpu.memory_space<vmem>>, %arg2: memref<128x128xbf16, #tpu.memory_space<vmem>>, %arg3: memref<1x128xf32, #tpu.memory_space<vmem>>, %arg4: memref<288x128xf32, #tpu.memory_space<vmem>>) attributes {dimension_semantics = [#tpu.dimension_semantics<parallel>], iteration_bounds = array<i64: 1>, scalar_prefetch = 0 : i64, scratch_operands = 0 : i64, tpu.core_type = #tpu.core_type<tc>, window_params = [{transform_indices = @transform_0, window_bounds = array<i64: 4, 288, 128>}, {pipeline_mode = #tpu.pipeline_mode<synchronous>, transform_indices = @transform_1, window_bounds = array<i64: 128, 128>}, {pipeline_mode = #tpu.pipeline_mode<synchronous>, transform_indices = @transform_2, window_bounds = array<i64: 1, 128>}, {transform_indices = @transform_3, window_bounds = array<i64: 288, 128>}]} {
    %c0 = arith.constant 0 : index
    %c0_0 = arith.constant 0 : index
    %c0_1 = arith.constant 0 : index
    %0 = vector.load %arg1[%c0, %c0_0, %c0_1] : memref<4x288x128xbf16, #tpu.memory_space<vmem>>, vector<4x288x128xbf16>
    %1 = vector.shape_cast %0 : vector<4x288x128xbf16> to vector<1152x128xbf16>
    %c0_2 = arith.constant 0 : index
    %c0_3 = arith.constant 0 : index
    %2 = vector.load %arg2[%c0_2, %c0_3] : memref<128x128xbf16, #tpu.memory_space<vmem>>, vector<128x128xbf16>
    %cst = arith.constant dense<0.000000e+00> : vector<1152x128xf32>
    %3 = tpu.matmul %1, %2, %cst {dimension_numbers = #tpu.dot_dimension_numbers<[1], [0], [0], [1], [0, 0, 1, 1], [], []>} : vector<1152x128xbf16>, vector<128x128xbf16>, vector<1152x128xf32> -> vector<1152x128xf32>
    %4 = vector.shape_cast %3 : vector<1152x128xf32> to vector<4x288x128xf32>
    %5 = vector.extract_strided_slice %4 {offsets = [0, 0, 0], sizes = [1, 288, 128], strides = [1, 1, 1]} : vector<4x288x128xf32> to vector<1x288x128xf32>
    %6 = vector.shape_cast %5 : vector<1x288x128xf32> to vector<288x128xf32>
    %7 = vector.extract_strided_slice %4 {offsets = [1, 0, 0], sizes = [1, 288, 128], strides = [1, 1, 1]} : vector<4x288x128xf32> to vector<1x288x128xf32>
    %8 = vector.shape_cast %7 : vector<1x288x128xf32> to vector<288x128xf32>
    %9 = arith.maximumf %6, %8 : vector<288x128xf32>
    %10 = vector.extract_strided_slice %4 {offsets = [2, 0, 0], sizes = [1, 288, 128], strides = [1, 1, 1]} : vector<4x288x128xf32> to vector<1x288x128xf32>
    %11 = vector.shape_cast %10 : vector<1x288x128xf32> to vector<288x128xf32>
    %12 = vector.extract_strided_slice %4 {offsets = [3, 0, 0], sizes = [1, 288, 128], strides = [1, 1, 1]} : vector<4x288x128xf32> to vector<1x288x128xf32>
    %13 = vector.shape_cast %12 : vector<1x288x128xf32> to vector<288x128xf32>
    %14 = arith.maximumf %11, %13 : vector<288x128xf32>
    %15 = arith.maximumf %9, %14 : vector<288x128xf32>
    %c0_4 = arith.constant 0 : index
    %c0_5 = arith.constant 0 : index
    %16 = vector.load %arg3[%c0_4, %c0_5] : memref<1x128xf32, #tpu.memory_space<vmem>>, vector<1x128xf32>
    %17 = vector.broadcast %16 : vector<1x128xf32> to vector<288x128xf32>
    %18 = arith.addf %15, %17 : vector<288x128xf32>
    %cst_6 = arith.constant 0.000000e+00 : f32
    %19 = vector.broadcast %cst_6 : f32 to vector<288x128xf32>
    %20 = arith.maximumf %18, %19 : vector<288x128xf32>
    %c0_7 = arith.constant 0 : index
    %c0_8 = arith.constant 0 : index
    %21 = vector.load %arg4[%c0_7, %c0_8] : memref<288x128xf32, #tpu.memory_space<vmem>>, vector<288x128xf32>
    tpu.vector_store %arg4[%c0_7, %c0_8], %20 {strides = array<i32>} : memref<288x128xf32, #tpu.memory_space<vmem>>, vector<288x128xf32>,
    return
  }
  func.func @transform_0(%arg0: i32) -> (i32, i32, i32) {
    %c0_i32 = arith.constant 0 : i32
    %c0_i32_0 = arith.constant 0 : i32
    %c0_i32_1 = arith.constant 0 : i32
    return %c0_i32, %arg0, %c0_i32_0 : i32, i32, i32
  }
  func.func @transform_1(%arg0: i32) -> (i32, i32) {
    %c0_i32 = arith.constant 0 : i32
    %c0_i32_0 = arith.constant 0 : i32
    %c0_i32_1 = arith.constant 0 : i32
    return %c0_i32, %c0_i32_0 : i32, i32
  }
  func.func @transform_2(%arg0: i32) -> (i32, i32) {
    %c0_i32 = arith.constant 0 : i32
    %c0_i32_0 = arith.constant 0 : i32
    %c0_i32_1 = arith.constant 0 : i32
    return %c0_i32, %c0_i32_0 : i32, i32
  }
  func.func @transform_3(%arg0: i32) -> (i32, i32) {
    %c0_i32 = arith.constant 0 : i32
    %c0_i32_0 = arith.constant 0 : i32
    return %arg0, %c0_i32 : i32, i32
  }
}

module attributes {stable_mosaic.version = 11 : i64} {
  func.func @_conv2_mlp_kernel(%arg0: i32, %arg1: memref<2x12x12x128xf32, #tpu.memory_space<vmem>>, %arg2: memref<1664x128xbf16, #tpu.memory_space<vmem>>, %arg3: memref<1x128xf32, #tpu.memory_space<vmem>>, %arg4: memref<2048x128xbf16, #tpu.memory_space<vmem>>, %arg5: memref<1x128xf32, #tpu.memory_space<vmem>>, %arg6: memref<128x128xbf16, #tpu.memory_space<vmem>>, %arg7: memref<1x128xf32, #tpu.memory_space<vmem>>, %arg8: memref<128x128xbf16, #tpu.memory_space<vmem>>, %arg9: memref<1x128xf32, #tpu.memory_space<vmem>>, %arg10: memref<2x128xf32, #tpu.memory_space<vmem>>, %arg11: memref<2x8x8x128xf32, #tpu.memory_space<vmem>>) attributes {dimension_semantics = [#tpu.dimension_semantics<parallel>], iteration_bounds = array<i64: 1>, scalar_prefetch = 0 : i64, scratch_operands = 1 : i64, tpu.core_type = #tpu.core_type<tc>, window_params = [{transform_indices = @transform_0, window_bounds = array<i64: 2, 12, 12, 128>}, {pipeline_mode = #tpu.pipeline_mode<synchronous>, transform_indices = @transform_1, window_bounds = array<i64: 1664, 128>}, {pipeline_mode = #tpu.pipeline_mode<synchronous>, transform_indices = @transform_2, window_bounds = array<i64: 1, 128>}, {pipeline_mode = #tpu.pipeline_mode<synchronous>, transform_indices = @transform_3, window_bounds = array<i64: 2048, 128>}, {pipeline_mode = #tpu.pipeline_mode<synchronous>, transform_indices = @transform_4, window_bounds = array<i64: 1, 128>}, {pipeline_mode = #tpu.pipeline_mode<synchronous>, transform_indices = @transform_5, window_bounds = array<i64: 128, 128>}, {pipeline_mode = #tpu.pipeline_mode<synchronous>, transform_indices = @transform_6, window_bounds = array<i64: 1, 128>}, {pipeline_mode = #tpu.pipeline_mode<synchronous>, transform_indices = @transform_7, window_bounds = array<i64: 128, 128>}, {pipeline_mode = #tpu.pipeline_mode<synchronous>, transform_indices = @transform_8, window_bounds = array<i64: 1, 128>}, {transform_indices = @transform_9, window_bounds = array<i64: 2, 128>}]} {
    %cst = arith.constant 0.000000e+00 : f32
    %0 = vector.broadcast %cst : f32 to vector<2x8x8x128xf32>
    %c0 = arith.constant 0 : index
    %c0_0 = arith.constant 0 : index
    %c0_1 = arith.constant 0 : index
    %c0_2 = arith.constant 0 : index
    %1 = vector.load %arg11[%c0, %c0_0, %c0_1, %c0_2] : memref<2x8x8x128xf32, #tpu.memory_space<vmem>>, vector<2x8x8x128xf32>
    tpu.vector_store %arg11[%c0, %c0_0, %c0_1, %c0_2], %0 {strides = array<i32>} : memref<2x8x8x128xf32, #tpu.memory_space<vmem>>, vector<2x8x8x128xf32>,
    %c0_3 = arith.constant 0 : index
    %c0_4 = arith.constant 0 : index
    %c0_5 = arith.constant 0 : index
    %c0_6 = arith.constant 0 : index
    %2 = vector.load %arg1[%c0_3, %c0_4, %c0_5, %c0_6] : memref<2x12x12x128xf32, #tpu.memory_space<vmem>>, vector<2x8x8x64xf32>
    %c0_7 = arith.constant 0 : index
    %c0_8 = arith.constant 0 : index
    %c1 = arith.constant 1 : index
    %c0_9 = arith.constant 0 : index
    %3 = vector.load %arg1[%c0_7, %c0_8, %c1, %c0_9] : memref<2x12x12x128xf32, #tpu.memory_space<vmem>>, vector<2x8x8x64xf32>
    %4 = tpu.concatenate %2, %3 in 3 : vector<2x8x8x64xf32>, vector<2x8x8x64xf32> -> vector<2x8x8x128xf32>
    %5 = vector.shape_cast %4 : vector<2x8x8x128xf32> to vector<128x128xf32>
    %6 = arith.truncf %5 : vector<128x128xf32> to vector<128x128xbf16>
    %c0_10 = arith.constant 0 : index
    %c0_11 = arith.constant 0 : index
    %7 = vector.load %arg2[%c0_10, %c0_11] : memref<1664x128xbf16, #tpu.memory_space<vmem>>, vector<128x128xbf16>
    %cst_12 = arith.constant dense<0.000000e+00> : vector<128x128xf32>
    %8 = tpu.matmul %6, %7, %cst_12 {dimension_numbers = #tpu.dot_dimension_numbers<[1], [0], [0], [1], [0, 0, 1, 1], [], []>} : vector<128x128xbf16>, vector<128x128xbf16>, vector<128x128xf32> -> vector<128x128xf32>
    %c0_13 = arith.constant 0 : index
    %c0_14 = arith.constant 0 : index
    %c0_15 = arith.constant 0 : index
    %c0_16 = arith.constant 0 : index
    %9 = vector.load %arg11[%c0_13, %c0_14, %c0_15, %c0_16] : memref<2x8x8x128xf32, #tpu.memory_space<vmem>>, vector<2x8x8x128xf32>
    %10 = vector.shape_cast %8 : vector<128x128xf32> to vector<2x8x8x128xf32>
    %11 = arith.addf %9, %10 : vector<2x8x8x128xf32>
    %c0_17 = arith.constant 0 : index
    %c0_18 = arith.constant 0 : index
    %c0_19 = arith.constant 0 : index
    %c0_20 = arith.constant 0 : index
    %12 = vector.load %arg11[%c0_17, %c0_18, %c0_19, %c0_20] : memref<2x8x8x128xf32, #tpu.memory_space<vmem>>, vector<2x8x8x128xf32>
    tpu.vector_store %arg11[%c0_17, %c0_18, %c0_19, %c0_20], %11 {strides = array<i32>} : memref<2x8x8x128xf32, #tpu.memory_space<vmem>>, vector<2x8x8x128xf32>,
    %c0_21 = arith.constant 0 : index
    %c0_22 = arith.constant 0 : index
    %c2 = arith.constant 2 : index
    %c0_23 = arith.constant 0 : index
    %13 = vector.load %arg1[%c0_21, %c0_22, %c2, %c0_23] : memref<2x12x12x128xf32, #tpu.memory_space<vmem>>, vector<2x8x8x64xf32>
    %c0_24 = arith.constant 0 : index
    %c0_25 = arith.constant 0 : index
    %c3 = arith.constant 3 : index
    %c0_26 = arith.constant 0 : index
    %14 = vector.load %arg1[%c0_24, %c0_25, %c3, %c0_26] : memref<2x12x12x128xf32, #tpu.memory_space<vmem>>, vector<2x8x8x64xf32>
    %15 = tpu.concatenate %13, %14 in 3 : vector<2x8x8x64xf32>, vector<2x8x8x64xf32> -> vector<2x8x8x128xf32>
    %16 = vector.shape_cast %15 : vector<2x8x8x128xf32> to vector<128x128xf32>
    %17 = arith.truncf %16 : vector<128x128xf32> to vector<128x128xbf16>
    %c128 = arith.constant 128 : index
    %c0_27 = arith.constant 0 : index
    %18 = vector.load %arg2[%c128, %c0_27] : memref<1664x128xbf16, #tpu.memory_space<vmem>>, vector<128x128xbf16>
    %cst_28 = arith.constant dense<0.000000e+00> : vector<128x128xf32>
    %19 = tpu.matmul %17, %18, %cst_28 {dimension_numbers = #tpu.dot_dimension_numbers<[1], [0], [0], [1], [0, 0, 1, 1], [], []>} : vector<128x128xbf16>, vector<128x128xbf16>, vector<128x128xf32> -> vector<128x128xf32>
    %c0_29 = arith.constant 0 : index
    %c0_30 = arith.constant 0 : index
    %c0_31 = arith.constant 0 : index
    %c0_32 = arith.constant 0 : index
    %20 = vector.load %arg11[%c0_29, %c0_30, %c0_31, %c0_32] : memref<2x8x8x128xf32, #tpu.memory_space<vmem>>, vector<2x8x8x128xf32>
    %21 = vector.shape_cast %19 : vector<128x128xf32> to vector<2x8x8x128xf32>
    %22 = arith.addf %20, %21 : vector<2x8x8x128xf32>
    %c0_33 = arith.constant 0 : index
    %c0_34 = arith.constant 0 : index
    %c0_35 = arith.constant 0 : index
    %c0_36 = arith.constant 0 : index
    %23 = vector.load %arg11[%c0_33, %c0_34, %c0_35, %c0_36] : memref<2x8x8x128xf32, #tpu.memory_space<vmem>>, vector<2x8x8x128xf32>
    tpu.vector_store %arg11[%c0_33, %c0_34, %c0_35, %c0_36], %22 {strides = array<i32>} : memref<2x8x8x128xf32, #tpu.memory_space<vmem>>, vector<2x8x8x128xf32>,
    %c0_37 = arith.constant 0 : index
    %c0_38 = arith.constant 0 : index
    %c4 = arith.constant 4 : index
    %c0_39 = arith.constant 0 : index
    %24 = vector.load %arg1[%c0_37, %c0_38, %c4, %c0_39] : memref<2x12x12x128xf32, #tpu.memory_space<vmem>>, vector<2x8x8x64xf32>
    %c0_40 = arith.constant 0 : index
    %c1_41 = arith.constant 1 : index
    %c0_42 = arith.constant 0 : index
    %c0_43 = arith.constant 0 : index
    %25 = vector.load %arg1[%c0_40, %c1_41, %c0_42, %c0_43] : memref<2x12x12x128xf32, #tpu.memory_space<vmem>>, vector<2x8x8x64xf32>
    %26 = tpu.concatenate %24, %25 in 3 : vector<2x8x8x64xf32>, vector<2x8x8x64xf32> -> vector<2x8x8x128xf32>
    %27 = vector.shape_cast %26 : vector<2x8x8x128xf32> to vector<128x128xf32>
    %28 = arith.truncf %27 : vector<128x128xf32> to vector<128x128xbf16>
    %c256 = arith.constant 256 : index
    %c0_44 = arith.constant 0 : index
    %29 = vector.load %arg2[%c256, %c0_44] : memref<1664x128xbf16, #tpu.memory_space<vmem>>, vector<128x128xbf16>
    %cst_45 = arith.constant dense<0.000000e+00> : vector<128x128xf32>
    %30 = tpu.matmul %28, %29, %cst_45 {dimension_numbers = #tpu.dot_dimension_numbers<[1], [0], [0], [1], [0, 0, 1, 1], [], []>} : vector<128x128xbf16>, vector<128x128xbf16>, vector<128x128xf32> -> vector<128x128xf32>
    %c0_46 = arith.constant 0 : index
    %c0_47 = arith.constant 0 : index
    %c0_48 = arith.constant 0 : index
    %c0_49 = arith.constant 0 : index
    %31 = vector.load %arg11[%c0_46, %c0_47, %c0_48, %c0_49] : memref<2x8x8x128xf32, #tpu.memory_space<vmem>>, vector<2x8x8x128xf32>
    %32 = vector.shape_cast %30 : vector<128x128xf32> to vector<2x8x8x128xf32>
    %33 = arith.addf %31, %32 : vector<2x8x8x128xf32>
    %c0_50 = arith.constant 0 : index
    %c0_51 = arith.constant 0 : index
    %c0_52 = arith.constant 0 : index
    %c0_53 = arith.constant 0 : index
    %34 = vector.load %arg11[%c0_50, %c0_51, %c0_52, %c0_53] : memref<2x8x8x128xf32, #tpu.memory_space<vmem>>, vector<2x8x8x128xf32>
    tpu.vector_store %arg11[%c0_50, %c0_51, %c0_52, %c0_53], %33 {strides = array<i32>} : memref<2x8x8x128xf32, #tpu.memory_space<vmem>>, vector<2x8x8x128xf32>,
    %c0_54 = arith.constant 0 : index
    %c1_55 = arith.constant 1 : index
    %c1_56 = arith.constant 1 : index
    %c0_57 = arith.constant 0 : index
    %35 = vector.load %arg1[%c0_54, %c1_55, %c1_56, %c0_57] : memref<2x12x12x128xf32, #tpu.memory_space<vmem>>, vector<2x8x8x64xf32>
    %c0_58 = arith.constant 0 : index
    %c1_59 = arith.constant 1 : index
    %c2_60 = arith.constant 2 : index
    %c0_61 = arith.constant 0 : index
    %36 = vector.load %arg1[%c0_58, %c1_59, %c2_60, %c0_61] : memref<2x12x12x128xf32, #tpu.memory_space<vmem>>, vector<2x8x8x64xf32>
    %37 = tpu.concatenate %35, %36 in 3 : vector<2x8x8x64xf32>, vector<2x8x8x64xf32> -> vector<2x8x8x128xf32>
    %38 = vector.shape_cast %37 : vector<2x8x8x128xf32> to vector<128x128xf32>
    %39 = arith.truncf %38 : vector<128x128xf32> to vector<128x128xbf16>
    %c384 = arith.constant 384 : index
    %c0_62 = arith.constant 0 : index
    %40 = vector.load %arg2[%c384, %c0_62] : memref<1664x128xbf16, #tpu.memory_space<vmem>>, vector<128x128xbf16>
    %cst_63 = arith.constant dense<0.000000e+00> : vector<128x128xf32>
    %41 = tpu.matmul %39, %40, %cst_63 {dimension_numbers = #tpu.dot_dimension_numbers<[1], [0], [0], [1], [0, 0, 1, 1], [], []>} : vector<128x128xbf16>, vector<128x128xbf16>, vector<128x128xf32> -> vector<128x128xf32>
    %c0_64 = arith.constant 0 : index
    %c0_65 = arith.constant 0 : index
    %c0_66 = arith.constant 0 : index
    %c0_67 = arith.constant 0 : index
    %42 = vector.load %arg11[%c0_64, %c0_65, %c0_66, %c0_67] : memref<2x8x8x128xf32, #tpu.memory_space<vmem>>, vector<2x8x8x128xf32>
    %43 = vector.shape_cast %41 : vector<128x128xf32> to vector<2x8x8x128xf32>
    %44 = arith.addf %42, %43 : vector<2x8x8x128xf32>
    %c0_68 = arith.constant 0 : index
    %c0_69 = arith.constant 0 : index
    %c0_70 = arith.constant 0 : index
    %c0_71 = arith.constant 0 : index
    %45 = vector.load %arg11[%c0_68, %c0_69, %c0_70, %c0_71] : memref<2x8x8x128xf32, #tpu.memory_space<vmem>>, vector<2x8x8x128xf32>
    tpu.vector_store %arg11[%c0_68, %c0_69, %c0_70, %c0_71], %44 {strides = array<i32>} : memref<2x8x8x128xf32, #tpu.memory_space<vmem>>, vector<2x8x8x128xf32>,
    %c0_72 = arith.constant 0 : index
    %c1_73 = arith.constant 1 : index
    %c3_74 = arith.constant 3 : index
    %c0_75 = arith.constant 0 : index
    %46 = vector.load %arg1[%c0_72, %c1_73, %c3_74, %c0_75] : memref<2x12x12x128xf32, #tpu.memory_space<vmem>>, vector<2x8x8x64xf32>
    %c0_76 = arith.constant 0 : index
    %c1_77 = arith.constant 1 : index
    %c4_78 = arith.constant 4 : index
    %c0_79 = arith.constant 0 : index
    %47 = vector.load %arg1[%c0_76, %c1_77, %c4_78, %c0_79] : memref<2x12x12x128xf32, #tpu.memory_space<vmem>>, vector<2x8x8x64xf32>
    %48 = tpu.concatenate %46, %47 in 3 : vector<2x8x8x64xf32>, vector<2x8x8x64xf32> -> vector<2x8x8x128xf32>
    %49 = vector.shape_cast %48 : vector<2x8x8x128xf32> to vector<128x128xf32>
    %50 = arith.truncf %49 : vector<128x128xf32> to vector<128x128xbf16>
    %c512 = arith.constant 512 : index
    %c0_80 = arith.constant 0 : index
    %51 = vector.load %arg2[%c512, %c0_80] : memref<1664x128xbf16, #tpu.memory_space<vmem>>, vector<128x128xbf16>
    %cst_81 = arith.constant dense<0.000000e+00> : vector<128x128xf32>
    %52 = tpu.matmul %50, %51, %cst_81 {dimension_numbers = #tpu.dot_dimension_numbers<[1], [0], [0], [1], [0, 0, 1, 1], [], []>} : vector<128x128xbf16>, vector<128x128xbf16>, vector<128x128xf32> -> vector<128x128xf32>
    %c0_82 = arith.constant 0 : index
    %c0_83 = arith.constant 0 : index
    %c0_84 = arith.constant 0 : index
    %c0_85 = arith.constant 0 : index
    %53 = vector.load %arg11[%c0_82, %c0_83, %c0_84, %c0_85] : memref<2x8x8x128xf32, #tpu.memory_space<vmem>>, vector<2x8x8x128xf32>
    %54 = vector.shape_cast %52 : vector<128x128xf32> to vector<2x8x8x128xf32>
    %55 = arith.addf %53, %54 : vector<2x8x8x128xf32>
    %c0_86 = arith.constant 0 : index
    %c0_87 = arith.constant 0 : index
    %c0_88 = arith.constant 0 : index
    %c0_89 = arith.constant 0 : index
    %56 = vector.load %arg11[%c0_86, %c0_87, %c0_88, %c0_89] : memref<2x8x8x128xf32, #tpu.memory_space<vmem>>, vector<2x8x8x128xf32>
    tpu.vector_store %arg11[%c0_86, %c0_87, %c0_88, %c0_89], %55 {strides = array<i32>} : memref<2x8x8x128xf32, #tpu.memory_space<vmem>>, vector<2x8x8x128xf32>,
    %c0_90 = arith.constant 0 : index
    %c2_91 = arith.constant 2 : index
    %c0_92 = arith.constant 0 : index
    %c0_93 = arith.constant 0 : index
    %57 = vector.load %arg1[%c0_90, %c2_91, %c0_92, %c0_93] : memref<2x12x12x128xf32, #tpu.memory_space<vmem>>, vector<2x8x8x64xf32>
    %c0_94 = arith.constant 0 : index
    %c2_95 = arith.constant 2 : index
    %c1_96 = arith.constant 1 : index
    %c0_97 = arith.constant 0 : index
    %58 = vector.load %arg1[%c0_94, %c2_95, %c1_96, %c0_97] : memref<2x12x12x128xf32, #tpu.memory_space<vmem>>, vector<2x8x8x64xf32>
    %59 = tpu.concatenate %57, %58 in 3 : vector<2x8x8x64xf32>, vector<2x8x8x64xf32> -> vector<2x8x8x128xf32>
    %60 = vector.shape_cast %59 : vector<2x8x8x128xf32> to vector<128x128xf32>
    %61 = arith.truncf %60 : vector<128x128xf32> to vector<128x128xbf16>
    %c640 = arith.constant 640 : index
    %c0_98 = arith.constant 0 : index
    %62 = vector.load %arg2[%c640, %c0_98] : memref<1664x128xbf16, #tpu.memory_space<vmem>>, vector<128x128xbf16>
    %cst_99 = arith.constant dense<0.000000e+00> : vector<128x128xf32>
    %63 = tpu.matmul %61, %62, %cst_99 {dimension_numbers = #tpu.dot_dimension_numbers<[1], [0], [0], [1], [0, 0, 1, 1], [], []>} : vector<128x128xbf16>, vector<128x128xbf16>, vector<128x128xf32> -> vector<128x128xf32>
    %c0_100 = arith.constant 0 : index
    %c0_101 = arith.constant 0 : index
    %c0_102 = arith.constant 0 : index
    %c0_103 = arith.constant 0 : index
    %64 = vector.load %arg11[%c0_100, %c0_101, %c0_102, %c0_103] : memref<2x8x8x128xf32, #tpu.memory_space<vmem>>, vector<2x8x8x128xf32>
    %65 = vector.shape_cast %63 : vector<128x128xf32> to vector<2x8x8x128xf32>
    %66 = arith.addf %64, %65 : vector<2x8x8x128xf32>
    %c0_104 = arith.constant 0 : index
    %c0_105 = arith.constant 0 : index
    %c0_106 = arith.constant 0 : index
    %c0_107 = arith.constant 0 : index
    %67 = vector.load %arg11[%c0_104, %c0_105, %c0_106, %c0_107] : memref<2x8x8x128xf32, #tpu.memory_space<vmem>>, vector<2x8x8x128xf32>
    tpu.vector_store %arg11[%c0_104, %c0_105, %c0_106, %c0_107], %66 {strides = array<i32>} : memref<2x8x8x128xf32, #tpu.memory_space<vmem>>, vector<2x8x8x128xf32>,
    %c0_108 = arith.constant 0 : index
    %c2_109 = arith.constant 2 : index
    %c2_110 = arith.constant 2 : index
    %c0_111 = arith.constant 0 : index
    %68 = vector.load %arg1[%c0_108, %c2_109, %c2_110, %c0_111] : memref<2x12x12x128xf32, #tpu.memory_space<vmem>>, vector<2x8x8x64xf32>
    %c0_112 = arith.constant 0 : index
    %c2_113 = arith.constant 2 : index
    %c3_114 = arith.constant 3 : index
    %c0_115 = arith.constant 0 : index
    %69 = vector.load %arg1[%c0_112, %c2_113, %c3_114, %c0_115] : memref<2x12x12x128xf32, #tpu.memory_space<vmem>>, vector<2x8x8x64xf32>
    %70 = tpu.concatenate %68, %69 in 3 : vector<2x8x8x64xf32>, vector<2x8x8x64xf32> -> vector<2x8x8x128xf32>
    %71 = vector.shape_cast %70 : vector<2x8x8x128xf32> to vector<128x128xf32>
    %72 = arith.truncf %71 : vector<128x128xf32> to vector<128x128xbf16>
    %c768 = arith.constant 768 : index
    %c0_116 = arith.constant 0 : index
    %73 = vector.load %arg2[%c768, %c0_116] : memref<1664x128xbf16, #tpu.memory_space<vmem>>, vector<128x128xbf16>
    %cst_117 = arith.constant dense<0.000000e+00> : vector<128x128xf32>
    %74 = tpu.matmul %72, %73, %cst_117 {dimension_numbers = #tpu.dot_dimension_numbers<[1], [0], [0], [1], [0, 0, 1, 1], [], []>} : vector<128x128xbf16>, vector<128x128xbf16>, vector<128x128xf32> -> vector<128x128xf32>
    %c0_118 = arith.constant 0 : index
    %c0_119 = arith.constant 0 : index
    %c0_120 = arith.constant 0 : index
    %c0_121 = arith.constant 0 : index
    %75 = vector.load %arg11[%c0_118, %c0_119, %c0_120, %c0_121] : memref<2x8x8x128xf32, #tpu.memory_space<vmem>>, vector<2x8x8x128xf32>
    %76 = vector.shape_cast %74 : vector<128x128xf32> to vector<2x8x8x128xf32>
    %77 = arith.addf %75, %76 : vector<2x8x8x128xf32>
    %c0_122 = arith.constant 0 : index
    %c0_123 = arith.constant 0 : index
    %c0_124 = arith.constant 0 : index
    %c0_125 = arith.constant 0 : index
    %78 = vector.load %arg11[%c0_122, %c0_123, %c0_124, %c0_125] : memref<2x8x8x128xf32, #tpu.memory_space<vmem>>, vector<2x8x8x128xf32>
    tpu.vector_store %arg11[%c0_122, %c0_123, %c0_124, %c0_125], %77 {strides = array<i32>} : memref<2x8x8x128xf32, #tpu.memory_space<vmem>>, vector<2x8x8x128xf32>,
    %c0_126 = arith.constant 0 : index
    %c2_127 = arith.constant 2 : index
    %c4_128 = arith.constant 4 : index
    %c0_129 = arith.constant 0 : index
    %79 = vector.load %arg1[%c0_126, %c2_127, %c4_128, %c0_129] : memref<2x12x12x128xf32, #tpu.memory_space<vmem>>, vector<2x8x8x64xf32>
    %c0_130 = arith.constant 0 : index
    %c3_131 = arith.constant 3 : index
    %c0_132 = arith.constant 0 : index
    %c0_133 = arith.constant 0 : index
    %80 = vector.load %arg1[%c0_130, %c3_131, %c0_132, %c0_133] : memref<2x12x12x128xf32, #tpu.memory_space<vmem>>, vector<2x8x8x64xf32>
    %81 = tpu.concatenate %79, %80 in 3 : vector<2x8x8x64xf32>, vector<2x8x8x64xf32> -> vector<2x8x8x128xf32>
    %82 = vector.shape_cast %81 : vector<2x8x8x128xf32> to vector<128x128xf32>
    %83 = arith.truncf %82 : vector<128x128xf32> to vector<128x128xbf16>
    %c896 = arith.constant 896 : index
    %c0_134 = arith.constant 0 : index
    %84 = vector.load %arg2[%c896, %c0_134] : memref<1664x128xbf16, #tpu.memory_space<vmem>>, vector<128x128xbf16>
    %cst_135 = arith.constant dense<0.000000e+00> : vector<128x128xf32>
    %85 = tpu.matmul %83, %84, %cst_135 {dimension_numbers = #tpu.dot_dimension_numbers<[1], [0], [0], [1], [0, 0, 1, 1], [], []>} : vector<128x128xbf16>, vector<128x128xbf16>, vector<128x128xf32> -> vector<128x128xf32>
    %c0_136 = arith.constant 0 : index
    %c0_137 = arith.constant 0 : index
    %c0_138 = arith.constant 0 : index
    %c0_139 = arith.constant 0 : index
    %86 = vector.load %arg11[%c0_136, %c0_137, %c0_138, %c0_139] : memref<2x8x8x128xf32, #tpu.memory_space<vmem>>, vector<2x8x8x128xf32>
    %87 = vector.shape_cast %85 : vector<128x128xf32> to vector<2x8x8x128xf32>
    %88 = arith.addf %86, %87 : vector<2x8x8x128xf32>
    %c0_140 = arith.constant 0 : index
    %c0_141 = arith.constant 0 : index
    %c0_142 = arith.constant 0 : index
    %c0_143 = arith.constant 0 : index
    %89 = vector.load %arg11[%c0_140, %c0_141, %c0_142, %c0_143] : memref<2x8x8x128xf32, #tpu.memory_space<vmem>>, vector<2x8x8x128xf32>
    tpu.vector_store %arg11[%c0_140, %c0_141, %c0_142, %c0_143], %88 {strides = array<i32>} : memref<2x8x8x128xf32, #tpu.memory_space<vmem>>, vector<2x8x8x128xf32>,
    %c0_144 = arith.constant 0 : index
    %c3_145 = arith.constant 3 : index
    %c1_146 = arith.constant 1 : index
    %c0_147 = arith.constant 0 : index
    %90 = vector.load %arg1[%c0_144, %c3_145, %c1_146, %c0_147] : memref<2x12x12x128xf32, #tpu.memory_space<vmem>>, vector<2x8x8x64xf32>
    %c0_148 = arith.constant 0 : index
    %c3_149 = arith.constant 3 : index
    %c2_150 = arith.constant 2 : index
    %c0_151 = arith.constant 0 : index
    %91 = vector.load %arg1[%c0_148, %c3_149, %c2_150, %c0_151] : memref<2x12x12x128xf32, #tpu.memory_space<vmem>>, vector<2x8x8x64xf32>
    %92 = tpu.concatenate %90, %91 in 3 : vector<2x8x8x64xf32>, vector<2x8x8x64xf32> -> vector<2x8x8x128xf32>
    %93 = vector.shape_cast %92 : vector<2x8x8x128xf32> to vector<128x128xf32>
    %94 = arith.truncf %93 : vector<128x128xf32> to vector<128x128xbf16>
    %c1024 = arith.constant 1024 : index
    %c0_152 = arith.constant 0 : index
    %95 = vector.load %arg2[%c1024, %c0_152] : memref<1664x128xbf16, #tpu.memory_space<vmem>>, vector<128x128xbf16>
    %cst_153 = arith.constant dense<0.000000e+00> : vector<128x128xf32>
    %96 = tpu.matmul %94, %95, %cst_153 {dimension_numbers = #tpu.dot_dimension_numbers<[1], [0], [0], [1], [0, 0, 1, 1], [], []>} : vector<128x128xbf16>, vector<128x128xbf16>, vector<128x128xf32> -> vector<128x128xf32>
    %c0_154 = arith.constant 0 : index
    %c0_155 = arith.constant 0 : index
    %c0_156 = arith.constant 0 : index
    %c0_157 = arith.constant 0 : index
    %97 = vector.load %arg11[%c0_154, %c0_155, %c0_156, %c0_157] : memref<2x8x8x128xf32, #tpu.memory_space<vmem>>, vector<2x8x8x128xf32>
    %98 = vector.shape_cast %96 : vector<128x128xf32> to vector<2x8x8x128xf32>
    %99 = arith.addf %97, %98 : vector<2x8x8x128xf32>
    %c0_158 = arith.constant 0 : index
    %c0_159 = arith.constant 0 : index
    %c0_160 = arith.constant 0 : index
    %c0_161 = arith.constant 0 : index
    %100 = vector.load %arg11[%c0_158, %c0_159, %c0_160, %c0_161] : memref<2x8x8x128xf32, #tpu.memory_space<vmem>>, vector<2x8x8x128xf32>
    tpu.vector_store %arg11[%c0_158, %c0_159, %c0_160, %c0_161], %99 {strides = array<i32>} : memref<2x8x8x128xf32, #tpu.memory_space<vmem>>, vector<2x8x8x128xf32>,
    %c0_162 = arith.constant 0 : index
    %c3_163 = arith.constant 3 : index
    %c3_164 = arith.constant 3 : index
    %c0_165 = arith.constant 0 : index
    %101 = vector.load %arg1[%c0_162, %c3_163, %c3_164, %c0_165] : memref<2x12x12x128xf32, #tpu.memory_space<vmem>>, vector<2x8x8x64xf32>
    %c0_166 = arith.constant 0 : index
    %c3_167 = arith.constant 3 : index
    %c4_168 = arith.constant 4 : index
    %c0_169 = arith.constant 0 : index
    %102 = vector.load %arg1[%c0_166, %c3_167, %c4_168, %c0_169] : memref<2x12x12x128xf32, #tpu.memory_space<vmem>>, vector<2x8x8x64xf32>
    %103 = tpu.concatenate %101, %102 in 3 : vector<2x8x8x64xf32>, vector<2x8x8x64xf32> -> vector<2x8x8x128xf32>
    %104 = vector.shape_cast %103 : vector<2x8x8x128xf32> to vector<128x128xf32>
    %105 = arith.truncf %104 : vector<128x128xf32> to vector<128x128xbf16>
    %c1152 = arith.constant 1152 : index
    %c0_170 = arith.constant 0 : index
    %106 = vector.load %arg2[%c1152, %c0_170] : memref<1664x128xbf16, #tpu.memory_space<vmem>>, vector<128x128xbf16>
    %cst_171 = arith.constant dense<0.000000e+00> : vector<128x128xf32>
    %107 = tpu.matmul %105, %106, %cst_171 {dimension_numbers = #tpu.dot_dimension_numbers<[1], [0], [0], [1], [0, 0, 1, 1], [], []>} : vector<128x128xbf16>, vector<128x128xbf16>, vector<128x128xf32> -> vector<128x128xf32>
    %c0_172 = arith.constant 0 : index
    %c0_173 = arith.constant 0 : index
    %c0_174 = arith.constant 0 : index
    %c0_175 = arith.constant 0 : index
    %108 = vector.load %arg11[%c0_172, %c0_173, %c0_174, %c0_175] : memref<2x8x8x128xf32, #tpu.memory_space<vmem>>, vector<2x8x8x128xf32>
    %109 = vector.shape_cast %107 : vector<128x128xf32> to vector<2x8x8x128xf32>
    %110 = arith.addf %108, %109 : vector<2x8x8x128xf32>
    %c0_176 = arith.constant 0 : index
    %c0_177 = arith.constant 0 : index
    %c0_178 = arith.constant 0 : index
    %c0_179 = arith.constant 0 : index
    %111 = vector.load %arg11[%c0_176, %c0_177, %c0_178, %c0_179] : memref<2x8x8x128xf32, #tpu.memory_space<vmem>>, vector<2x8x8x128xf32>
    tpu.vector_store %arg11[%c0_176, %c0_177, %c0_178, %c0_179], %110 {strides = array<i32>} : memref<2x8x8x128xf32, #tpu.memory_space<vmem>>, vector<2x8x8x128xf32>,
    %c0_180 = arith.constant 0 : index
    %c4_181 = arith.constant 4 : index
    %c0_182 = arith.constant 0 : index
    %c0_183 = arith.constant 0 : index
    %112 = vector.load %arg1[%c0_180, %c4_181, %c0_182, %c0_183] : memref<2x12x12x128xf32, #tpu.memory_space<vmem>>, vector<2x8x8x64xf32>
    %c0_184 = arith.constant 0 : index
    %c4_185 = arith.constant 4 : index
    %c1_186 = arith.constant 1 : index
    %c0_187 = arith.constant 0 : index
    %113 = vector.load %arg1[%c0_184, %c4_185, %c1_186, %c0_187] : memref<2x12x12x128xf32, #tpu.memory_space<vmem>>, vector<2x8x8x64xf32>
    %114 = tpu.concatenate %112, %113 in 3 : vector<2x8x8x64xf32>, vector<2x8x8x64xf32> -> vector<2x8x8x128xf32>
    %115 = vector.shape_cast %114 : vector<2x8x8x128xf32> to vector<128x128xf32>
    %116 = arith.truncf %115 : vector<128x128xf32> to vector<128x128xbf16>
    %c1280 = arith.constant 1280 : index
    %c0_188 = arith.constant 0 : index
    %117 = vector.load %arg2[%c1280, %c0_188] : memref<1664x128xbf16, #tpu.memory_space<vmem>>, vector<128x128xbf16>
    %cst_189 = arith.constant dense<0.000000e+00> : vector<128x128xf32>
    %118 = tpu.matmul %116, %117, %cst_189 {dimension_numbers = #tpu.dot_dimension_numbers<[1], [0], [0], [1], [0, 0, 1, 1], [], []>} : vector<128x128xbf16>, vector<128x128xbf16>, vector<128x128xf32> -> vector<128x128xf32>
    %c0_190 = arith.constant 0 : index
    %c0_191 = arith.constant 0 : index
    %c0_192 = arith.constant 0 : index
    %c0_193 = arith.constant 0 : index
    %119 = vector.load %arg11[%c0_190, %c0_191, %c0_192, %c0_193] : memref<2x8x8x128xf32, #tpu.memory_space<vmem>>, vector<2x8x8x128xf32>
    %120 = vector.shape_cast %118 : vector<128x128xf32> to vector<2x8x8x128xf32>
    %121 = arith.addf %119, %120 : vector<2x8x8x128xf32>
    %c0_194 = arith.constant 0 : index
    %c0_195 = arith.constant 0 : index
    %c0_196 = arith.constant 0 : index
    %c0_197 = arith.constant 0 : index
    %122 = vector.load %arg11[%c0_194, %c0_195, %c0_196, %c0_197] : memref<2x8x8x128xf32, #tpu.memory_space<vmem>>, vector<2x8x8x128xf32>
    tpu.vector_store %arg11[%c0_194, %c0_195, %c0_196, %c0_197], %121 {strides = array<i32>} : memref<2x8x8x128xf32, #tpu.memory_space<vmem>>, vector<2x8x8x128xf32>,
    %c0_198 = arith.constant 0 : index
    %c4_199 = arith.constant 4 : index
    %c2_200 = arith.constant 2 : index
    %c0_201 = arith.constant 0 : index
    %123 = vector.load %arg1[%c0_198, %c4_199, %c2_200, %c0_201] : memref<2x12x12x128xf32, #tpu.memory_space<vmem>>, vector<2x8x8x64xf32>
    %c0_202 = arith.constant 0 : index
    %c4_203 = arith.constant 4 : index
    %c3_204 = arith.constant 3 : index
    %c0_205 = arith.constant 0 : index
    %124 = vector.load %arg1[%c0_202, %c4_203, %c3_204, %c0_205] : memref<2x12x12x128xf32, #tpu.memory_space<vmem>>, vector<2x8x8x64xf32>
    %125 = tpu.concatenate %123, %124 in 3 : vector<2x8x8x64xf32>, vector<2x8x8x64xf32> -> vector<2x8x8x128xf32>
    %126 = vector.shape_cast %125 : vector<2x8x8x128xf32> to vector<128x128xf32>
    %127 = arith.truncf %126 : vector<128x128xf32> to vector<128x128xbf16>
    %c1408 = arith.constant 1408 : index
    %c0_206 = arith.constant 0 : index
    %128 = vector.load %arg2[%c1408, %c0_206] : memref<1664x128xbf16, #tpu.memory_space<vmem>>, vector<128x128xbf16>
    %cst_207 = arith.constant dense<0.000000e+00> : vector<128x128xf32>
    %129 = tpu.matmul %127, %128, %cst_207 {dimension_numbers = #tpu.dot_dimension_numbers<[1], [0], [0], [1], [0, 0, 1, 1], [], []>} : vector<128x128xbf16>, vector<128x128xbf16>, vector<128x128xf32> -> vector<128x128xf32>
    %c0_208 = arith.constant 0 : index
    %c0_209 = arith.constant 0 : index
    %c0_210 = arith.constant 0 : index
    %c0_211 = arith.constant 0 : index
    %130 = vector.load %arg11[%c0_208, %c0_209, %c0_210, %c0_211] : memref<2x8x8x128xf32, #tpu.memory_space<vmem>>, vector<2x8x8x128xf32>
    %131 = vector.shape_cast %129 : vector<128x128xf32> to vector<2x8x8x128xf32>
    %132 = arith.addf %130, %131 : vector<2x8x8x128xf32>
    %c0_212 = arith.constant 0 : index
    %c0_213 = arith.constant 0 : index
    %c0_214 = arith.constant 0 : index
    %c0_215 = arith.constant 0 : index
    %133 = vector.load %arg11[%c0_212, %c0_213, %c0_214, %c0_215] : memref<2x8x8x128xf32, #tpu.memory_space<vmem>>, vector<2x8x8x128xf32>
    tpu.vector_store %arg11[%c0_212, %c0_213, %c0_214, %c0_215], %132 {strides = array<i32>} : memref<2x8x8x128xf32, #tpu.memory_space<vmem>>, vector<2x8x8x128xf32>,
    %c0_216 = arith.constant 0 : index
    %c4_217 = arith.constant 4 : index
    %c4_218 = arith.constant 4 : index
    %c0_219 = arith.constant 0 : index
    %134 = vector.load %arg1[%c0_216, %c4_217, %c4_218, %c0_219] : memref<2x12x12x128xf32, #tpu.memory_space<vmem>>, vector<2x8x8x64xf32>
    %135 = tpu.concatenate %134, %134 in 3 : vector<2x8x8x64xf32>, vector<2x8x8x64xf32> -> vector<2x8x8x128xf32>
    %136 = vector.shape_cast %135 : vector<2x8x8x128xf32> to vector<128x128xf32>
    %137 = arith.truncf %136 : vector<128x128xf32> to vector<128x128xbf16>
    %c1536 = arith.constant 1536 : index
    %c0_220 = arith.constant 0 : index
    %138 = vector.load %arg2[%c1536, %c0_220] : memref<1664x128xbf16, #tpu.memory_space<vmem>>, vector<128x128xbf16>
    %cst_221 = arith.constant dense<0.000000e+00> : vector<128x128xf32>
    %139 = tpu.matmul %137, %138, %cst_221 {dimension_numbers = #tpu.dot_dimension_numbers<[1], [0], [0], [1], [0, 0, 1, 1], [], []>} : vector<128x128xbf16>, vector<128x128xbf16>, vector<128x128xf32> -> vector<128x128xf32>
    %c0_222 = arith.constant 0 : index
    %c0_223 = arith.constant 0 : index
    %c0_224 = arith.constant 0 : index
    %c0_225 = arith.constant 0 : index
    %140 = vector.load %arg11[%c0_222, %c0_223, %c0_224, %c0_225] : memref<2x8x8x128xf32, #tpu.memory_space<vmem>>, vector<2x8x8x128xf32>
    %141 = vector.shape_cast %139 : vector<128x128xf32> to vector<2x8x8x128xf32>
    %142 = arith.addf %140, %141 : vector<2x8x8x128xf32>
    %c0_226 = arith.constant 0 : index
    %c0_227 = arith.constant 0 : index
    %c0_228 = arith.constant 0 : index
    %c0_229 = arith.constant 0 : index
    %143 = vector.load %arg11[%c0_226, %c0_227, %c0_228, %c0_229] : memref<2x8x8x128xf32, #tpu.memory_space<vmem>>, vector<2x8x8x128xf32>
    tpu.vector_store %arg11[%c0_226, %c0_227, %c0_228, %c0_229], %142 {strides = array<i32>} : memref<2x8x8x128xf32, #tpu.memory_space<vmem>>, vector<2x8x8x128xf32>,
    %c0_230 = arith.constant 0 : index
    %c0_231 = arith.constant 0 : index
    %144 = vector.load %arg3[%c0_230, %c0_231] : memref<1x128xf32, #tpu.memory_space<vmem>>, vector<1x128xf32>
    %c0_232 = arith.constant 0 : index
    %c0_233 = arith.constant 0 : index
    %c0_234 = arith.constant 0 : index
    %c0_235 = arith.constant 0 : index
    %145 = vector.load %arg11[%c0_232, %c0_233, %c0_234, %c0_235] : memref<2x8x8x128xf32, #tpu.memory_space<vmem>>, vector<2x1x1x128xf32>
    %146 = vector.shape_cast %145 : vector<2x1x1x128xf32> to vector<2x128xf32>
    %c0_236 = arith.constant 0 : index
    %c0_237 = arith.constant 0 : index
    %c1_238 = arith.constant 1 : index
    %c0_239 = arith.constant 0 : index
    %147 = vector.load %arg11[%c0_236, %c0_237, %c1_238, %c0_239] : memref<2x8x8x128xf32, #tpu.memory_space<vmem>>, vector<2x1x1x128xf32>
    %148 = vector.shape_cast %147 : vector<2x1x1x128xf32> to vector<2x128xf32>
    %149 = arith.maximumf %146, %148 : vector<2x128xf32>
    %c0_240 = arith.constant 0 : index
    %c1_241 = arith.constant 1 : index
    %c0_242 = arith.constant 0 : index
    %c0_243 = arith.constant 0 : index
    %150 = vector.load %arg11[%c0_240, %c1_241, %c0_242, %c0_243] : memref<2x8x8x128xf32, #tpu.memory_space<vmem>>, vector<2x1x1x128xf32>
    %151 = vector.shape_cast %150 : vector<2x1x1x128xf32> to vector<2x128xf32>
    %c0_244 = arith.constant 0 : index
    %c1_245 = arith.constant 1 : index
    %c1_246 = arith.constant 1 : index
    %c0_247 = arith.constant 0 : index
    %152 = vector.load %arg11[%c0_244, %c1_245, %c1_246, %c0_247] : memref<2x8x8x128xf32, #tpu.memory_space<vmem>>, vector<2x1x1x128xf32>
    %153 = vector.shape_cast %152 : vector<2x1x1x128xf32> to vector<2x128xf32>
    %154 = arith.maximumf %151, %153 : vector<2x128xf32>
    %155 = arith.maximumf %149, %154 : vector<2x128xf32>
    %156 = vector.broadcast %144 : vector<1x128xf32> to vector<2x128xf32>
    %157 = arith.addf %155, %156 : vector<2x128xf32>
    %cst_248 = arith.constant 0.000000e+00 : f32
    %158 = vector.broadcast %cst_248 : f32 to vector<2x128xf32>
    %159 = arith.maximumf %157, %158 : vector<2x128xf32>
    %c0_249 = arith.constant 0 : index
    %c0_250 = arith.constant 0 : index
    %c2_251 = arith.constant 2 : index
    %c0_252 = arith.constant 0 : index
    %160 = vector.load %arg11[%c0_249, %c0_250, %c2_251, %c0_252] : memref<2x8x8x128xf32, #tpu.memory_space<vmem>>, vector<2x1x1x128xf32>
    %161 = vector.shape_cast %160 : vector<2x1x1x128xf32> to vector<2x128xf32>
    %c0_253 = arith.constant 0 : index
    %c0_254 = arith.constant 0 : index
    %c3_255 = arith.constant 3 : index
    %c0_256 = arith.constant 0 : index
    %162 = vector.load %arg11[%c0_253, %c0_254, %c3_255, %c0_256] : memref<2x8x8x128xf32, #tpu.memory_space<vmem>>, vector<2x1x1x128xf32>
    %163 = vector.shape_cast %162 : vector<2x1x1x128xf32> to vector<2x128xf32>
    %164 = arith.maximumf %161, %163 : vector<2x128xf32>
    %c0_257 = arith.constant 0 : index
    %c1_258 = arith.constant 1 : index
    %c2_259 = arith.constant 2 : index
    %c0_260 = arith.constant 0 : index
    %165 = vector.load %arg11[%c0_257, %c1_258, %c2_259, %c0_260] : memref<2x8x8x128xf32, #tpu.memory_space<vmem>>, vector<2x1x1x128xf32>
    %166 = vector.shape_cast %165 : vector<2x1x1x128xf32> to vector<2x128xf32>
    %c0_261 = arith.constant 0 : index
    %c1_262 = arith.constant 1 : index
    %c3_263 = arith.constant 3 : index
    %c0_264 = arith.constant 0 : index
    %167 = vector.load %arg11[%c0_261, %c1_262, %c3_263, %c0_264] : memref<2x8x8x128xf32, #tpu.memory_space<vmem>>, vector<2x1x1x128xf32>
    %168 = vector.shape_cast %167 : vector<2x1x1x128xf32> to vector<2x128xf32>
    %169 = arith.maximumf %166, %168 : vector<2x128xf32>
    %170 = arith.maximumf %164, %169 : vector<2x128xf32>
    %171 = vector.broadcast %144 : vector<1x128xf32> to vector<2x128xf32>
    %172 = arith.addf %170, %171 : vector<2x128xf32>
    %cst_265 = arith.constant 0.000000e+00 : f32
    %173 = vector.broadcast %cst_265 : f32 to vector<2x128xf32>
    %174 = arith.maximumf %172, %173 : vector<2x128xf32>
    %c0_266 = arith.constant 0 : index
    %c0_267 = arith.constant 0 : index
    %c4_268 = arith.constant 4 : index
    %c0_269 = arith.constant 0 : index
    %175 = vector.load %arg11[%c0_266, %c0_267, %c4_268, %c0_269] : memref<2x8x8x128xf32, #tpu.memory_space<vmem>>, vector<2x1x1x128xf32>
    %176 = vector.shape_cast %175 : vector<2x1x1x128xf32> to vector<2x128xf32>
    %c0_270 = arith.constant 0 : index
    %c0_271 = arith.constant 0 : index
    %c5 = arith.constant 5 : index
    %c0_272 = arith.constant 0 : index
    %177 = vector.load %arg11[%c0_270, %c0_271, %c5, %c0_272] : memref<2x8x8x128xf32, #tpu.memory_space<vmem>>, vector<2x1x1x128xf32>
    %178 = vector.shape_cast %177 : vector<2x1x1x128xf32> to vector<2x128xf32>
    %179 = arith.maximumf %176, %178 : vector<2x128xf32>
    %c0_273 = arith.constant 0 : index
    %c1_274 = arith.constant 1 : index
    %c4_275 = arith.constant 4 : index
    %c0_276 = arith.constant 0 : index
    %180 = vector.load %arg11[%c0_273, %c1_274, %c4_275, %c0_276] : memref<2x8x8x128xf32, #tpu.memory_space<vmem>>, vector<2x1x1x128xf32>
    %181 = vector.shape_cast %180 : vector<2x1x1x128xf32> to vector<2x128xf32>
    %c0_277 = arith.constant 0 : index
    %c1_278 = arith.constant 1 : index
    %c5_279 = arith.constant 5 : index
    %c0_280 = arith.constant 0 : index
    %182 = vector.load %arg11[%c0_277, %c1_278, %c5_279, %c0_280] : memref<2x8x8x128xf32, #tpu.memory_space<vmem>>, vector<2x1x1x128xf32>
    %183 = vector.shape_cast %182 : vector<2x1x1x128xf32> to vector<2x128xf32>
    %184 = arith.maximumf %181, %183 : vector<2x128xf32>
    %185 = arith.maximumf %179, %184 : vector<2x128xf32>
    %186 = vector.broadcast %144 : vector<1x128xf32> to vector<2x128xf32>
    %187 = arith.addf %185, %186 : vector<2x128xf32>
    %cst_281 = arith.constant 0.000000e+00 : f32
    %188 = vector.broadcast %cst_281 : f32 to vector<2x128xf32>
    %189 = arith.maximumf %187, %188 : vector<2x128xf32>
    %c0_282 = arith.constant 0 : index
    %c0_283 = arith.constant 0 : index
    %c6 = arith.constant 6 : index
    %c0_284 = arith.constant 0 : index
    %190 = vector.load %arg11[%c0_282, %c0_283, %c6, %c0_284] : memref<2x8x8x128xf32, #tpu.memory_space<vmem>>, vector<2x1x1x128xf32>
    %191 = vector.shape_cast %190 : vector<2x1x1x128xf32> to vector<2x128xf32>
    %c0_285 = arith.constant 0 : index
    %c0_286 = arith.constant 0 : index
    %c7 = arith.constant 7 : index
    %c0_287 = arith.constant 0 : index
    %192 = vector.load %arg11[%c0_285, %c0_286, %c7, %c0_287] : memref<2x8x8x128xf32, #tpu.memory_space<vmem>>, vector<2x1x1x128xf32>
    %193 = vector.shape_cast %192 : vector<2x1x1x128xf32> to vector<2x128xf32>
    %194 = arith.maximumf %191, %193 : vector<2x128xf32>
    %c0_288 = arith.constant 0 : index
    %c1_289 = arith.constant 1 : index
    %c6_290 = arith.constant 6 : index
    %c0_291 = arith.constant 0 : index
    %195 = vector.load %arg11[%c0_288, %c1_289, %c6_290, %c0_291] : memref<2x8x8x128xf32, #tpu.memory_space<vmem>>, vector<2x1x1x128xf32>
    %196 = vector.shape_cast %195 : vector<2x1x1x128xf32> to vector<2x128xf32>
    %c0_292 = arith.constant 0 : index
    %c1_293 = arith.constant 1 : index
    %c7_294 = arith.constant 7 : index
    %c0_295 = arith.constant 0 : index
    %197 = vector.load %arg11[%c0_292, %c1_293, %c7_294, %c0_295] : memref<2x8x8x128xf32, #tpu.memory_space<vmem>>, vector<2x1x1x128xf32>
    %198 = vector.shape_cast %197 : vector<2x1x1x128xf32> to vector<2x128xf32>
    %199 = arith.maximumf %196, %198 : vector<2x128xf32>
    %200 = arith.maximumf %194, %199 : vector<2x128xf32>
    %201 = vector.broadcast %144 : vector<1x128xf32> to vector<2x128xf32>
    %202 = arith.addf %200, %201 : vector<2x128xf32>
    %cst_296 = arith.constant 0.000000e+00 : f32
    %203 = vector.broadcast %cst_296 : f32 to vector<2x128xf32>
    %204 = arith.maximumf %202, %203 : vector<2x128xf32>
    %c0_297 = arith.constant 0 : index
    %c2_298 = arith.constant 2 : index
    %c0_299 = arith.constant 0 : index
    %c0_300 = arith.constant 0 : index
    %205 = vector.load %arg11[%c0_297, %c2_298, %c0_299, %c0_300] : memref<2x8x8x128xf32, #tpu.memory_space<vmem>>, vector<2x1x1x128xf32>
    %206 = vector.shape_cast %205 : vector<2x1x1x128xf32> to vector<2x128xf32>
    %c0_301 = arith.constant 0 : index
    %c2_302 = arith.constant 2 : index
    %c1_303 = arith.constant 1 : index
    %c0_304 = arith.constant 0 : index
    %207 = vector.load %arg11[%c0_301, %c2_302, %c1_303, %c0_304] : memref<2x8x8x128xf32, #tpu.memory_space<vmem>>, vector<2x1x1x128xf32>
    %208 = vector.shape_cast %207 : vector<2x1x1x128xf32> to vector<2x128xf32>
    %209 = arith.maximumf %206, %208 : vector<2x128xf32>
    %c0_305 = arith.constant 0 : index
    %c3_306 = arith.constant 3 : index
    %c0_307 = arith.constant 0 : index
    %c0_308 = arith.constant 0 : index
    %210 = vector.load %arg11[%c0_305, %c3_306, %c0_307, %c0_308] : memref<2x8x8x128xf32, #tpu.memory_space<vmem>>, vector<2x1x1x128xf32>
    %211 = vector.shape_cast %210 : vector<2x1x1x128xf32> to vector<2x128xf32>
    %c0_309 = arith.constant 0 : index
    %c3_310 = arith.constant 3 : index
    %c1_311 = arith.constant 1 : index
    %c0_312 = arith.constant 0 : index
    %212 = vector.load %arg11[%c0_309, %c3_310, %c1_311, %c0_312] : memref<2x8x8x128xf32, #tpu.memory_space<vmem>>, vector<2x1x1x128xf32>
    %213 = vector.shape_cast %212 : vector<2x1x1x128xf32> to vector<2x128xf32>
    %214 = arith.maximumf %211, %213 : vector<2x128xf32>
    %215 = arith.maximumf %209, %214 : vector<2x128xf32>
    %216 = vector.broadcast %144 : vector<1x128xf32> to vector<2x128xf32>
    %217 = arith.addf %215, %216 : vector<2x128xf32>
    %cst_313 = arith.constant 0.000000e+00 : f32
    %218 = vector.broadcast %cst_313 : f32 to vector<2x128xf32>
    %219 = arith.maximumf %217, %218 : vector<2x128xf32>
    %c0_314 = arith.constant 0 : index
    %c2_315 = arith.constant 2 : index
    %c2_316 = arith.constant 2 : index
    %c0_317 = arith.constant 0 : index
    %220 = vector.load %arg11[%c0_314, %c2_315, %c2_316, %c0_317] : memref<2x8x8x128xf32, #tpu.memory_space<vmem>>, vector<2x1x1x128xf32>
    %221 = vector.shape_cast %220 : vector<2x1x1x128xf32> to vector<2x128xf32>
    %c0_318 = arith.constant 0 : index
    %c2_319 = arith.constant 2 : index
    %c3_320 = arith.constant 3 : index
    %c0_321 = arith.constant 0 : index
    %222 = vector.load %arg11[%c0_318, %c2_319, %c3_320, %c0_321] : memref<2x8x8x128xf32, #tpu.memory_space<vmem>>, vector<2x1x1x128xf32>
    %223 = vector.shape_cast %222 : vector<2x1x1x128xf32> to vector<2x128xf32>
    %224 = arith.maximumf %221, %223 : vector<2x128xf32>
    %c0_322 = arith.constant 0 : index
    %c3_323 = arith.constant 3 : index
    %c2_324 = arith.constant 2 : index
    %c0_325 = arith.constant 0 : index
    %225 = vector.load %arg11[%c0_322, %c3_323, %c2_324, %c0_325] : memref<2x8x8x128xf32, #tpu.memory_space<vmem>>, vector<2x1x1x128xf32>
    %226 = vector.shape_cast %225 : vector<2x1x1x128xf32> to vector<2x128xf32>
    %c0_326 = arith.constant 0 : index
    %c3_327 = arith.constant 3 : index
    %c3_328 = arith.constant 3 : index
    %c0_329 = arith.constant 0 : index
    %227 = vector.load %arg11[%c0_326, %c3_327, %c3_328, %c0_329] : memref<2x8x8x128xf32, #tpu.memory_space<vmem>>, vector<2x1x1x128xf32>
    %228 = vector.shape_cast %227 : vector<2x1x1x128xf32> to vector<2x128xf32>
    %229 = arith.maximumf %226, %228 : vector<2x128xf32>
    %230 = arith.maximumf %224, %229 : vector<2x128xf32>
    %231 = vector.broadcast %144 : vector<1x128xf32> to vector<2x128xf32>
    %232 = arith.addf %230, %231 : vector<2x128xf32>
    %cst_330 = arith.constant 0.000000e+00 : f32
    %233 = vector.broadcast %cst_330 : f32 to vector<2x128xf32>
    %234 = arith.maximumf %232, %233 : vector<2x128xf32>
    %c0_331 = arith.constant 0 : index
    %c2_332 = arith.constant 2 : index
    %c4_333 = arith.constant 4 : index
    %c0_334 = arith.constant 0 : index
    %235 = vector.load %arg11[%c0_331, %c2_332, %c4_333, %c0_334] : memref<2x8x8x128xf32, #tpu.memory_space<vmem>>, vector<2x1x1x128xf32>
    %236 = vector.shape_cast %235 : vector<2x1x1x128xf32> to vector<2x128xf32>
    %c0_335 = arith.constant 0 : index
    %c2_336 = arith.constant 2 : index
    %c5_337 = arith.constant 5 : index
    %c0_338 = arith.constant 0 : index
    %237 = vector.load %arg11[%c0_335, %c2_336, %c5_337, %c0_338] : memref<2x8x8x128xf32, #tpu.memory_space<vmem>>, vector<2x1x1x128xf32>
    %238 = vector.shape_cast %237 : vector<2x1x1x128xf32> to vector<2x128xf32>
    %239 = arith.maximumf %236, %238 : vector<2x128xf32>
    %c0_339 = arith.constant 0 : index
    %c3_340 = arith.constant 3 : index
    %c4_341 = arith.constant 4 : index
    %c0_342 = arith.constant 0 : index
    %240 = vector.load %arg11[%c0_339, %c3_340, %c4_341, %c0_342] : memref<2x8x8x128xf32, #tpu.memory_space<vmem>>, vector<2x1x1x128xf32>
    %241 = vector.shape_cast %240 : vector<2x1x1x128xf32> to vector<2x128xf32>
    %c0_343 = arith.constant 0 : index
    %c3_344 = arith.constant 3 : index
    %c5_345 = arith.constant 5 : index
    %c0_346 = arith.constant 0 : index
    %242 = vector.load %arg11[%c0_343, %c3_344, %c5_345, %c0_346] : memref<2x8x8x128xf32, #tpu.memory_space<vmem>>, vector<2x1x1x128xf32>
    %243 = vector.shape_cast %242 : vector<2x1x1x128xf32> to vector<2x128xf32>
    %244 = arith.maximumf %241, %243 : vector<2x128xf32>
    %245 = arith.maximumf %239, %244 : vector<2x128xf32>
    %246 = vector.broadcast %144 : vector<1x128xf32> to vector<2x128xf32>
    %247 = arith.addf %245, %246 : vector<2x128xf32>
    %cst_347 = arith.constant 0.000000e+00 : f32
    %248 = vector.broadcast %cst_347 : f32 to vector<2x128xf32>
    %249 = arith.maximumf %247, %248 : vector<2x128xf32>
    %c0_348 = arith.constant 0 : index
    %c2_349 = arith.constant 2 : index
    %c6_350 = arith.constant 6 : index
    %c0_351 = arith.constant 0 : index
    %250 = vector.load %arg11[%c0_348, %c2_349, %c6_350, %c0_351] : memref<2x8x8x128xf32, #tpu.memory_space<vmem>>, vector<2x1x1x128xf32>
    %251 = vector.shape_cast %250 : vector<2x1x1x128xf32> to vector<2x128xf32>
    %c0_352 = arith.constant 0 : index
    %c2_353 = arith.constant 2 : index
    %c7_354 = arith.constant 7 : index
    %c0_355 = arith.constant 0 : index
    %252 = vector.load %arg11[%c0_352, %c2_353, %c7_354, %c0_355] : memref<2x8x8x128xf32, #tpu.memory_space<vmem>>, vector<2x1x1x128xf32>
    %253 = vector.shape_cast %252 : vector<2x1x1x128xf32> to vector<2x128xf32>
    %254 = arith.maximumf %251, %253 : vector<2x128xf32>
    %c0_356 = arith.constant 0 : index
    %c3_357 = arith.constant 3 : index
    %c6_358 = arith.constant 6 : index
    %c0_359 = arith.constant 0 : index
    %255 = vector.load %arg11[%c0_356, %c3_357, %c6_358, %c0_359] : memref<2x8x8x128xf32, #tpu.memory_space<vmem>>, vector<2x1x1x128xf32>
    %256 = vector.shape_cast %255 : vector<2x1x1x128xf32> to vector<2x128xf32>
    %c0_360 = arith.constant 0 : index
    %c3_361 = arith.constant 3 : index
    %c7_362 = arith.constant 7 : index
    %c0_363 = arith.constant 0 : index
    %257 = vector.load %arg11[%c0_360, %c3_361, %c7_362, %c0_363] : memref<2x8x8x128xf32, #tpu.memory_space<vmem>>, vector<2x1x1x128xf32>
    %258 = vector.shape_cast %257 : vector<2x1x1x128xf32> to vector<2x128xf32>
    %259 = arith.maximumf %256, %258 : vector<2x128xf32>
    %260 = arith.maximumf %254, %259 : vector<2x128xf32>
    %261 = vector.broadcast %144 : vector<1x128xf32> to vector<2x128xf32>
    %262 = arith.addf %260, %261 : vector<2x128xf32>
    %cst_364 = arith.constant 0.000000e+00 : f32
    %263 = vector.broadcast %cst_364 : f32 to vector<2x128xf32>
    %264 = arith.maximumf %262, %263 : vector<2x128xf32>
    %c0_365 = arith.constant 0 : index
    %c4_366 = arith.constant 4 : index
    %c0_367 = arith.constant 0 : index
    %c0_368 = arith.constant 0 : index
    %265 = vector.load %arg11[%c0_365, %c4_366, %c0_367, %c0_368] : memref<2x8x8x128xf32, #tpu.memory_space<vmem>>, vector<2x1x1x128xf32>
    %266 = vector.shape_cast %265 : vector<2x1x1x128xf32> to vector<2x128xf32>
    %c0_369 = arith.constant 0 : index
    %c4_370 = arith.constant 4 : index
    %c1_371 = arith.constant 1 : index
    %c0_372 = arith.constant 0 : index
    %267 = vector.load %arg11[%c0_369, %c4_370, %c1_371, %c0_372] : memref<2x8x8x128xf32, #tpu.memory_space<vmem>>, vector<2x1x1x128xf32>
    %268 = vector.shape_cast %267 : vector<2x1x1x128xf32> to vector<2x128xf32>
    %269 = arith.maximumf %266, %268 : vector<2x128xf32>
    %c0_373 = arith.constant 0 : index
    %c5_374 = arith.constant 5 : index
    %c0_375 = arith.constant 0 : index
    %c0_376 = arith.constant 0 : index
    %270 = vector.load %arg11[%c0_373, %c5_374, %c0_375, %c0_376] : memref<2x8x8x128xf32, #tpu.memory_space<vmem>>, vector<2x1x1x128xf32>
    %271 = vector.shape_cast %270 : vector<2x1x1x128xf32> to vector<2x128xf32>
    %c0_377 = arith.constant 0 : index
    %c5_378 = arith.constant 5 : index
    %c1_379 = arith.constant 1 : index
    %c0_380 = arith.constant 0 : index
    %272 = vector.load %arg11[%c0_377, %c5_378, %c1_379, %c0_380] : memref<2x8x8x128xf32, #tpu.memory_space<vmem>>, vector<2x1x1x128xf32>
    %273 = vector.shape_cast %272 : vector<2x1x1x128xf32> to vector<2x128xf32>
    %274 = arith.maximumf %271, %273 : vector<2x128xf32>
    %275 = arith.maximumf %269, %274 : vector<2x128xf32>
    %276 = vector.broadcast %144 : vector<1x128xf32> to vector<2x128xf32>
    %277 = arith.addf %275, %276 : vector<2x128xf32>
    %cst_381 = arith.constant 0.000000e+00 : f32
    %278 = vector.broadcast %cst_381 : f32 to vector<2x128xf32>
    %279 = arith.maximumf %277, %278 : vector<2x128xf32>
    %c0_382 = arith.constant 0 : index
    %c4_383 = arith.constant 4 : index
    %c2_384 = arith.constant 2 : index
    %c0_385 = arith.constant 0 : index
    %280 = vector.load %arg11[%c0_382, %c4_383, %c2_384, %c0_385] : memref<2x8x8x128xf32, #tpu.memory_space<vmem>>, vector<2x1x1x128xf32>
    %281 = vector.shape_cast %280 : vector<2x1x1x128xf32> to vector<2x128xf32>
    %c0_386 = arith.constant 0 : index
    %c4_387 = arith.constant 4 : index
    %c3_388 = arith.constant 3 : index
    %c0_389 = arith.constant 0 : index
    %282 = vector.load %arg11[%c0_386, %c4_387, %c3_388, %c0_389] : memref<2x8x8x128xf32, #tpu.memory_space<vmem>>, vector<2x1x1x128xf32>
    %283 = vector.shape_cast %282 : vector<2x1x1x128xf32> to vector<2x128xf32>
    %284 = arith.maximumf %281, %283 : vector<2x128xf32>
    %c0_390 = arith.constant 0 : index
    %c5_391 = arith.constant 5 : index
    %c2_392 = arith.constant 2 : index
    %c0_393 = arith.constant 0 : index
    %285 = vector.load %arg11[%c0_390, %c5_391, %c2_392, %c0_393] : memref<2x8x8x128xf32, #tpu.memory_space<vmem>>, vector<2x1x1x128xf32>
    %286 = vector.shape_cast %285 : vector<2x1x1x128xf32> to vector<2x128xf32>
    %c0_394 = arith.constant 0 : index
    %c5_395 = arith.constant 5 : index
    %c3_396 = arith.constant 3 : index
    %c0_397 = arith.constant 0 : index
    %287 = vector.load %arg11[%c0_394, %c5_395, %c3_396, %c0_397] : memref<2x8x8x128xf32, #tpu.memory_space<vmem>>, vector<2x1x1x128xf32>
    %288 = vector.shape_cast %287 : vector<2x1x1x128xf32> to vector<2x128xf32>
    %289 = arith.maximumf %286, %288 : vector<2x128xf32>
    %290 = arith.maximumf %284, %289 : vector<2x128xf32>
    %291 = vector.broadcast %144 : vector<1x128xf32> to vector<2x128xf32>
    %292 = arith.addf %290, %291 : vector<2x128xf32>
    %cst_398 = arith.constant 0.000000e+00 : f32
    %293 = vector.broadcast %cst_398 : f32 to vector<2x128xf32>
    %294 = arith.maximumf %292, %293 : vector<2x128xf32>
    %c0_399 = arith.constant 0 : index
    %c4_400 = arith.constant 4 : index
    %c4_401 = arith.constant 4 : index
    %c0_402 = arith.constant 0 : index
    %295 = vector.load %arg11[%c0_399, %c4_400, %c4_401, %c0_402] : memref<2x8x8x128xf32, #tpu.memory_space<vmem>>, vector<2x1x1x128xf32>
    %296 = vector.shape_cast %295 : vector<2x1x1x128xf32> to vector<2x128xf32>
    %c0_403 = arith.constant 0 : index
    %c4_404 = arith.constant 4 : index
    %c5_405 = arith.constant 5 : index
    %c0_406 = arith.constant 0 : index
    %297 = vector.load %arg11[%c0_403, %c4_404, %c5_405, %c0_406] : memref<2x8x8x128xf32, #tpu.memory_space<vmem>>, vector<2x1x1x128xf32>
    %298 = vector.shape_cast %297 : vector<2x1x1x128xf32> to vector<2x128xf32>
    %299 = arith.maximumf %296, %298 : vector<2x128xf32>
    %c0_407 = arith.constant 0 : index
    %c5_408 = arith.constant 5 : index
    %c4_409 = arith.constant 4 : index
    %c0_410 = arith.constant 0 : index
    %300 = vector.load %arg11[%c0_407, %c5_408, %c4_409, %c0_410] : memref<2x8x8x128xf32, #tpu.memory_space<vmem>>, vector<2x1x1x128xf32>
    %301 = vector.shape_cast %300 : vector<2x1x1x128xf32> to vector<2x128xf32>
    %c0_411 = arith.constant 0 : index
    %c5_412 = arith.constant 5 : index
    %c5_413 = arith.constant 5 : index
    %c0_414 = arith.constant 0 : index
    %302 = vector.load %arg11[%c0_411, %c5_412, %c5_413, %c0_414] : memref<2x8x8x128xf32, #tpu.memory_space<vmem>>, vector<2x1x1x128xf32>
    %303 = vector.shape_cast %302 : vector<2x1x1x128xf32> to vector<2x128xf32>
    %304 = arith.maximumf %301, %303 : vector<2x128xf32>
    %305 = arith.maximumf %299, %304 : vector<2x128xf32>
    %306 = vector.broadcast %144 : vector<1x128xf32> to vector<2x128xf32>
    %307 = arith.addf %305, %306 : vector<2x128xf32>
    %cst_415 = arith.constant 0.000000e+00 : f32
    %308 = vector.broadcast %cst_415 : f32 to vector<2x128xf32>
    %309 = arith.maximumf %307, %308 : vector<2x128xf32>
    %c0_416 = arith.constant 0 : index
    %c4_417 = arith.constant 4 : index
    %c6_418 = arith.constant 6 : index
    %c0_419 = arith.constant 0 : index
    %310 = vector.load %arg11[%c0_416, %c4_417, %c6_418, %c0_419] : memref<2x8x8x128xf32, #tpu.memory_space<vmem>>, vector<2x1x1x128xf32>
    %311 = vector.shape_cast %310 : vector<2x1x1x128xf32> to vector<2x128xf32>
    %c0_420 = arith.constant 0 : index
    %c4_421 = arith.constant 4 : index
    %c7_422 = arith.constant 7 : index
    %c0_423 = arith.constant 0 : index
    %312 = vector.load %arg11[%c0_420, %c4_421, %c7_422, %c0_423] : memref<2x8x8x128xf32, #tpu.memory_space<vmem>>, vector<2x1x1x128xf32>
    %313 = vector.shape_cast %312 : vector<2x1x1x128xf32> to vector<2x128xf32>
    %314 = arith.maximumf %311, %313 : vector<2x128xf32>
    %c0_424 = arith.constant 0 : index
    %c5_425 = arith.constant 5 : index
    %c6_426 = arith.constant 6 : index
    %c0_427 = arith.constant 0 : index
    %315 = vector.load %arg11[%c0_424, %c5_425, %c6_426, %c0_427] : memref<2x8x8x128xf32, #tpu.memory_space<vmem>>, vector<2x1x1x128xf32>
    %316 = vector.shape_cast %315 : vector<2x1x1x128xf32> to vector<2x128xf32>
    %c0_428 = arith.constant 0 : index
    %c5_429 = arith.constant 5 : index
    %c7_430 = arith.constant 7 : index
    %c0_431 = arith.constant 0 : index
    %317 = vector.load %arg11[%c0_428, %c5_429, %c7_430, %c0_431] : memref<2x8x8x128xf32, #tpu.memory_space<vmem>>, vector<2x1x1x128xf32>
    %318 = vector.shape_cast %317 : vector<2x1x1x128xf32> to vector<2x128xf32>
    %319 = arith.maximumf %316, %318 : vector<2x128xf32>
    %320 = arith.maximumf %314, %319 : vector<2x128xf32>
    %321 = vector.broadcast %144 : vector<1x128xf32> to vector<2x128xf32>
    %322 = arith.addf %320, %321 : vector<2x128xf32>
    %cst_432 = arith.constant 0.000000e+00 : f32
    %323 = vector.broadcast %cst_432 : f32 to vector<2x128xf32>
    %324 = arith.maximumf %322, %323 : vector<2x128xf32>
    %c0_433 = arith.constant 0 : index
    %c6_434 = arith.constant 6 : index
    %c0_435 = arith.constant 0 : index
    %c0_436 = arith.constant 0 : index
    %325 = vector.load %arg11[%c0_433, %c6_434, %c0_435, %c0_436] : memref<2x8x8x128xf32, #tpu.memory_space<vmem>>, vector<2x1x1x128xf32>
    %326 = vector.shape_cast %325 : vector<2x1x1x128xf32> to vector<2x128xf32>
    %c0_437 = arith.constant 0 : index
    %c6_438 = arith.constant 6 : index
    %c1_439 = arith.constant 1 : index
    %c0_440 = arith.constant 0 : index
    %327 = vector.load %arg11[%c0_437, %c6_438, %c1_439, %c0_440] : memref<2x8x8x128xf32, #tpu.memory_space<vmem>>, vector<2x1x1x128xf32>
    %328 = vector.shape_cast %327 : vector<2x1x1x128xf32> to vector<2x128xf32>
    %329 = arith.maximumf %326, %328 : vector<2x128xf32>
    %c0_441 = arith.constant 0 : index
    %c7_442 = arith.constant 7 : index
    %c0_443 = arith.constant 0 : index
    %c0_444 = arith.constant 0 : index
    %330 = vector.load %arg11[%c0_441, %c7_442, %c0_443, %c0_444] : memref<2x8x8x128xf32, #tpu.memory_space<vmem>>, vector<2x1x1x128xf32>
    %331 = vector.shape_cast %330 : vector<2x1x1x128xf32> to vector<2x128xf32>
    %c0_445 = arith.constant 0 : index
    %c7_446 = arith.constant 7 : index
    %c1_447 = arith.constant 1 : index
    %c0_448 = arith.constant 0 : index
    %332 = vector.load %arg11[%c0_445, %c7_446, %c1_447, %c0_448] : memref<2x8x8x128xf32, #tpu.memory_space<vmem>>, vector<2x1x1x128xf32>
    %333 = vector.shape_cast %332 : vector<2x1x1x128xf32> to vector<2x128xf32>
    %334 = arith.maximumf %331, %333 : vector<2x128xf32>
    %335 = arith.maximumf %329, %334 : vector<2x128xf32>
    %336 = vector.broadcast %144 : vector<1x128xf32> to vector<2x128xf32>
    %337 = arith.addf %335, %336 : vector<2x128xf32>
    %cst_449 = arith.constant 0.000000e+00 : f32
    %338 = vector.broadcast %cst_449 : f32 to vector<2x128xf32>
    %339 = arith.maximumf %337, %338 : vector<2x128xf32>
    %c0_450 = arith.constant 0 : index
    %c6_451 = arith.constant 6 : index
    %c2_452 = arith.constant 2 : index
    %c0_453 = arith.constant 0 : index
    %340 = vector.load %arg11[%c0_450, %c6_451, %c2_452, %c0_453] : memref<2x8x8x128xf32, #tpu.memory_space<vmem>>, vector<2x1x1x128xf32>
    %341 = vector.shape_cast %340 : vector<2x1x1x128xf32> to vector<2x128xf32>
    %c0_454 = arith.constant 0 : index
    %c6_455 = arith.constant 6 : index
    %c3_456 = arith.constant 3 : index
    %c0_457 = arith.constant 0 : index
    %342 = vector.load %arg11[%c0_454, %c6_455, %c3_456, %c0_457] : memref<2x8x8x128xf32, #tpu.memory_space<vmem>>, vector<2x1x1x128xf32>
    %343 = vector.shape_cast %342 : vector<2x1x1x128xf32> to vector<2x128xf32>
    %344 = arith.maximumf %341, %343 : vector<2x128xf32>
    %c0_458 = arith.constant 0 : index
    %c7_459 = arith.constant 7 : index
    %c2_460 = arith.constant 2 : index
    %c0_461 = arith.constant 0 : index
    %345 = vector.load %arg11[%c0_458, %c7_459, %c2_460, %c0_461] : memref<2x8x8x128xf32, #tpu.memory_space<vmem>>, vector<2x1x1x128xf32>
    %346 = vector.shape_cast %345 : vector<2x1x1x128xf32> to vector<2x128xf32>
    %c0_462 = arith.constant 0 : index
    %c7_463 = arith.constant 7 : index
    %c3_464 = arith.constant 3 : index
    %c0_465 = arith.constant 0 : index
    %347 = vector.load %arg11[%c0_462, %c7_463, %c3_464, %c0_465] : memref<2x8x8x128xf32, #tpu.memory_space<vmem>>, vector<2x1x1x128xf32>
    %348 = vector.shape_cast %347 : vector<2x1x1x128xf32> to vector<2x128xf32>
    %349 = arith.maximumf %346, %348 : vector<2x128xf32>
    %350 = arith.maximumf %344, %349 : vector<2x128xf32>
    %351 = vector.broadcast %144 : vector<1x128xf32> to vector<2x128xf32>
    %352 = arith.addf %350, %351 : vector<2x128xf32>
    %cst_466 = arith.constant 0.000000e+00 : f32
    %353 = vector.broadcast %cst_466 : f32 to vector<2x128xf32>
    %354 = arith.maximumf %352, %353 : vector<2x128xf32>
    %c0_467 = arith.constant 0 : index
    %c6_468 = arith.constant 6 : index
    %c4_469 = arith.constant 4 : index
    %c0_470 = arith.constant 0 : index
    %355 = vector.load %arg11[%c0_467, %c6_468, %c4_469, %c0_470] : memref<2x8x8x128xf32, #tpu.memory_space<vmem>>, vector<2x1x1x128xf32>
    %356 = vector.shape_cast %355 : vector<2x1x1x128xf32> to vector<2x128xf32>
    %c0_471 = arith.constant 0 : index
    %c6_472 = arith.constant 6 : index
    %c5_473 = arith.constant 5 : index
    %c0_474 = arith.constant 0 : index
    %357 = vector.load %arg11[%c0_471, %c6_472, %c5_473, %c0_474] : memref<2x8x8x128xf32, #tpu.memory_space<vmem>>, vector<2x1x1x128xf32>
    %358 = vector.shape_cast %357 : vector<2x1x1x128xf32> to vector<2x128xf32>
    %359 = arith.maximumf %356, %358 : vector<2x128xf32>
    %c0_475 = arith.constant 0 : index
    %c7_476 = arith.constant 7 : index
    %c4_477 = arith.constant 4 : index
    %c0_478 = arith.constant 0 : index
    %360 = vector.load %arg11[%c0_475, %c7_476, %c4_477, %c0_478] : memref<2x8x8x128xf32, #tpu.memory_space<vmem>>, vector<2x1x1x128xf32>
    %361 = vector.shape_cast %360 : vector<2x1x1x128xf32> to vector<2x128xf32>
    %c0_479 = arith.constant 0 : index
    %c7_480 = arith.constant 7 : index
    %c5_481 = arith.constant 5 : index
    %c0_482 = arith.constant 0 : index
    %362 = vector.load %arg11[%c0_479, %c7_480, %c5_481, %c0_482] : memref<2x8x8x128xf32, #tpu.memory_space<vmem>>, vector<2x1x1x128xf32>
    %363 = vector.shape_cast %362 : vector<2x1x1x128xf32> to vector<2x128xf32>
    %364 = arith.maximumf %361, %363 : vector<2x128xf32>
    %365 = arith.maximumf %359, %364 : vector<2x128xf32>
    %366 = vector.broadcast %144 : vector<1x128xf32> to vector<2x128xf32>
    %367 = arith.addf %365, %366 : vector<2x128xf32>
    %cst_483 = arith.constant 0.000000e+00 : f32
    %368 = vector.broadcast %cst_483 : f32 to vector<2x128xf32>
    %369 = arith.maximumf %367, %368 : vector<2x128xf32>
    %c0_484 = arith.constant 0 : index
    %c6_485 = arith.constant 6 : index
    %c6_486 = arith.constant 6 : index
    %c0_487 = arith.constant 0 : index
    %370 = vector.load %arg11[%c0_484, %c6_485, %c6_486, %c0_487] : memref<2x8x8x128xf32, #tpu.memory_space<vmem>>, vector<2x1x1x128xf32>
    %371 = vector.shape_cast %370 : vector<2x1x1x128xf32> to vector<2x128xf32>
    %c0_488 = arith.constant 0 : index
    %c6_489 = arith.constant 6 : index
    %c7_490 = arith.constant 7 : index
    %c0_491 = arith.constant 0 : index
    %372 = vector.load %arg11[%c0_488, %c6_489, %c7_490, %c0_491] : memref<2x8x8x128xf32, #tpu.memory_space<vmem>>, vector<2x1x1x128xf32>
    %373 = vector.shape_cast %372 : vector<2x1x1x128xf32> to vector<2x128xf32>
    %374 = arith.maximumf %371, %373 : vector<2x128xf32>
    %c0_492 = arith.constant 0 : index
    %c7_493 = arith.constant 7 : index
    %c6_494 = arith.constant 6 : index
    %c0_495 = arith.constant 0 : index
    %375 = vector.load %arg11[%c0_492, %c7_493, %c6_494, %c0_495] : memref<2x8x8x128xf32, #tpu.memory_space<vmem>>, vector<2x1x1x128xf32>
    %376 = vector.shape_cast %375 : vector<2x1x1x128xf32> to vector<2x128xf32>
    %c0_496 = arith.constant 0 : index
    %c7_497 = arith.constant 7 : index
    %c7_498 = arith.constant 7 : index
    %c0_499 = arith.constant 0 : index
    %377 = vector.load %arg11[%c0_496, %c7_497, %c7_498, %c0_499] : memref<2x8x8x128xf32, #tpu.memory_space<vmem>>, vector<2x1x1x128xf32>
    %378 = vector.shape_cast %377 : vector<2x1x1x128xf32> to vector<2x128xf32>
    %379 = arith.maximumf %376, %378 : vector<2x128xf32>
    %380 = arith.maximumf %374, %379 : vector<2x128xf32>
    %381 = vector.broadcast %144 : vector<1x128xf32> to vector<2x128xf32>
    %382 = arith.addf %380, %381 : vector<2x128xf32>
    %cst_500 = arith.constant 0.000000e+00 : f32
    %383 = vector.broadcast %cst_500 : f32 to vector<2x128xf32>
    %384 = arith.maximumf %382, %383 : vector<2x128xf32>
    %385 = tpu.concatenate %159, %174, %189, %204, %219, %234, %249, %264, %279, %294, %309, %324, %339, %354, %369, %384 in 1 : vector<2x128xf32>, vector<2x128xf32>, vector<2x128xf32>, vector<2x128xf32>, vector<2x128xf32>, vector<2x128xf32>, vector<2x128xf32>, vector<2x128xf32>, vector<2x128xf32>, vector<2x128xf32>, vector<2x128xf32>, vector<2x128xf32>, vector<2x128xf32>, vector<2x128xf32>, vector<2x128xf32>, vector<2x128xf32> -> vector<2x2048xf32>
    %386 = arith.truncf %385 : vector<2x2048xf32> to vector<2x2048xbf16>
    %c0_501 = arith.constant 0 : index
    %c0_502 = arith.constant 0 : index
    %387 = vector.load %arg4[%c0_501, %c0_502] : memref<2048x128xbf16, #tpu.memory_space<vmem>>, vector<2048x128xbf16>
    %cst_503 = arith.constant dense<0.000000e+00> : vector<2x128xf32>
    %388 = tpu.matmul %386, %387, %cst_503 {dimension_numbers = #tpu.dot_dimension_numbers<[1], [0], [0], [1], [0, 0, 1, 1], [], []>} : vector<2x2048xbf16>, vector<2048x128xbf16>, vector<2x128xf32> -> vector<2x128xf32>
    %c0_504 = arith.constant 0 : index
    %c0_505 = arith.constant 0 : index
    %389 = vector.load %arg5[%c0_504, %c0_505] : memref<1x128xf32, #tpu.memory_space<vmem>>, vector<1x128xf32>
    %390 = vector.broadcast %389 : vector<1x128xf32> to vector<2x128xf32>
    %391 = arith.addf %388, %390 : vector<2x128xf32>
    %cst_506 = arith.constant 0.000000e+00 : f32
    %392 = vector.broadcast %cst_506 : f32 to vector<2x128xf32>
    %393 = arith.maximumf %391, %392 : vector<2x128xf32>
    %394 = arith.truncf %393 : vector<2x128xf32> to vector<2x128xbf16>
    %c0_507 = arith.constant 0 : index
    %c0_508 = arith.constant 0 : index
    %395 = vector.load %arg6[%c0_507, %c0_508] : memref<128x128xbf16, #tpu.memory_space<vmem>>, vector<128x128xbf16>
    %cst_509 = arith.constant dense<0.000000e+00> : vector<2x128xf32>
    %396 = tpu.matmul %394, %395, %cst_509 {dimension_numbers = #tpu.dot_dimension_numbers<[1], [0], [0], [1], [0, 0, 1, 1], [], []>} : vector<2x128xbf16>, vector<128x128xbf16>, vector<2x128xf32> -> vector<2x128xf32>
    %c0_510 = arith.constant 0 : index
    %c0_511 = arith.constant 0 : index
    %397 = vector.load %arg7[%c0_510, %c0_511] : memref<1x128xf32, #tpu.memory_space<vmem>>, vector<1x128xf32>
    %398 = vector.broadcast %397 : vector<1x128xf32> to vector<2x128xf32>
    %399 = arith.addf %396, %398 : vector<2x128xf32>
    %cst_512 = arith.constant 0.000000e+00 : f32
    %400 = vector.broadcast %cst_512 : f32 to vector<2x128xf32>
    %401 = arith.maximumf %399, %400 : vector<2x128xf32>
    %402 = arith.truncf %401 : vector<2x128xf32> to vector<2x128xbf16>
    %c0_513 = arith.constant 0 : index
    %c0_514 = arith.constant 0 : index
    %403 = vector.load %arg8[%c0_513, %c0_514] : memref<128x128xbf16, #tpu.memory_space<vmem>>, vector<128x128xbf16>
    %cst_515 = arith.constant dense<0.000000e+00> : vector<2x128xf32>
    %404 = tpu.matmul %402, %403, %cst_515 {dimension_numbers = #tpu.dot_dimension_numbers<[1], [0], [0], [1], [0, 0, 1, 1], [], []>} : vector<2x128xbf16>, vector<128x128xbf16>, vector<2x128xf32> -> vector<2x128xf32>
    %c0_516 = arith.constant 0 : index
    %c0_517 = arith.constant 0 : index
    %405 = vector.load %arg9[%c0_516, %c0_517] : memref<1x128xf32, #tpu.memory_space<vmem>>, vector<1x128xf32>
    %406 = vector.broadcast %405 : vector<1x128xf32> to vector<2x128xf32>
    %407 = arith.addf %404, %406 : vector<2x128xf32>
    %c0_518 = arith.constant 0 : index
    %c0_519 = arith.constant 0 : index
    %408 = vector.load %arg10[%c0_518, %c0_519] : memref<2x128xf32, #tpu.memory_space<vmem>>, vector<2x128xf32>
    tpu.vector_store %arg10[%c0_518, %c0_519], %407 {strides = array<i32>} : memref<2x128xf32, #tpu.memory_space<vmem>>, vector<2x128xf32>,
    return
  }
  func.func @transform_0(%arg0: i32) -> (i32, i32, i32, i32) {
    %c0_i32 = arith.constant 0 : i32
    %c0_i32_0 = arith.constant 0 : i32
    %c0_i32_1 = arith.constant 0 : i32
    %c0_i32_2 = arith.constant 0 : i32
    return %arg0, %c0_i32, %c0_i32_0, %c0_i32_1 : i32, i32, i32, i32
  }
  func.func @transform_1(%arg0: i32) -> (i32, i32) {
    %c0_i32 = arith.constant 0 : i32
    %c0_i32_0 = arith.constant 0 : i32
    %c0_i32_1 = arith.constant 0 : i32
    return %c0_i32, %c0_i32_0 : i32, i32
  }
  func.func @transform_2(%arg0: i32) -> (i32, i32) {
    %c0_i32 = arith.constant 0 : i32
    %c0_i32_0 = arith.constant 0 : i32
    %c0_i32_1 = arith.constant 0 : i32
    return %c0_i32, %c0_i32_0 : i32, i32
  }
  func.func @transform_3(%arg0: i32) -> (i32, i32) {
    %c0_i32 = arith.constant 0 : i32
    %c0_i32_0 = arith.constant 0 : i32
    %c0_i32_1 = arith.constant 0 : i32
    return %c0_i32, %c0_i32_0 : i32, i32
  }
  func.func @transform_4(%arg0: i32) -> (i32, i32) {
    %c0_i32 = arith.constant 0 : i32
    %c0_i32_0 = arith.constant 0 : i32
    %c0_i32_1 = arith.constant 0 : i32
    return %c0_i32, %c0_i32_0 : i32, i32
  }
  func.func @transform_5(%arg0: i32) -> (i32, i32) {
    %c0_i32 = arith.constant 0 : i32
    %c0_i32_0 = arith.constant 0 : i32
    %c0_i32_1 = arith.constant 0 : i32
    return %c0_i32, %c0_i32_0 : i32, i32
  }
  func.func @transform_6(%arg0: i32) -> (i32, i32) {
    %c0_i32 = arith.constant 0 : i32
    %c0_i32_0 = arith.constant 0 : i32
    %c0_i32_1 = arith.constant 0 : i32
    return %c0_i32, %c0_i32_0 : i32, i32
  }
  func.func @transform_7(%arg0: i32) -> (i32, i32) {
    %c0_i32 = arith.constant 0 : i32
    %c0_i32_0 = arith.constant 0 : i32
    %c0_i32_1 = arith.constant 0 : i32
    return %c0_i32, %c0_i32_0 : i32, i32
  }
  func.func @transform_8(%arg0: i32) -> (i32, i32) {
    %c0_i32 = arith.constant 0 : i32
    %c0_i32_0 = arith.constant 0 : i32
    %c0_i32_1 = arith.constant 0 : i32
    return %c0_i32, %c0_i32_0 : i32, i32
  }
  func.func @transform_9(%arg0: i32) -> (i32, i32) {
    %c0_i32 = arith.constant 0 : i32
    %c0_i32_0 = arith.constant 0 : i32
    return %arg0, %c0_i32 : i32, i32
  }
}

</mosaic_0001>

<llo_original>
// kernel: forward.2
$region0: #{forward.2}
  #allocation0 [shape = 'u32[]', space=smem, size = 0x4, offset = 0x4, fixed_abs, tag = 'smem constant byte address 0x4 - core index']
  #allocation1 [shape = 'u32[144,128]{1,0:T(1,128)}', space=vmem, size = 0x12000, scoped, tag = 'internal scratch']
  %s0 = inlined_call_operand.vmem [shape: bf16[4,288,128], index: 0, kind: input, shape index: {}]
  %s1 = inlined_call_operand.vmem [shape: bf16[128,128], index: 1, kind: input, shape index: {}]
  %s2 = inlined_call_operand.vmem [shape: f32[1,128], index: 2, kind: input, shape index: {}]
  %s3 = inlined_call_operand.vmem [shape: f32[288,128], index: 3, kind: output, shape index: {}]
  %s4 = sld [smem:[#allocation0]]
  $region22: #{forward.2} parent=0
    _
  %s6 = ssub.s32 1, %s4
  %s7 = scalar_select 0, %s6, %s4
  // Predicated region
  $region2: #{forward.2} parent=0 // pred_check
    _
  $region3: #{forward.2} parent=0 // pred_check_branch
    %9 = sbr.rel (0) target = $region5
  $region4: #{forward.2} parent=0 // pred_region
    _
  $region5: #{forward.2} parent=0 // pred_fallthru
    _
  // Predicated region
  $region6: #{forward.2} parent=0 // pred_check
    _
  $region7: #{forward.2} parent=0 // pred_check_branch
    %11 = sbr.rel (0) target = $region9
  $region8: #{forward.2} parent=0 // pred_region
    _
  $region9: #{forward.2} parent=0 // pred_fallthru
    _
  // Predicated region
  $region10: #{forward.2} parent=0 // pred_check
    _
  $region11: #{forward.2} parent=0 // pred_check_branch
    %13 = sbr.rel (0) target = $region13
  $region12: #{forward.2} parent=0 // pred_region
    _
  $region13: #{forward.2} parent=0 // pred_fallthru
    _
  %v15 = vld [vmem:[%s0] sm:$0xf]
  %v16 = vld [vmem:[%s0 + $0x4] sm:$0xf]
  %v17 = vld [vmem:[%s0 + $0x8] sm:$0xf]
  %v18 = vld [vmem:[%s0 + $0xc] sm:$0xf]
  %v19 = vld [vmem:[%s0 + $0x10] sm:$0xf]
  %v20 = vld [vmem:[%s0 + $0x14] sm:$0xf]
  %v21 = vld [vmem:[%s0 + $0x18] sm:$0xf]
  %v22 = vld [vmem:[%s0 + $0x1c] sm:$0xf]
  %v23 = vld [vmem:[%s0 + $0x20] sm:$0xf]
  %v24 = vld [vmem:[%s0 + $0x24] sm:$0xf]
  %v25 = vld [vmem:[%s0 + $0x28] sm:$0xf]
  %v26 = vld [vmem:[%s0 + $0x2c] sm:$0xf]
  %v27 = vld [vmem:[%s0 + $0x30] sm:$0xf]
  %v28 = vld [vmem:[%s0 + $0x34] sm:$0xf]
  %v29 = vld [vmem:[%s0 + $0x38] sm:$0xf]
  %v30 = vld [vmem:[%s0 + $0x3c] sm:$0xf]
  %v31 = vld [vmem:[%s0 + $0x40] sm:$0xf]
  %v32 = vld [vmem:[%s0 + $0x44] sm:$0xf]
  %v33 = vld [vmem:[%s0 + $0x48] sm:$0xf]
  %v34 = vld [vmem:[%s0 + $0x4c] sm:$0xf]
  %v35 = vld [vmem:[%s0 + $0x50] sm:$0xf]
  %v36 = vld [vmem:[%s0 + $0x54] sm:$0xf]
  %v37 = vld [vmem:[%s0 + $0x58] sm:$0xf]
  %v38 = vld [vmem:[%s0 + $0x5c] sm:$0xf]
  %v39 = vld [vmem:[%s0 + $0x60] sm:$0xf]
  %v40 = vld [vmem:[%s0 + $0x64] sm:$0xf]
  %v41 = vld [vmem:[%s0 + $0x68] sm:$0xf]
  %v42 = vld [vmem:[%s0 + $0x6c] sm:$0xf]
  %v43 = vld [vmem:[%s0 + $0x70] sm:$0xf]
  %v44 = vld [vmem:[%s0 + $0x74] sm:$0xf]
  %v45 = vld [vmem:[%s0 + $0x78] sm:$0xf]
  %v46 = vld [vmem:[%s0 + $0x7c] sm:$0xf]
  %v47 = vld [vmem:[%s0 + $0x80] sm:$0xf]
  %v48 = vld [vmem:[%s0 + $0x84] sm:$0xf]
  %v49 = vld [vmem:[%s0 + $0x88] sm:$0xf]
  %v50 = vld [vmem:[%s0 + $0x8c] sm:$0xf]
  %v51 = vld [vmem:[%s0 + $0x90] sm:$0xf]
  %v52 = vld [vmem:[%s0 + $0x94] sm:$0xf]
  %v53 = vld [vmem:[%s0 + $0x98] sm:$0xf]
  %v54 = vld [vmem:[%s0 + $0x9c] sm:$0xf]
  %v55 = vld [vmem:[%s0 + $0xa0] sm:$0xf]
  %v56 = vld [vmem:[%s0 + $0xa4] sm:$0xf]
  %v57 = vld [vmem:[%s0 + $0xa8] sm:$0xf]
  %v58 = vld [vmem:[%s0 + $0xac] sm:$0xf]
  %v59 = vld [vmem:[%s0 + $0xb0] sm:$0xf]
  %v60 = vld [vmem:[%s0 + $0xb4] sm:$0xf]
  %v61 = vld [vmem:[%s0 + $0xb8] sm:$0xf]
  %v62 = vld [vmem:[%s0 + $0xbc] sm:$0xf]
  %v63 = vld [vmem:[%s0 + $0xc0] sm:$0xf]
  %v64 = vld [vmem:[%s0 + $0xc4] sm:$0xf]
  %v65 = vld [vmem:[%s0 + $0xc8] sm:$0xf]
  %v66 = vld [vmem:[%s0 + $0xcc] sm:$0xf]
  %v67 = vld [vmem:[%s0 + $0xd0] sm:$0xf]
  %v68 = vld [vmem:[%s0 + $0xd4] sm:$0xf]
  %v69 = vld [vmem:[%s0 + $0xd8] sm:$0xf]
  %v70 = vld [vmem:[%s0 + $0xdc] sm:$0xf]
  %v71 = vld [vmem:[%s0 + $0xe0] sm:$0xf]
  %v72 = vld [vmem:[%s0 + $0xe4] sm:$0xf]
  %v73 = vld [vmem:[%s0 + $0xe8] sm:$0xf]
  %v74 = vld [vmem:[%s0 + $0xec] sm:$0xf]
  %v75 = vld [vmem:[%s0 + $0xf0] sm:$0xf]
  %v76 = vld [vmem:[%s0 + $0xf4] sm:$0xf]
  %v77 = vld [vmem:[%s0 + $0xf8] sm:$0xf]
  %v78 = vld [vmem:[%s0 + $0xfc] sm:$0xf]
  %v79 = vld [vmem:[%s0 + $0x100] sm:$0xf]
  %v80 = vld [vmem:[%s0 + $0x104] sm:$0xf]
  %v81 = vld [vmem:[%s0 + $0x108] sm:$0xf]
  %v82 = vld [vmem:[%s0 + $0x10c] sm:$0xf]
  %v83 = vld [vmem:[%s0 + $0x110] sm:$0xf]
  %v84 = vld [vmem:[%s0 + $0x114] sm:$0xf]
  %v85 = vld [vmem:[%s0 + $0x118] sm:$0xf]
  %v86 = vld [vmem:[%s0 + $0x11c] sm:$0xf]
  %v87 = vld [vmem:[%s0 + $0x120] sm:$0xf]
  %v88 = vld [vmem:[%s0 + $0x124] sm:$0xf]
  %v89 = vld [vmem:[%s0 + $0x128] sm:$0xf]
  %v90 = vld [vmem:[%s0 + $0x12c] sm:$0xf]
  %v91 = vld [vmem:[%s0 + $0x130] sm:$0xf]
  %v92 = vld [vmem:[%s0 + $0x134] sm:$0xf]
  %v93 = vld [vmem:[%s0 + $0x138] sm:$0xf]
  %v94 = vld [vmem:[%s0 + $0x13c] sm:$0xf]
  %v95 = vld [vmem:[%s0 + $0x140] sm:$0xf]
  %v96 = vld [vmem:[%s0 + $0x144] sm:$0xf]
  %v97 = vld [vmem:[%s0 + $0x148] sm:$0xf]
  %v98 = vld [vmem:[%s0 + $0x14c] sm:$0xf]
  %v99 = vld [vmem:[%s0 + $0x150] sm:$0xf]
  %v100 = vld [vmem:[%s0 + $0x154] sm:$0xf]
  %v101 = vld [vmem:[%s0 + $0x158] sm:$0xf]
  %v102 = vld [vmem:[%s0 + $0x15c] sm:$0xf]
  %v103 = vld [vmem:[%s0 + $0x160] sm:$0xf]
  %v104 = vld [vmem:[%s0 + $0x164] sm:$0xf]
  %v105 = vld [vmem:[%s0 + $0x168] sm:$0xf]
  %v106 = vld [vmem:[%s0 + $0x16c] sm:$0xf]
  %v107 = vld [vmem:[%s0 + $0x170] sm:$0xf]
  %v108 = vld [vmem:[%s0 + $0x174] sm:$0xf]
  %v109 = vld [vmem:[%s0 + $0x178] sm:$0xf]
  %v110 = vld [vmem:[%s0 + $0x17c] sm:$0xf]
  %v111 = vld [vmem:[%s0 + $0x180] sm:$0xf]
  %v112 = vld [vmem:[%s0 + $0x184] sm:$0xf]
  %v113 = vld [vmem:[%s0 + $0x188] sm:$0xf]
  %v114 = vld [vmem:[%s0 + $0x18c] sm:$0xf]
  %v115 = vld [vmem:[%s0 + $0x190] sm:$0xf]
  %v116 = vld [vmem:[%s0 + $0x194] sm:$0xf]
  %v117 = vld [vmem:[%s0 + $0x198] sm:$0xf]
  %v118 = vld [vmem:[%s0 + $0x19c] sm:$0xf]
  %v119 = vld [vmem:[%s0 + $0x1a0] sm:$0xf]
  %v120 = vld [vmem:[%s0 + $0x1a4] sm:$0xf]
  %v121 = vld [vmem:[%s0 + $0x1a8] sm:$0xf]
  %v122 = vld [vmem:[%s0 + $0x1ac] sm:$0xf]
  %v123 = vld [vmem:[%s0 + $0x1b0] sm:$0xf]
  %v124 = vld [vmem:[%s0 + $0x1b4] sm:$0xf]
  %v125 = vld [vmem:[%s0 + $0x1b8] sm:$0xf]
  %v126 = vld [vmem:[%s0 + $0x1bc] sm:$0xf]
  %v127 = vld [vmem:[%s0 + $0x1c0] sm:$0xf]
  %v128 = vld [vmem:[%s0 + $0x1c4] sm:$0xf]
  %v129 = vld [vmem:[%s0 + $0x1c8] sm:$0xf]
  %v130 = vld [vmem:[%s0 + $0x1cc] sm:$0xf]
  %v131 = vld [vmem:[%s0 + $0x1d0] sm:$0xf]
  %v132 = vld [vmem:[%s0 + $0x1d4] sm:$0xf]
  %v133 = vld [vmem:[%s0 + $0x1d8] sm:$0xf]
  %v134 = vld [vmem:[%s0 + $0x1dc] sm:$0xf]
  %v135 = vld [vmem:[%s0 + $0x1e0] sm:$0xf]
  %v136 = vld [vmem:[%s0 + $0x1e4] sm:$0xf]
  %v137 = vld [vmem:[%s0 + $0x1e8] sm:$0xf]
  %v138 = vld [vmem:[%s0 + $0x1ec] sm:$0xf]
  %v139 = vld [vmem:[%s0 + $0x1f0] sm:$0xf]
  %v140 = vld [vmem:[%s0 + $0x1f4] sm:$0xf]
  %v141 = vld [vmem:[%s0 + $0x1f8] sm:$0xf]
  %v142 = vld [vmem:[%s0 + $0x1fc] sm:$0xf]
  %v143 = vld [vmem:[%s0 + $0x200] sm:$0xf]
  %v144 = vld [vmem:[%s0 + $0x204] sm:$0xf]
  %v145 = vld [vmem:[%s0 + $0x208] sm:$0xf]
  %v146 = vld [vmem:[%s0 + $0x20c] sm:$0xf]
  %v147 = vld [vmem:[%s0 + $0x210] sm:$0xf]
  %v148 = vld [vmem:[%s0 + $0x214] sm:$0xf]
  %v149 = vld [vmem:[%s0 + $0x218] sm:$0xf]
  %v150 = vld [vmem:[%s0 + $0x21c] sm:$0xf]
  %v151 = vld [vmem:[%s0 + $0x220] sm:$0xf]
  %v152 = vld [vmem:[%s0 + $0x224] sm:$0xf]
  %v153 = vld [vmem:[%s0 + $0x228] sm:$0xf]
  %v154 = vld [vmem:[%s0 + $0x22c] sm:$0xf]
  %v155 = vld [vmem:[%s0 + $0x230] sm:$0xf]
  %v156 = vld [vmem:[%s0 + $0x234] sm:$0xf]
  %v157 = vld [vmem:[%s0 + $0x238] sm:$0xf]
  %v158 = vld [vmem:[%s0 + $0x23c] sm:$0xf]
  %v159 = vld [vmem:[%s1] sm:$0xf]
  %v160 = vld [vmem:[%s1 + $0x4] sm:$0xf]
  %v161 = vld [vmem:[%s1 + $0x8] sm:$0xf]
  %v162 = vld [vmem:[%s1 + $0xc] sm:$0xf]
  %v163 = vld [vmem:[%s1 + $0x10] sm:$0xf]
  %v164 = vld [vmem:[%s1 + $0x14] sm:$0xf]
  %v165 = vld [vmem:[%s1 + $0x18] sm:$0xf]
  %v166 = vld [vmem:[%s1 + $0x1c] sm:$0xf]
  %v167 = vld [vmem:[%s1 + $0x20] sm:$0xf]
  %v168 = vld [vmem:[%s1 + $0x24] sm:$0xf]
  %v169 = vld [vmem:[%s1 + $0x28] sm:$0xf]
  %v170 = vld [vmem:[%s1 + $0x2c] sm:$0xf]
  %v171 = vld [vmem:[%s1 + $0x30] sm:$0xf]
  %v172 = vld [vmem:[%s1 + $0x34] sm:$0xf]
  %v173 = vld [vmem:[%s1 + $0x38] sm:$0xf]
  %v174 = vld [vmem:[%s1 + $0x3c] sm:$0xf]
  %v319 = vunpack.c.l.b16 %v15
  %v320 = vunpack.c.l.b16 %v16
  %v321 = vunpack.c.l.b16 %v17
  %v322 = vunpack.c.l.b16 %v18
  %v323 = vunpack.c.l.b16 %v19
  %v324 = vunpack.c.l.b16 %v20
  %v325 = vunpack.c.l.b16 %v21
  %v326 = vunpack.c.l.b16 %v22
  %v327 = vunpack.c.l.b16 %v23
  %v328 = vunpack.c.l.b16 %v24
  %v329 = vunpack.c.l.b16 %v25
  %v330 = vunpack.c.l.b16 %v26
  %v331 = vunpack.c.l.b16 %v27
  %v332 = vunpack.c.l.b16 %v28
  %v333 = vunpack.c.l.b16 %v29
  %v334 = vunpack.c.l.b16 %v30
  %v335 = vunpack.c.l.b16 %v31
  %v336 = vunpack.c.l.b16 %v32
  %v337 = vunpack.c.l.b16 %v33
  %v338 = vunpack.c.l.b16 %v34
  %v339 = vunpack.c.l.b16 %v35
  %v340 = vunpack.c.l.b16 %v36
  %v341 = vunpack.c.l.b16 %v37
  %v342 = vunpack.c.l.b16 %v38
  %v343 = vunpack.c.l.b16 %v39
  %v344 = vunpack.c.l.b16 %v40
  %v345 = vunpack.c.l.b16 %v41
  %v346 = vunpack.c.l.b16 %v42
  %v347 = vunpack.c.l.b16 %v43
  %v348 = vunpack.c.l.b16 %v44
  %v349 = vunpack.c.l.b16 %v45
  %v350 = vunpack.c.l.b16 %v46
  %v351 = vunpack.c.l.b16 %v47
  %v352 = vunpack.c.l.b16 %v48
  %v353 = vunpack.c.l.b16 %v49
  %v354 = vunpack.c.l.b16 %v50
  %v355 = vunpack.c.l.b16 %v51
  %v356 = vunpack.c.l.b16 %v52
  %v357 = vunpack.c.l.b16 %v53
  %v358 = vunpack.c.l.b16 %v54
  %v359 = vunpack.c.l.b16 %v55
  %v360 = vunpack.c.l.b16 %v56
  %v361 = vunpack.c.l.b16 %v57
  %v362 = vunpack.c.l.b16 %v58
  %v363 = vunpack.c.l.b16 %v59
  %v364 = vunpack.c.l.b16 %v60
  %v365 = vunpack.c.l.b16 %v61
  %v366 = vunpack.c.l.b16 %v62
  %v367 = vunpack.c.l.b16 %v63
  %v368 = vunpack.c.l.b16 %v64
  %v369 = vunpack.c.l.b16 %v65
  %v370 = vunpack.c.l.b16 %v66
  %v371 = vunpack.c.l.b16 %v67
  %v372 = vunpack.c.l.b16 %v68
  %v373 = vunpack.c.l.b16 %v69
  %v374 = vunpack.c.l.b16 %v70
  %v375 = vunpack.c.l.b16 %v71
  %v376 = vunpack.c.l.b16 %v72
  %v377 = vunpack.c.l.b16 %v73
  %v378 = vunpack.c.l.b16 %v74
  %v379 = vunpack.c.l.b16 %v75
  %v380 = vunpack.c.l.b16 %v76
  %v381 = vunpack.c.l.b16 %v77
  %v382 = vunpack.c.l.b16 %v78
  %v383 = vunpack.c.l.b16 %v79
  %v384 = vunpack.c.l.b16 %v80
  %v385 = vunpack.c.l.b16 %v81
  %v386 = vunpack.c.l.b16 %v82
  %v387 = vunpack.c.l.b16 %v83
  %v388 = vunpack.c.l.b16 %v84
  %v389 = vunpack.c.l.b16 %v85
  %v390 = vunpack.c.l.b16 %v86
  %v391 = vunpack.c.l.b16 %v87
  %v392 = vunpack.c.l.b16 %v88
  %v393 = vunpack.c.l.b16 %v89
  %v394 = vunpack.c.l.b16 %v90
  %v395 = vunpack.c.l.b16 %v91
  %v396 = vunpack.c.l.b16 %v92
  %v397 = vunpack.c.l.b16 %v93
  %v398 = vunpack.c.l.b16 %v94
  %v399 = vunpack.c.l.b16 %v95
  %v400 = vunpack.c.l.b16 %v96
  %v401 = vunpack.c.l.b16 %v97
  %v402 = vunpack.c.l.b16 %v98
  %v403 = vunpack.c.l.b16 %v99
  %v404 = vunpack.c.l.b16 %v100
  %v405 = vunpack.c.l.b16 %v101
  %v406 = vunpack.c.l.b16 %v102
  %v407 = vunpack.c.l.b16 %v103
  %v408 = vunpack.c.l.b16 %v104
  %v409 = vunpack.c.l.b16 %v105
  %v410 = vunpack.c.l.b16 %v106
  %v411 = vunpack.c.l.b16 %v107
  %v412 = vunpack.c.l.b16 %v108
  %v413 = vunpack.c.l.b16 %v109
  %v414 = vunpack.c.l.b16 %v110
  %v415 = vunpack.c.l.b16 %v111
  %v416 = vunpack.c.l.b16 %v112
  %v417 = vunpack.c.l.b16 %v113
  %v418 = vunpack.c.l.b16 %v114
  %v419 = vunpack.c.l.b16 %v115
  %v420 = vunpack.c.l.b16 %v116
  %v421 = vunpack.c.l.b16 %v117
  %v422 = vunpack.c.l.b16 %v118
  %v423 = vunpack.c.l.b16 %v119
  %v424 = vunpack.c.l.b16 %v120
  %v425 = vunpack.c.l.b16 %v121
  %v426 = vunpack.c.l.b16 %v122
  %v427 = vunpack.c.l.b16 %v123
  %v428 = vunpack.c.l.b16 %v124
  %v429 = vunpack.c.l.b16 %v125
  %v430 = vunpack.c.l.b16 %v126
  %v431 = vunpack.c.l.b16 %v127
  %v432 = vunpack.c.l.b16 %v128
  %v433 = vunpack.c.l.b16 %v129
  %v434 = vunpack.c.l.b16 %v130
  %v435 = vunpack.c.l.b16 %v131
  %v436 = vunpack.c.l.b16 %v132
  %v437 = vunpack.c.l.b16 %v133
  %v438 = vunpack.c.l.b16 %v134
  %v439 = vunpack.c.l.b16 %v135
  %v440 = vunpack.c.l.b16 %v136
  %v441 = vunpack.c.l.b16 %v137
  %v442 = vunpack.c.l.b16 %v138
  %v443 = vunpack.c.l.b16 %v139
  %v444 = vunpack.c.l.b16 %v140
  %v445 = vunpack.c.l.b16 %v141
  %v446 = vunpack.c.l.b16 %v142
  %v447 = vunpack.c.l.b16 %v143
  %v448 = vunpack.c.l.b16 %v144
  %v449 = vunpack.c.l.b16 %v145
  %v450 = vunpack.c.l.b16 %v146
  %v451 = vunpack.c.l.b16 %v147
  %v452 = vunpack.c.l.b16 %v148
  %v453 = vunpack.c.l.b16 %v149
  %v454 = vunpack.c.l.b16 %v150
  %v455 = vunpack.c.l.b16 %v151
  %v456 = vunpack.c.l.b16 %v152
  %v457 = vunpack.c.l.b16 %v153
  %v458 = vunpack.c.l.b16 %v154
  %v459 = vunpack.c.l.b16 %v155
  %v460 = vunpack.c.l.b16 %v156
  %v461 = vunpack.c.l.b16 %v157
  %v462 = vunpack.c.l.b16 %v158
  %v463 = vpack.c.b16 %v320, %v319
  %v464 = vpack.c.b16 %v322, %v321
  %v465 = vpack.c.b16 %v324, %v323
  %v466 = vpack.c.b16 %v326, %v325
  %v467 = vpack.c.b16 %v328, %v327
  %v468 = vpack.c.b16 %v330, %v329
  %v469 = vpack.c.b16 %v332, %v331
  %v470 = vpack.c.b16 %v334, %v333
  %v471 = vpack.c.b16 %v336, %v335
  %v472 = vpack.c.b16 %v338, %v337
  %v473 = vpack.c.b16 %v340, %v339
  %v474 = vpack.c.b16 %v342, %v341
  %v475 = vpack.c.b16 %v344, %v343
  %v476 = vpack.c.b16 %v346, %v345
  %v477 = vpack.c.b16 %v348, %v347
  %v478 = vpack.c.b16 %v350, %v349
  %v479 = vpack.c.b16 %v352, %v351
  %v480 = vpack.c.b16 %v354, %v353
  %v481 = vpack.c.b16 %v356, %v355
  %v482 = vpack.c.b16 %v358, %v357
  %v483 = vpack.c.b16 %v360, %v359
  %v484 = vpack.c.b16 %v362, %v361
  %v485 = vpack.c.b16 %v364, %v363
  %v486 = vpack.c.b16 %v366, %v365
  %v487 = vpack.c.b16 %v368, %v367
  %v488 = vpack.c.b16 %v370, %v369
  %v489 = vpack.c.b16 %v372, %v371
  %v490 = vpack.c.b16 %v374, %v373
  %v491 = vpack.c.b16 %v376, %v375
  %v492 = vpack.c.b16 %v378, %v377
  %v493 = vpack.c.b16 %v380, %v379
  %v494 = vpack.c.b16 %v382, %v381
  %v495 = vpack.c.b16 %v384, %v383
  %v496 = vpack.c.b16 %v386, %v385
  %v497 = vpack.c.b16 %v388, %v387
  %v498 = vpack.c.b16 %v390, %v389
  %v499 = vpack.c.b16 %v392, %v391
  %v500 = vpack.c.b16 %v394, %v393
  %v501 = vpack.c.b16 %v396, %v395
  %v502 = vpack.c.b16 %v398, %v397
  %v503 = vpack.c.b16 %v400, %v399
  %v504 = vpack.c.b16 %v402, %v401
  %v505 = vpack.c.b16 %v404, %v403
  %v506 = vpack.c.b16 %v406, %v405
  %v507 = vpack.c.b16 %v408, %v407
  %v508 = vpack.c.b16 %v410, %v409
  %v509 = vpack.c.b16 %v412, %v411
  %v510 = vpack.c.b16 %v414, %v413
  %v511 = vpack.c.b16 %v416, %v415
  %v512 = vpack.c.b16 %v418, %v417
  %v513 = vpack.c.b16 %v420, %v419
  %v514 = vpack.c.b16 %v422, %v421
  %v515 = vpack.c.b16 %v424, %v423
  %v516 = vpack.c.b16 %v426, %v425
  %v517 = vpack.c.b16 %v428, %v427
  %v518 = vpack.c.b16 %v430, %v429
  %v519 = vpack.c.b16 %v432, %v431
  %v520 = vpack.c.b16 %v434, %v433
  %v521 = vpack.c.b16 %v436, %v435
  %v522 = vpack.c.b16 %v438, %v437
  %v523 = vpack.c.b16 %v440, %v439
  %v524 = vpack.c.b16 %v442, %v441
  %v525 = vpack.c.b16 %v444, %v443
  %v526 = vpack.c.b16 %v446, %v445
  %v527 = vpack.c.b16 %v448, %v447
  %v528 = vpack.c.b16 %v450, %v449
  %v529 = vpack.c.b16 %v452, %v451
  %v530 = vpack.c.b16 %v454, %v453
  %v531 = vpack.c.b16 %v456, %v455
  %v532 = vpack.c.b16 %v458, %v457
  %v533 = vpack.c.b16 %v460, %v459
  %v534 = vpack.c.b16 %v462, %v461
  %v623 = vunpack.c.l.b16 %v159
  %v624 = vunpack.c.l.b16 %v160
  %v625 = vunpack.c.l.b16 %v161
  %v626 = vunpack.c.l.b16 %v162
  %v627 = vunpack.c.l.b16 %v163
  %v628 = vunpack.c.l.b16 %v164
  %v629 = vunpack.c.l.b16 %v165
  %v630 = vunpack.c.l.b16 %v166
  %v631 = vunpack.c.l.b16 %v167
  %v632 = vunpack.c.l.b16 %v168
  %v633 = vunpack.c.l.b16 %v169
  %v634 = vunpack.c.l.b16 %v170
  %v635 = vunpack.c.l.b16 %v171
  %v636 = vunpack.c.l.b16 %v172
  %v637 = vunpack.c.l.b16 %v173
  %v638 = vunpack.c.l.b16 %v174
  %v639 = vpack.c.b16 %v624, %v623
  %v640 = vpack.c.b16 %v626, %v625
  %v641 = vpack.c.b16 %v628, %v627
  %v642 = vpack.c.b16 %v630, %v629
  %v643 = vpack.c.b16 %v632, %v631
  %v644 = vpack.c.b16 %v634, %v633
  %v645 = vpack.c.b16 %v636, %v635
  %v646 = vpack.c.b16 %v638, %v637
  %655 = vmatprep.subr.bf16.mxu0 0
  %656 = vmatpush1.bf16.msra.mxu0 %v646
  %657 = vmatprep.subr.bf16.mxu0 0
  %658 = vmatpush1.bf16.msra.mxu0 %v645
  %659 = vmatprep.subr.bf16.mxu0 0
  %660 = vmatpush1.bf16.msra.mxu0 %v644
  %661 = vmatprep.subr.bf16.mxu0 0
  %662 = vmatpush1.bf16.msra.mxu0 %v643
  %663 = vmatprep.subr.bf16.mxu0 0
  %664 = vmatpush1.bf16.msra.mxu0 %v642
  %665 = vmatprep.subr.bf16.mxu0 0
  %666 = vmatpush1.bf16.msra.mxu0 %v641
  %667 = vmatprep.subr.bf16.mxu0 0
  %668 = vmatpush1.bf16.msra.mxu0 %v640
  %669 = vmatprep.subr.bf16.mxu0 0
  %670 = vmatpush1.bf16.msra.mxu0 %v639
  %671 = vmatprep.subr.bf16.mxu0 0
  %672 = vmatpush2.bf16.msra.mxu0 0
  %673 = vmatprep.subr.bf16.mxu0 0
  %674 = vmatpush2.bf16.msra.mxu0 0
  %675 = vmatprep.subr.bf16.mxu0 0
  %676 = vmatpush2.bf16.msra.mxu0 0
  %677 = vmatprep.subr.bf16.mxu0 0
  %678 = vmatpush2.bf16.msra.mxu0 0
  %679 = vmatprep.subr.bf16.mxu0 0
  %680 = vmatpush2.bf16.msra.mxu0 0
  %681 = vmatprep.subr.bf16.mxu0 0
  %682 = vmatpush2.bf16.msra.mxu0 0
  %683 = vmatprep.subr.bf16.mxu0 0
  %684 = vmatpush2.bf16.msra.mxu0 0
  %685 = vmatprep.subr.bf16.mxu0 0
  %686 = vmatpush2.bf16.msra.mxu0 0
  %687 = vmatprep.mubr.bf16.mxu0 0
  %688 = vmatmul.mubr.bf16.gmra.mxu0 %v463
  %v689 = vpop.f32.mrf.mxu0
  %v690 = vadd.f32 0.0, %v689
  %v691 = vpop.f32.mrf.mxu0
  %v692 = vpop.f32.mrf.mxu0
  %v693 = vadd.f32 0.0, %v692
  %v694 = vpop.f32.mrf.mxu0
  %695 = vmatprep.mubr.bf16.mxu0 0
  %696 = vmatmul.mubr.bf16.gmra.mxu0 %v464
  %v697 = vpop.f32.mrf.mxu0
  %v698 = vadd.f32 0.0, %v697
  %v699 = vpop.f32.mrf.mxu0
  %v700 = vpop.f32.mrf.mxu0
  %v701 = vadd.f32 0.0, %v700
  %v702 = vpop.f32.mrf.mxu0
  %703 = vmatprep.mubr.bf16.mxu0 0
  %704 = vmatmul.mubr.bf16.gmra.mxu0 %v465
  %v705 = vpop.f32.mrf.mxu0
  %v706 = vadd.f32 0.0, %v705
  %v707 = vpop.f32.mrf.mxu0
  %v708 = vpop.f32.mrf.mxu0
  %v709 = vadd.f32 0.0, %v708
  %v710 = vpop.f32.mrf.mxu0
  %711 = vmatprep.mubr.bf16.mxu0 0
  %712 = vmatmul.mubr.bf16.gmra.mxu0 %v466
  %v713 = vpop.f32.mrf.mxu0
  %v714 = vadd.f32 0.0, %v713
  %v715 = vpop.f32.mrf.mxu0
  %v716 = vpop.f32.mrf.mxu0
  %v717 = vadd.f32 0.0, %v716
  %v718 = vpop.f32.mrf.mxu0
  %719 = vmatprep.mubr.bf16.mxu0 0
  %720 = vmatmul.mubr.bf16.gmra.mxu0 %v467
  %v721 = vpop.f32.mrf.mxu0
  %v722 = vadd.f32 0.0, %v721
  %v723 = vpop.f32.mrf.mxu0
  %v724 = vpop.f32.mrf.mxu0
  %v725 = vadd.f32 0.0, %v724
  %v726 = vpop.f32.mrf.mxu0
  %727 = vmatprep.mubr.bf16.mxu0 0
  %728 = vmatmul.mubr.bf16.gmra.mxu0 %v468
  %v729 = vpop.f32.mrf.mxu0
  %v730 = vadd.f32 0.0, %v729
  %v731 = vpop.f32.mrf.mxu0
  %v732 = vpop.f32.mrf.mxu0
  %v733 = vadd.f32 0.0, %v732
  %v734 = vpop.f32.mrf.mxu0
  %735 = vmatprep.mubr.bf16.mxu0 0
  %736 = vmatmul.mubr.bf16.gmra.mxu0 %v469
  %v737 = vpop.f32.mrf.mxu0
  %v738 = vadd.f32 0.0, %v737
  %v739 = vpop.f32.mrf.mxu0
  %v740 = vpop.f32.mrf.mxu0
  %v741 = vadd.f32 0.0, %v740
  %v742 = vpop.f32.mrf.mxu0
  %743 = vmatprep.mubr.bf16.mxu0 0
  %744 = vmatmul.mubr.bf16.gmra.mxu0 %v470
  %v745 = vpop.f32.mrf.mxu0
  %v746 = vadd.f32 0.0, %v745
  %v747 = vpop.f32.mrf.mxu0
  %v748 = vpop.f32.mrf.mxu0
  %v749 = vadd.f32 0.0, %v748
  %v750 = vpop.f32.mrf.mxu0
  %751 = vmatprep.mubr.bf16.mxu0 0
  %752 = vmatmul.mubr.bf16.gmra.mxu0 %v471
  %v753 = vpop.f32.mrf.mxu0
  %v754 = vadd.f32 0.0, %v753
  %v755 = vpop.f32.mrf.mxu0
  %v756 = vpop.f32.mrf.mxu0
  %v757 = vadd.f32 0.0, %v756
  %v758 = vpop.f32.mrf.mxu0
  %759 = vmatprep.mubr.bf16.mxu0 0
  %760 = vmatmul.mubr.bf16.gmra.mxu0 %v472
  %v761 = vpop.f32.mrf.mxu0
  %v762 = vadd.f32 0.0, %v761
  %v763 = vpop.f32.mrf.mxu0
  %v764 = vpop.f32.mrf.mxu0
  %v765 = vadd.f32 0.0, %v764
  %v766 = vpop.f32.mrf.mxu0
  %767 = vmatprep.mubr.bf16.mxu0 0
  %768 = vmatmul.mubr.bf16.gmra.mxu0 %v473
  %v769 = vpop.f32.mrf.mxu0
  %v770 = vadd.f32 0.0, %v769
  %v771 = vpop.f32.mrf.mxu0
  %v772 = vpop.f32.mrf.mxu0
  %v773 = vadd.f32 0.0, %v772
  %v774 = vpop.f32.mrf.mxu0
  %775 = vmatprep.mubr.bf16.mxu0 0
  %776 = vmatmul.mubr.bf16.gmra.mxu0 %v474
  %v777 = vpop.f32.mrf.mxu0
  %v778 = vadd.f32 0.0, %v777
  %v779 = vpop.f32.mrf.mxu0
  %v780 = vpop.f32.mrf.mxu0
  %v781 = vadd.f32 0.0, %v780
  %v782 = vpop.f32.mrf.mxu0
  %783 = vmatprep.mubr.bf16.mxu0 0
  %784 = vmatmul.mubr.bf16.gmra.mxu0 %v475
  %v785 = vpop.f32.mrf.mxu0
  %v786 = vadd.f32 0.0, %v785
  %v787 = vpop.f32.mrf.mxu0
  %v788 = vpop.f32.mrf.mxu0
  %v789 = vadd.f32 0.0, %v788
  %v790 = vpop.f32.mrf.mxu0
  %791 = vmatprep.mubr.bf16.mxu0 0
  %792 = vmatmul.mubr.bf16.gmra.mxu0 %v476
  %v793 = vpop.f32.mrf.mxu0
  %v794 = vadd.f32 0.0, %v793
  %v795 = vpop.f32.mrf.mxu0
  %v796 = vpop.f32.mrf.mxu0
  %v797 = vadd.f32 0.0, %v796
  %v798 = vpop.f32.mrf.mxu0
  %799 = vmatprep.mubr.bf16.mxu0 0
  %800 = vmatmul.mubr.bf16.gmra.mxu0 %v477
  %v801 = vpop.f32.mrf.mxu0
  %v802 = vadd.f32 0.0, %v801
  %v803 = vpop.f32.mrf.mxu0
  %v804 = vpop.f32.mrf.mxu0
  %v805 = vadd.f32 0.0, %v804
  %v806 = vpop.f32.mrf.mxu0
  %807 = vmatprep.mubr.bf16.mxu0 0
  %808 = vmatmul.mubr.bf16.gmra.mxu0 %v478
  %v809 = vpop.f32.mrf.mxu0
  %v810 = vadd.f32 0.0, %v809
  %v811 = vpop.f32.mrf.mxu0
  %v812 = vpop.f32.mrf.mxu0
  %v813 = vadd.f32 0.0, %v812
  %v814 = vpop.f32.mrf.mxu0
  %815 = vmatprep.mubr.bf16.mxu0 0
  %816 = vmatmul.mubr.bf16.gmra.mxu0 %v479
  %v817 = vpop.f32.mrf.mxu0
  %v818 = vadd.f32 0.0, %v817
  %v819 = vpop.f32.mrf.mxu0
  %v820 = vpop.f32.mrf.mxu0
  %v821 = vadd.f32 0.0, %v820
  %v822 = vpop.f32.mrf.mxu0
  %823 = vmatprep.mubr.bf16.mxu0 0
  %824 = vmatmul.mubr.bf16.gmra.mxu0 %v480
  %v825 = vpop.f32.mrf.mxu0
  %v826 = vadd.f32 0.0, %v825
  %v827 = vpop.f32.mrf.mxu0
  %v828 = vpop.f32.mrf.mxu0
  %v829 = vadd.f32 0.0, %v828
  %v830 = vpop.f32.mrf.mxu0
  %831 = vmatprep.mubr.bf16.mxu0 0
  %832 = vmatmul.mubr.bf16.gmra.mxu0 %v481
  %v833 = vpop.f32.mrf.mxu0
  %v834 = vadd.f32 0.0, %v833
  %v835 = vpop.f32.mrf.mxu0
  %v836 = vpop.f32.mrf.mxu0
  %v837 = vadd.f32 0.0, %v836
  %v838 = vpop.f32.mrf.mxu0
  %839 = vmatprep.mubr.bf16.mxu0 0
  %840 = vmatmul.mubr.bf16.gmra.mxu0 %v482
  %v841 = vpop.f32.mrf.mxu0
  %v842 = vadd.f32 0.0, %v841
  %v843 = vpop.f32.mrf.mxu0
  %v844 = vpop.f32.mrf.mxu0
  %v845 = vadd.f32 0.0, %v844
  %v846 = vpop.f32.mrf.mxu0
  %847 = vmatprep.mubr.bf16.mxu0 0
  %848 = vmatmul.mubr.bf16.gmra.mxu0 %v483
  %v849 = vpop.f32.mrf.mxu0
  %v850 = vadd.f32 0.0, %v849
  %v851 = vpop.f32.mrf.mxu0
  %v852 = vpop.f32.mrf.mxu0
  %v853 = vadd.f32 0.0, %v852
  %v854 = vpop.f32.mrf.mxu0
  %855 = vmatprep.mubr.bf16.mxu0 0
  %856 = vmatmul.mubr.bf16.gmra.mxu0 %v484
  %v857 = vpop.f32.mrf.mxu0
  %v858 = vadd.f32 0.0, %v857
  %v859 = vpop.f32.mrf.mxu0
  %v860 = vpop.f32.mrf.mxu0
  %v861 = vadd.f32 0.0, %v860
  %v862 = vpop.f32.mrf.mxu0
  %863 = vmatprep.mubr.bf16.mxu0 0
  %864 = vmatmul.mubr.bf16.gmra.mxu0 %v485
  %v865 = vpop.f32.mrf.mxu0
  %v866 = vadd.f32 0.0, %v865
  %v867 = vpop.f32.mrf.mxu0
  %v868 = vpop.f32.mrf.mxu0
  %v869 = vadd.f32 0.0, %v868
  %v870 = vpop.f32.mrf.mxu0
  %871 = vmatprep.mubr.bf16.mxu0 0
  %872 = vmatmul.mubr.bf16.gmra.mxu0 %v486
  %v873 = vpop.f32.mrf.mxu0
  %v874 = vadd.f32 0.0, %v873
  %v875 = vpop.f32.mrf.mxu0
  %v876 = vpop.f32.mrf.mxu0
  %v877 = vadd.f32 0.0, %v876
  %v878 = vpop.f32.mrf.mxu0
  %879 = vmatprep.mubr.bf16.mxu0 0
  %880 = vmatmul.mubr.bf16.gmra.mxu0 %v487
  %v881 = vpop.f32.mrf.mxu0
  %v882 = vadd.f32 0.0, %v881
  %v883 = vpop.f32.mrf.mxu0
  %v884 = vpop.f32.mrf.mxu0
  %v885 = vadd.f32 0.0, %v884
  %v886 = vpop.f32.mrf.mxu0
  %887 = vmatprep.mubr.bf16.mxu0 0
  %888 = vmatmul.mubr.bf16.gmra.mxu0 %v488
  %v889 = vpop.f32.mrf.mxu0
  %v890 = vadd.f32 0.0, %v889
  %v891 = vpop.f32.mrf.mxu0
  %v892 = vpop.f32.mrf.mxu0
  %v893 = vadd.f32 0.0, %v892
  %v894 = vpop.f32.mrf.mxu0
  %895 = vmatprep.mubr.bf16.mxu0 0
  %896 = vmatmul.mubr.bf16.gmra.mxu0 %v489
  %v897 = vpop.f32.mrf.mxu0
  %v898 = vadd.f32 0.0, %v897
  %v899 = vpop.f32.mrf.mxu0
  %v900 = vpop.f32.mrf.mxu0
  %v901 = vadd.f32 0.0, %v900
  %v902 = vpop.f32.mrf.mxu0
  %903 = vmatprep.mubr.bf16.mxu0 0
  %904 = vmatmul.mubr.bf16.gmra.mxu0 %v490
  %v905 = vpop.f32.mrf.mxu0
  %v906 = vadd.f32 0.0, %v905
  %v907 = vpop.f32.mrf.mxu0
  %v908 = vpop.f32.mrf.mxu0
  %v909 = vadd.f32 0.0, %v908
  %v910 = vpop.f32.mrf.mxu0
  %911 = vmatprep.mubr.bf16.mxu0 0
  %912 = vmatmul.mubr.bf16.gmra.mxu0 %v491
  %v913 = vpop.f32.mrf.mxu0
  %v914 = vadd.f32 0.0, %v913
  %v915 = vpop.f32.mrf.mxu0
  %v916 = vpop.f32.mrf.mxu0
  %v917 = vadd.f32 0.0, %v916
  %v918 = vpop.f32.mrf.mxu0
  %919 = vmatprep.mubr.bf16.mxu0 0
  %920 = vmatmul.mubr.bf16.gmra.mxu0 %v492
  %v921 = vpop.f32.mrf.mxu0
  %v922 = vadd.f32 0.0, %v921
  %v923 = vpop.f32.mrf.mxu0
  %v924 = vpop.f32.mrf.mxu0
  %v925 = vadd.f32 0.0, %v924
  %v926 = vpop.f32.mrf.mxu0
  %927 = vmatprep.mubr.bf16.mxu0 0
  %928 = vmatmul.mubr.bf16.gmra.mxu0 %v493
  %v929 = vpop.f32.mrf.mxu0
  %v930 = vadd.f32 0.0, %v929
  %v931 = vpop.f32.mrf.mxu0
  %v932 = vpop.f32.mrf.mxu0
  %v933 = vadd.f32 0.0, %v932
  %v934 = vpop.f32.mrf.mxu0
  %935 = vmatprep.mubr.bf16.mxu0 0
  %936 = vmatmul.mubr.bf16.gmra.mxu0 %v494
  %v937 = vpop.f32.mrf.mxu0
  %v938 = vadd.f32 0.0, %v937
  %v939 = vpop.f32.mrf.mxu0
  %v940 = vpop.f32.mrf.mxu0
  %v941 = vadd.f32 0.0, %v940
  %v942 = vpop.f32.mrf.mxu0
  %943 = vmatprep.mubr.bf16.mxu0 0
  %944 = vmatmul.mubr.bf16.gmra.mxu0 %v495
  %v945 = vpop.f32.mrf.mxu0
  %v946 = vadd.f32 0.0, %v945
  %v947 = vpop.f32.mrf.mxu0
  %v948 = vpop.f32.mrf.mxu0
  %v949 = vadd.f32 0.0, %v948
  %v950 = vpop.f32.mrf.mxu0
  %951 = vmatprep.mubr.bf16.mxu0 0
  %952 = vmatmul.mubr.bf16.gmra.mxu0 %v496
  %v953 = vpop.f32.mrf.mxu0
  %v954 = vadd.f32 0.0, %v953
  %v955 = vpop.f32.mrf.mxu0
  %v956 = vpop.f32.mrf.mxu0
  %v957 = vadd.f32 0.0, %v956
  %v958 = vpop.f32.mrf.mxu0
  %959 = vmatprep.mubr.bf16.mxu0 0
  %960 = vmatmul.mubr.bf16.gmra.mxu0 %v497
  %v961 = vpop.f32.mrf.mxu0
  %v962 = vadd.f32 0.0, %v961
  %v963 = vpop.f32.mrf.mxu0
  %v964 = vpop.f32.mrf.mxu0
  %v965 = vadd.f32 0.0, %v964
  %v966 = vpop.f32.mrf.mxu0
  %967 = vmatprep.mubr.bf16.mxu0 0
  %968 = vmatmul.mubr.bf16.gmra.mxu0 %v498
  %v969 = vpop.f32.mrf.mxu0
  %v970 = vadd.f32 0.0, %v969
  %v971 = vpop.f32.mrf.mxu0
  %v972 = vpop.f32.mrf.mxu0
  %v973 = vadd.f32 0.0, %v972
  %v974 = vpop.f32.mrf.mxu0
  %975 = vmatprep.mubr.bf16.mxu0 0
  %976 = vmatmul.mubr.bf16.gmra.mxu0 %v499
  %v977 = vpop.f32.mrf.mxu0
  %v978 = vadd.f32 0.0, %v977
  %v979 = vpop.f32.mrf.mxu0
  %v980 = vpop.f32.mrf.mxu0
  %v981 = vadd.f32 0.0, %v980
  %v982 = vpop.f32.mrf.mxu0
  %983 = vmatprep.mubr.bf16.mxu0 0
  %984 = vmatmul.mubr.bf16.gmra.mxu0 %v500
  %v985 = vpop.f32.mrf.mxu0
  %v986 = vadd.f32 0.0, %v985
  %v987 = vpop.f32.mrf.mxu0
  %v988 = vpop.f32.mrf.mxu0
  %v989 = vadd.f32 0.0, %v988
  %v990 = vpop.f32.mrf.mxu0
  %991 = vmatprep.mubr.bf16.mxu0 0
  %992 = vmatmul.mubr.bf16.gmra.mxu0 %v501
  %v993 = vpop.f32.mrf.mxu0
  %v994 = vadd.f32 0.0, %v993
  %v995 = vpop.f32.mrf.mxu0
  %v996 = vpop.f32.mrf.mxu0
  %v997 = vadd.f32 0.0, %v996
  %v998 = vpop.f32.mrf.mxu0
  %999 = vmatprep.mubr.bf16.mxu0 0
  %1000 = vmatmul.mubr.bf16.gmra.mxu0 %v502
  %v1001 = vpop.f32.mrf.mxu0
  %v1002 = vadd.f32 0.0, %v1001
  %v1003 = vpop.f32.mrf.mxu0
  %v1004 = vpop.f32.mrf.mxu0
  %v1005 = vadd.f32 0.0, %v1004
  %v1006 = vpop.f32.mrf.mxu0
  %1007 = vmatprep.mubr.bf16.mxu0 0
  %1008 = vmatmul.mubr.bf16.gmra.mxu0 %v503
  %v1009 = vpop.f32.mrf.mxu0
  %v1010 = vadd.f32 0.0, %v1009
  %v1011 = vpop.f32.mrf.mxu0
  %v1012 = vpop.f32.mrf.mxu0
  %v1013 = vadd.f32 0.0, %v1012
  %v1014 = vpop.f32.mrf.mxu0
  %1015 = vmatprep.mubr.bf16.mxu0 0
  %1016 = vmatmul.mubr.bf16.gmra.mxu0 %v504
  %v1017 = vpop.f32.mrf.mxu0
  %v1018 = vadd.f32 0.0, %v1017
  %v1019 = vpop.f32.mrf.mxu0
  %v1020 = vpop.f32.mrf.mxu0
  %v1021 = vadd.f32 0.0, %v1020
  %v1022 = vpop.f32.mrf.mxu0
  %1023 = vmatprep.mubr.bf16.mxu0 0
  %1024 = vmatmul.mubr.bf16.gmra.mxu0 %v505
  %v1025 = vpop.f32.mrf.mxu0
  %v1026 = vadd.f32 0.0, %v1025
  %v1027 = vpop.f32.mrf.mxu0
  %v1028 = vpop.f32.mrf.mxu0
  %v1029 = vadd.f32 0.0, %v1028
  %v1030 = vpop.f32.mrf.mxu0
  %1031 = vmatprep.mubr.bf16.mxu0 0
  %1032 = vmatmul.mubr.bf16.gmra.mxu0 %v506
  %v1033 = vpop.f32.mrf.mxu0
  %v1034 = vadd.f32 0.0, %v1033
  %v1035 = vpop.f32.mrf.mxu0
  %v1036 = vpop.f32.mrf.mxu0
  %v1037 = vadd.f32 0.0, %v1036
  %v1038 = vpop.f32.mrf.mxu0
  %1039 = vmatprep.mubr.bf16.mxu0 0
  %1040 = vmatmul.mubr.bf16.gmra.mxu0 %v507
  %v1041 = vpop.f32.mrf.mxu0
  %v1042 = vadd.f32 0.0, %v1041
  %v1043 = vpop.f32.mrf.mxu0
  %v1044 = vpop.f32.mrf.mxu0
  %v1045 = vadd.f32 0.0, %v1044
  %v1046 = vpop.f32.mrf.mxu0
  %1047 = vmatprep.mubr.bf16.mxu0 0
  %1048 = vmatmul.mubr.bf16.gmra.mxu0 %v508
  %v1049 = vpop.f32.mrf.mxu0
  %v1050 = vadd.f32 0.0, %v1049
  %v1051 = vpop.f32.mrf.mxu0
  %v1052 = vpop.f32.mrf.mxu0
  %v1053 = vadd.f32 0.0, %v1052
  %v1054 = vpop.f32.mrf.mxu0
  %1055 = vmatprep.mubr.bf16.mxu0 0
  %1056 = vmatmul.mubr.bf16.gmra.mxu0 %v509
  %v1057 = vpop.f32.mrf.mxu0
  %v1058 = vadd.f32 0.0, %v1057
  %v1059 = vpop.f32.mrf.mxu0
  %v1060 = vpop.f32.mrf.mxu0
  %v1061 = vadd.f32 0.0, %v1060
  %v1062 = vpop.f32.mrf.mxu0
  %1063 = vmatprep.mubr.bf16.mxu0 0
  %1064 = vmatmul.mubr.bf16.gmra.mxu0 %v510
  %v1065 = vpop.f32.mrf.mxu0
  %v1066 = vadd.f32 0.0, %v1065
  %v1067 = vpop.f32.mrf.mxu0
  %v1068 = vpop.f32.mrf.mxu0
  %v1069 = vadd.f32 0.0, %v1068
  %v1070 = vpop.f32.mrf.mxu0
  %1071 = vmatprep.mubr.bf16.mxu0 0
  %1072 = vmatmul.mubr.bf16.gmra.mxu0 %v511
  %v1073 = vpop.f32.mrf.mxu0
  %v1074 = vadd.f32 0.0, %v1073
  %v1075 = vpop.f32.mrf.mxu0
  %v1076 = vpop.f32.mrf.mxu0
  %v1077 = vadd.f32 0.0, %v1076
  %v1078 = vpop.f32.mrf.mxu0
  %1079 = vmatprep.mubr.bf16.mxu0 0
  %1080 = vmatmul.mubr.bf16.gmra.mxu0 %v512
  %v1081 = vpop.f32.mrf.mxu0
  %v1082 = vadd.f32 0.0, %v1081
  %v1083 = vpop.f32.mrf.mxu0
  %v1084 = vpop.f32.mrf.mxu0
  %v1085 = vadd.f32 0.0, %v1084
  %v1086 = vpop.f32.mrf.mxu0
  %1087 = vmatprep.mubr.bf16.mxu0 0
  %1088 = vmatmul.mubr.bf16.gmra.mxu0 %v513
  %v1089 = vpop.f32.mrf.mxu0
  %v1090 = vadd.f32 0.0, %v1089
  %v1091 = vpop.f32.mrf.mxu0
  %v1092 = vpop.f32.mrf.mxu0
  %v1093 = vadd.f32 0.0, %v1092
  %v1094 = vpop.f32.mrf.mxu0
  %1095 = vmatprep.mubr.bf16.mxu0 0
  %1096 = vmatmul.mubr.bf16.gmra.mxu0 %v514
  %v1097 = vpop.f32.mrf.mxu0
  %v1098 = vadd.f32 0.0, %v1097
  %v1099 = vpop.f32.mrf.mxu0
  %v1100 = vpop.f32.mrf.mxu0
  %v1101 = vadd.f32 0.0, %v1100
  %v1102 = vpop.f32.mrf.mxu0
  %1103 = vmatprep.mubr.bf16.mxu0 0
  %1104 = vmatmul.mubr.bf16.gmra.mxu0 %v515
  %v1105 = vpop.f32.mrf.mxu0
  %v1106 = vadd.f32 0.0, %v1105
  %v1107 = vpop.f32.mrf.mxu0
  %v1108 = vpop.f32.mrf.mxu0
  %v1109 = vadd.f32 0.0, %v1108
  %v1110 = vpop.f32.mrf.mxu0
  %1111 = vmatprep.mubr.bf16.mxu0 0
  %1112 = vmatmul.mubr.bf16.gmra.mxu0 %v516
  %v1113 = vpop.f32.mrf.mxu0
  %v1114 = vadd.f32 0.0, %v1113
  %v1115 = vpop.f32.mrf.mxu0
  %v1116 = vpop.f32.mrf.mxu0
  %v1117 = vadd.f32 0.0, %v1116
  %v1118 = vpop.f32.mrf.mxu0
  %1119 = vmatprep.mubr.bf16.mxu0 0
  %1120 = vmatmul.mubr.bf16.gmra.mxu0 %v517
  %v1121 = vpop.f32.mrf.mxu0
  %v1122 = vadd.f32 0.0, %v1121
  %v1123 = vpop.f32.mrf.mxu0
  %v1124 = vpop.f32.mrf.mxu0
  %v1125 = vadd.f32 0.0, %v1124
  %v1126 = vpop.f32.mrf.mxu0
  %1127 = vmatprep.mubr.bf16.mxu0 0
  %1128 = vmatmul.mubr.bf16.gmra.mxu0 %v518
  %v1129 = vpop.f32.mrf.mxu0
  %v1130 = vadd.f32 0.0, %v1129
  %v1131 = vpop.f32.mrf.mxu0
  %v1132 = vpop.f32.mrf.mxu0
  %v1133 = vadd.f32 0.0, %v1132
  %v1134 = vpop.f32.mrf.mxu0
  %1135 = vmatprep.mubr.bf16.mxu0 0
  %1136 = vmatmul.mubr.bf16.gmra.mxu0 %v519
  %v1137 = vpop.f32.mrf.mxu0
  %v1138 = vadd.f32 0.0, %v1137
  %v1139 = vpop.f32.mrf.mxu0
  %v1140 = vpop.f32.mrf.mxu0
  %v1141 = vadd.f32 0.0, %v1140
  %v1142 = vpop.f32.mrf.mxu0
  %1143 = vmatprep.mubr.bf16.mxu0 0
  %1144 = vmatmul.mubr.bf16.gmra.mxu0 %v520
  %v1145 = vpop.f32.mrf.mxu0
  %v1146 = vadd.f32 0.0, %v1145
  %v1147 = vpop.f32.mrf.mxu0
  %v1148 = vpop.f32.mrf.mxu0
  %v1149 = vadd.f32 0.0, %v1148
  %v1150 = vpop.f32.mrf.mxu0
  %1151 = vmatprep.mubr.bf16.mxu0 0
  %1152 = vmatmul.mubr.bf16.gmra.mxu0 %v521
  %v1153 = vpop.f32.mrf.mxu0
  %v1154 = vadd.f32 0.0, %v1153
  %v1155 = vpop.f32.mrf.mxu0
  %v1156 = vpop.f32.mrf.mxu0
  %v1157 = vadd.f32 0.0, %v1156
  %v1158 = vpop.f32.mrf.mxu0
  %1159 = vmatprep.mubr.bf16.mxu0 0
  %1160 = vmatmul.mubr.bf16.gmra.mxu0 %v522
  %v1161 = vpop.f32.mrf.mxu0
  %v1162 = vadd.f32 0.0, %v1161
  %v1163 = vpop.f32.mrf.mxu0
  %v1164 = vpop.f32.mrf.mxu0
  %v1165 = vadd.f32 0.0, %v1164
  %v1166 = vpop.f32.mrf.mxu0
  %1167 = vmatprep.mubr.bf16.mxu0 0
  %1168 = vmatmul.mubr.bf16.gmra.mxu0 %v523
  %v1169 = vpop.f32.mrf.mxu0
  %v1170 = vadd.f32 0.0, %v1169
  %v1171 = vpop.f32.mrf.mxu0
  %v1172 = vpop.f32.mrf.mxu0
  %v1173 = vadd.f32 0.0, %v1172
  %v1174 = vpop.f32.mrf.mxu0
  %1175 = vmatprep.mubr.bf16.mxu0 0
  %1176 = vmatmul.mubr.bf16.gmra.mxu0 %v524
  %v1177 = vpop.f32.mrf.mxu0
  %v1178 = vadd.f32 0.0, %v1177
  %v1179 = vpop.f32.mrf.mxu0
  %v1180 = vpop.f32.mrf.mxu0
  %v1181 = vadd.f32 0.0, %v1180
  %v1182 = vpop.f32.mrf.mxu0
  %1183 = vmatprep.mubr.bf16.mxu0 0
  %1184 = vmatmul.mubr.bf16.gmra.mxu0 %v525
  %v1185 = vpop.f32.mrf.mxu0
  %v1186 = vadd.f32 0.0, %v1185
  %v1187 = vpop.f32.mrf.mxu0
  %v1188 = vpop.f32.mrf.mxu0
  %v1189 = vadd.f32 0.0, %v1188
  %v1190 = vpop.f32.mrf.mxu0
  %1191 = vmatprep.mubr.bf16.mxu0 0
  %1192 = vmatmul.mubr.bf16.gmra.mxu0 %v526
  %v1193 = vpop.f32.mrf.mxu0
  %v1194 = vadd.f32 0.0, %v1193
  %v1195 = vpop.f32.mrf.mxu0
  %v1196 = vpop.f32.mrf.mxu0
  %v1197 = vadd.f32 0.0, %v1196
  %v1198 = vpop.f32.mrf.mxu0
  %1199 = vmatprep.mubr.bf16.mxu0 0
  %1200 = vmatmul.mubr.bf16.gmra.mxu0 %v527
  %v1201 = vpop.f32.mrf.mxu0
  %v1202 = vadd.f32 0.0, %v1201
  %v1203 = vpop.f32.mrf.mxu0
  %v1204 = vpop.f32.mrf.mxu0
  %v1205 = vadd.f32 0.0, %v1204
  %v1206 = vpop.f32.mrf.mxu0
  %1207 = vmatprep.mubr.bf16.mxu0 0
  %1208 = vmatmul.mubr.bf16.gmra.mxu0 %v528
  %v1209 = vpop.f32.mrf.mxu0
  %v1210 = vadd.f32 0.0, %v1209
  %v1211 = vpop.f32.mrf.mxu0
  %v1212 = vpop.f32.mrf.mxu0
  %v1213 = vadd.f32 0.0, %v1212
  %v1214 = vpop.f32.mrf.mxu0
  %1215 = vmatprep.mubr.bf16.mxu0 0
  %1216 = vmatmul.mubr.bf16.gmra.mxu0 %v529
  %v1217 = vpop.f32.mrf.mxu0
  %v1218 = vadd.f32 0.0, %v1217
  %v1219 = vpop.f32.mrf.mxu0
  %v1220 = vpop.f32.mrf.mxu0
  %v1221 = vadd.f32 0.0, %v1220
  %v1222 = vpop.f32.mrf.mxu0
  %1223 = vmatprep.mubr.bf16.mxu0 0
  %1224 = vmatmul.mubr.bf16.gmra.mxu0 %v530
  %v1225 = vpop.f32.mrf.mxu0
  %v1226 = vadd.f32 0.0, %v1225
  %v1227 = vpop.f32.mrf.mxu0
  %v1228 = vpop.f32.mrf.mxu0
  %v1229 = vadd.f32 0.0, %v1228
  %v1230 = vpop.f32.mrf.mxu0
  %1231 = vmatprep.mubr.bf16.mxu0 0
  %1232 = vmatmul.mubr.bf16.gmra.mxu0 %v531
  %v1233 = vpop.f32.mrf.mxu0
  %v1234 = vadd.f32 0.0, %v1233
  %v1235 = vpop.f32.mrf.mxu0
  %v1236 = vpop.f32.mrf.mxu0
  %v1237 = vadd.f32 0.0, %v1236
  %v1238 = vpop.f32.mrf.mxu0
  %1239 = vmatprep.mubr.bf16.mxu0 0
  %1240 = vmatmul.mubr.bf16.gmra.mxu0 %v532
  %v1241 = vpop.f32.mrf.mxu0
  %v1242 = vadd.f32 0.0, %v1241
  %v1243 = vpop.f32.mrf.mxu0
  %v1244 = vpop.f32.mrf.mxu0
  %v1245 = vadd.f32 0.0, %v1244
  %v1246 = vpop.f32.mrf.mxu0
  %1247 = vmatprep.mubr.bf16.mxu0 0
  %1248 = vmatmul.mubr.bf16.gmra.mxu0 %v533
  %v1249 = vpop.f32.mrf.mxu0
  %v1250 = vadd.f32 0.0, %v1249
  %v1251 = vpop.f32.mrf.mxu0
  %v1252 = vpop.f32.mrf.mxu0
  %v1253 = vadd.f32 0.0, %v1252
  %v1254 = vpop.f32.mrf.mxu0
  %1255 = vmatprep.mubr.bf16.mxu0 0
  %1256 = vmatmul.mubr.bf16.gmra.mxu0 %v534
  %v1257 = vpop.f32.mrf.mxu0
  %v1258 = vadd.f32 0.0, %v1257
  %v1259 = vpop.f32.mrf.mxu0
  %v1260 = vpop.f32.mrf.mxu0
  %v1261 = vadd.f32 0.0, %v1260
  %v1262 = vpop.f32.mrf.mxu0
  %1263 = vdwg.mxu0
  %v1264 = vmax.f32 %v690, %v834
  %v1265 = vmax.f32 %v693, %v837
  %v1266 = vmax.f32 %v698, %v842
  %v1267 = vmax.f32 %v701, %v845
  %v1268 = vmax.f32 %v706, %v850
  %v1269 = vmax.f32 %v709, %v853
  %v1270 = vmax.f32 %v714, %v858
  %v1271 = vmax.f32 %v717, %v861
  %v1272 = vmax.f32 %v722, %v866
  %v1273 = vmax.f32 %v725, %v869
  %v1274 = vmax.f32 %v730, %v874
  %v1275 = vmax.f32 %v733, %v877
  %v1276 = vmax.f32 %v738, %v882
  %v1277 = vmax.f32 %v741, %v885
  %v1278 = vmax.f32 %v746, %v890
  %v1279 = vmax.f32 %v749, %v893
  %v1280 = vmax.f32 %v754, %v898
  %v1281 = vmax.f32 %v757, %v901
  %v1282 = vmax.f32 %v762, %v906
  %v1283 = vmax.f32 %v765, %v909
  %v1284 = vmax.f32 %v770, %v914
  %v1285 = vmax.f32 %v773, %v917
  %v1286 = vmax.f32 %v778, %v922
  %v1287 = vmax.f32 %v781, %v925
  %v1288 = vmax.f32 %v786, %v930
  %v1289 = vmax.f32 %v789, %v933
  %v1290 = vmax.f32 %v794, %v938
  %v1291 = vmax.f32 %v797, %v941
  %v1292 = vmax.f32 %v802, %v946
  %v1293 = vmax.f32 %v805, %v949
  %v1294 = vmax.f32 %v810, %v954
  %v1295 = vmax.f32 %v813, %v957
  %v1296 = vmax.f32 %v818, %v962
  %v1297 = vmax.f32 %v821, %v965
  %v1298 = vmax.f32 %v826, %v970
  %v1299 = vmax.f32 %v829, %v973
  %v1300 = vmax.f32 %v978, %v1122
  %v1301 = vmax.f32 %v981, %v1125
  %v1302 = vmax.f32 %v986, %v1130
  %v1303 = vmax.f32 %v989, %v1133
  %v1304 = vmax.f32 %v994, %v1138
  %v1305 = vmax.f32 %v997, %v1141
  %v1306 = vmax.f32 %v1002, %v1146
  %v1307 = vmax.f32 %v1005, %v1149
  %v1308 = vmax.f32 %v1010, %v1154
  %v1309 = vmax.f32 %v1013, %v1157
  %v1310 = vmax.f32 %v1018, %v1162
  %v1311 = vmax.f32 %v1021, %v1165
  %v1312 = vmax.f32 %v1026, %v1170
  %v1313 = vmax.f32 %v1029, %v1173
  %v1314 = vmax.f32 %v1034, %v1178
  %v1315 = vmax.f32 %v1037, %v1181
  %v1316 = vmax.f32 %v1042, %v1186
  %v1317 = vmax.f32 %v1045, %v1189
  %v1318 = vmax.f32 %v1050, %v1194
  %v1319 = vmax.f32 %v1053, %v1197
  %v1320 = vmax.f32 %v1058, %v1202
  %v1321 = vmax.f32 %v1061, %v1205
  %v1322 = vmax.f32 %v1066, %v1210
  %v1323 = vmax.f32 %v1069, %v1213
  %v1324 = vmax.f32 %v1074, %v1218
  %v1325 = vmax.f32 %v1077, %v1221
  %v1326 = vmax.f32 %v1082, %v1226
  %v1327 = vmax.f32 %v1085, %v1229
  %v1328 = vmax.f32 %v1090, %v1234
  %v1329 = vmax.f32 %v1093, %v1237
  %v1330 = vmax.f32 %v1098, %v1242
  %v1331 = vmax.f32 %v1101, %v1245
  %v1332 = vmax.f32 %v1106, %v1250
  %v1333 = vmax.f32 %v1109, %v1253
  %v1334 = vmax.f32 %v1114, %v1258
  %v1335 = vmax.f32 %v1117, %v1261
  %v1336 = vmax.f32 %v1264, %v1300
  %v1337 = vmax.f32 %v1265, %v1301
  %v1338 = vmax.f32 %v1266, %v1302
  %v1339 = vmax.f32 %v1267, %v1303
  %v1340 = vmax.f32 %v1268, %v1304
  %v1341 = vmax.f32 %v1269, %v1305
  %v1342 = vmax.f32 %v1270, %v1306
  %v1343 = vmax.f32 %v1271, %v1307
  %v1344 = vmax.f32 %v1272, %v1308
  %v1345 = vmax.f32 %v1273, %v1309
  %v1346 = vmax.f32 %v1274, %v1310
  %v1347 = vmax.f32 %v1275, %v1311
  %v1348 = vmax.f32 %v1276, %v1312
  %v1349 = vmax.f32 %v1277, %v1313
  %v1350 = vmax.f32 %v1278, %v1314
  %v1351 = vmax.f32 %v1279, %v1315
  %v1352 = vmax.f32 %v1280, %v1316
  %v1353 = vmax.f32 %v1281, %v1317
  %v1354 = vmax.f32 %v1282, %v1318
  %v1355 = vmax.f32 %v1283, %v1319
  %v1356 = vmax.f32 %v1284, %v1320
  %v1357 = vmax.f32 %v1285, %v1321
  %v1358 = vmax.f32 %v1286, %v1322
  %v1359 = vmax.f32 %v1287, %v1323
  %v1360 = vmax.f32 %v1288, %v1324
  %v1361 = vmax.f32 %v1289, %v1325
  %v1362 = vmax.f32 %v1290, %v1326
  %v1363 = vmax.f32 %v1291, %v1327
  %v1364 = vmax.f32 %v1292, %v1328
  %v1365 = vmax.f32 %v1293, %v1329
  %v1366 = vmax.f32 %v1294, %v1330
  %v1367 = vmax.f32 %v1295, %v1331
  %v1368 = vmax.f32 %v1296, %v1332
  %v1369 = vmax.f32 %v1297, %v1333
  %v1370 = vmax.f32 %v1298, %v1334
  %v1371 = vmax.f32 %v1299, %v1335
  %v1372 = vld [vmem:[%s2] sm:$0x1]
  %v1374 = vlaneseq
  %v1375 = vshrl.u32 %v1374, 7
  %v1376 = vsub.s32 0, %v1375
  %v1377 = vrot.slane %v1372, %v1376
  %v1379 = vadd.f32 %v1336, %v1377
  %v1380 = vadd.f32 %v1337, %v1377
  %v1381 = vadd.f32 %v1338, %v1377
  %v1382 = vadd.f32 %v1339, %v1377
  %v1383 = vadd.f32 %v1340, %v1377
  %v1384 = vadd.f32 %v1341, %v1377
  %v1385 = vadd.f32 %v1342, %v1377
  %v1386 = vadd.f32 %v1343, %v1377
  %v1387 = vadd.f32 %v1344, %v1377
  %v1388 = vadd.f32 %v1345, %v1377
  %v1389 = vadd.f32 %v1346, %v1377
  %v1390 = vadd.f32 %v1347, %v1377
  %v1391 = vadd.f32 %v1348, %v1377
  %v1392 = vadd.f32 %v1349, %v1377
  %v1393 = vadd.f32 %v1350, %v1377
  %v1394 = vadd.f32 %v1351, %v1377
  %v1395 = vadd.f32 %v1352, %v1377
  %v1396 = vadd.f32 %v1353, %v1377
  %v1397 = vadd.f32 %v1354, %v1377
  %v1398 = vadd.f32 %v1355, %v1377
  %v1399 = vadd.f32 %v1356, %v1377
  %v1400 = vadd.f32 %v1357, %v1377
  %v1401 = vadd.f32 %v1358, %v1377
  %v1402 = vadd.f32 %v1359, %v1377
  %v1403 = vadd.f32 %v1360, %v1377
  %v1404 = vadd.f32 %v1361, %v1377
  %v1405 = vadd.f32 %v1362, %v1377
  %v1406 = vadd.f32 %v1363, %v1377
  %v1407 = vadd.f32 %v1364, %v1377
  %v1408 = vadd.f32 %v1365, %v1377
  %v1409 = vadd.f32 %v1366, %v1377
  %v1410 = vadd.f32 %v1367, %v1377
  %v1411 = vadd.f32 %v1368, %v1377
  %v1412 = vadd.f32 %v1369, %v1377
  %v1413 = vadd.f32 %v1370, %v1377
  %v1414 = vadd.f32 %v1371, %v1377
  %v1415 = vmax.f32 %v1379, 0.0
  %v1416 = vmax.f32 %v1380, 0.0
  %v1417 = vmax.f32 %v1381, 0.0
  %v1418 = vmax.f32 %v1382, 0.0
  %v1419 = vmax.f32 %v1383, 0.0
  %v1420 = vmax.f32 %v1384, 0.0
  %v1421 = vmax.f32 %v1385, 0.0
  %v1422 = vmax.f32 %v1386, 0.0
  %v1423 = vmax.f32 %v1387, 0.0
  %v1424 = vmax.f32 %v1388, 0.0
  %v1425 = vmax.f32 %v1389, 0.0
  %v1426 = vmax.f32 %v1390, 0.0
  %v1427 = vmax.f32 %v1391, 0.0
  %v1428 = vmax.f32 %v1392, 0.0
  %v1429 = vmax.f32 %v1393, 0.0
  %v1430 = vmax.f32 %v1394, 0.0
  %v1431 = vmax.f32 %v1395, 0.0
  %v1432 = vmax.f32 %v1396, 0.0
  %v1433 = vmax.f32 %v1397, 0.0
  %v1434 = vmax.f32 %v1398, 0.0
  %v1435 = vmax.f32 %v1399, 0.0
  %v1436 = vmax.f32 %v1400, 0.0
  %v1437 = vmax.f32 %v1401, 0.0
  %v1438 = vmax.f32 %v1402, 0.0
  %v1439 = vmax.f32 %v1403, 0.0
  %v1440 = vmax.f32 %v1404, 0.0
  %v1441 = vmax.f32 %v1405, 0.0
  %v1442 = vmax.f32 %v1406, 0.0
  %v1443 = vmax.f32 %v1407, 0.0
  %v1444 = vmax.f32 %v1408, 0.0
  %v1445 = vmax.f32 %v1409, 0.0
  %v1446 = vmax.f32 %v1410, 0.0
  %v1447 = vmax.f32 %v1411, 0.0
  %v1448 = vmax.f32 %v1412, 0.0
  %v1449 = vmax.f32 %v1413, 0.0
  %v1450 = vmax.f32 %v1414, 0.0
  %1451 = vst [vmem:[%s3] sm:$0xff] %v1415
  %1452 = vst [vmem:[%s3 + $0x8] sm:$0xff] %v1416
  %1453 = vst [vmem:[%s3 + $0x10] sm:$0xff] %v1417
  %1454 = vst [vmem:[%s3 + $0x18] sm:$0xff] %v1418
  %1455 = vst [vmem:[%s3 + $0x20] sm:$0xff] %v1419
  %1456 = vst [vmem:[%s3 + $0x28] sm:$0xff] %v1420
  %1457 = vst [vmem:[%s3 + $0x30] sm:$0xff] %v1421
  %1458 = vst [vmem:[%s3 + $0x38] sm:$0xff] %v1422
  %1459 = vst [vmem:[%s3 + $0x40] sm:$0xff] %v1423
  %1460 = vst [vmem:[%s3 + $0x48] sm:$0xff] %v1424
  %1461 = vst [vmem:[%s3 + $0x50] sm:$0xff] %v1425
  %1462 = vst [vmem:[%s3 + $0x58] sm:$0xff] %v1426
  %1463 = vst [vmem:[%s3 + $0x60] sm:$0xff] %v1427
  %1464 = vst [vmem:[%s3 + $0x68] sm:$0xff] %v1428
  %1465 = vst [vmem:[%s3 + $0x70] sm:$0xff] %v1429
  %1466 = vst [vmem:[%s3 + $0x78] sm:$0xff] %v1430
  %1467 = vst [vmem:[%s3 + $0x80] sm:$0xff] %v1431
  %1468 = vst [vmem:[%s3 + $0x88] sm:$0xff] %v1432
  %1469 = vst [vmem:[%s3 + $0x90] sm:$0xff] %v1433
  %1470 = vst [vmem:[%s3 + $0x98] sm:$0xff] %v1434
  %1471 = vst [vmem:[%s3 + $0xa0] sm:$0xff] %v1435
  %1472 = vst [vmem:[%s3 + $0xa8] sm:$0xff] %v1436
  %1473 = vst [vmem:[%s3 + $0xb0] sm:$0xff] %v1437
  %1474 = vst [vmem:[%s3 + $0xb8] sm:$0xff] %v1438
  %1475 = vst [vmem:[%s3 + $0xc0] sm:$0xff] %v1439
  %1476 = vst [vmem:[%s3 + $0xc8] sm:$0xff] %v1440
  %1477 = vst [vmem:[%s3 + $0xd0] sm:$0xff] %v1441
  %1478 = vst [vmem:[%s3 + $0xd8] sm:$0xff] %v1442
  %1479 = vst [vmem:[%s3 + $0xe0] sm:$0xff] %v1443
  %1480 = vst [vmem:[%s3 + $0xe8] sm:$0xff] %v1444
  %1481 = vst [vmem:[%s3 + $0xf0] sm:$0xff] %v1445
  %1482 = vst [vmem:[%s3 + $0xf8] sm:$0xff] %v1446
  %1483 = vst [vmem:[%s3 + $0x100] sm:$0xff] %v1447
  %1484 = vst [vmem:[%s3 + $0x108] sm:$0xff] %v1448
  %1485 = vst [vmem:[%s3 + $0x110] sm:$0xff] %v1449
  %1486 = vst [vmem:[%s3 + $0x118] sm:$0xff] %v1450
  // Predicated region
  $region14: #{forward.2} parent=0 // pred_check
    _
  $region15: #{forward.2} parent=0 // pred_check_branch
    %1488 = sbr.rel (0) target = $region17
  $region16: #{forward.2} parent=0 // pred_region
    _
  $region17: #{forward.2} parent=0 // pred_fallthru
    _
  // Predicated region
  $region18: #{forward.2} parent=0 // pred_check
    _
  $region19: #{forward.2} parent=0 // pred_check_branch
    %1490 = sbr.rel (0) target = $region21
  $region20: #{forward.2} parent=0 // pred_region
    _
  $region21: #{forward.2} parent=0 // pred_fallthru
    _

// kernel: forward.3
$region0: #{forward.3}
  #allocation0 [shape = 'u32[]', space=smem, size = 0x4, offset = 0x4, fixed_abs, tag = 'smem constant byte address 0x4 - core index']
  #allocation1 [shape = 'u32[144,128]{1,0:T(1,128)}', space=vmem, size = 0x12000, scoped, tag = 'internal scratch']
  #allocation2 [shape = 'f32[2,8,8,128]{3,2,1,0:T(8,128)}', space=vmem, size = 0x10000, scoped, tag = 'scratch operand']
  %s0 = inlined_call_operand.vmem [shape: f32[2,12,12,128], index: 0, kind: input, shape index: {}]
  %s1 = inlined_call_operand.vmem [shape: bf16[1664,128], index: 1, kind: input, shape index: {}]
  %s2 = inlined_call_operand.vmem [shape: f32[1,128], index: 2, kind: input, shape index: {}]
  %s3 = inlined_call_operand.vmem [shape: bf16[2048,128], index: 3, kind: input, shape index: {}]
  %s4 = inlined_call_operand.vmem [shape: f32[1,128], index: 4, kind: input, shape index: {}]
  %s5 = inlined_call_operand.vmem [shape: bf16[128,128], index: 5, kind: input, shape index: {}]
  %s6 = inlined_call_operand.vmem [shape: f32[1,128], index: 6, kind: input, shape index: {}]
  %s7 = inlined_call_operand.vmem [shape: bf16[128,128], index: 7, kind: input, shape index: {}]
  %s8 = inlined_call_operand.vmem [shape: f32[1,128], index: 8, kind: input, shape index: {}]
  %s9 = inlined_call_operand.hbm [shape: f32[2,128], index: 9, kind: output, shape index: {}]
  %s10 = sld [smem:[#allocation0]]
  $region46: #{forward.3} parent=0
    _
  %s12 = ssub.s32 1, %s10
  %s13 = scalar_select 0, %s12, %s10
  $region1: #{forward.3} parent=0
    #allocation3 [shape = 'u8[1024]{0}', space=vmem, size = 0x400, scoped, tag = 'output window, operand 0, single buffered']
    #allocation4 [shape = 's32[1]{0}', space=sflag, size = 0x4, scoped, tag = 'scoped memory for forward.3']
    %14 = vsyncpa [#allocation4], 0
    // Predicated region
    $region2: #{forward.3} parent=1 // pred_check
      _
    $region3: #{forward.3} parent=1 // pred_check_branch
      %16 = sbr.rel (0) target = $region5
    $region4: #{forward.3} parent=1 // pred_region
      _
    $region5: #{forward.3} parent=1 // pred_fallthru
      _
    // Predicated region
    $region6: #{forward.3} parent=1 // pred_check
      _
    $region7: #{forward.3} parent=1 // pred_check_branch
      %18 = sbr.rel (0) target = $region9
    $region8: #{forward.3} parent=1 // pred_region
      _
    $region9: #{forward.3} parent=1 // pred_fallthru
      _
    // Predicated region
    $region10: #{forward.3} parent=1 // pred_check
      _
    $region11: #{forward.3} parent=1 // pred_check_branch
      %20 = sbr.rel (0) target = $region13
    $region12: #{forward.3} parent=1 // pred_region
      _
    $region13: #{forward.3} parent=1 // pred_fallthru
      _
    // Predicated region
    $region14: #{forward.3} parent=1 // pred_check
      _
    $region15: #{forward.3} parent=1 // pred_check_branch
      %22 = sbr.rel (0) target = $region17
    $region16: #{forward.3} parent=1 // pred_region
      _
    $region17: #{forward.3} parent=1 // pred_fallthru
      _
    // Predicated region
    $region18: #{forward.3} parent=1 // pred_check
      _
    $region19: #{forward.3} parent=1 // pred_check_branch
      %24 = sbr.rel (0) target = $region21
    $region20: #{forward.3} parent=1 // pred_region
      _
    $region21: #{forward.3} parent=1 // pred_fallthru
      _
    // Predicated region
    $region22: #{forward.3} parent=1 // pred_check
      _
    $region23: #{forward.3} parent=1 // pred_check_branch
      %26 = sbr.rel (0) target = $region25
    $region24: #{forward.3} parent=1 // pred_region
      _
    $region25: #{forward.3} parent=1 // pred_fallthru
      _
    // Predicated region
    $region26: #{forward.3} parent=1 // pred_check
      _
    $region27: #{forward.3} parent=1 // pred_check_branch
      %28 = sbr.rel (0) target = $region29
    $region28: #{forward.3} parent=1 // pred_region
      _
    $region29: #{forward.3} parent=1 // pred_fallthru
      _
    // Predicated region
    $region30: #{forward.3} parent=1 // pred_check
      _
    $region31: #{forward.3} parent=1 // pred_check_branch
      %30 = sbr.rel (0) target = $region33
    $region32: #{forward.3} parent=1 // pred_region
      _
    $region33: #{forward.3} parent=1 // pred_fallthru
      _
    // Predicated region
    $region34: #{forward.3} parent=1 // pred_check
      _
    $region35: #{forward.3} parent=1 // pred_check_branch
      %32 = sbr.rel (0) target = $region37
    $region36: #{forward.3} parent=1 // pred_region
      _
    $region37: #{forward.3} parent=1 // pred_fallthru
      _
    %34 = vst [vmem:[#allocation2] sm:$0xff] 0.0
    %35 = vst [vmem:[#allocation2 + $0x8] sm:$0xff] 0.0
    %36 = vst [vmem:[#allocation2 + $0x10] sm:$0xff] 0.0
    %37 = vst [vmem:[#allocation2 + $0x18] sm:$0xff] 0.0
    %38 = vst [vmem:[#allocation2 + $0x20] sm:$0xff] 0.0
    %39 = vst [vmem:[#allocation2 + $0x28] sm:$0xff] 0.0
    %40 = vst [vmem:[#allocation2 + $0x30] sm:$0xff] 0.0
    %41 = vst [vmem:[#allocation2 + $0x38] sm:$0xff] 0.0
    %42 = vst [vmem:[#allocation2 + $0x40] sm:$0xff] 0.0
    %43 = vst [vmem:[#allocation2 + $0x48] sm:$0xff] 0.0
    %44 = vst [vmem:[#allocation2 + $0x50] sm:$0xff] 0.0
    %45 = vst [vmem:[#allocation2 + $0x58] sm:$0xff] 0.0
    %46 = vst [vmem:[#allocation2 + $0x60] sm:$0xff] 0.0
    %47 = vst [vmem:[#allocation2 + $0x68] sm:$0xff] 0.0
    %48 = vst [vmem:[#allocation2 + $0x70] sm:$0xff] 0.0
    %49 = vst [vmem:[#allocation2 + $0x78] sm:$0xff] 0.0
    %v50 = vld [vmem:[%s0] sm:$0xff]
    %v51 = vld [vmem:[%s0 + $0x10] sm:$0xff]
    %v52 = vld [vmem:[%s0 + $0x20] sm:$0xff]
    %v53 = vld [vmem:[%s0 + $0x30] sm:$0xff]
    %v54 = vld [vmem:[%s0 + $0x40] sm:$0xff]
    %v55 = vld [vmem:[%s0 + $0x50] sm:$0xff]
    %v56 = vld [vmem:[%s0 + $0x60] sm:$0xff]
    %v57 = vld [vmem:[%s0 + $0x70] sm:$0xff]
    %v58 = vld [vmem:[%s0 + $0xc0] sm:$0xff]
    %v59 = vld [vmem:[%s0 + $0xd0] sm:$0xff]
    %v60 = vld [vmem:[%s0 + $0xe0] sm:$0xff]
    %v61 = vld [vmem:[%s0 + $0xf0] sm:$0xff]
    %v62 = vld [vmem:[%s0 + $0x100] sm:$0xff]
    %v63 = vld [vmem:[%s0 + $0x110] sm:$0xff]
    %v64 = vld [vmem:[%s0 + $0x120] sm:$0xff]
    %v65 = vld [vmem:[%s0 + $0x130] sm:$0xff]
    %v66 = vld [vmem:[%s0 + $0x1] sm:$0xff]
    %v67 = vld [vmem:[%s0 + $0x11] sm:$0xff]
    %v68 = vld [vmem:[%s0 + $0x21] sm:$0xff]
    %v69 = vld [vmem:[%s0 + $0x31] sm:$0xff]
    %v70 = vld [vmem:[%s0 + $0x41] sm:$0xff]
    %v71 = vld [vmem:[%s0 + $0x51] sm:$0xff]
    %v72 = vld [vmem:[%s0 + $0x61] sm:$0xff]
    %v73 = vld [vmem:[%s0 + $0x71] sm:$0xff]
    %v74 = vld [vmem:[%s0 + $0xc1] sm:$0xff]
    %v75 = vld [vmem:[%s0 + $0xd1] sm:$0xff]
    %v76 = vld [vmem:[%s0 + $0xe1] sm:$0xff]
    %v77 = vld [vmem:[%s0 + $0xf1] sm:$0xff]
    %v78 = vld [vmem:[%s0 + $0x101] sm:$0xff]
    %v79 = vld [vmem:[%s0 + $0x111] sm:$0xff]
    %v80 = vld [vmem:[%s0 + $0x121] sm:$0xff]
    %v81 = vld [vmem:[%s0 + $0x131] sm:$0xff]
    %98 = vrot.lane.b32.xlu0 %v66, 64
    %v99 = vpop.permute.xlu0 %98
    %100 = vrot.lane.b32.xlu0 %v67, 64
    %v101 = vpop.permute.xlu0 %100
    %102 = vrot.lane.b32.xlu0 %v68, 64
    %v103 = vpop.permute.xlu0 %102
    %104 = vrot.lane.b32.xlu0 %v69, 64
    %v105 = vpop.permute.xlu0 %104
    %106 = vrot.lane.b32.xlu0 %v70, 64
    %v107 = vpop.permute.xlu0 %106
    %108 = vrot.lane.b32.xlu0 %v71, 64
    %v109 = vpop.permute.xlu0 %108
    %110 = vrot.lane.b32.xlu0 %v72, 64
    %v111 = vpop.permute.xlu0 %110
    %112 = vrot.lane.b32.xlu0 %v73, 64
    %v113 = vpop.permute.xlu0 %112
    %114 = vrot.lane.b32.xlu0 %v74, 64
    %v115 = vpop.permute.xlu0 %114
    %116 = vrot.lane.b32.xlu0 %v75, 64
    %v117 = vpop.permute.xlu0 %116
    %118 = vrot.lane.b32.xlu0 %v76, 64
    %v119 = vpop.permute.xlu0 %118
    %120 = vrot.lane.b32.xlu0 %v77, 64
    %v121 = vpop.permute.xlu0 %120
    %122 = vrot.lane.b32.xlu0 %v78, 64
    %v123 = vpop.permute.xlu0 %122
    %124 = vrot.lane.b32.xlu0 %v79, 64
    %v125 = vpop.permute.xlu0 %124
    %126 = vrot.lane.b32.xlu0 %v80, 64
    %v127 = vpop.permute.xlu0 %126
    %128 = vrot.lane.b32.xlu0 %v81, 64
    %v129 = vpop.permute.xlu0 %128
    %vm146 = vcmask 523264
    %v147 = vsel %vm146, %v50, %v99
    %v148 = vsel %vm146, %v51, %v101
    %v149 = vsel %vm146, %v52, %v103
    %v150 = vsel %vm146, %v53, %v105
    %v151 = vsel %vm146, %v54, %v107
    %v152 = vsel %vm146, %v55, %v109
    %v153 = vsel %vm146, %v56, %v111
    %v154 = vsel %vm146, %v57, %v113
    %v155 = vsel %vm146, %v58, %v115
    %v156 = vsel %vm146, %v59, %v117
    %v157 = vsel %vm146, %v60, %v119
    %v158 = vsel %vm146, %v61, %v121
    %v159 = vsel %vm146, %v62, %v123
    %v160 = vsel %vm146, %v63, %v125
    %v161 = vsel %vm146, %v64, %v127
    %v162 = vsel %vm146, %v65, %v129
    %v163 = vpack.c.bf16 %v148, %v147
    %v164 = vpack.c.bf16 %v150, %v149
    %v165 = vpack.c.bf16 %v152, %v151
    %v166 = vpack.c.bf16 %v154, %v153
    %v167 = vpack.c.bf16 %v156, %v155
    %v168 = vpack.c.bf16 %v158, %v157
    %v169 = vpack.c.bf16 %v160, %v159
    %v170 = vpack.c.bf16 %v162, %v161
    %v171 = vld [vmem:[%s1] sm:$0xf]
    %v172 = vld [vmem:[%s1 + $0x4] sm:$0xf]
    %v173 = vld [vmem:[%s1 + $0x8] sm:$0xf]
    %v174 = vld [vmem:[%s1 + $0xc] sm:$0xf]
    %v175 = vld [vmem:[%s1 + $0x10] sm:$0xf]
    %v176 = vld [vmem:[%s1 + $0x14] sm:$0xf]
    %v177 = vld [vmem:[%s1 + $0x18] sm:$0xf]
    %v178 = vld [vmem:[%s1 + $0x1c] sm:$0xf]
    %v179 = vld [vmem:[%s1 + $0x20] sm:$0xf]
    %v180 = vld [vmem:[%s1 + $0x24] sm:$0xf]
    %v181 = vld [vmem:[%s1 + $0x28] sm:$0xf]
    %v182 = vld [vmem:[%s1 + $0x2c] sm:$0xf]
    %v183 = vld [vmem:[%s1 + $0x30] sm:$0xf]
    %v184 = vld [vmem:[%s1 + $0x34] sm:$0xf]
    %v185 = vld [vmem:[%s1 + $0x38] sm:$0xf]
    %v186 = vld [vmem:[%s1 + $0x3c] sm:$0xf]
    %v203 = vunpack.c.l.b16 %v171
    %v204 = vunpack.c.l.b16 %v172
    %v205 = vunpack.c.l.b16 %v173
    %v206 = vunpack.c.l.b16 %v174
    %v207 = vunpack.c.l.b16 %v175
    %v208 = vunpack.c.l.b16 %v176
    %v209 = vunpack.c.l.b16 %v177
    %v210 = vunpack.c.l.b16 %v178
    %v211 = vunpack.c.l.b16 %v179
    %v212 = vunpack.c.l.b16 %v180
    %v213 = vunpack.c.l.b16 %v181
    %v214 = vunpack.c.l.b16 %v182
    %v215 = vunpack.c.l.b16 %v183
    %v216 = vunpack.c.l.b16 %v184
    %v217 = vunpack.c.l.b16 %v185
    %v218 = vunpack.c.l.b16 %v186
    %v219 = vpack.c.b16 %v204, %v203
    %v220 = vpack.c.b16 %v206, %v205
    %v221 = vpack.c.b16 %v208, %v207
    %v222 = vpack.c.b16 %v210, %v209
    %v223 = vpack.c.b16 %v212, %v211
    %v224 = vpack.c.b16 %v214, %v213
    %v225 = vpack.c.b16 %v216, %v215
    %v226 = vpack.c.b16 %v218, %v217
    %235 = vmatprep.subr.bf16.mxu0 0
    %236 = vmatpush1.bf16.msra.mxu0 %v226
    %237 = vmatprep.subr.bf16.mxu0 0
    %238 = vmatpush1.bf16.msra.mxu0 %v225
    %239 = vmatprep.subr.bf16.mxu0 0
    %240 = vmatpush1.bf16.msra.mxu0 %v224
    %241 = vmatprep.subr.bf16.mxu0 0
    %242 = vmatpush1.bf16.msra.mxu0 %v223
    %243 = vmatprep.subr.bf16.mxu0 0
    %244 = vmatpush1.bf16.msra.mxu0 %v222
    %245 = vmatprep.subr.bf16.mxu0 0
    %246 = vmatpush1.bf16.msra.mxu0 %v221
    %247 = vmatprep.subr.bf16.mxu0 0
    %248 = vmatpush1.bf16.msra.mxu0 %v220
    %249 = vmatprep.subr.bf16.mxu0 0
    %250 = vmatpush1.bf16.msra.mxu0 %v219
    %251 = vmatprep.subr.bf16.mxu0 0
    %252 = vmatpush2.bf16.msra.mxu0 0
    %253 = vmatprep.subr.bf16.mxu0 0
    %254 = vmatpush2.bf16.msra.mxu0 0
    %255 = vmatprep.subr.bf16.mxu0 0
    %256 = vmatpush2.bf16.msra.mxu0 0
    %257 = vmatprep.subr.bf16.mxu0 0
    %258 = vmatpush2.bf16.msra.mxu0 0
    %259 = vmatprep.subr.bf16.mxu0 0
    %260 = vmatpush2.bf16.msra.mxu0 0
    %261 = vmatprep.subr.bf16.mxu0 0
    %262 = vmatpush2.bf16.msra.mxu0 0
    %263 = vmatprep.subr.bf16.mxu0 0
    %264 = vmatpush2.bf16.msra.mxu0 0
    %265 = vmatprep.subr.bf16.mxu0 0
    %266 = vmatpush2.bf16.msra.mxu0 0
    %267 = vmatprep.mubr.bf16.mxu0 0
    %268 = vmatmul.mubr.bf16.gmra.mxu0 %v163
    %v269 = vpop.f32.mrf.mxu0
    %v270 = vadd.f32 0.0, %v269
    %v271 = vpop.f32.mrf.mxu0
    %v272 = vpop.f32.mrf.mxu0
    %v273 = vadd.f32 0.0, %v272
    %v274 = vpop.f32.mrf.mxu0
    %275 = vmatprep.mubr.bf16.mxu0 0
    %276 = vmatmul.mubr.bf16.gmra.mxu0 %v164
    %v277 = vpop.f32.mrf.mxu0
    %v278 = vadd.f32 0.0, %v277
    %v279 = vpop.f32.mrf.mxu0
    %v280 = vpop.f32.mrf.mxu0
    %v281 = vadd.f32 0.0, %v280
    %v282 = vpop.f32.mrf.mxu0
    %283 = vmatprep.mubr.bf16.mxu0 0
    %284 = vmatmul.mubr.bf16.gmra.mxu0 %v165
    %v285 = vpop.f32.mrf.mxu0
    %v286 = vadd.f32 0.0, %v285
    %v287 = vpop.f32.mrf.mxu0
    %v288 = vpop.f32.mrf.mxu0
    %v289 = vadd.f32 0.0, %v288
    %v290 = vpop.f32.mrf.mxu0
    %291 = vmatprep.mubr.bf16.mxu0 0
    %292 = vmatmul.mubr.bf16.gmra.mxu0 %v166
    %v293 = vpop.f32.mrf.mxu0
    %v294 = vadd.f32 0.0, %v293
    %v295 = vpop.f32.mrf.mxu0
    %v296 = vpop.f32.mrf.mxu0
    %v297 = vadd.f32 0.0, %v296
    %v298 = vpop.f32.mrf.mxu0
    %299 = vmatprep.mubr.bf16.mxu0 0
    %300 = vmatmul.mubr.bf16.gmra.mxu0 %v167
    %v301 = vpop.f32.mrf.mxu0
    %v302 = vadd.f32 0.0, %v301
    %v303 = vpop.f32.mrf.mxu0
    %v304 = vpop.f32.mrf.mxu0
    %v305 = vadd.f32 0.0, %v304
    %v306 = vpop.f32.mrf.mxu0
    %307 = vmatprep.mubr.bf16.mxu0 0
    %308 = vmatmul.mubr.bf16.gmra.mxu0 %v168
    %v309 = vpop.f32.mrf.mxu0
    %v310 = vadd.f32 0.0, %v309
    %v311 = vpop.f32.mrf.mxu0
    %v312 = vpop.f32.mrf.mxu0
    %v313 = vadd.f32 0.0, %v312
    %v314 = vpop.f32.mrf.mxu0
    %315 = vmatprep.mubr.bf16.mxu0 0
    %316 = vmatmul.mubr.bf16.gmra.mxu0 %v169
    %v317 = vpop.f32.mrf.mxu0
    %v318 = vadd.f32 0.0, %v317
    %v319 = vpop.f32.mrf.mxu0
    %v320 = vpop.f32.mrf.mxu0
    %v321 = vadd.f32 0.0, %v320
    %v322 = vpop.f32.mrf.mxu0
    %323 = vmatprep.mubr.bf16.mxu0 0
    %324 = vmatmul.mubr.bf16.gmra.mxu0 %v170
    %v325 = vpop.f32.mrf.mxu0
    %v326 = vadd.f32 0.0, %v325
    %v327 = vpop.f32.mrf.mxu0
    %v328 = vpop.f32.mrf.mxu0
    %v329 = vadd.f32 0.0, %v328
    %v330 = vpop.f32.mrf.mxu0
    %331 = vdwg.mxu0
    %v332 = vld [vmem:[#allocation2] sm:$0xff]
    %v333 = vld [vmem:[#allocation2 + $0x8] sm:$0xff]
    %v334 = vld [vmem:[#allocation2 + $0x10] sm:$0xff]
    %v335 = vld [vmem:[#allocation2 + $0x18] sm:$0xff]
    %v336 = vld [vmem:[#allocation2 + $0x20] sm:$0xff]
    %v337 = vld [vmem:[#allocation2 + $0x28] sm:$0xff]
    %v338 = vld [vmem:[#allocation2 + $0x30] sm:$0xff]
    %v339 = vld [vmem:[#allocation2 + $0x38] sm:$0xff]
    %v340 = vld [vmem:[#allocation2 + $0x40] sm:$0xff]
    %v341 = vld [vmem:[#allocation2 + $0x48] sm:$0xff]
    %v342 = vld [vmem:[#allocation2 + $0x50] sm:$0xff]
    %v343 = vld [vmem:[#allocation2 + $0x58] sm:$0xff]
    %v344 = vld [vmem:[#allocation2 + $0x60] sm:$0xff]
    %v345 = vld [vmem:[#allocation2 + $0x68] sm:$0xff]
    %v346 = vld [vmem:[#allocation2 + $0x70] sm:$0xff]
    %v347 = vld [vmem:[#allocation2 + $0x78] sm:$0xff]
    %v348 = vadd.f32 %v332, %v270
    %v349 = vadd.f32 %v333, %v273
    %v350 = vadd.f32 %v334, %v278
    %v351 = vadd.f32 %v335, %v281
    %v352 = vadd.f32 %v336, %v286
    %v353 = vadd.f32 %v337, %v289
    %v354 = vadd.f32 %v338, %v294
    %v355 = vadd.f32 %v339, %v297
    %v356 = vadd.f32 %v340, %v302
    %v357 = vadd.f32 %v341, %v305
    %v358 = vadd.f32 %v342, %v310
    %v359 = vadd.f32 %v343, %v313
    %v360 = vadd.f32 %v344, %v318
    %v361 = vadd.f32 %v345, %v321
    %v362 = vadd.f32 %v346, %v326
    %v363 = vadd.f32 %v347, %v329
    %364 = vst [vmem:[#allocation2] sm:$0xff] %v348
    %365 = vst [vmem:[#allocation2 + $0x8] sm:$0xff] %v349
    %366 = vst [vmem:[#allocation2 + $0x10] sm:$0xff] %v350
    %367 = vst [vmem:[#allocation2 + $0x18] sm:$0xff] %v351
    %368 = vst [vmem:[#allocation2 + $0x20] sm:$0xff] %v352
    %369 = vst [vmem:[#allocation2 + $0x28] sm:$0xff] %v353
    %370 = vst [vmem:[#allocation2 + $0x30] sm:$0xff] %v354
    %371 = vst [vmem:[#allocation2 + $0x38] sm:$0xff] %v355
    %372 = vst [vmem:[#allocation2 + $0x40] sm:$0xff] %v356
    %373 = vst [vmem:[#allocation2 + $0x48] sm:$0xff] %v357
    %374 = vst [vmem:[#allocation2 + $0x50] sm:$0xff] %v358
    %375 = vst [vmem:[#allocation2 + $0x58] sm:$0xff] %v359
    %376 = vst [vmem:[#allocation2 + $0x60] sm:$0xff] %v360
    %377 = vst [vmem:[#allocation2 + $0x68] sm:$0xff] %v361
    %378 = vst [vmem:[#allocation2 + $0x70] sm:$0xff] %v362
    %379 = vst [vmem:[#allocation2 + $0x78] sm:$0xff] %v363
    %v380 = vld [vmem:[%s0 + $0x2] sm:$0xff]
    %v381 = vld [vmem:[%s0 + $0x12] sm:$0xff]
    %v382 = vld [vmem:[%s0 + $0x22] sm:$0xff]
    %v383 = vld [vmem:[%s0 + $0x32] sm:$0xff]
    %v384 = vld [vmem:[%s0 + $0x42] sm:$0xff]
    %v385 = vld [vmem:[%s0 + $0x52] sm:$0xff]
    %v386 = vld [vmem:[%s0 + $0x62] sm:$0xff]
    %v387 = vld [vmem:[%s0 + $0x72] sm:$0xff]
    %v388 = vld [vmem:[%s0 + $0xc2] sm:$0xff]
    %v389 = vld [vmem:[%s0 + $0xd2] sm:$0xff]
    %v390 = vld [vmem:[%s0 + $0xe2] sm:$0xff]
    %v391 = vld [vmem:[%s0 + $0xf2] sm:$0xff]
    %v392 = vld [vmem:[%s0 + $0x102] sm:$0xff]
    %v393 = vld [vmem:[%s0 + $0x112] sm:$0xff]
    %v394 = vld [vmem:[%s0 + $0x122] sm:$0xff]
    %v395 = vld [vmem:[%s0 + $0x132] sm:$0xff]
    %v396 = vld [vmem:[%s0 + $0x3] sm:$0xff]
    %v397 = vld [vmem:[%s0 + $0x13] sm:$0xff]
    %v398 = vld [vmem:[%s0 + $0x23] sm:$0xff]
    %v399 = vld [vmem:[%s0 + $0x33] sm:$0xff]
    %v400 = vld [vmem:[%s0 + $0x43] sm:$0xff]
    %v401 = vld [vmem:[%s0 + $0x53] sm:$0xff]
    %v402 = vld [vmem:[%s0 + $0x63] sm:$0xff]
    %v403 = vld [vmem:[%s0 + $0x73] sm:$0xff]
    %v404 = vld [vmem:[%s0 + $0xc3] sm:$0xff]
    %v405 = vld [vmem:[%s0 + $0xd3] sm:$0xff]
    %v406 = vld [vmem:[%s0 + $0xe3] sm:$0xff]
    %v407 = vld [vmem:[%s0 + $0xf3] sm:$0xff]
    %v408 = vld [vmem:[%s0 + $0x103] sm:$0xff]
    %v409 = vld [vmem:[%s0 + $0x113] sm:$0xff]
    %v410 = vld [vmem:[%s0 + $0x123] sm:$0xff]
    %v411 = vld [vmem:[%s0 + $0x133] sm:$0xff]
    %428 = vrot.lane.b32.xlu0 %v396, 64
    %v429 = vpop.permute.xlu0 %428
    %430 = vrot.lane.b32.xlu0 %v397, 64
    %v431 = vpop.permute.xlu0 %430
    %432 = vrot.lane.b32.xlu0 %v398, 64
    %v433 = vpop.permute.xlu0 %432
    %434 = vrot.lane.b32.xlu0 %v399, 64
    %v435 = vpop.permute.xlu0 %434
    %436 = vrot.lane.b32.xlu0 %v400, 64
    %v437 = vpop.permute.xlu0 %436
    %438 = vrot.lane.b32.xlu0 %v401, 64
    %v439 = vpop.permute.xlu0 %438
    %440 = vrot.lane.b32.xlu0 %v402, 64
    %v441 = vpop.permute.xlu0 %440
    %442 = vrot.lane.b32.xlu0 %v403, 64
    %v443 = vpop.permute.xlu0 %442
    %444 = vrot.lane.b32.xlu0 %v404, 64
    %v445 = vpop.permute.xlu0 %444
    %446 = vrot.lane.b32.xlu0 %v405, 64
    %v447 = vpop.permute.xlu0 %446
    %448 = vrot.lane.b32.xlu0 %v406, 64
    %v449 = vpop.permute.xlu0 %448
    %450 = vrot.lane.b32.xlu0 %v407, 64
    %v451 = vpop.permute.xlu0 %450
    %452 = vrot.lane.b32.xlu0 %v408, 64
    %v453 = vpop.permute.xlu0 %452
    %454 = vrot.lane.b32.xlu0 %v409, 64
    %v455 = vpop.permute.xlu0 %454
    %456 = vrot.lane.b32.xlu0 %v410, 64
    %v457 = vpop.permute.xlu0 %456
    %458 = vrot.lane.b32.xlu0 %v411, 64
    %v459 = vpop.permute.xlu0 %458
    %v476 = vsel %vm146, %v380, %v429
    %v477 = vsel %vm146, %v381, %v431
    %v478 = vsel %vm146, %v382, %v433
    %v479 = vsel %vm146, %v383, %v435
    %v480 = vsel %vm146, %v384, %v437
    %v481 = vsel %vm146, %v385, %v439
    %v482 = vsel %vm146, %v386, %v441
    %v483 = vsel %vm146, %v387, %v443
    %v484 = vsel %vm146, %v388, %v445
    %v485 = vsel %vm146, %v389, %v447
    %v486 = vsel %vm146, %v390, %v449
    %v487 = vsel %vm146, %v391, %v451
    %v488 = vsel %vm146, %v392, %v453
    %v489 = vsel %vm146, %v393, %v455
    %v490 = vsel %vm146, %v394, %v457
    %v491 = vsel %vm146, %v395, %v459
    %v492 = vpack.c.bf16 %v477, %v476
    %v493 = vpack.c.bf16 %v479, %v478
    %v494 = vpack.c.bf16 %v481, %v480
    %v495 = vpack.c.bf16 %v483, %v482
    %v496 = vpack.c.bf16 %v485, %v484
    %v497 = vpack.c.bf16 %v487, %v486
    %v498 = vpack.c.bf16 %v489, %v488
    %v499 = vpack.c.bf16 %v491, %v490
    %v500 = vld [vmem:[%s1 + $0x40] sm:$0xf]
    %v501 = vld [vmem:[%s1 + $0x44] sm:$0xf]
    %v502 = vld [vmem:[%s1 + $0x48] sm:$0xf]
    %v503 = vld [vmem:[%s1 + $0x4c] sm:$0xf]
    %v504 = vld [vmem:[%s1 + $0x50] sm:$0xf]
    %v505 = vld [vmem:[%s1 + $0x54] sm:$0xf]
    %v506 = vld [vmem:[%s1 + $0x58] sm:$0xf]
    %v507 = vld [vmem:[%s1 + $0x5c] sm:$0xf]
    %v508 = vld [vmem:[%s1 + $0x60] sm:$0xf]
    %v509 = vld [vmem:[%s1 + $0x64] sm:$0xf]
    %v510 = vld [vmem:[%s1 + $0x68] sm:$0xf]
    %v511 = vld [vmem:[%s1 + $0x6c] sm:$0xf]
    %v512 = vld [vmem:[%s1 + $0x70] sm:$0xf]
    %v513 = vld [vmem:[%s1 + $0x74] sm:$0xf]
    %v514 = vld [vmem:[%s1 + $0x78] sm:$0xf]
    %v515 = vld [vmem:[%s1 + $0x7c] sm:$0xf]
    %v532 = vunpack.c.l.b16 %v500
    %v533 = vunpack.c.l.b16 %v501
    %v534 = vunpack.c.l.b16 %v502
    %v535 = vunpack.c.l.b16 %v503
    %v536 = vunpack.c.l.b16 %v504
    %v537 = vunpack.c.l.b16 %v505
    %v538 = vunpack.c.l.b16 %v506
    %v539 = vunpack.c.l.b16 %v507
    %v540 = vunpack.c.l.b16 %v508
    %v541 = vunpack.c.l.b16 %v509
    %v542 = vunpack.c.l.b16 %v510
    %v543 = vunpack.c.l.b16 %v511
    %v544 = vunpack.c.l.b16 %v512
    %v545 = vunpack.c.l.b16 %v513
    %v546 = vunpack.c.l.b16 %v514
    %v547 = vunpack.c.l.b16 %v515
    %v548 = vpack.c.b16 %v533, %v532
    %v549 = vpack.c.b16 %v535, %v534
    %v550 = vpack.c.b16 %v537, %v536
    %v551 = vpack.c.b16 %v539, %v538
    %v552 = vpack.c.b16 %v541, %v540
    %v553 = vpack.c.b16 %v543, %v542
    %v554 = vpack.c.b16 %v545, %v544
    %v555 = vpack.c.b16 %v547, %v546
    %564 = vmatprep.subr.bf16.mxu0 0
    %565 = vmatpush1.bf16.msra.mxu0 %v555
    %566 = vmatprep.subr.bf16.mxu0 0
    %567 = vmatpush1.bf16.msra.mxu0 %v554
    %568 = vmatprep.subr.bf16.mxu0 0
    %569 = vmatpush1.bf16.msra.mxu0 %v553
    %570 = vmatprep.subr.bf16.mxu0 0
    %571 = vmatpush1.bf16.msra.mxu0 %v552
    %572 = vmatprep.subr.bf16.mxu0 0
    %573 = vmatpush1.bf16.msra.mxu0 %v551
    %574 = vmatprep.subr.bf16.mxu0 0
    %575 = vmatpush1.bf16.msra.mxu0 %v550
    %576 = vmatprep.subr.bf16.mxu0 0
    %577 = vmatpush1.bf16.msra.mxu0 %v549
    %578 = vmatprep.subr.bf16.mxu0 0
    %579 = vmatpush1.bf16.msra.mxu0 %v548
    %580 = vmatprep.subr.bf16.mxu0 0
    %581 = vmatpush2.bf16.msra.mxu0 0
    %582 = vmatprep.subr.bf16.mxu0 0
    %583 = vmatpush2.bf16.msra.mxu0 0
    %584 = vmatprep.subr.bf16.mxu0 0
    %585 = vmatpush2.bf16.msra.mxu0 0
    %586 = vmatprep.subr.bf16.mxu0 0
    %587 = vmatpush2.bf16.msra.mxu0 0
    %588 = vmatprep.subr.bf16.mxu0 0
    %589 = vmatpush2.bf16.msra.mxu0 0
    %590 = vmatprep.subr.bf16.mxu0 0
    %591 = vmatpush2.bf16.msra.mxu0 0
    %592 = vmatprep.subr.bf16.mxu0 0
    %593 = vmatpush2.bf16.msra.mxu0 0
    %594 = vmatprep.subr.bf16.mxu0 0
    %595 = vmatpush2.bf16.msra.mxu0 0
    %596 = vmatprep.mubr.bf16.mxu0 0
    %597 = vmatmul.mubr.bf16.gmra.mxu0 %v492
    %v598 = vpop.f32.mrf.mxu0
    %v599 = vadd.f32 0.0, %v598
    %v600 = vpop.f32.mrf.mxu0
    %v601 = vpop.f32.mrf.mxu0
    %v602 = vadd.f32 0.0, %v601
    %v603 = vpop.f32.mrf.mxu0
    %604 = vmatprep.mubr.bf16.mxu0 0
    %605 = vmatmul.mubr.bf16.gmra.mxu0 %v493
    %v606 = vpop.f32.mrf.mxu0
    %v607 = vadd.f32 0.0, %v606
    %v608 = vpop.f32.mrf.mxu0
    %v609 = vpop.f32.mrf.mxu0
    %v610 = vadd.f32 0.0, %v609
    %v611 = vpop.f32.mrf.mxu0
    %612 = vmatprep.mubr.bf16.mxu0 0
    %613 = vmatmul.mubr.bf16.gmra.mxu0 %v494
    %v614 = vpop.f32.mrf.mxu0
    %v615 = vadd.f32 0.0, %v614
    %v616 = vpop.f32.mrf.mxu0
    %v617 = vpop.f32.mrf.mxu0
    %v618 = vadd.f32 0.0, %v617
    %v619 = vpop.f32.mrf.mxu0
    %620 = vmatprep.mubr.bf16.mxu0 0
    %621 = vmatmul.mubr.bf16.gmra.mxu0 %v495
    %v622 = vpop.f32.mrf.mxu0
    %v623 = vadd.f32 0.0, %v622
    %v624 = vpop.f32.mrf.mxu0
    %v625 = vpop.f32.mrf.mxu0
    %v626 = vadd.f32 0.0, %v625
    %v627 = vpop.f32.mrf.mxu0
    %628 = vmatprep.mubr.bf16.mxu0 0
    %629 = vmatmul.mubr.bf16.gmra.mxu0 %v496
    %v630 = vpop.f32.mrf.mxu0
    %v631 = vadd.f32 0.0, %v630
    %v632 = vpop.f32.mrf.mxu0
    %v633 = vpop.f32.mrf.mxu0
    %v634 = vadd.f32 0.0, %v633
    %v635 = vpop.f32.mrf.mxu0
    %636 = vmatprep.mubr.bf16.mxu0 0
    %637 = vmatmul.mubr.bf16.gmra.mxu0 %v497
    %v638 = vpop.f32.mrf.mxu0
    %v639 = vadd.f32 0.0, %v638
    %v640 = vpop.f32.mrf.mxu0
    %v641 = vpop.f32.mrf.mxu0
    %v642 = vadd.f32 0.0, %v641
    %v643 = vpop.f32.mrf.mxu0
    %644 = vmatprep.mubr.bf16.mxu0 0
    %645 = vmatmul.mubr.bf16.gmra.mxu0 %v498
    %v646 = vpop.f32.mrf.mxu0
    %v647 = vadd.f32 0.0, %v646
    %v648 = vpop.f32.mrf.mxu0
    %v649 = vpop.f32.mrf.mxu0
    %v650 = vadd.f32 0.0, %v649
    %v651 = vpop.f32.mrf.mxu0
    %652 = vmatprep.mubr.bf16.mxu0 0
    %653 = vmatmul.mubr.bf16.gmra.mxu0 %v499
    %v654 = vpop.f32.mrf.mxu0
    %v655 = vadd.f32 0.0, %v654
    %v656 = vpop.f32.mrf.mxu0
    %v657 = vpop.f32.mrf.mxu0
    %v658 = vadd.f32 0.0, %v657
    %v659 = vpop.f32.mrf.mxu0
    %660 = vdwg.mxu0
    %v661 = vld [vmem:[#allocation2] sm:$0xff]
    %v662 = vld [vmem:[#allocation2 + $0x8] sm:$0xff]
    %v663 = vld [vmem:[#allocation2 + $0x10] sm:$0xff]
    %v664 = vld [vmem:[#allocation2 + $0x18] sm:$0xff]
    %v665 = vld [vmem:[#allocation2 + $0x20] sm:$0xff]
    %v666 = vld [vmem:[#allocation2 + $0x28] sm:$0xff]
    %v667 = vld [vmem:[#allocation2 + $0x30] sm:$0xff]
    %v668 = vld [vmem:[#allocation2 + $0x38] sm:$0xff]
    %v669 = vld [vmem:[#allocation2 + $0x40] sm:$0xff]
    %v670 = vld [vmem:[#allocation2 + $0x48] sm:$0xff]
    %v671 = vld [vmem:[#allocation2 + $0x50] sm:$0xff]
    %v672 = vld [vmem:[#allocation2 + $0x58] sm:$0xff]
    %v673 = vld [vmem:[#allocation2 + $0x60] sm:$0xff]
    %v674 = vld [vmem:[#allocation2 + $0x68] sm:$0xff]
    %v675 = vld [vmem:[#allocation2 + $0x70] sm:$0xff]
    %v676 = vld [vmem:[#allocation2 + $0x78] sm:$0xff]
    %v677 = vadd.f32 %v661, %v599
    %v678 = vadd.f32 %v662, %v602
    %v679 = vadd.f32 %v663, %v607
    %v680 = vadd.f32 %v664, %v610
    %v681 = vadd.f32 %v665, %v615
    %v682 = vadd.f32 %v666, %v618
    %v683 = vadd.f32 %v667, %v623
    %v684 = vadd.f32 %v668, %v626
    %v685 = vadd.f32 %v669, %v631
    %v686 = vadd.f32 %v670, %v634
    %v687 = vadd.f32 %v671, %v639
    %v688 = vadd.f32 %v672, %v642
    %v689 = vadd.f32 %v673, %v647
    %v690 = vadd.f32 %v674, %v650
    %v691 = vadd.f32 %v675, %v655
    %v692 = vadd.f32 %v676, %v658
    %693 = vst [vmem:[#allocation2] sm:$0xff] %v677
    %694 = vst [vmem:[#allocation2 + $0x8] sm:$0xff] %v678
    %695 = vst [vmem:[#allocation2 + $0x10] sm:$0xff] %v679
    %696 = vst [vmem:[#allocation2 + $0x18] sm:$0xff] %v680
    %697 = vst [vmem:[#allocation2 + $0x20] sm:$0xff] %v681
    %698 = vst [vmem:[#allocation2 + $0x28] sm:$0xff] %v682
    %699 = vst [vmem:[#allocation2 + $0x30] sm:$0xff] %v683
    %700 = vst [vmem:[#allocation2 + $0x38] sm:$0xff] %v684
    %701 = vst [vmem:[#allocation2 + $0x40] sm:$0xff] %v685
    %702 = vst [vmem:[#allocation2 + $0x48] sm:$0xff] %v686
    %703 = vst [vmem:[#allocation2 + $0x50] sm:$0xff] %v687
    %704 = vst [vmem:[#allocation2 + $0x58] sm:$0xff] %v688
    %705 = vst [vmem:[#allocation2 + $0x60] sm:$0xff] %v689
    %706 = vst [vmem:[#allocation2 + $0x68] sm:$0xff] %v690
    %707 = vst [vmem:[#allocation2 + $0x70] sm:$0xff] %v691
    %708 = vst [vmem:[#allocation2 + $0x78] sm:$0xff] %v692
    %v709 = vld [vmem:[%s0 + $0x4] sm:$0xff]
    %v710 = vld [vmem:[%s0 + $0x14] sm:$0xff]
    %v711 = vld [vmem:[%s0 + $0x24] sm:$0xff]
    %v712 = vld [vmem:[%s0 + $0x34] sm:$0xff]
    %v713 = vld [vmem:[%s0 + $0x44] sm:$0xff]
    %v714 = vld [vmem:[%s0 + $0x54] sm:$0xff]
    %v715 = vld [vmem:[%s0 + $0x64] sm:$0xff]
    %v716 = vld [vmem:[%s0 + $0x74] sm:$0xff]
    %v717 = vld [vmem:[%s0 + $0xc4] sm:$0xff]
    %v718 = vld [vmem:[%s0 + $0xd4] sm:$0xff]
    %v719 = vld [vmem:[%s0 + $0xe4] sm:$0xff]
    %v720 = vld [vmem:[%s0 + $0xf4] sm:$0xff]
    %v721 = vld [vmem:[%s0 + $0x104] sm:$0xff]
    %v722 = vld [vmem:[%s0 + $0x114] sm:$0xff]
    %v723 = vld [vmem:[%s0 + $0x124] sm:$0xff]
    %v724 = vld [vmem:[%s0 + $0x134] sm:$0xff]
    %s725 = scalar_lea.vmem %s0, 16
    %v726 = vld [vmem:[%s725] sm:$0xff]
    %v727 = vld [vmem:[%s725 + $0x10] sm:$0xff]
    %v728 = vld [vmem:[%s725 + $0x20] sm:$0xff]
    %v729 = vld [vmem:[%s725 + $0x30] sm:$0xff]
    %v730 = vld [vmem:[%s725 + $0x40] sm:$0xff]
    %v731 = vld [vmem:[%s725 + $0x50] sm:$0xff]
    %v732 = vld [vmem:[%s725 + $0x60] sm:$0xff]
    %v733 = vld [vmem:[%s725 + $0x70] sm:$0xff]
    %v734 = vld [vmem:[%s725 + $0xc0] sm:$0xff]
    %v735 = vld [vmem:[%s725 + $0xd0] sm:$0xff]
    %v736 = vld [vmem:[%s725 + $0xe0] sm:$0xff]
    %v737 = vld [vmem:[%s725 + $0xf0] sm:$0xff]
    %v738 = vld [vmem:[%s725 + $0x100] sm:$0xff]
    %v739 = vld [vmem:[%s725 + $0x110] sm:$0xff]
    %v740 = vld [vmem:[%s725 + $0x120] sm:$0xff]
    %v741 = vld [vmem:[%s725 + $0x130] sm:$0xff]
    %758 = vrot.lane.b32.xlu0 %v726, 64
    %v759 = vpop.permute.xlu0 %758
    %760 = vrot.lane.b32.xlu0 %v727, 64
    %v761 = vpop.permute.xlu0 %760
    %762 = vrot.lane.b32.xlu0 %v728, 64
    %v763 = vpop.permute.xlu0 %762
    %764 = vrot.lane.b32.xlu0 %v729, 64
    %v765 = vpop.permute.xlu0 %764
    %766 = vrot.lane.b32.xlu0 %v730, 64
    %v767 = vpop.permute.xlu0 %766
    %768 = vrot.lane.b32.xlu0 %v731, 64
    %v769 = vpop.permute.xlu0 %768
    %770 = vrot.lane.b32.xlu0 %v732, 64
    %v771 = vpop.permute.xlu0 %770
    %772 = vrot.lane.b32.xlu0 %v733, 64
    %v773 = vpop.permute.xlu0 %772
    %774 = vrot.lane.b32.xlu0 %v734, 64
    %v775 = vpop.permute.xlu0 %774
    %776 = vrot.lane.b32.xlu0 %v735, 64
    %v777 = vpop.permute.xlu0 %776
    %778 = vrot.lane.b32.xlu0 %v736, 64
    %v779 = vpop.permute.xlu0 %778
    %780 = vrot.lane.b32.xlu0 %v737, 64
    %v781 = vpop.permute.xlu0 %780
    %782 = vrot.lane.b32.xlu0 %v738, 64
    %v783 = vpop.permute.xlu0 %782
    %784 = vrot.lane.b32.xlu0 %v739, 64
    %v785 = vpop.permute.xlu0 %784
    %786 = vrot.lane.b32.xlu0 %v740, 64
    %v787 = vpop.permute.xlu0 %786
    %788 = vrot.lane.b32.xlu0 %v741, 64
    %v789 = vpop.permute.xlu0 %788
    %v806 = vsel %vm146, %v709, %v759
    %v807 = vsel %vm146, %v710, %v761
    %v808 = vsel %vm146, %v711, %v763
    %v809 = vsel %vm146, %v712, %v765
    %v810 = vsel %vm146, %v713, %v767
    %v811 = vsel %vm146, %v714, %v769
    %v812 = vsel %vm146, %v715, %v771
    %v813 = vsel %vm146, %v716, %v773
    %v814 = vsel %vm146, %v717, %v775
    %v815 = vsel %vm146, %v718, %v777
    %v816 = vsel %vm146, %v719, %v779
    %v817 = vsel %vm146, %v720, %v781
    %v818 = vsel %vm146, %v721, %v783
    %v819 = vsel %vm146, %v722, %v785
    %v820 = vsel %vm146, %v723, %v787
    %v821 = vsel %vm146, %v724, %v789
    %v822 = vpack.c.bf16 %v807, %v806
    %v823 = vpack.c.bf16 %v809, %v808
    %v824 = vpack.c.bf16 %v811, %v810
    %v825 = vpack.c.bf16 %v813, %v812
    %v826 = vpack.c.bf16 %v815, %v814
    %v827 = vpack.c.bf16 %v817, %v816
    %v828 = vpack.c.bf16 %v819, %v818
    %v829 = vpack.c.bf16 %v821, %v820
    %v830 = vld [vmem:[%s1 + $0x80] sm:$0xf]
    %v831 = vld [vmem:[%s1 + $0x84] sm:$0xf]
    %v832 = vld [vmem:[%s1 + $0x88] sm:$0xf]
    %v833 = vld [vmem:[%s1 + $0x8c] sm:$0xf]
    %v834 = vld [vmem:[%s1 + $0x90] sm:$0xf]
    %v835 = vld [vmem:[%s1 + $0x94] sm:$0xf]
    %v836 = vld [vmem:[%s1 + $0x98] sm:$0xf]
    %v837 = vld [vmem:[%s1 + $0x9c] sm:$0xf]
    %v838 = vld [vmem:[%s1 + $0xa0] sm:$0xf]
    %v839 = vld [vmem:[%s1 + $0xa4] sm:$0xf]
    %v840 = vld [vmem:[%s1 + $0xa8] sm:$0xf]
    %v841 = vld [vmem:[%s1 + $0xac] sm:$0xf]
    %v842 = vld [vmem:[%s1 + $0xb0] sm:$0xf]
    %v843 = vld [vmem:[%s1 + $0xb4] sm:$0xf]
    %v844 = vld [vmem:[%s1 + $0xb8] sm:$0xf]
    %v845 = vld [vmem:[%s1 + $0xbc] sm:$0xf]
    %v862 = vunpack.c.l.b16 %v830
    %v863 = vunpack.c.l.b16 %v831
    %v864 = vunpack.c.l.b16 %v832
    %v865 = vunpack.c.l.b16 %v833
    %v866 = vunpack.c.l.b16 %v834
    %v867 = vunpack.c.l.b16 %v835
    %v868 = vunpack.c.l.b16 %v836
    %v869 = vunpack.c.l.b16 %v837
    %v870 = vunpack.c.l.b16 %v838
    %v871 = vunpack.c.l.b16 %v839
    %v872 = vunpack.c.l.b16 %v840
    %v873 = vunpack.c.l.b16 %v841
    %v874 = vunpack.c.l.b16 %v842
    %v875 = vunpack.c.l.b16 %v843
    %v876 = vunpack.c.l.b16 %v844
    %v877 = vunpack.c.l.b16 %v845
    %v878 = vpack.c.b16 %v863, %v862
    %v879 = vpack.c.b16 %v865, %v864
    %v880 = vpack.c.b16 %v867, %v866
    %v881 = vpack.c.b16 %v869, %v868
    %v882 = vpack.c.b16 %v871, %v870
    %v883 = vpack.c.b16 %v873, %v872
    %v884 = vpack.c.b16 %v875, %v874
    %v885 = vpack.c.b16 %v877, %v876
    %894 = vmatprep.subr.bf16.mxu0 0
    %895 = vmatpush1.bf16.msra.mxu0 %v885
    %896 = vmatprep.subr.bf16.mxu0 0
    %897 = vmatpush1.bf16.msra.mxu0 %v884
    %898 = vmatprep.subr.bf16.mxu0 0
    %899 = vmatpush1.bf16.msra.mxu0 %v883
    %900 = vmatprep.subr.bf16.mxu0 0
    %901 = vmatpush1.bf16.msra.mxu0 %v882
    %902 = vmatprep.subr.bf16.mxu0 0
    %903 = vmatpush1.bf16.msra.mxu0 %v881
    %904 = vmatprep.subr.bf16.mxu0 0
    %905 = vmatpush1.bf16.msra.mxu0 %v880
    %906 = vmatprep.subr.bf16.mxu0 0
    %907 = vmatpush1.bf16.msra.mxu0 %v879
    %908 = vmatprep.subr.bf16.mxu0 0
    %909 = vmatpush1.bf16.msra.mxu0 %v878
    %910 = vmatprep.subr.bf16.mxu0 0
    %911 = vmatpush2.bf16.msra.mxu0 0
    %912 = vmatprep.subr.bf16.mxu0 0
    %913 = vmatpush2.bf16.msra.mxu0 0
    %914 = vmatprep.subr.bf16.mxu0 0
    %915 = vmatpush2.bf16.msra.mxu0 0
    %916 = vmatprep.subr.bf16.mxu0 0
    %917 = vmatpush2.bf16.msra.mxu0 0
    %918 = vmatprep.subr.bf16.mxu0 0
    %919 = vmatpush2.bf16.msra.mxu0 0
    %920 = vmatprep.subr.bf16.mxu0 0
    %921 = vmatpush2.bf16.msra.mxu0 0
    %922 = vmatprep.subr.bf16.mxu0 0
    %923 = vmatpush2.bf16.msra.mxu0 0
    %924 = vmatprep.subr.bf16.mxu0 0
    %925 = vmatpush2.bf16.msra.mxu0 0
    %926 = vmatprep.mubr.bf16.mxu0 0
    %927 = vmatmul.mubr.bf16.gmra.mxu0 %v822
    %v928 = vpop.f32.mrf.mxu0
    %v929 = vadd.f32 0.0, %v928
    %v930 = vpop.f32.mrf.mxu0
    %v931 = vpop.f32.mrf.mxu0
    %v932 = vadd.f32 0.0, %v931
    %v933 = vpop.f32.mrf.mxu0
    %934 = vmatprep.mubr.bf16.mxu0 0
    %935 = vmatmul.mubr.bf16.gmra.mxu0 %v823
    %v936 = vpop.f32.mrf.mxu0
    %v937 = vadd.f32 0.0, %v936
    %v938 = vpop.f32.mrf.mxu0
    %v939 = vpop.f32.mrf.mxu0
    %v940 = vadd.f32 0.0, %v939
    %v941 = vpop.f32.mrf.mxu0
    %942 = vmatprep.mubr.bf16.mxu0 0
    %943 = vmatmul.mubr.bf16.gmra.mxu0 %v824
    %v944 = vpop.f32.mrf.mxu0
    %v945 = vadd.f32 0.0, %v944
    %v946 = vpop.f32.mrf.mxu0
    %v947 = vpop.f32.mrf.mxu0
    %v948 = vadd.f32 0.0, %v947
    %v949 = vpop.f32.mrf.mxu0
    %950 = vmatprep.mubr.bf16.mxu0 0
    %951 = vmatmul.mubr.bf16.gmra.mxu0 %v825
    %v952 = vpop.f32.mrf.mxu0
    %v953 = vadd.f32 0.0, %v952
    %v954 = vpop.f32.mrf.mxu0
    %v955 = vpop.f32.mrf.mxu0
    %v956 = vadd.f32 0.0, %v955
    %v957 = vpop.f32.mrf.mxu0
    %958 = vmatprep.mubr.bf16.mxu0 0
    %959 = vmatmul.mubr.bf16.gmra.mxu0 %v826
    %v960 = vpop.f32.mrf.mxu0
    %v961 = vadd.f32 0.0, %v960
    %v962 = vpop.f32.mrf.mxu0
    %v963 = vpop.f32.mrf.mxu0
    %v964 = vadd.f32 0.0, %v963
    %v965 = vpop.f32.mrf.mxu0
    %966 = vmatprep.mubr.bf16.mxu0 0
    %967 = vmatmul.mubr.bf16.gmra.mxu0 %v827
    %v968 = vpop.f32.mrf.mxu0
    %v969 = vadd.f32 0.0, %v968
    %v970 = vpop.f32.mrf.mxu0
    %v971 = vpop.f32.mrf.mxu0
    %v972 = vadd.f32 0.0, %v971
    %v973 = vpop.f32.mrf.mxu0
    %974 = vmatprep.mubr.bf16.mxu0 0
    %975 = vmatmul.mubr.bf16.gmra.mxu0 %v828
    %v976 = vpop.f32.mrf.mxu0
    %v977 = vadd.f32 0.0, %v976
    %v978 = vpop.f32.mrf.mxu0
    %v979 = vpop.f32.mrf.mxu0
    %v980 = vadd.f32 0.0, %v979
    %v981 = vpop.f32.mrf.mxu0
    %982 = vmatprep.mubr.bf16.mxu0 0
    %983 = vmatmul.mubr.bf16.gmra.mxu0 %v829
    %v984 = vpop.f32.mrf.mxu0
    %v985 = vadd.f32 0.0, %v984
    %v986 = vpop.f32.mrf.mxu0
    %v987 = vpop.f32.mrf.mxu0
    %v988 = vadd.f32 0.0, %v987
    %v989 = vpop.f32.mrf.mxu0
    %990 = vdwg.mxu0
    %v991 = vld [vmem:[#allocation2] sm:$0xff]
    %v992 = vld [vmem:[#allocation2 + $0x8] sm:$0xff]
    %v993 = vld [vmem:[#allocation2 + $0x10] sm:$0xff]
    %v994 = vld [vmem:[#allocation2 + $0x18] sm:$0xff]
    %v995 = vld [vmem:[#allocation2 + $0x20] sm:$0xff]
    %v996 = vld [vmem:[#allocation2 + $0x28] sm:$0xff]
    %v997 = vld [vmem:[#allocation2 + $0x30] sm:$0xff]
    %v998 = vld [vmem:[#allocation2 + $0x38] sm:$0xff]
    %v999 = vld [vmem:[#allocation2 + $0x40] sm:$0xff]
    %v1000 = vld [vmem:[#allocation2 + $0x48] sm:$0xff]
    %v1001 = vld [vmem:[#allocation2 + $0x50] sm:$0xff]
    %v1002 = vld [vmem:[#allocation2 + $0x58] sm:$0xff]
    %v1003 = vld [vmem:[#allocation2 + $0x60] sm:$0xff]
    %v1004 = vld [vmem:[#allocation2 + $0x68] sm:$0xff]
    %v1005 = vld [vmem:[#allocation2 + $0x70] sm:$0xff]
    %v1006 = vld [vmem:[#allocation2 + $0x78] sm:$0xff]
    %v1007 = vadd.f32 %v991, %v929
    %v1008 = vadd.f32 %v992, %v932
    %v1009 = vadd.f32 %v993, %v937
    %v1010 = vadd.f32 %v994, %v940
    %v1011 = vadd.f32 %v995, %v945
    %v1012 = vadd.f32 %v996, %v948
    %v1013 = vadd.f32 %v997, %v953
    %v1014 = vadd.f32 %v998, %v956
    %v1015 = vadd.f32 %v999, %v961
    %v1016 = vadd.f32 %v1000, %v964
    %v1017 = vadd.f32 %v1001, %v969
    %v1018 = vadd.f32 %v1002, %v972
    %v1019 = vadd.f32 %v1003, %v977
    %v1020 = vadd.f32 %v1004, %v980
    %v1021 = vadd.f32 %v1005, %v985
    %v1022 = vadd.f32 %v1006, %v988
    %1023 = vst [vmem:[#allocation2] sm:$0xff] %v1007
    %1024 = vst [vmem:[#allocation2 + $0x8] sm:$0xff] %v1008
    %1025 = vst [vmem:[#allocation2 + $0x10] sm:$0xff] %v1009
    %1026 = vst [vmem:[#allocation2 + $0x18] sm:$0xff] %v1010
    %1027 = vst [vmem:[#allocation2 + $0x20] sm:$0xff] %v1011
    %1028 = vst [vmem:[#allocation2 + $0x28] sm:$0xff] %v1012
    %1029 = vst [vmem:[#allocation2 + $0x30] sm:$0xff] %v1013
    %1030 = vst [vmem:[#allocation2 + $0x38] sm:$0xff] %v1014
    %1031 = vst [vmem:[#allocation2 + $0x40] sm:$0xff] %v1015
    %1032 = vst [vmem:[#allocation2 + $0x48] sm:$0xff] %v1016
    %1033 = vst [vmem:[#allocation2 + $0x50] sm:$0xff] %v1017
    %1034 = vst [vmem:[#allocation2 + $0x58] sm:$0xff] %v1018
    %1035 = vst [vmem:[#allocation2 + $0x60] sm:$0xff] %v1019
    %1036 = vst [vmem:[#allocation2 + $0x68] sm:$0xff] %v1020
    %1037 = vst [vmem:[#allocation2 + $0x70] sm:$0xff] %v1021
    %1038 = vst [vmem:[#allocation2 + $0x78] sm:$0xff] %v1022
    %v1039 = vld [vmem:[%s725 + $0x1] sm:$0xff]
    %v1040 = vld [vmem:[%s725 + $0x11] sm:$0xff]
    %v1041 = vld [vmem:[%s725 + $0x21] sm:$0xff]
    %v1042 = vld [vmem:[%s725 + $0x31] sm:$0xff]
    %v1043 = vld [vmem:[%s725 + $0x41] sm:$0xff]
    %v1044 = vld [vmem:[%s725 + $0x51] sm:$0xff]
    %v1045 = vld [vmem:[%s725 + $0x61] sm:$0xff]
    %v1046 = vld [vmem:[%s725 + $0x71] sm:$0xff]
    %v1047 = vld [vmem:[%s725 + $0xc1] sm:$0xff]
    %v1048 = vld [vmem:[%s725 + $0xd1] sm:$0xff]
    %v1049 = vld [vmem:[%s725 + $0xe1] sm:$0xff]
    %v1050 = vld [vmem:[%s725 + $0xf1] sm:$0xff]
    %v1051 = vld [vmem:[%s725 + $0x101] sm:$0xff]
    %v1052 = vld [vmem:[%s725 + $0x111] sm:$0xff]
    %v1053 = vld [vmem:[%s725 + $0x121] sm:$0xff]
    %v1054 = vld [vmem:[%s725 + $0x131] sm:$0xff]
    %v1055 = vld [vmem:[%s725 + $0x2] sm:$0xff]
    %v1056 = vld [vmem:[%s725 + $0x12] sm:$0xff]
    %v1057 = vld [vmem:[%s725 + $0x22] sm:$0xff]
    %v1058 = vld [vmem:[%s725 + $0x32] sm:$0xff]
    %v1059 = vld [vmem:[%s725 + $0x42] sm:$0xff]
    %v1060 = vld [vmem:[%s725 + $0x52] sm:$0xff]
    %v1061 = vld [vmem:[%s725 + $0x62] sm:$0xff]
    %v1062 = vld [vmem:[%s725 + $0x72] sm:$0xff]
    %v1063 = vld [vmem:[%s725 + $0xc2] sm:$0xff]
    %v1064 = vld [vmem:[%s725 + $0xd2] sm:$0xff]
    %v1065 = vld [vmem:[%s725 + $0xe2] sm:$0xff]
    %v1066 = vld [vmem:[%s725 + $0xf2] sm:$0xff]
    %v1067 = vld [vmem:[%s725 + $0x102] sm:$0xff]
    %v1068 = vld [vmem:[%s725 + $0x112] sm:$0xff]
    %v1069 = vld [vmem:[%s725 + $0x122] sm:$0xff]
    %v1070 = vld [vmem:[%s725 + $0x132] sm:$0xff]
    %1087 = vrot.lane.b32.xlu0 %v1055, 64
    %v1088 = vpop.permute.xlu0 %1087
    %1089 = vrot.lane.b32.xlu0 %v1056, 64
    %v1090 = vpop.permute.xlu0 %1089
    %1091 = vrot.lane.b32.xlu0 %v1057, 64
    %v1092 = vpop.permute.xlu0 %1091
    %1093 = vrot.lane.b32.xlu0 %v1058, 64
    %v1094 = vpop.permute.xlu0 %1093
    %1095 = vrot.lane.b32.xlu0 %v1059, 64
    %v1096 = vpop.permute.xlu0 %1095
    %1097 = vrot.lane.b32.xlu0 %v1060, 64
    %v1098 = vpop.permute.xlu0 %1097
    %1099 = vrot.lane.b32.xlu0 %v1061, 64
    %v1100 = vpop.permute.xlu0 %1099
    %1101 = vrot.lane.b32.xlu0 %v1062, 64
    %v1102 = vpop.permute.xlu0 %1101
    %1103 = vrot.lane.b32.xlu0 %v1063, 64
    %v1104 = vpop.permute.xlu0 %1103
    %1105 = vrot.lane.b32.xlu0 %v1064, 64
    %v1106 = vpop.permute.xlu0 %1105
    %1107 = vrot.lane.b32.xlu0 %v1065, 64
    %v1108 = vpop.permute.xlu0 %1107
    %1109 = vrot.lane.b32.xlu0 %v1066, 64
    %v1110 = vpop.permute.xlu0 %1109
    %1111 = vrot.lane.b32.xlu0 %v1067, 64
    %v1112 = vpop.permute.xlu0 %1111
    %1113 = vrot.lane.b32.xlu0 %v1068, 64
    %v1114 = vpop.permute.xlu0 %1113
    %1115 = vrot.lane.b32.xlu0 %v1069, 64
    %v1116 = vpop.permute.xlu0 %1115
    %1117 = vrot.lane.b32.xlu0 %v1070, 64
    %v1118 = vpop.permute.xlu0 %1117
    %v1135 = vsel %vm146, %v1039, %v1088
    %v1136 = vsel %vm146, %v1040, %v1090
    %v1137 = vsel %vm146, %v1041, %v1092
    %v1138 = vsel %vm146, %v1042, %v1094
    %v1139 = vsel %vm146, %v1043, %v1096
    %v1140 = vsel %vm146, %v1044, %v1098
    %v1141 = vsel %vm146, %v1045, %v1100
    %v1142 = vsel %vm146, %v1046, %v1102
    %v1143 = vsel %vm146, %v1047, %v1104
    %v1144 = vsel %vm146, %v1048, %v1106
    %v1145 = vsel %vm146, %v1049, %v1108
    %v1146 = vsel %vm146, %v1050, %v1110
    %v1147 = vsel %vm146, %v1051, %v1112
    %v1148 = vsel %vm146, %v1052, %v1114
    %v1149 = vsel %vm146, %v1053, %v1116
    %v1150 = vsel %vm146, %v1054, %v1118
    %v1151 = vpack.c.bf16 %v1136, %v1135
    %v1152 = vpack.c.bf16 %v1138, %v1137
    %v1153 = vpack.c.bf16 %v1140, %v1139
    %v1154 = vpack.c.bf16 %v1142, %v1141
    %v1155 = vpack.c.bf16 %v1144, %v1143
    %v1156 = vpack.c.bf16 %v1146, %v1145
    %v1157 = vpack.c.bf16 %v1148, %v1147
    %v1158 = vpack.c.bf16 %v1150, %v1149
    %v1159 = vld [vmem:[%s1 + $0xc0] sm:$0xf]
    %v1160 = vld [vmem:[%s1 + $0xc4] sm:$0xf]
    %v1161 = vld [vmem:[%s1 + $0xc8] sm:$0xf]
    %v1162 = vld [vmem:[%s1 + $0xcc] sm:$0xf]
    %v1163 = vld [vmem:[%s1 + $0xd0] sm:$0xf]
    %v1164 = vld [vmem:[%s1 + $0xd4] sm:$0xf]
    %v1165 = vld [vmem:[%s1 + $0xd8] sm:$0xf]
    %v1166 = vld [vmem:[%s1 + $0xdc] sm:$0xf]
    %v1167 = vld [vmem:[%s1 + $0xe0] sm:$0xf]
    %v1168 = vld [vmem:[%s1 + $0xe4] sm:$0xf]
    %v1169 = vld [vmem:[%s1 + $0xe8] sm:$0xf]
    %v1170 = vld [vmem:[%s1 + $0xec] sm:$0xf]
    %v1171 = vld [vmem:[%s1 + $0xf0] sm:$0xf]
    %v1172 = vld [vmem:[%s1 + $0xf4] sm:$0xf]
    %v1173 = vld [vmem:[%s1 + $0xf8] sm:$0xf]
    %v1174 = vld [vmem:[%s1 + $0xfc] sm:$0xf]
    %v1191 = vunpack.c.l.b16 %v1159
    %v1192 = vunpack.c.l.b16 %v1160
    %v1193 = vunpack.c.l.b16 %v1161
    %v1194 = vunpack.c.l.b16 %v1162
    %v1195 = vunpack.c.l.b16 %v1163
    %v1196 = vunpack.c.l.b16 %v1164
    %v1197 = vunpack.c.l.b16 %v1165
    %v1198 = vunpack.c.l.b16 %v1166
    %v1199 = vunpack.c.l.b16 %v1167
    %v1200 = vunpack.c.l.b16 %v1168
    %v1201 = vunpack.c.l.b16 %v1169
    %v1202 = vunpack.c.l.b16 %v1170
    %v1203 = vunpack.c.l.b16 %v1171
    %v1204 = vunpack.c.l.b16 %v1172
    %v1205 = vunpack.c.l.b16 %v1173
    %v1206 = vunpack.c.l.b16 %v1174
    %v1207 = vpack.c.b16 %v1192, %v1191
    %v1208 = vpack.c.b16 %v1194, %v1193
    %v1209 = vpack.c.b16 %v1196, %v1195
    %v1210 = vpack.c.b16 %v1198, %v1197
    %v1211 = vpack.c.b16 %v1200, %v1199
    %v1212 = vpack.c.b16 %v1202, %v1201
    %v1213 = vpack.c.b16 %v1204, %v1203
    %v1214 = vpack.c.b16 %v1206, %v1205
    %1223 = vmatprep.subr.bf16.mxu0 0
    %1224 = vmatpush1.bf16.msra.mxu0 %v1214
    %1225 = vmatprep.subr.bf16.mxu0 0
    %1226 = vmatpush1.bf16.msra.mxu0 %v1213
    %1227 = vmatprep.subr.bf16.mxu0 0
    %1228 = vmatpush1.bf16.msra.mxu0 %v1212
    %1229 = vmatprep.subr.bf16.mxu0 0
    %1230 = vmatpush1.bf16.msra.mxu0 %v1211
    %1231 = vmatprep.subr.bf16.mxu0 0
    %1232 = vmatpush1.bf16.msra.mxu0 %v1210
    %1233 = vmatprep.subr.bf16.mxu0 0
    %1234 = vmatpush1.bf16.msra.mxu0 %v1209
    %1235 = vmatprep.subr.bf16.mxu0 0
    %1236 = vmatpush1.bf16.msra.mxu0 %v1208
    %1237 = vmatprep.subr.bf16.mxu0 0
    %1238 = vmatpush1.bf16.msra.mxu0 %v1207
    %1239 = vmatprep.subr.bf16.mxu0 0
    %1240 = vmatpush2.bf16.msra.mxu0 0
    %1241 = vmatprep.subr.bf16.mxu0 0
    %1242 = vmatpush2.bf16.msra.mxu0 0
    %1243 = vmatprep.subr.bf16.mxu0 0
    %1244 = vmatpush2.bf16.msra.mxu0 0
    %1245 = vmatprep.subr.bf16.mxu0 0
    %1246 = vmatpush2.bf16.msra.mxu0 0
    %1247 = vmatprep.subr.bf16.mxu0 0
    %1248 = vmatpush2.bf16.msra.mxu0 0
    %1249 = vmatprep.subr.bf16.mxu0 0
    %1250 = vmatpush2.bf16.msra.mxu0 0
    %1251 = vmatprep.subr.bf16.mxu0 0
    %1252 = vmatpush2.bf16.msra.mxu0 0
    %1253 = vmatprep.subr.bf16.mxu0 0
    %1254 = vmatpush2.bf16.msra.mxu0 0
    %1255 = vmatprep.mubr.bf16.mxu0 0
    %1256 = vmatmul.mubr.bf16.gmra.mxu0 %v1151
    %v1257 = vpop.f32.mrf.mxu0
    %v1258 = vadd.f32 0.0, %v1257
    %v1259 = vpop.f32.mrf.mxu0
    %v1260 = vpop.f32.mrf.mxu0
    %v1261 = vadd.f32 0.0, %v1260
    %v1262 = vpop.f32.mrf.mxu0
    %1263 = vmatprep.mubr.bf16.mxu0 0
    %1264 = vmatmul.mubr.bf16.gmra.mxu0 %v1152
    %v1265 = vpop.f32.mrf.mxu0
    %v1266 = vadd.f32 0.0, %v1265
    %v1267 = vpop.f32.mrf.mxu0
    %v1268 = vpop.f32.mrf.mxu0
    %v1269 = vadd.f32 0.0, %v1268
    %v1270 = vpop.f32.mrf.mxu0
    %1271 = vmatprep.mubr.bf16.mxu0 0
    %1272 = vmatmul.mubr.bf16.gmra.mxu0 %v1153
    %v1273 = vpop.f32.mrf.mxu0
    %v1274 = vadd.f32 0.0, %v1273
    %v1275 = vpop.f32.mrf.mxu0
    %v1276 = vpop.f32.mrf.mxu0
    %v1277 = vadd.f32 0.0, %v1276
    %v1278 = vpop.f32.mrf.mxu0
    %1279 = vmatprep.mubr.bf16.mxu0 0
    %1280 = vmatmul.mubr.bf16.gmra.mxu0 %v1154
    %v1281 = vpop.f32.mrf.mxu0
    %v1282 = vadd.f32 0.0, %v1281
    %v1283 = vpop.f32.mrf.mxu0
    %v1284 = vpop.f32.mrf.mxu0
    %v1285 = vadd.f32 0.0, %v1284
    %v1286 = vpop.f32.mrf.mxu0
    %1287 = vmatprep.mubr.bf16.mxu0 0
    %1288 = vmatmul.mubr.bf16.gmra.mxu0 %v1155
    %v1289 = vpop.f32.mrf.mxu0
    %v1290 = vadd.f32 0.0, %v1289
    %v1291 = vpop.f32.mrf.mxu0
    %v1292 = vpop.f32.mrf.mxu0
    %v1293 = vadd.f32 0.0, %v1292
    %v1294 = vpop.f32.mrf.mxu0
    %1295 = vmatprep.mubr.bf16.mxu0 0
    %1296 = vmatmul.mubr.bf16.gmra.mxu0 %v1156
    %v1297 = vpop.f32.mrf.mxu0
    %v1298 = vadd.f32 0.0, %v1297
    %v1299 = vpop.f32.mrf.mxu0
    %v1300 = vpop.f32.mrf.mxu0
    %v1301 = vadd.f32 0.0, %v1300
    %v1302 = vpop.f32.mrf.mxu0
    %1303 = vmatprep.mubr.bf16.mxu0 0
    %1304 = vmatmul.mubr.bf16.gmra.mxu0 %v1157
    %v1305 = vpop.f32.mrf.mxu0
    %v1306 = vadd.f32 0.0, %v1305
    %v1307 = vpop.f32.mrf.mxu0
    %v1308 = vpop.f32.mrf.mxu0
    %v1309 = vadd.f32 0.0, %v1308
    %v1310 = vpop.f32.mrf.mxu0
    %1311 = vmatprep.mubr.bf16.mxu0 0
    %1312 = vmatmul.mubr.bf16.gmra.mxu0 %v1158
    %v1313 = vpop.f32.mrf.mxu0
    %v1314 = vadd.f32 0.0, %v1313
    %v1315 = vpop.f32.mrf.mxu0
    %v1316 = vpop.f32.mrf.mxu0
    %v1317 = vadd.f32 0.0, %v1316
    %v1318 = vpop.f32.mrf.mxu0
    %1319 = vdwg.mxu0
    %v1320 = vld [vmem:[#allocation2] sm:$0xff]
    %v1321 = vld [vmem:[#allocation2 + $0x8] sm:$0xff]
    %v1322 = vld [vmem:[#allocation2 + $0x10] sm:$0xff]
    %v1323 = vld [vmem:[#allocation2 + $0x18] sm:$0xff]
    %v1324 = vld [vmem:[#allocation2 + $0x20] sm:$0xff]
    %v1325 = vld [vmem:[#allocation2 + $0x28] sm:$0xff]
    %v1326 = vld [vmem:[#allocation2 + $0x30] sm:$0xff]
    %v1327 = vld [vmem:[#allocation2 + $0x38] sm:$0xff]
    %v1328 = vld [vmem:[#allocation2 + $0x40] sm:$0xff]
    %v1329 = vld [vmem:[#allocation2 + $0x48] sm:$0xff]
    %v1330 = vld [vmem:[#allocation2 + $0x50] sm:$0xff]
    %v1331 = vld [vmem:[#allocation2 + $0x58] sm:$0xff]
    %v1332 = vld [vmem:[#allocation2 + $0x60] sm:$0xff]
    %v1333 = vld [vmem:[#allocation2 + $0x68] sm:$0xff]
    %v1334 = vld [vmem:[#allocation2 + $0x70] sm:$0xff]
    %v1335 = vld [vmem:[#allocation2 + $0x78] sm:$0xff]
    %v1336 = vadd.f32 %v1320, %v1258
    %v1337 = vadd.f32 %v1321, %v1261
    %v1338 = vadd.f32 %v1322, %v1266
    %v1339 = vadd.f32 %v1323, %v1269
    %v1340 = vadd.f32 %v1324, %v1274
    %v1341 = vadd.f32 %v1325, %v1277
    %v1342 = vadd.f32 %v1326, %v1282
    %v1343 = vadd.f32 %v1327, %v1285
    %v1344 = vadd.f32 %v1328, %v1290
    %v1345 = vadd.f32 %v1329, %v1293
    %v1346 = vadd.f32 %v1330, %v1298
    %v1347 = vadd.f32 %v1331, %v1301
    %v1348 = vadd.f32 %v1332, %v1306
    %v1349 = vadd.f32 %v1333, %v1309
    %v1350 = vadd.f32 %v1334, %v1314
    %v1351 = vadd.f32 %v1335, %v1317
    %1352 = vst [vmem:[#allocation2] sm:$0xff] %v1336
    %1353 = vst [vmem:[#allocation2 + $0x8] sm:$0xff] %v1337
    %1354 = vst [vmem:[#allocation2 + $0x10] sm:$0xff] %v1338
    %1355 = vst [vmem:[#allocation2 + $0x18] sm:$0xff] %v1339
    %1356 = vst [vmem:[#allocation2 + $0x20] sm:$0xff] %v1340
    %1357 = vst [vmem:[#allocation2 + $0x28] sm:$0xff] %v1341
    %1358 = vst [vmem:[#allocation2 + $0x30] sm:$0xff] %v1342
    %1359 = vst [vmem:[#allocation2 + $0x38] sm:$0xff] %v1343
    %1360 = vst [vmem:[#allocation2 + $0x40] sm:$0xff] %v1344
    %1361 = vst [vmem:[#allocation2 + $0x48] sm:$0xff] %v1345
    %1362 = vst [vmem:[#allocation2 + $0x50] sm:$0xff] %v1346
    %1363 = vst [vmem:[#allocation2 + $0x58] sm:$0xff] %v1347
    %1364 = vst [vmem:[#allocation2 + $0x60] sm:$0xff] %v1348
    %1365 = vst [vmem:[#allocation2 + $0x68] sm:$0xff] %v1349
    %1366 = vst [vmem:[#allocation2 + $0x70] sm:$0xff] %v1350
    %1367 = vst [vmem:[#allocation2 + $0x78] sm:$0xff] %v1351
    %v1368 = vld [vmem:[%s725 + $0x3] sm:$0xff]
    %v1369 = vld [vmem:[%s725 + $0x13] sm:$0xff]
    %v1370 = vld [vmem:[%s725 + $0x23] sm:$0xff]
    %v1371 = vld [vmem:[%s725 + $0x33] sm:$0xff]
    %v1372 = vld [vmem:[%s725 + $0x43] sm:$0xff]
    %v1373 = vld [vmem:[%s725 + $0x53] sm:$0xff]
    %v1374 = vld [vmem:[%s725 + $0x63] sm:$0xff]
    %v1375 = vld [vmem:[%s725 + $0x73] sm:$0xff]
    %v1376 = vld [vmem:[%s725 + $0xc3] sm:$0xff]
    %v1377 = vld [vmem:[%s725 + $0xd3] sm:$0xff]
    %v1378 = vld [vmem:[%s725 + $0xe3] sm:$0xff]
    %v1379 = vld [vmem:[%s725 + $0xf3] sm:$0xff]
    %v1380 = vld [vmem:[%s725 + $0x103] sm:$0xff]
    %v1381 = vld [vmem:[%s725 + $0x113] sm:$0xff]
    %v1382 = vld [vmem:[%s725 + $0x123] sm:$0xff]
    %v1383 = vld [vmem:[%s725 + $0x133] sm:$0xff]
    %v1384 = vld [vmem:[%s725 + $0x4] sm:$0xff]
    %v1385 = vld [vmem:[%s725 + $0x14] sm:$0xff]
    %v1386 = vld [vmem:[%s725 + $0x24] sm:$0xff]
    %v1387 = vld [vmem:[%s725 + $0x34] sm:$0xff]
    %v1388 = vld [vmem:[%s725 + $0x44] sm:$0xff]
    %v1389 = vld [vmem:[%s725 + $0x54] sm:$0xff]
    %v1390 = vld [vmem:[%s725 + $0x64] sm:$0xff]
    %v1391 = vld [vmem:[%s725 + $0x74] sm:$0xff]
    %v1392 = vld [vmem:[%s725 + $0xc4] sm:$0xff]
    %v1393 = vld [vmem:[%s725 + $0xd4] sm:$0xff]
    %v1394 = vld [vmem:[%s725 + $0xe4] sm:$0xff]
    %v1395 = vld [vmem:[%s725 + $0xf4] sm:$0xff]
    %v1396 = vld [vmem:[%s725 + $0x104] sm:$0xff]
    %v1397 = vld [vmem:[%s725 + $0x114] sm:$0xff]
    %v1398 = vld [vmem:[%s725 + $0x124] sm:$0xff]
    %v1399 = vld [vmem:[%s725 + $0x134] sm:$0xff]
    %1416 = vrot.lane.b32.xlu0 %v1384, 64
    %v1417 = vpop.permute.xlu0 %1416
    %1418 = vrot.lane.b32.xlu0 %v1385, 64
    %v1419 = vpop.permute.xlu0 %1418
    %1420 = vrot.lane.b32.xlu0 %v1386, 64
    %v1421 = vpop.permute.xlu0 %1420
    %1422 = vrot.lane.b32.xlu0 %v1387, 64
    %v1423 = vpop.permute.xlu0 %1422
    %1424 = vrot.lane.b32.xlu0 %v1388, 64
    %v1425 = vpop.permute.xlu0 %1424
    %1426 = vrot.lane.b32.xlu0 %v1389, 64
    %v1427 = vpop.permute.xlu0 %1426
    %1428 = vrot.lane.b32.xlu0 %v1390, 64
    %v1429 = vpop.permute.xlu0 %1428
    %1430 = vrot.lane.b32.xlu0 %v1391, 64
    %v1431 = vpop.permute.xlu0 %1430
    %1432 = vrot.lane.b32.xlu0 %v1392, 64
    %v1433 = vpop.permute.xlu0 %1432
    %1434 = vrot.lane.b32.xlu0 %v1393, 64
    %v1435 = vpop.permute.xlu0 %1434
    %1436 = vrot.lane.b32.xlu0 %v1394, 64
    %v1437 = vpop.permute.xlu0 %1436
    %1438 = vrot.lane.b32.xlu0 %v1395, 64
    %v1439 = vpop.permute.xlu0 %1438
    %1440 = vrot.lane.b32.xlu0 %v1396, 64
    %v1441 = vpop.permute.xlu0 %1440
    %1442 = vrot.lane.b32.xlu0 %v1397, 64
    %v1443 = vpop.permute.xlu0 %1442
    %1444 = vrot.lane.b32.xlu0 %v1398, 64
    %v1445 = vpop.permute.xlu0 %1444
    %1446 = vrot.lane.b32.xlu0 %v1399, 64
    %v1447 = vpop.permute.xlu0 %1446
    %v1464 = vsel %vm146, %v1368, %v1417
    %v1465 = vsel %vm146, %v1369, %v1419
    %v1466 = vsel %vm146, %v1370, %v1421
    %v1467 = vsel %vm146, %v1371, %v1423
    %v1468 = vsel %vm146, %v1372, %v1425
    %v1469 = vsel %vm146, %v1373, %v1427
    %v1470 = vsel %vm146, %v1374, %v1429
    %v1471 = vsel %vm146, %v1375, %v1431
    %v1472 = vsel %vm146, %v1376, %v1433
    %v1473 = vsel %vm146, %v1377, %v1435
    %v1474 = vsel %vm146, %v1378, %v1437
    %v1475 = vsel %vm146, %v1379, %v1439
    %v1476 = vsel %vm146, %v1380, %v1441
    %v1477 = vsel %vm146, %v1381, %v1443
    %v1478 = vsel %vm146, %v1382, %v1445
    %v1479 = vsel %vm146, %v1383, %v1447
    %v1480 = vpack.c.bf16 %v1465, %v1464
    %v1481 = vpack.c.bf16 %v1467, %v1466
    %v1482 = vpack.c.bf16 %v1469, %v1468
    %v1483 = vpack.c.bf16 %v1471, %v1470
    %v1484 = vpack.c.bf16 %v1473, %v1472
    %v1485 = vpack.c.bf16 %v1475, %v1474
    %v1486 = vpack.c.bf16 %v1477, %v1476
    %v1487 = vpack.c.bf16 %v1479, %v1478
    %v1488 = vld [vmem:[%s1 + $0x100] sm:$0xf]
    %v1489 = vld [vmem:[%s1 + $0x104] sm:$0xf]
    %v1490 = vld [vmem:[%s1 + $0x108] sm:$0xf]
    %v1491 = vld [vmem:[%s1 + $0x10c] sm:$0xf]
    %v1492 = vld [vmem:[%s1 + $0x110] sm:$0xf]
    %v1493 = vld [vmem:[%s1 + $0x114] sm:$0xf]
    %v1494 = vld [vmem:[%s1 + $0x118] sm:$0xf]
    %v1495 = vld [vmem:[%s1 + $0x11c] sm:$0xf]
    %v1496 = vld [vmem:[%s1 + $0x120] sm:$0xf]
    %v1497 = vld [vmem:[%s1 + $0x124] sm:$0xf]
    %v1498 = vld [vmem:[%s1 + $0x128] sm:$0xf]
    %v1499 = vld [vmem:[%s1 + $0x12c] sm:$0xf]
    %v1500 = vld [vmem:[%s1 + $0x130] sm:$0xf]
    %v1501 = vld [vmem:[%s1 + $0x134] sm:$0xf]
    %v1502 = vld [vmem:[%s1 + $0x138] sm:$0xf]
    %v1503 = vld [vmem:[%s1 + $0x13c] sm:$0xf]
    %v1520 = vunpack.c.l.b16 %v1488
    %v1521 = vunpack.c.l.b16 %v1489
    %v1522 = vunpack.c.l.b16 %v1490
    %v1523 = vunpack.c.l.b16 %v1491
    %v1524 = vunpack.c.l.b16 %v1492
    %v1525 = vunpack.c.l.b16 %v1493
    %v1526 = vunpack.c.l.b16 %v1494
    %v1527 = vunpack.c.l.b16 %v1495
    %v1528 = vunpack.c.l.b16 %v1496
    %v1529 = vunpack.c.l.b16 %v1497
    %v1530 = vunpack.c.l.b16 %v1498
    %v1531 = vunpack.c.l.b16 %v1499
    %v1532 = vunpack.c.l.b16 %v1500
    %v1533 = vunpack.c.l.b16 %v1501
    %v1534 = vunpack.c.l.b16 %v1502
    %v1535 = vunpack.c.l.b16 %v1503
    %v1536 = vpack.c.b16 %v1521, %v1520
    %v1537 = vpack.c.b16 %v1523, %v1522
    %v1538 = vpack.c.b16 %v1525, %v1524
    %v1539 = vpack.c.b16 %v1527, %v1526
    %v1540 = vpack.c.b16 %v1529, %v1528
    %v1541 = vpack.c.b16 %v1531, %v1530
    %v1542 = vpack.c.b16 %v1533, %v1532
    %v1543 = vpack.c.b16 %v1535, %v1534
    %1552 = vmatprep.subr.bf16.mxu0 0
    %1553 = vmatpush1.bf16.msra.mxu0 %v1543
    %1554 = vmatprep.subr.bf16.mxu0 0
    %1555 = vmatpush1.bf16.msra.mxu0 %v1542
    %1556 = vmatprep.subr.bf16.mxu0 0
    %1557 = vmatpush1.bf16.msra.mxu0 %v1541
    %1558 = vmatprep.subr.bf16.mxu0 0
    %1559 = vmatpush1.bf16.msra.mxu0 %v1540
    %1560 = vmatprep.subr.bf16.mxu0 0
    %1561 = vmatpush1.bf16.msra.mxu0 %v1539
    %1562 = vmatprep.subr.bf16.mxu0 0
    %1563 = vmatpush1.bf16.msra.mxu0 %v1538
    %1564 = vmatprep.subr.bf16.mxu0 0
    %1565 = vmatpush1.bf16.msra.mxu0 %v1537
    %1566 = vmatprep.subr.bf16.mxu0 0
    %1567 = vmatpush1.bf16.msra.mxu0 %v1536
    %1568 = vmatprep.subr.bf16.mxu0 0
    %1569 = vmatpush2.bf16.msra.mxu0 0
    %1570 = vmatprep.subr.bf16.mxu0 0
    %1571 = vmatpush2.bf16.msra.mxu0 0
    %1572 = vmatprep.subr.bf16.mxu0 0
    %1573 = vmatpush2.bf16.msra.mxu0 0
    %1574 = vmatprep.subr.bf16.mxu0 0
    %1575 = vmatpush2.bf16.msra.mxu0 0
    %1576 = vmatprep.subr.bf16.mxu0 0
    %1577 = vmatpush2.bf16.msra.mxu0 0
    %1578 = vmatprep.subr.bf16.mxu0 0
    %1579 = vmatpush2.bf16.msra.mxu0 0
    %1580 = vmatprep.subr.bf16.mxu0 0
    %1581 = vmatpush2.bf16.msra.mxu0 0
    %1582 = vmatprep.subr.bf16.mxu0 0
    %1583 = vmatpush2.bf16.msra.mxu0 0
    %1584 = vmatprep.mubr.bf16.mxu0 0
    %1585 = vmatmul.mubr.bf16.gmra.mxu0 %v1480
    %v1586 = vpop.f32.mrf.mxu0
    %v1587 = vadd.f32 0.0, %v1586
    %v1588 = vpop.f32.mrf.mxu0
    %v1589 = vpop.f32.mrf.mxu0
    %v1590 = vadd.f32 0.0, %v1589
    %v1591 = vpop.f32.mrf.mxu0
    %1592 = vmatprep.mubr.bf16.mxu0 0
    %1593 = vmatmul.mubr.bf16.gmra.mxu0 %v1481
    %v1594 = vpop.f32.mrf.mxu0
    %v1595 = vadd.f32 0.0, %v1594
    %v1596 = vpop.f32.mrf.mxu0
    %v1597 = vpop.f32.mrf.mxu0
    %v1598 = vadd.f32 0.0, %v1597
    %v1599 = vpop.f32.mrf.mxu0
    %1600 = vmatprep.mubr.bf16.mxu0 0
    %1601 = vmatmul.mubr.bf16.gmra.mxu0 %v1482
    %v1602 = vpop.f32.mrf.mxu0
    %v1603 = vadd.f32 0.0, %v1602
    %v1604 = vpop.f32.mrf.mxu0
    %v1605 = vpop.f32.mrf.mxu0
    %v1606 = vadd.f32 0.0, %v1605
    %v1607 = vpop.f32.mrf.mxu0
    %1608 = vmatprep.mubr.bf16.mxu0 0
    %1609 = vmatmul.mubr.bf16.gmra.mxu0 %v1483
    %v1610 = vpop.f32.mrf.mxu0
    %v1611 = vadd.f32 0.0, %v1610
    %v1612 = vpop.f32.mrf.mxu0
    %v1613 = vpop.f32.mrf.mxu0
    %v1614 = vadd.f32 0.0, %v1613
    %v1615 = vpop.f32.mrf.mxu0
    %1616 = vmatprep.mubr.bf16.mxu0 0
    %1617 = vmatmul.mubr.bf16.gmra.mxu0 %v1484
    %v1618 = vpop.f32.mrf.mxu0
    %v1619 = vadd.f32 0.0, %v1618
    %v1620 = vpop.f32.mrf.mxu0
    %v1621 = vpop.f32.mrf.mxu0
    %v1622 = vadd.f32 0.0, %v1621
    %v1623 = vpop.f32.mrf.mxu0
    %1624 = vmatprep.mubr.bf16.mxu0 0
    %1625 = vmatmul.mubr.bf16.gmra.mxu0 %v1485
    %v1626 = vpop.f32.mrf.mxu0
    %v1627 = vadd.f32 0.0, %v1626
    %v1628 = vpop.f32.mrf.mxu0
    %v1629 = vpop.f32.mrf.mxu0
    %v1630 = vadd.f32 0.0, %v1629
    %v1631 = vpop.f32.mrf.mxu0
    %1632 = vmatprep.mubr.bf16.mxu0 0
    %1633 = vmatmul.mubr.bf16.gmra.mxu0 %v1486
    %v1634 = vpop.f32.mrf.mxu0
    %v1635 = vadd.f32 0.0, %v1634
    %v1636 = vpop.f32.mrf.mxu0
    %v1637 = vpop.f32.mrf.mxu0
    %v1638 = vadd.f32 0.0, %v1637
    %v1639 = vpop.f32.mrf.mxu0
    %1640 = vmatprep.mubr.bf16.mxu0 0
    %1641 = vmatmul.mubr.bf16.gmra.mxu0 %v1487
    %v1642 = vpop.f32.mrf.mxu0
    %v1643 = vadd.f32 0.0, %v1642
    %v1644 = vpop.f32.mrf.mxu0
    %v1645 = vpop.f32.mrf.mxu0
    %v1646 = vadd.f32 0.0, %v1645
    %v1647 = vpop.f32.mrf.mxu0
    %1648 = vdwg.mxu0
    %v1649 = vld [vmem:[#allocation2] sm:$0xff]
    %v1650 = vld [vmem:[#allocation2 + $0x8] sm:$0xff]
    %v1651 = vld [vmem:[#allocation2 + $0x10] sm:$0xff]
    %v1652 = vld [vmem:[#allocation2 + $0x18] sm:$0xff]
    %v1653 = vld [vmem:[#allocation2 + $0x20] sm:$0xff]
    %v1654 = vld [vmem:[#allocation2 + $0x28] sm:$0xff]
    %v1655 = vld [vmem:[#allocation2 + $0x30] sm:$0xff]
    %v1656 = vld [vmem:[#allocation2 + $0x38] sm:$0xff]
    %v1657 = vld [vmem:[#allocation2 + $0x40] sm:$0xff]
    %v1658 = vld [vmem:[#allocation2 + $0x48] sm:$0xff]
    %v1659 = vld [vmem:[#allocation2 + $0x50] sm:$0xff]
    %v1660 = vld [vmem:[#allocation2 + $0x58] sm:$0xff]
    %v1661 = vld [vmem:[#allocation2 + $0x60] sm:$0xff]
    %v1662 = vld [vmem:[#allocation2 + $0x68] sm:$0xff]
    %v1663 = vld [vmem:[#allocation2 + $0x70] sm:$0xff]
    %v1664 = vld [vmem:[#allocation2 + $0x78] sm:$0xff]
    %v1665 = vadd.f32 %v1649, %v1587
    %v1666 = vadd.f32 %v1650, %v1590
    %v1667 = vadd.f32 %v1651, %v1595
    %v1668 = vadd.f32 %v1652, %v1598
    %v1669 = vadd.f32 %v1653, %v1603
    %v1670 = vadd.f32 %v1654, %v1606
    %v1671 = vadd.f32 %v1655, %v1611
    %v1672 = vadd.f32 %v1656, %v1614
    %v1673 = vadd.f32 %v1657, %v1619
    %v1674 = vadd.f32 %v1658, %v1622
    %v1675 = vadd.f32 %v1659, %v1627
    %v1676 = vadd.f32 %v1660, %v1630
    %v1677 = vadd.f32 %v1661, %v1635
    %v1678 = vadd.f32 %v1662, %v1638
    %v1679 = vadd.f32 %v1663, %v1643
    %v1680 = vadd.f32 %v1664, %v1646
    %1681 = vst [vmem:[#allocation2] sm:$0xff] %v1665
    %1682 = vst [vmem:[#allocation2 + $0x8] sm:$0xff] %v1666
    %1683 = vst [vmem:[#allocation2 + $0x10] sm:$0xff] %v1667
    %1684 = vst [vmem:[#allocation2 + $0x18] sm:$0xff] %v1668
    %1685 = vst [vmem:[#allocation2 + $0x20] sm:$0xff] %v1669
    %1686 = vst [vmem:[#allocation2 + $0x28] sm:$0xff] %v1670
    %1687 = vst [vmem:[#allocation2 + $0x30] sm:$0xff] %v1671
    %1688 = vst [vmem:[#allocation2 + $0x38] sm:$0xff] %v1672
    %1689 = vst [vmem:[#allocation2 + $0x40] sm:$0xff] %v1673
    %1690 = vst [vmem:[#allocation2 + $0x48] sm:$0xff] %v1674
    %1691 = vst [vmem:[#allocation2 + $0x50] sm:$0xff] %v1675
    %1692 = vst [vmem:[#allocation2 + $0x58] sm:$0xff] %v1676
    %1693 = vst [vmem:[#allocation2 + $0x60] sm:$0xff] %v1677
    %1694 = vst [vmem:[#allocation2 + $0x68] sm:$0xff] %v1678
    %1695 = vst [vmem:[#allocation2 + $0x70] sm:$0xff] %v1679
    %1696 = vst [vmem:[#allocation2 + $0x78] sm:$0xff] %v1680
    %s1697 = scalar_lea.vmem %s0, 32
    %v1698 = vld [vmem:[%s1697] sm:$0xff]
    %v1699 = vld [vmem:[%s1697 + $0x10] sm:$0xff]
    %v1700 = vld [vmem:[%s1697 + $0x20] sm:$0xff]
    %v1701 = vld [vmem:[%s1697 + $0x30] sm:$0xff]
    %v1702 = vld [vmem:[%s1697 + $0x40] sm:$0xff]
    %v1703 = vld [vmem:[%s1697 + $0x50] sm:$0xff]
    %v1704 = vld [vmem:[%s1697 + $0x60] sm:$0xff]
    %v1705 = vld [vmem:[%s1697 + $0x70] sm:$0xff]
    %v1706 = vld [vmem:[%s1697 + $0xc0] sm:$0xff]
    %v1707 = vld [vmem:[%s1697 + $0xd0] sm:$0xff]
    %v1708 = vld [vmem:[%s1697 + $0xe0] sm:$0xff]
    %v1709 = vld [vmem:[%s1697 + $0xf0] sm:$0xff]
    %v1710 = vld [vmem:[%s1697 + $0x100] sm:$0xff]
    %v1711 = vld [vmem:[%s1697 + $0x110] sm:$0xff]
    %v1712 = vld [vmem:[%s1697 + $0x120] sm:$0xff]
    %v1713 = vld [vmem:[%s1697 + $0x130] sm:$0xff]
    %v1714 = vld [vmem:[%s1697 + $0x1] sm:$0xff]
    %v1715 = vld [vmem:[%s1697 + $0x11] sm:$0xff]
    %v1716 = vld [vmem:[%s1697 + $0x21] sm:$0xff]
    %v1717 = vld [vmem:[%s1697 + $0x31] sm:$0xff]
    %v1718 = vld [vmem:[%s1697 + $0x41] sm:$0xff]
    %v1719 = vld [vmem:[%s1697 + $0x51] sm:$0xff]
    %v1720 = vld [vmem:[%s1697 + $0x61] sm:$0xff]
    %v1721 = vld [vmem:[%s1697 + $0x71] sm:$0xff]
    %v1722 = vld [vmem:[%s1697 + $0xc1] sm:$0xff]
    %v1723 = vld [vmem:[%s1697 + $0xd1] sm:$0xff]
    %v1724 = vld [vmem:[%s1697 + $0xe1] sm:$0xff]
    %v1725 = vld [vmem:[%s1697 + $0xf1] sm:$0xff]
    %v1726 = vld [vmem:[%s1697 + $0x101] sm:$0xff]
    %v1727 = vld [vmem:[%s1697 + $0x111] sm:$0xff]
    %v1728 = vld [vmem:[%s1697 + $0x121] sm:$0xff]
    %v1729 = vld [vmem:[%s1697 + $0x131] sm:$0xff]
    %1746 = vrot.lane.b32.xlu0 %v1714, 64
    %v1747 = vpop.permute.xlu0 %1746
    %1748 = vrot.lane.b32.xlu0 %v1715, 64
    %v1749 = vpop.permute.xlu0 %1748
    %1750 = vrot.lane.b32.xlu0 %v1716, 64
    %v1751 = vpop.permute.xlu0 %1750
    %1752 = vrot.lane.b32.xlu0 %v1717, 64
    %v1753 = vpop.permute.xlu0 %1752
    %1754 = vrot.lane.b32.xlu0 %v1718, 64
    %v1755 = vpop.permute.xlu0 %1754
    %1756 = vrot.lane.b32.xlu0 %v1719, 64
    %v1757 = vpop.permute.xlu0 %1756
    %1758 = vrot.lane.b32.xlu0 %v1720, 64
    %v1759 = vpop.permute.xlu0 %1758
    %1760 = vrot.lane.b32.xlu0 %v1721, 64
    %v1761 = vpop.permute.xlu0 %1760
    %1762 = vrot.lane.b32.xlu0 %v1722, 64
    %v1763 = vpop.permute.xlu0 %1762
    %1764 = vrot.lane.b32.xlu0 %v1723, 64
    %v1765 = vpop.permute.xlu0 %1764
    %1766 = vrot.lane.b32.xlu0 %v1724, 64
    %v1767 = vpop.permute.xlu0 %1766
    %1768 = vrot.lane.b32.xlu0 %v1725, 64
    %v1769 = vpop.permute.xlu0 %1768
    %1770 = vrot.lane.b32.xlu0 %v1726, 64
    %v1771 = vpop.permute.xlu0 %1770
    %1772 = vrot.lane.b32.xlu0 %v1727, 64
    %v1773 = vpop.permute.xlu0 %1772
    %1774 = vrot.lane.b32.xlu0 %v1728, 64
    %v1775 = vpop.permute.xlu0 %1774
    %1776 = vrot.lane.b32.xlu0 %v1729, 64
    %v1777 = vpop.permute.xlu0 %1776
    %v1794 = vsel %vm146, %v1698, %v1747
    %v1795 = vsel %vm146, %v1699, %v1749
    %v1796 = vsel %vm146, %v1700, %v1751
    %v1797 = vsel %vm146, %v1701, %v1753
    %v1798 = vsel %vm146, %v1702, %v1755
    %v1799 = vsel %vm146, %v1703, %v1757
    %v1800 = vsel %vm146, %v1704, %v1759
    %v1801 = vsel %vm146, %v1705, %v1761
    %v1802 = vsel %vm146, %v1706, %v1763
    %v1803 = vsel %vm146, %v1707, %v1765
    %v1804 = vsel %vm146, %v1708, %v1767
    %v1805 = vsel %vm146, %v1709, %v1769
    %v1806 = vsel %vm146, %v1710, %v1771
    %v1807 = vsel %vm146, %v1711, %v1773
    %v1808 = vsel %vm146, %v1712, %v1775
    %v1809 = vsel %vm146, %v1713, %v1777
    %v1810 = vpack.c.bf16 %v1795, %v1794
    %v1811 = vpack.c.bf16 %v1797, %v1796
    %v1812 = vpack.c.bf16 %v1799, %v1798
    %v1813 = vpack.c.bf16 %v1801, %v1800
    %v1814 = vpack.c.bf16 %v1803, %v1802
    %v1815 = vpack.c.bf16 %v1805, %v1804
    %v1816 = vpack.c.bf16 %v1807, %v1806
    %v1817 = vpack.c.bf16 %v1809, %v1808
    %v1818 = vld [vmem:[%s1 + $0x140] sm:$0xf]
    %v1819 = vld [vmem:[%s1 + $0x144] sm:$0xf]
    %v1820 = vld [vmem:[%s1 + $0x148] sm:$0xf]
    %v1821 = vld [vmem:[%s1 + $0x14c] sm:$0xf]
    %v1822 = vld [vmem:[%s1 + $0x150] sm:$0xf]
    %v1823 = vld [vmem:[%s1 + $0x154] sm:$0xf]
    %v1824 = vld [vmem:[%s1 + $0x158] sm:$0xf]
    %v1825 = vld [vmem:[%s1 + $0x15c] sm:$0xf]
    %v1826 = vld [vmem:[%s1 + $0x160] sm:$0xf]
    %v1827 = vld [vmem:[%s1 + $0x164] sm:$0xf]
    %v1828 = vld [vmem:[%s1 + $0x168] sm:$0xf]
    %v1829 = vld [vmem:[%s1 + $0x16c] sm:$0xf]
    %v1830 = vld [vmem:[%s1 + $0x170] sm:$0xf]
    %v1831 = vld [vmem:[%s1 + $0x174] sm:$0xf]
    %v1832 = vld [vmem:[%s1 + $0x178] sm:$0xf]
    %v1833 = vld [vmem:[%s1 + $0x17c] sm:$0xf]
    %v1850 = vunpack.c.l.b16 %v1818
    %v1851 = vunpack.c.l.b16 %v1819
    %v1852 = vunpack.c.l.b16 %v1820
    %v1853 = vunpack.c.l.b16 %v1821
    %v1854 = vunpack.c.l.b16 %v1822
    %v1855 = vunpack.c.l.b16 %v1823
    %v1856 = vunpack.c.l.b16 %v1824
    %v1857 = vunpack.c.l.b16 %v1825
    %v1858 = vunpack.c.l.b16 %v1826
    %v1859 = vunpack.c.l.b16 %v1827
    %v1860 = vunpack.c.l.b16 %v1828
    %v1861 = vunpack.c.l.b16 %v1829
    %v1862 = vunpack.c.l.b16 %v1830
    %v1863 = vunpack.c.l.b16 %v1831
    %v1864 = vunpack.c.l.b16 %v1832
    %v1865 = vunpack.c.l.b16 %v1833
    %v1866 = vpack.c.b16 %v1851, %v1850
    %v1867 = vpack.c.b16 %v1853, %v1852
    %v1868 = vpack.c.b16 %v1855, %v1854
    %v1869 = vpack.c.b16 %v1857, %v1856
    %v1870 = vpack.c.b16 %v1859, %v1858
    %v1871 = vpack.c.b16 %v1861, %v1860
    %v1872 = vpack.c.b16 %v1863, %v1862
    %v1873 = vpack.c.b16 %v1865, %v1864
    %1882 = vmatprep.subr.bf16.mxu0 0
    %1883 = vmatpush1.bf16.msra.mxu0 %v1873
    %1884 = vmatprep.subr.bf16.mxu0 0
    %1885 = vmatpush1.bf16.msra.mxu0 %v1872
    %1886 = vmatprep.subr.bf16.mxu0 0
    %1887 = vmatpush1.bf16.msra.mxu0 %v1871
    %1888 = vmatprep.subr.bf16.mxu0 0
    %1889 = vmatpush1.bf16.msra.mxu0 %v1870
    %1890 = vmatprep.subr.bf16.mxu0 0
    %1891 = vmatpush1.bf16.msra.mxu0 %v1869
    %1892 = vmatprep.subr.bf16.mxu0 0
    %1893 = vmatpush1.bf16.msra.mxu0 %v1868
    %1894 = vmatprep.subr.bf16.mxu0 0
    %1895 = vmatpush1.bf16.msra.mxu0 %v1867
    %1896 = vmatprep.subr.bf16.mxu0 0
    %1897 = vmatpush1.bf16.msra.mxu0 %v1866
    %1898 = vmatprep.subr.bf16.mxu0 0
    %1899 = vmatpush2.bf16.msra.mxu0 0
    %1900 = vmatprep.subr.bf16.mxu0 0
    %1901 = vmatpush2.bf16.msra.mxu0 0
    %1902 = vmatprep.subr.bf16.mxu0 0
    %1903 = vmatpush2.bf16.msra.mxu0 0
    %1904 = vmatprep.subr.bf16.mxu0 0
    %1905 = vmatpush2.bf16.msra.mxu0 0
    %1906 = vmatprep.subr.bf16.mxu0 0
    %1907 = vmatpush2.bf16.msra.mxu0 0
    %1908 = vmatprep.subr.bf16.mxu0 0
    %1909 = vmatpush2.bf16.msra.mxu0 0
    %1910 = vmatprep.subr.bf16.mxu0 0
    %1911 = vmatpush2.bf16.msra.mxu0 0
    %1912 = vmatprep.subr.bf16.mxu0 0
    %1913 = vmatpush2.bf16.msra.mxu0 0
    %1914 = vmatprep.mubr.bf16.mxu0 0
    %1915 = vmatmul.mubr.bf16.gmra.mxu0 %v1810
    %v1916 = vpop.f32.mrf.mxu0
    %v1917 = vadd.f32 0.0, %v1916
    %v1918 = vpop.f32.mrf.mxu0
    %v1919 = vpop.f32.mrf.mxu0
    %v1920 = vadd.f32 0.0, %v1919
    %v1921 = vpop.f32.mrf.mxu0
    %1922 = vmatprep.mubr.bf16.mxu0 0
    %1923 = vmatmul.mubr.bf16.gmra.mxu0 %v1811
    %v1924 = vpop.f32.mrf.mxu0
    %v1925 = vadd.f32 0.0, %v1924
    %v1926 = vpop.f32.mrf.mxu0
    %v1927 = vpop.f32.mrf.mxu0
    %v1928 = vadd.f32 0.0, %v1927
    %v1929 = vpop.f32.mrf.mxu0
    %1930 = vmatprep.mubr.bf16.mxu0 0
    %1931 = vmatmul.mubr.bf16.gmra.mxu0 %v1812
    %v1932 = vpop.f32.mrf.mxu0
    %v1933 = vadd.f32 0.0, %v1932
    %v1934 = vpop.f32.mrf.mxu0
    %v1935 = vpop.f32.mrf.mxu0
    %v1936 = vadd.f32 0.0, %v1935
    %v1937 = vpop.f32.mrf.mxu0
    %1938 = vmatprep.mubr.bf16.mxu0 0
    %1939 = vmatmul.mubr.bf16.gmra.mxu0 %v1813
    %v1940 = vpop.f32.mrf.mxu0
    %v1941 = vadd.f32 0.0, %v1940
    %v1942 = vpop.f32.mrf.mxu0
    %v1943 = vpop.f32.mrf.mxu0
    %v1944 = vadd.f32 0.0, %v1943
    %v1945 = vpop.f32.mrf.mxu0
    %1946 = vmatprep.mubr.bf16.mxu0 0
    %1947 = vmatmul.mubr.bf16.gmra.mxu0 %v1814
    %v1948 = vpop.f32.mrf.mxu0
    %v1949 = vadd.f32 0.0, %v1948
    %v1950 = vpop.f32.mrf.mxu0
    %v1951 = vpop.f32.mrf.mxu0
    %v1952 = vadd.f32 0.0, %v1951
    %v1953 = vpop.f32.mrf.mxu0
    %1954 = vmatprep.mubr.bf16.mxu0 0
    %1955 = vmatmul.mubr.bf16.gmra.mxu0 %v1815
    %v1956 = vpop.f32.mrf.mxu0
    %v1957 = vadd.f32 0.0, %v1956
    %v1958 = vpop.f32.mrf.mxu0
    %v1959 = vpop.f32.mrf.mxu0
    %v1960 = vadd.f32 0.0, %v1959
    %v1961 = vpop.f32.mrf.mxu0
    %1962 = vmatprep.mubr.bf16.mxu0 0
    %1963 = vmatmul.mubr.bf16.gmra.mxu0 %v1816
    %v1964 = vpop.f32.mrf.mxu0
    %v1965 = vadd.f32 0.0, %v1964
    %v1966 = vpop.f32.mrf.mxu0
    %v1967 = vpop.f32.mrf.mxu0
    %v1968 = vadd.f32 0.0, %v1967
    %v1969 = vpop.f32.mrf.mxu0
    %1970 = vmatprep.mubr.bf16.mxu0 0
    %1971 = vmatmul.mubr.bf16.gmra.mxu0 %v1817
    %v1972 = vpop.f32.mrf.mxu0
    %v1973 = vadd.f32 0.0, %v1972
    %v1974 = vpop.f32.mrf.mxu0
    %v1975 = vpop.f32.mrf.mxu0
    %v1976 = vadd.f32 0.0, %v1975
    %v1977 = vpop.f32.mrf.mxu0
    %1978 = vdwg.mxu0
    %v1979 = vld [vmem:[#allocation2] sm:$0xff]
    %v1980 = vld [vmem:[#allocation2 + $0x8] sm:$0xff]
    %v1981 = vld [vmem:[#allocation2 + $0x10] sm:$0xff]
    %v1982 = vld [vmem:[#allocation2 + $0x18] sm:$0xff]
    %v1983 = vld [vmem:[#allocation2 + $0x20] sm:$0xff]
    %v1984 = vld [vmem:[#allocation2 + $0x28] sm:$0xff]
    %v1985 = vld [vmem:[#allocation2 + $0x30] sm:$0xff]
    %v1986 = vld [vmem:[#allocation2 + $0x38] sm:$0xff]
    %v1987 = vld [vmem:[#allocation2 + $0x40] sm:$0xff]
    %v1988 = vld [vmem:[#allocation2 + $0x48] sm:$0xff]
    %v1989 = vld [vmem:[#allocation2 + $0x50] sm:$0xff]
    %v1990 = vld [vmem:[#allocation2 + $0x58] sm:$0xff]
    %v1991 = vld [vmem:[#allocation2 + $0x60] sm:$0xff]
    %v1992 = vld [vmem:[#allocation2 + $0x68] sm:$0xff]
    %v1993 = vld [vmem:[#allocation2 + $0x70] sm:$0xff]
    %v1994 = vld [vmem:[#allocation2 + $0x78] sm:$0xff]
    %v1995 = vadd.f32 %v1979, %v1917
    %v1996 = vadd.f32 %v1980, %v1920
    %v1997 = vadd.f32 %v1981, %v1925
    %v1998 = vadd.f32 %v1982, %v1928
    %v1999 = vadd.f32 %v1983, %v1933
    %v2000 = vadd.f32 %v1984, %v1936
    %v2001 = vadd.f32 %v1985, %v1941
    %v2002 = vadd.f32 %v1986, %v1944
    %v2003 = vadd.f32 %v1987, %v1949
    %v2004 = vadd.f32 %v1988, %v1952
    %v2005 = vadd.f32 %v1989, %v1957
    %v2006 = vadd.f32 %v1990, %v1960
    %v2007 = vadd.f32 %v1991, %v1965
    %v2008 = vadd.f32 %v1992, %v1968
    %v2009 = vadd.f32 %v1993, %v1973
    %v2010 = vadd.f32 %v1994, %v1976
    %2011 = vst [vmem:[#allocation2] sm:$0xff] %v1995
    %2012 = vst [vmem:[#allocation2 + $0x8] sm:$0xff] %v1996
    %2013 = vst [vmem:[#allocation2 + $0x10] sm:$0xff] %v1997
    %2014 = vst [vmem:[#allocation2 + $0x18] sm:$0xff] %v1998
    %2015 = vst [vmem:[#allocation2 + $0x20] sm:$0xff] %v1999
    %2016 = vst [vmem:[#allocation2 + $0x28] sm:$0xff] %v2000
    %2017 = vst [vmem:[#allocation2 + $0x30] sm:$0xff] %v2001
    %2018 = vst [vmem:[#allocation2 + $0x38] sm:$0xff] %v2002
    %2019 = vst [vmem:[#allocation2 + $0x40] sm:$0xff] %v2003
    %2020 = vst [vmem:[#allocation2 + $0x48] sm:$0xff] %v2004
    %2021 = vst [vmem:[#allocation2 + $0x50] sm:$0xff] %v2005
    %2022 = vst [vmem:[#allocation2 + $0x58] sm:$0xff] %v2006
    %2023 = vst [vmem:[#allocation2 + $0x60] sm:$0xff] %v2007
    %2024 = vst [vmem:[#allocation2 + $0x68] sm:$0xff] %v2008
    %2025 = vst [vmem:[#allocation2 + $0x70] sm:$0xff] %v2009
    %2026 = vst [vmem:[#allocation2 + $0x78] sm:$0xff] %v2010
    %v2027 = vld [vmem:[%s1697 + $0x2] sm:$0xff]
    %v2028 = vld [vmem:[%s1697 + $0x12] sm:$0xff]
    %v2029 = vld [vmem:[%s1697 + $0x22] sm:$0xff]
    %v2030 = vld [vmem:[%s1697 + $0x32] sm:$0xff]
    %v2031 = vld [vmem:[%s1697 + $0x42] sm:$0xff]
    %v2032 = vld [vmem:[%s1697 + $0x52] sm:$0xff]
    %v2033 = vld [vmem:[%s1697 + $0x62] sm:$0xff]
    %v2034 = vld [vmem:[%s1697 + $0x72] sm:$0xff]
    %v2035 = vld [vmem:[%s1697 + $0xc2] sm:$0xff]
    %v2036 = vld [vmem:[%s1697 + $0xd2] sm:$0xff]
    %v2037 = vld [vmem:[%s1697 + $0xe2] sm:$0xff]
    %v2038 = vld [vmem:[%s1697 + $0xf2] sm:$0xff]
    %v2039 = vld [vmem:[%s1697 + $0x102] sm:$0xff]
    %v2040 = vld [vmem:[%s1697 + $0x112] sm:$0xff]
    %v2041 = vld [vmem:[%s1697 + $0x122] sm:$0xff]
    %v2042 = vld [vmem:[%s1697 + $0x132] sm:$0xff]
    %v2043 = vld [vmem:[%s1697 + $0x3] sm:$0xff]
    %v2044 = vld [vmem:[%s1697 + $0x13] sm:$0xff]
    %v2045 = vld [vmem:[%s1697 + $0x23] sm:$0xff]
    %v2046 = vld [vmem:[%s1697 + $0x33] sm:$0xff]
    %v2047 = vld [vmem:[%s1697 + $0x43] sm:$0xff]
    %v2048 = vld [vmem:[%s1697 + $0x53] sm:$0xff]
    %v2049 = vld [vmem:[%s1697 + $0x63] sm:$0xff]
    %v2050 = vld [vmem:[%s1697 + $0x73] sm:$0xff]
    %v2051 = vld [vmem:[%s1697 + $0xc3] sm:$0xff]
    %v2052 = vld [vmem:[%s1697 + $0xd3] sm:$0xff]
    %v2053 = vld [vmem:[%s1697 + $0xe3] sm:$0xff]
    %v2054 = vld [vmem:[%s1697 + $0xf3] sm:$0xff]
    %v2055 = vld [vmem:[%s1697 + $0x103] sm:$0xff]
    %v2056 = vld [vmem:[%s1697 + $0x113] sm:$0xff]
    %v2057 = vld [vmem:[%s1697 + $0x123] sm:$0xff]
    %v2058 = vld [vmem:[%s1697 + $0x133] sm:$0xff]
    %2075 = vrot.lane.b32.xlu0 %v2043, 64
    %v2076 = vpop.permute.xlu0 %2075
    %2077 = vrot.lane.b32.xlu0 %v2044, 64
    %v2078 = vpop.permute.xlu0 %2077
    %2079 = vrot.lane.b32.xlu0 %v2045, 64
    %v2080 = vpop.permute.xlu0 %2079
    %2081 = vrot.lane.b32.xlu0 %v2046, 64
    %v2082 = vpop.permute.xlu0 %2081
    %2083 = vrot.lane.b32.xlu0 %v2047, 64
    %v2084 = vpop.permute.xlu0 %2083
    %2085 = vrot.lane.b32.xlu0 %v2048, 64
    %v2086 = vpop.permute.xlu0 %2085
    %2087 = vrot.lane.b32.xlu0 %v2049, 64
    %v2088 = vpop.permute.xlu0 %2087
    %2089 = vrot.lane.b32.xlu0 %v2050, 64
    %v2090 = vpop.permute.xlu0 %2089
    %2091 = vrot.lane.b32.xlu0 %v2051, 64
    %v2092 = vpop.permute.xlu0 %2091
    %2093 = vrot.lane.b32.xlu0 %v2052, 64
    %v2094 = vpop.permute.xlu0 %2093
    %2095 = vrot.lane.b32.xlu0 %v2053, 64
    %v2096 = vpop.permute.xlu0 %2095
    %2097 = vrot.lane.b32.xlu0 %v2054, 64
    %v2098 = vpop.permute.xlu0 %2097
    %2099 = vrot.lane.b32.xlu0 %v2055, 64
    %v2100 = vpop.permute.xlu0 %2099
    %2101 = vrot.lane.b32.xlu0 %v2056, 64
    %v2102 = vpop.permute.xlu0 %2101
    %2103 = vrot.lane.b32.xlu0 %v2057, 64
    %v2104 = vpop.permute.xlu0 %2103
    %2105 = vrot.lane.b32.xlu0 %v2058, 64
    %v2106 = vpop.permute.xlu0 %2105
    %v2123 = vsel %vm146, %v2027, %v2076
    %v2124 = vsel %vm146, %v2028, %v2078
    %v2125 = vsel %vm146, %v2029, %v2080
    %v2126 = vsel %vm146, %v2030, %v2082
    %v2127 = vsel %vm146, %v2031, %v2084
    %v2128 = vsel %vm146, %v2032, %v2086
    %v2129 = vsel %vm146, %v2033, %v2088
    %v2130 = vsel %vm146, %v2034, %v2090
    %v2131 = vsel %vm146, %v2035, %v2092
    %v2132 = vsel %vm146, %v2036, %v2094
    %v2133 = vsel %vm146, %v2037, %v2096
    %v2134 = vsel %vm146, %v2038, %v2098
    %v2135 = vsel %vm146, %v2039, %v2100
    %v2136 = vsel %vm146, %v2040, %v2102
    %v2137 = vsel %vm146, %v2041, %v2104
    %v2138 = vsel %vm146, %v2042, %v2106
    %v2139 = vpack.c.bf16 %v2124, %v2123
    %v2140 = vpack.c.bf16 %v2126, %v2125
    %v2141 = vpack.c.bf16 %v2128, %v2127
    %v2142 = vpack.c.bf16 %v2130, %v2129
    %v2143 = vpack.c.bf16 %v2132, %v2131
    %v2144 = vpack.c.bf16 %v2134, %v2133
    %v2145 = vpack.c.bf16 %v2136, %v2135
    %v2146 = vpack.c.bf16 %v2138, %v2137
    %v2147 = vld [vmem:[%s1 + $0x180] sm:$0xf]
    %v2148 = vld [vmem:[%s1 + $0x184] sm:$0xf]
    %v2149 = vld [vmem:[%s1 + $0x188] sm:$0xf]
    %v2150 = vld [vmem:[%s1 + $0x18c] sm:$0xf]
    %v2151 = vld [vmem:[%s1 + $0x190] sm:$0xf]
    %v2152 = vld [vmem:[%s1 + $0x194] sm:$0xf]
    %v2153 = vld [vmem:[%s1 + $0x198] sm:$0xf]
    %v2154 = vld [vmem:[%s1 + $0x19c] sm:$0xf]
    %v2155 = vld [vmem:[%s1 + $0x1a0] sm:$0xf]
    %v2156 = vld [vmem:[%s1 + $0x1a4] sm:$0xf]
    %v2157 = vld [vmem:[%s1 + $0x1a8] sm:$0xf]
    %v2158 = vld [vmem:[%s1 + $0x1ac] sm:$0xf]
    %v2159 = vld [vmem:[%s1 + $0x1b0] sm:$0xf]
    %v2160 = vld [vmem:[%s1 + $0x1b4] sm:$0xf]
    %v2161 = vld [vmem:[%s1 + $0x1b8] sm:$0xf]
    %v2162 = vld [vmem:[%s1 + $0x1bc] sm:$0xf]
    %v2179 = vunpack.c.l.b16 %v2147
    %v2180 = vunpack.c.l.b16 %v2148
    %v2181 = vunpack.c.l.b16 %v2149
    %v2182 = vunpack.c.l.b16 %v2150
    %v2183 = vunpack.c.l.b16 %v2151
    %v2184 = vunpack.c.l.b16 %v2152
    %v2185 = vunpack.c.l.b16 %v2153
    %v2186 = vunpack.c.l.b16 %v2154
    %v2187 = vunpack.c.l.b16 %v2155
    %v2188 = vunpack.c.l.b16 %v2156
    %v2189 = vunpack.c.l.b16 %v2157
    %v2190 = vunpack.c.l.b16 %v2158
    %v2191 = vunpack.c.l.b16 %v2159
    %v2192 = vunpack.c.l.b16 %v2160
    %v2193 = vunpack.c.l.b16 %v2161
    %v2194 = vunpack.c.l.b16 %v2162
    %v2195 = vpack.c.b16 %v2180, %v2179
    %v2196 = vpack.c.b16 %v2182, %v2181
    %v2197 = vpack.c.b16 %v2184, %v2183
    %v2198 = vpack.c.b16 %v2186, %v2185
    %v2199 = vpack.c.b16 %v2188, %v2187
    %v2200 = vpack.c.b16 %v2190, %v2189
    %v2201 = vpack.c.b16 %v2192, %v2191
    %v2202 = vpack.c.b16 %v2194, %v2193
    %2211 = vmatprep.subr.bf16.mxu0 0
    %2212 = vmatpush1.bf16.msra.mxu0 %v2202
    %2213 = vmatprep.subr.bf16.mxu0 0
    %2214 = vmatpush1.bf16.msra.mxu0 %v2201
    %2215 = vmatprep.subr.bf16.mxu0 0
    %2216 = vmatpush1.bf16.msra.mxu0 %v2200
    %2217 = vmatprep.subr.bf16.mxu0 0
    %2218 = vmatpush1.bf16.msra.mxu0 %v2199
    %2219 = vmatprep.subr.bf16.mxu0 0
    %2220 = vmatpush1.bf16.msra.mxu0 %v2198
    %2221 = vmatprep.subr.bf16.mxu0 0
    %2222 = vmatpush1.bf16.msra.mxu0 %v2197
    %2223 = vmatprep.subr.bf16.mxu0 0
    %2224 = vmatpush1.bf16.msra.mxu0 %v2196
    %2225 = vmatprep.subr.bf16.mxu0 0
    %2226 = vmatpush1.bf16.msra.mxu0 %v2195
    %2227 = vmatprep.subr.bf16.mxu0 0
    %2228 = vmatpush2.bf16.msra.mxu0 0
    %2229 = vmatprep.subr.bf16.mxu0 0
    %2230 = vmatpush2.bf16.msra.mxu0 0
    %2231 = vmatprep.subr.bf16.mxu0 0
    %2232 = vmatpush2.bf16.msra.mxu0 0
    %2233 = vmatprep.subr.bf16.mxu0 0
    %2234 = vmatpush2.bf16.msra.mxu0 0
    %2235 = vmatprep.subr.bf16.mxu0 0
    %2236 = vmatpush2.bf16.msra.mxu0 0
    %2237 = vmatprep.subr.bf16.mxu0 0
    %2238 = vmatpush2.bf16.msra.mxu0 0
    %2239 = vmatprep.subr.bf16.mxu0 0
    %2240 = vmatpush2.bf16.msra.mxu0 0
    %2241 = vmatprep.subr.bf16.mxu0 0
    %2242 = vmatpush2.bf16.msra.mxu0 0
    %2243 = vmatprep.mubr.bf16.mxu0 0
    %2244 = vmatmul.mubr.bf16.gmra.mxu0 %v2139
    %v2245 = vpop.f32.mrf.mxu0
    %v2246 = vadd.f32 0.0, %v2245
    %v2247 = vpop.f32.mrf.mxu0
    %v2248 = vpop.f32.mrf.mxu0
    %v2249 = vadd.f32 0.0, %v2248
    %v2250 = vpop.f32.mrf.mxu0
    %2251 = vmatprep.mubr.bf16.mxu0 0
    %2252 = vmatmul.mubr.bf16.gmra.mxu0 %v2140
    %v2253 = vpop.f32.mrf.mxu0
    %v2254 = vadd.f32 0.0, %v2253
    %v2255 = vpop.f32.mrf.mxu0
    %v2256 = vpop.f32.mrf.mxu0
    %v2257 = vadd.f32 0.0, %v2256
    %v2258 = vpop.f32.mrf.mxu0
    %2259 = vmatprep.mubr.bf16.mxu0 0
    %2260 = vmatmul.mubr.bf16.gmra.mxu0 %v2141
    %v2261 = vpop.f32.mrf.mxu0
    %v2262 = vadd.f32 0.0, %v2261
    %v2263 = vpop.f32.mrf.mxu0
    %v2264 = vpop.f32.mrf.mxu0
    %v2265 = vadd.f32 0.0, %v2264
    %v2266 = vpop.f32.mrf.mxu0
    %2267 = vmatprep.mubr.bf16.mxu0 0
    %2268 = vmatmul.mubr.bf16.gmra.mxu0 %v2142
    %v2269 = vpop.f32.mrf.mxu0
    %v2270 = vadd.f32 0.0, %v2269
    %v2271 = vpop.f32.mrf.mxu0
    %v2272 = vpop.f32.mrf.mxu0
    %v2273 = vadd.f32 0.0, %v2272
    %v2274 = vpop.f32.mrf.mxu0
    %2275 = vmatprep.mubr.bf16.mxu0 0
    %2276 = vmatmul.mubr.bf16.gmra.mxu0 %v2143
    %v2277 = vpop.f32.mrf.mxu0
    %v2278 = vadd.f32 0.0, %v2277
    %v2279 = vpop.f32.mrf.mxu0
    %v2280 = vpop.f32.mrf.mxu0
    %v2281 = vadd.f32 0.0, %v2280
    %v2282 = vpop.f32.mrf.mxu0
    %2283 = vmatprep.mubr.bf16.mxu0 0
    %2284 = vmatmul.mubr.bf16.gmra.mxu0 %v2144
    %v2285 = vpop.f32.mrf.mxu0
    %v2286 = vadd.f32 0.0, %v2285
    %v2287 = vpop.f32.mrf.mxu0
    %v2288 = vpop.f32.mrf.mxu0
    %v2289 = vadd.f32 0.0, %v2288
    %v2290 = vpop.f32.mrf.mxu0
    %2291 = vmatprep.mubr.bf16.mxu0 0
    %2292 = vmatmul.mubr.bf16.gmra.mxu0 %v2145
    %v2293 = vpop.f32.mrf.mxu0
    %v2294 = vadd.f32 0.0, %v2293
    %v2295 = vpop.f32.mrf.mxu0
    %v2296 = vpop.f32.mrf.mxu0
    %v2297 = vadd.f32 0.0, %v2296
    %v2298 = vpop.f32.mrf.mxu0
    %2299 = vmatprep.mubr.bf16.mxu0 0
    %2300 = vmatmul.mubr.bf16.gmra.mxu0 %v2146
    %v2301 = vpop.f32.mrf.mxu0
    %v2302 = vadd.f32 0.0, %v2301
    %v2303 = vpop.f32.mrf.mxu0
    %v2304 = vpop.f32.mrf.mxu0
    %v2305 = vadd.f32 0.0, %v2304
    %v2306 = vpop.f32.mrf.mxu0
    %2307 = vdwg.mxu0
    %v2308 = vld [vmem:[#allocation2] sm:$0xff]
    %v2309 = vld [vmem:[#allocation2 + $0x8] sm:$0xff]
    %v2310 = vld [vmem:[#allocation2 + $0x10] sm:$0xff]
    %v2311 = vld [vmem:[#allocation2 + $0x18] sm:$0xff]
    %v2312 = vld [vmem:[#allocation2 + $0x20] sm:$0xff]
    %v2313 = vld [vmem:[#allocation2 + $0x28] sm:$0xff]
    %v2314 = vld [vmem:[#allocation2 + $0x30] sm:$0xff]
    %v2315 = vld [vmem:[#allocation2 + $0x38] sm:$0xff]
    %v2316 = vld [vmem:[#allocation2 + $0x40] sm:$0xff]
    %v2317 = vld [vmem:[#allocation2 + $0x48] sm:$0xff]
    %v2318 = vld [vmem:[#allocation2 + $0x50] sm:$0xff]
    %v2319 = vld [vmem:[#allocation2 + $0x58] sm:$0xff]
    %v2320 = vld [vmem:[#allocation2 + $0x60] sm:$0xff]
    %v2321 = vld [vmem:[#allocation2 + $0x68] sm:$0xff]
    %v2322 = vld [vmem:[#allocation2 + $0x70] sm:$0xff]
    %v2323 = vld [vmem:[#allocation2 + $0x78] sm:$0xff]
    %v2324 = vadd.f32 %v2308, %v2246
    %v2325 = vadd.f32 %v2309, %v2249
    %v2326 = vadd.f32 %v2310, %v2254
    %v2327 = vadd.f32 %v2311, %v2257
    %v2328 = vadd.f32 %v2312, %v2262
    %v2329 = vadd.f32 %v2313, %v2265
    %v2330 = vadd.f32 %v2314, %v2270
    %v2331 = vadd.f32 %v2315, %v2273
    %v2332 = vadd.f32 %v2316, %v2278
    %v2333 = vadd.f32 %v2317, %v2281
    %v2334 = vadd.f32 %v2318, %v2286
    %v2335 = vadd.f32 %v2319, %v2289
    %v2336 = vadd.f32 %v2320, %v2294
    %v2337 = vadd.f32 %v2321, %v2297
    %v2338 = vadd.f32 %v2322, %v2302
    %v2339 = vadd.f32 %v2323, %v2305
    %2340 = vst [vmem:[#allocation2] sm:$0xff] %v2324
    %2341 = vst [vmem:[#allocation2 + $0x8] sm:$0xff] %v2325
    %2342 = vst [vmem:[#allocation2 + $0x10] sm:$0xff] %v2326
    %2343 = vst [vmem:[#allocation2 + $0x18] sm:$0xff] %v2327
    %2344 = vst [vmem:[#allocation2 + $0x20] sm:$0xff] %v2328
    %2345 = vst [vmem:[#allocation2 + $0x28] sm:$0xff] %v2329
    %2346 = vst [vmem:[#allocation2 + $0x30] sm:$0xff] %v2330
    %2347 = vst [vmem:[#allocation2 + $0x38] sm:$0xff] %v2331
    %2348 = vst [vmem:[#allocation2 + $0x40] sm:$0xff] %v2332
    %2349 = vst [vmem:[#allocation2 + $0x48] sm:$0xff] %v2333
    %2350 = vst [vmem:[#allocation2 + $0x50] sm:$0xff] %v2334
    %2351 = vst [vmem:[#allocation2 + $0x58] sm:$0xff] %v2335
    %2352 = vst [vmem:[#allocation2 + $0x60] sm:$0xff] %v2336
    %2353 = vst [vmem:[#allocation2 + $0x68] sm:$0xff] %v2337
    %2354 = vst [vmem:[#allocation2 + $0x70] sm:$0xff] %v2338
    %2355 = vst [vmem:[#allocation2 + $0x78] sm:$0xff] %v2339
    %v2356 = vld [vmem:[%s1697 + $0x4] sm:$0xff]
    %v2357 = vld [vmem:[%s1697 + $0x14] sm:$0xff]
    %v2358 = vld [vmem:[%s1697 + $0x24] sm:$0xff]
    %v2359 = vld [vmem:[%s1697 + $0x34] sm:$0xff]
    %v2360 = vld [vmem:[%s1697 + $0x44] sm:$0xff]
    %v2361 = vld [vmem:[%s1697 + $0x54] sm:$0xff]
    %v2362 = vld [vmem:[%s1697 + $0x64] sm:$0xff]
    %v2363 = vld [vmem:[%s1697 + $0x74] sm:$0xff]
    %v2364 = vld [vmem:[%s1697 + $0xc4] sm:$0xff]
    %v2365 = vld [vmem:[%s1697 + $0xd4] sm:$0xff]
    %v2366 = vld [vmem:[%s1697 + $0xe4] sm:$0xff]
    %v2367 = vld [vmem:[%s1697 + $0xf4] sm:$0xff]
    %v2368 = vld [vmem:[%s1697 + $0x104] sm:$0xff]
    %v2369 = vld [vmem:[%s1697 + $0x114] sm:$0xff]
    %v2370 = vld [vmem:[%s1697 + $0x124] sm:$0xff]
    %v2371 = vld [vmem:[%s1697 + $0x134] sm:$0xff]
    %s2372 = scalar_lea.vmem %s0, 48
    %v2373 = vld [vmem:[%s2372] sm:$0xff]
    %v2374 = vld [vmem:[%s2372 + $0x10] sm:$0xff]
    %v2375 = vld [vmem:[%s2372 + $0x20] sm:$0xff]
    %v2376 = vld [vmem:[%s2372 + $0x30] sm:$0xff]
    %v2377 = vld [vmem:[%s2372 + $0x40] sm:$0xff]
    %v2378 = vld [vmem:[%s2372 + $0x50] sm:$0xff]
    %v2379 = vld [vmem:[%s2372 + $0x60] sm:$0xff]
    %v2380 = vld [vmem:[%s2372 + $0x70] sm:$0xff]
    %v2381 = vld [vmem:[%s2372 + $0xc0] sm:$0xff]
    %v2382 = vld [vmem:[%s2372 + $0xd0] sm:$0xff]
    %v2383 = vld [vmem:[%s2372 + $0xe0] sm:$0xff]
    %v2384 = vld [vmem:[%s2372 + $0xf0] sm:$0xff]
    %v2385 = vld [vmem:[%s2372 + $0x100] sm:$0xff]
    %v2386 = vld [vmem:[%s2372 + $0x110] sm:$0xff]
    %v2387 = vld [vmem:[%s2372 + $0x120] sm:$0xff]
    %v2388 = vld [vmem:[%s2372 + $0x130] sm:$0xff]
    %2405 = vrot.lane.b32.xlu0 %v2373, 64
    %v2406 = vpop.permute.xlu0 %2405
    %2407 = vrot.lane.b32.xlu0 %v2374, 64
    %v2408 = vpop.permute.xlu0 %2407
    %2409 = vrot.lane.b32.xlu0 %v2375, 64
    %v2410 = vpop.permute.xlu0 %2409
    %2411 = vrot.lane.b32.xlu0 %v2376, 64
    %v2412 = vpop.permute.xlu0 %2411
    %2413 = vrot.lane.b32.xlu0 %v2377, 64
    %v2414 = vpop.permute.xlu0 %2413
    %2415 = vrot.lane.b32.xlu0 %v2378, 64
    %v2416 = vpop.permute.xlu0 %2415
    %2417 = vrot.lane.b32.xlu0 %v2379, 64
    %v2418 = vpop.permute.xlu0 %2417
    %2419 = vrot.lane.b32.xlu0 %v2380, 64
    %v2420 = vpop.permute.xlu0 %2419
    %2421 = vrot.lane.b32.xlu0 %v2381, 64
    %v2422 = vpop.permute.xlu0 %2421
    %2423 = vrot.lane.b32.xlu0 %v2382, 64
    %v2424 = vpop.permute.xlu0 %2423
    %2425 = vrot.lane.b32.xlu0 %v2383, 64
    %v2426 = vpop.permute.xlu0 %2425
    %2427 = vrot.lane.b32.xlu0 %v2384, 64
    %v2428 = vpop.permute.xlu0 %2427
    %2429 = vrot.lane.b32.xlu0 %v2385, 64
    %v2430 = vpop.permute.xlu0 %2429
    %2431 = vrot.lane.b32.xlu0 %v2386, 64
    %v2432 = vpop.permute.xlu0 %2431
    %2433 = vrot.lane.b32.xlu0 %v2387, 64
    %v2434 = vpop.permute.xlu0 %2433
    %2435 = vrot.lane.b32.xlu0 %v2388, 64
    %v2436 = vpop.permute.xlu0 %2435
    %v2453 = vsel %vm146, %v2356, %v2406
    %v2454 = vsel %vm146, %v2357, %v2408
    %v2455 = vsel %vm146, %v2358, %v2410
    %v2456 = vsel %vm146, %v2359, %v2412
    %v2457 = vsel %vm146, %v2360, %v2414
    %v2458 = vsel %vm146, %v2361, %v2416
    %v2459 = vsel %vm146, %v2362, %v2418
    %v2460 = vsel %vm146, %v2363, %v2420
    %v2461 = vsel %vm146, %v2364, %v2422
    %v2462 = vsel %vm146, %v2365, %v2424
    %v2463 = vsel %vm146, %v2366, %v2426
    %v2464 = vsel %vm146, %v2367, %v2428
    %v2465 = vsel %vm146, %v2368, %v2430
    %v2466 = vsel %vm146, %v2369, %v2432
    %v2467 = vsel %vm146, %v2370, %v2434
    %v2468 = vsel %vm146, %v2371, %v2436
    %v2469 = vpack.c.bf16 %v2454, %v2453
    %v2470 = vpack.c.bf16 %v2456, %v2455
    %v2471 = vpack.c.bf16 %v2458, %v2457
    %v2472 = vpack.c.bf16 %v2460, %v2459
    %v2473 = vpack.c.bf16 %v2462, %v2461
    %v2474 = vpack.c.bf16 %v2464, %v2463
    %v2475 = vpack.c.bf16 %v2466, %v2465
    %v2476 = vpack.c.bf16 %v2468, %v2467
    %v2477 = vld [vmem:[%s1 + $0x1c0] sm:$0xf]
    %v2478 = vld [vmem:[%s1 + $0x1c4] sm:$0xf]
    %v2479 = vld [vmem:[%s1 + $0x1c8] sm:$0xf]
    %v2480 = vld [vmem:[%s1 + $0x1cc] sm:$0xf]
    %v2481 = vld [vmem:[%s1 + $0x1d0] sm:$0xf]
    %v2482 = vld [vmem:[%s1 + $0x1d4] sm:$0xf]
    %v2483 = vld [vmem:[%s1 + $0x1d8] sm:$0xf]
    %v2484 = vld [vmem:[%s1 + $0x1dc] sm:$0xf]
    %v2485 = vld [vmem:[%s1 + $0x1e0] sm:$0xf]
    %v2486 = vld [vmem:[%s1 + $0x1e4] sm:$0xf]
    %v2487 = vld [vmem:[%s1 + $0x1e8] sm:$0xf]
    %v2488 = vld [vmem:[%s1 + $0x1ec] sm:$0xf]
    %v2489 = vld [vmem:[%s1 + $0x1f0] sm:$0xf]
    %v2490 = vld [vmem:[%s1 + $0x1f4] sm:$0xf]
    %v2491 = vld [vmem:[%s1 + $0x1f8] sm:$0xf]
    %v2492 = vld [vmem:[%s1 + $0x1fc] sm:$0xf]
    %v2509 = vunpack.c.l.b16 %v2477
    %v2510 = vunpack.c.l.b16 %v2478
    %v2511 = vunpack.c.l.b16 %v2479
    %v2512 = vunpack.c.l.b16 %v2480
    %v2513 = vunpack.c.l.b16 %v2481
    %v2514 = vunpack.c.l.b16 %v2482
    %v2515 = vunpack.c.l.b16 %v2483
    %v2516 = vunpack.c.l.b16 %v2484
    %v2517 = vunpack.c.l.b16 %v2485
    %v2518 = vunpack.c.l.b16 %v2486
    %v2519 = vunpack.c.l.b16 %v2487
    %v2520 = vunpack.c.l.b16 %v2488
    %v2521 = vunpack.c.l.b16 %v2489
    %v2522 = vunpack.c.l.b16 %v2490
    %v2523 = vunpack.c.l.b16 %v2491
    %v2524 = vunpack.c.l.b16 %v2492
    %v2525 = vpack.c.b16 %v2510, %v2509
    %v2526 = vpack.c.b16 %v2512, %v2511
    %v2527 = vpack.c.b16 %v2514, %v2513
    %v2528 = vpack.c.b16 %v2516, %v2515
    %v2529 = vpack.c.b16 %v2518, %v2517
    %v2530 = vpack.c.b16 %v2520, %v2519
    %v2531 = vpack.c.b16 %v2522, %v2521
    %v2532 = vpack.c.b16 %v2524, %v2523
    %2541 = vmatprep.subr.bf16.mxu0 0
    %2542 = vmatpush1.bf16.msra.mxu0 %v2532
    %2543 = vmatprep.subr.bf16.mxu0 0
    %2544 = vmatpush1.bf16.msra.mxu0 %v2531
    %2545 = vmatprep.subr.bf16.mxu0 0
    %2546 = vmatpush1.bf16.msra.mxu0 %v2530
    %2547 = vmatprep.subr.bf16.mxu0 0
    %2548 = vmatpush1.bf16.msra.mxu0 %v2529
    %2549 = vmatprep.subr.bf16.mxu0 0
    %2550 = vmatpush1.bf16.msra.mxu0 %v2528
    %2551 = vmatprep.subr.bf16.mxu0 0
    %2552 = vmatpush1.bf16.msra.mxu0 %v2527
    %2553 = vmatprep.subr.bf16.mxu0 0
    %2554 = vmatpush1.bf16.msra.mxu0 %v2526
    %2555 = vmatprep.subr.bf16.mxu0 0
    %2556 = vmatpush1.bf16.msra.mxu0 %v2525
    %2557 = vmatprep.subr.bf16.mxu0 0
    %2558 = vmatpush2.bf16.msra.mxu0 0
    %2559 = vmatprep.subr.bf16.mxu0 0
    %2560 = vmatpush2.bf16.msra.mxu0 0
    %2561 = vmatprep.subr.bf16.mxu0 0
    %2562 = vmatpush2.bf16.msra.mxu0 0
    %2563 = vmatprep.subr.bf16.mxu0 0
    %2564 = vmatpush2.bf16.msra.mxu0 0
    %2565 = vmatprep.subr.bf16.mxu0 0
    %2566 = vmatpush2.bf16.msra.mxu0 0
    %2567 = vmatprep.subr.bf16.mxu0 0
    %2568 = vmatpush2.bf16.msra.mxu0 0
    %2569 = vmatprep.subr.bf16.mxu0 0
    %2570 = vmatpush2.bf16.msra.mxu0 0
    %2571 = vmatprep.subr.bf16.mxu0 0
    %2572 = vmatpush2.bf16.msra.mxu0 0
    %2573 = vmatprep.mubr.bf16.mxu0 0
    %2574 = vmatmul.mubr.bf16.gmra.mxu0 %v2469
    %v2575 = vpop.f32.mrf.mxu0
    %v2576 = vadd.f32 0.0, %v2575
    %v2577 = vpop.f32.mrf.mxu0
    %v2578 = vpop.f32.mrf.mxu0
    %v2579 = vadd.f32 0.0, %v2578
    %v2580 = vpop.f32.mrf.mxu0
    %2581 = vmatprep.mubr.bf16.mxu0 0
    %2582 = vmatmul.mubr.bf16.gmra.mxu0 %v2470
    %v2583 = vpop.f32.mrf.mxu0
    %v2584 = vadd.f32 0.0, %v2583
    %v2585 = vpop.f32.mrf.mxu0
    %v2586 = vpop.f32.mrf.mxu0
    %v2587 = vadd.f32 0.0, %v2586
    %v2588 = vpop.f32.mrf.mxu0
    %2589 = vmatprep.mubr.bf16.mxu0 0
    %2590 = vmatmul.mubr.bf16.gmra.mxu0 %v2471
    %v2591 = vpop.f32.mrf.mxu0
    %v2592 = vadd.f32 0.0, %v2591
    %v2593 = vpop.f32.mrf.mxu0
    %v2594 = vpop.f32.mrf.mxu0
    %v2595 = vadd.f32 0.0, %v2594
    %v2596 = vpop.f32.mrf.mxu0
    %2597 = vmatprep.mubr.bf16.mxu0 0
    %2598 = vmatmul.mubr.bf16.gmra.mxu0 %v2472
    %v2599 = vpop.f32.mrf.mxu0
    %v2600 = vadd.f32 0.0, %v2599
    %v2601 = vpop.f32.mrf.mxu0
    %v2602 = vpop.f32.mrf.mxu0
    %v2603 = vadd.f32 0.0, %v2602
    %v2604 = vpop.f32.mrf.mxu0
    %2605 = vmatprep.mubr.bf16.mxu0 0
    %2606 = vmatmul.mubr.bf16.gmra.mxu0 %v2473
    %v2607 = vpop.f32.mrf.mxu0
    %v2608 = vadd.f32 0.0, %v2607
    %v2609 = vpop.f32.mrf.mxu0
    %v2610 = vpop.f32.mrf.mxu0
    %v2611 = vadd.f32 0.0, %v2610
    %v2612 = vpop.f32.mrf.mxu0
    %2613 = vmatprep.mubr.bf16.mxu0 0
    %2614 = vmatmul.mubr.bf16.gmra.mxu0 %v2474
    %v2615 = vpop.f32.mrf.mxu0
    %v2616 = vadd.f32 0.0, %v2615
    %v2617 = vpop.f32.mrf.mxu0
    %v2618 = vpop.f32.mrf.mxu0
    %v2619 = vadd.f32 0.0, %v2618
    %v2620 = vpop.f32.mrf.mxu0
    %2621 = vmatprep.mubr.bf16.mxu0 0
    %2622 = vmatmul.mubr.bf16.gmra.mxu0 %v2475
    %v2623 = vpop.f32.mrf.mxu0
    %v2624 = vadd.f32 0.0, %v2623
    %v2625 = vpop.f32.mrf.mxu0
    %v2626 = vpop.f32.mrf.mxu0
    %v2627 = vadd.f32 0.0, %v2626
    %v2628 = vpop.f32.mrf.mxu0
    %2629 = vmatprep.mubr.bf16.mxu0 0
    %2630 = vmatmul.mubr.bf16.gmra.mxu0 %v2476
    %v2631 = vpop.f32.mrf.mxu0
    %v2632 = vadd.f32 0.0, %v2631
    %v2633 = vpop.f32.mrf.mxu0
    %v2634 = vpop.f32.mrf.mxu0
    %v2635 = vadd.f32 0.0, %v2634
    %v2636 = vpop.f32.mrf.mxu0
    %2637 = vdwg.mxu0
    %v2638 = vld [vmem:[#allocation2] sm:$0xff]
    %v2639 = vld [vmem:[#allocation2 + $0x8] sm:$0xff]
    %v2640 = vld [vmem:[#allocation2 + $0x10] sm:$0xff]
    %v2641 = vld [vmem:[#allocation2 + $0x18] sm:$0xff]
    %v2642 = vld [vmem:[#allocation2 + $0x20] sm:$0xff]
    %v2643 = vld [vmem:[#allocation2 + $0x28] sm:$0xff]
    %v2644 = vld [vmem:[#allocation2 + $0x30] sm:$0xff]
    %v2645 = vld [vmem:[#allocation2 + $0x38] sm:$0xff]
    %v2646 = vld [vmem:[#allocation2 + $0x40] sm:$0xff]
    %v2647 = vld [vmem:[#allocation2 + $0x48] sm:$0xff]
    %v2648 = vld [vmem:[#allocation2 + $0x50] sm:$0xff]
    %v2649 = vld [vmem:[#allocation2 + $0x58] sm:$0xff]
    %v2650 = vld [vmem:[#allocation2 + $0x60] sm:$0xff]
    %v2651 = vld [vmem:[#allocation2 + $0x68] sm:$0xff]
    %v2652 = vld [vmem:[#allocation2 + $0x70] sm:$0xff]
    %v2653 = vld [vmem:[#allocation2 + $0x78] sm:$0xff]
    %v2654 = vadd.f32 %v2638, %v2576
    %v2655 = vadd.f32 %v2639, %v2579
    %v2656 = vadd.f32 %v2640, %v2584
    %v2657 = vadd.f32 %v2641, %v2587
    %v2658 = vadd.f32 %v2642, %v2592
    %v2659 = vadd.f32 %v2643, %v2595
    %v2660 = vadd.f32 %v2644, %v2600
    %v2661 = vadd.f32 %v2645, %v2603
    %v2662 = vadd.f32 %v2646, %v2608
    %v2663 = vadd.f32 %v2647, %v2611
    %v2664 = vadd.f32 %v2648, %v2616
    %v2665 = vadd.f32 %v2649, %v2619
    %v2666 = vadd.f32 %v2650, %v2624
    %v2667 = vadd.f32 %v2651, %v2627
    %v2668 = vadd.f32 %v2652, %v2632
    %v2669 = vadd.f32 %v2653, %v2635
    %2670 = vst [vmem:[#allocation2] sm:$0xff] %v2654
    %2671 = vst [vmem:[#allocation2 + $0x8] sm:$0xff] %v2655
    %2672 = vst [vmem:[#allocation2 + $0x10] sm:$0xff] %v2656
    %2673 = vst [vmem:[#allocation2 + $0x18] sm:$0xff] %v2657
    %2674 = vst [vmem:[#allocation2 + $0x20] sm:$0xff] %v2658
    %2675 = vst [vmem:[#allocation2 + $0x28] sm:$0xff] %v2659
    %2676 = vst [vmem:[#allocation2 + $0x30] sm:$0xff] %v2660
    %2677 = vst [vmem:[#allocation2 + $0x38] sm:$0xff] %v2661
    %2678 = vst [vmem:[#allocation2 + $0x40] sm:$0xff] %v2662
    %2679 = vst [vmem:[#allocation2 + $0x48] sm:$0xff] %v2663
    %2680 = vst [vmem:[#allocation2 + $0x50] sm:$0xff] %v2664
    %2681 = vst [vmem:[#allocation2 + $0x58] sm:$0xff] %v2665
    %2682 = vst [vmem:[#allocation2 + $0x60] sm:$0xff] %v2666
    %2683 = vst [vmem:[#allocation2 + $0x68] sm:$0xff] %v2667
    %2684 = vst [vmem:[#allocation2 + $0x70] sm:$0xff] %v2668
    %2685 = vst [vmem:[#allocation2 + $0x78] sm:$0xff] %v2669
    %v2686 = vld [vmem:[%s2372 + $0x1] sm:$0xff]
    %v2687 = vld [vmem:[%s2372 + $0x11] sm:$0xff]
    %v2688 = vld [vmem:[%s2372 + $0x21] sm:$0xff]
    %v2689 = vld [vmem:[%s2372 + $0x31] sm:$0xff]
    %v2690 = vld [vmem:[%s2372 + $0x41] sm:$0xff]
    %v2691 = vld [vmem:[%s2372 + $0x51] sm:$0xff]
    %v2692 = vld [vmem:[%s2372 + $0x61] sm:$0xff]
    %v2693 = vld [vmem:[%s2372 + $0x71] sm:$0xff]
    %v2694 = vld [vmem:[%s2372 + $0xc1] sm:$0xff]
    %v2695 = vld [vmem:[%s2372 + $0xd1] sm:$0xff]
    %v2696 = vld [vmem:[%s2372 + $0xe1] sm:$0xff]
    %v2697 = vld [vmem:[%s2372 + $0xf1] sm:$0xff]
    %v2698 = vld [vmem:[%s2372 + $0x101] sm:$0xff]
    %v2699 = vld [vmem:[%s2372 + $0x111] sm:$0xff]
    %v2700 = vld [vmem:[%s2372 + $0x121] sm:$0xff]
    %v2701 = vld [vmem:[%s2372 + $0x131] sm:$0xff]
    %v2702 = vld [vmem:[%s2372 + $0x2] sm:$0xff]
    %v2703 = vld [vmem:[%s2372 + $0x12] sm:$0xff]
    %v2704 = vld [vmem:[%s2372 + $0x22] sm:$0xff]
    %v2705 = vld [vmem:[%s2372 + $0x32] sm:$0xff]
    %v2706 = vld [vmem:[%s2372 + $0x42] sm:$0xff]
    %v2707 = vld [vmem:[%s2372 + $0x52] sm:$0xff]
    %v2708 = vld [vmem:[%s2372 + $0x62] sm:$0xff]
    %v2709 = vld [vmem:[%s2372 + $0x72] sm:$0xff]
    %v2710 = vld [vmem:[%s2372 + $0xc2] sm:$0xff]
    %v2711 = vld [vmem:[%s2372 + $0xd2] sm:$0xff]
    %v2712 = vld [vmem:[%s2372 + $0xe2] sm:$0xff]
    %v2713 = vld [vmem:[%s2372 + $0xf2] sm:$0xff]
    %v2714 = vld [vmem:[%s2372 + $0x102] sm:$0xff]
    %v2715 = vld [vmem:[%s2372 + $0x112] sm:$0xff]
    %v2716 = vld [vmem:[%s2372 + $0x122] sm:$0xff]
    %v2717 = vld [vmem:[%s2372 + $0x132] sm:$0xff]
    %2734 = vrot.lane.b32.xlu0 %v2702, 64
    %v2735 = vpop.permute.xlu0 %2734
    %2736 = vrot.lane.b32.xlu0 %v2703, 64
    %v2737 = vpop.permute.xlu0 %2736
    %2738 = vrot.lane.b32.xlu0 %v2704, 64
    %v2739 = vpop.permute.xlu0 %2738
    %2740 = vrot.lane.b32.xlu0 %v2705, 64
    %v2741 = vpop.permute.xlu0 %2740
    %2742 = vrot.lane.b32.xlu0 %v2706, 64
    %v2743 = vpop.permute.xlu0 %2742
    %2744 = vrot.lane.b32.xlu0 %v2707, 64
    %v2745 = vpop.permute.xlu0 %2744
    %2746 = vrot.lane.b32.xlu0 %v2708, 64
    %v2747 = vpop.permute.xlu0 %2746
    %2748 = vrot.lane.b32.xlu0 %v2709, 64
    %v2749 = vpop.permute.xlu0 %2748
    %2750 = vrot.lane.b32.xlu0 %v2710, 64
    %v2751 = vpop.permute.xlu0 %2750
    %2752 = vrot.lane.b32.xlu0 %v2711, 64
    %v2753 = vpop.permute.xlu0 %2752
    %2754 = vrot.lane.b32.xlu0 %v2712, 64
    %v2755 = vpop.permute.xlu0 %2754
    %2756 = vrot.lane.b32.xlu0 %v2713, 64
    %v2757 = vpop.permute.xlu0 %2756
    %2758 = vrot.lane.b32.xlu0 %v2714, 64
    %v2759 = vpop.permute.xlu0 %2758
    %2760 = vrot.lane.b32.xlu0 %v2715, 64
    %v2761 = vpop.permute.xlu0 %2760
    %2762 = vrot.lane.b32.xlu0 %v2716, 64
    %v2763 = vpop.permute.xlu0 %2762
    %2764 = vrot.lane.b32.xlu0 %v2717, 64
    %v2765 = vpop.permute.xlu0 %2764
    %v2782 = vsel %vm146, %v2686, %v2735
    %v2783 = vsel %vm146, %v2687, %v2737
    %v2784 = vsel %vm146, %v2688, %v2739
    %v2785 = vsel %vm146, %v2689, %v2741
    %v2786 = vsel %vm146, %v2690, %v2743
    %v2787 = vsel %vm146, %v2691, %v2745
    %v2788 = vsel %vm146, %v2692, %v2747
    %v2789 = vsel %vm146, %v2693, %v2749
    %v2790 = vsel %vm146, %v2694, %v2751
    %v2791 = vsel %vm146, %v2695, %v2753
    %v2792 = vsel %vm146, %v2696, %v2755
    %v2793 = vsel %vm146, %v2697, %v2757
    %v2794 = vsel %vm146, %v2698, %v2759
    %v2795 = vsel %vm146, %v2699, %v2761
    %v2796 = vsel %vm146, %v2700, %v2763
    %v2797 = vsel %vm146, %v2701, %v2765
    %v2798 = vpack.c.bf16 %v2783, %v2782
    %v2799 = vpack.c.bf16 %v2785, %v2784
    %v2800 = vpack.c.bf16 %v2787, %v2786
    %v2801 = vpack.c.bf16 %v2789, %v2788
    %v2802 = vpack.c.bf16 %v2791, %v2790
    %v2803 = vpack.c.bf16 %v2793, %v2792
    %v2804 = vpack.c.bf16 %v2795, %v2794
    %v2805 = vpack.c.bf16 %v2797, %v2796
    %v2806 = vld [vmem:[%s1 + $0x200] sm:$0xf]
    %v2807 = vld [vmem:[%s1 + $0x204] sm:$0xf]
    %v2808 = vld [vmem:[%s1 + $0x208] sm:$0xf]
    %v2809 = vld [vmem:[%s1 + $0x20c] sm:$0xf]
    %v2810 = vld [vmem:[%s1 + $0x210] sm:$0xf]
    %v2811 = vld [vmem:[%s1 + $0x214] sm:$0xf]
    %v2812 = vld [vmem:[%s1 + $0x218] sm:$0xf]
    %v2813 = vld [vmem:[%s1 + $0x21c] sm:$0xf]
    %v2814 = vld [vmem:[%s1 + $0x220] sm:$0xf]
    %v2815 = vld [vmem:[%s1 + $0x224] sm:$0xf]
    %v2816 = vld [vmem:[%s1 + $0x228] sm:$0xf]
    %v2817 = vld [vmem:[%s1 + $0x22c] sm:$0xf]
    %v2818 = vld [vmem:[%s1 + $0x230] sm:$0xf]
    %v2819 = vld [vmem:[%s1 + $0x234] sm:$0xf]
    %v2820 = vld [vmem:[%s1 + $0x238] sm:$0xf]
    %v2821 = vld [vmem:[%s1 + $0x23c] sm:$0xf]
    %v2838 = vunpack.c.l.b16 %v2806
    %v2839 = vunpack.c.l.b16 %v2807
    %v2840 = vunpack.c.l.b16 %v2808
    %v2841 = vunpack.c.l.b16 %v2809
    %v2842 = vunpack.c.l.b16 %v2810
    %v2843 = vunpack.c.l.b16 %v2811
    %v2844 = vunpack.c.l.b16 %v2812
    %v2845 = vunpack.c.l.b16 %v2813
    %v2846 = vunpack.c.l.b16 %v2814
    %v2847 = vunpack.c.l.b16 %v2815
    %v2848 = vunpack.c.l.b16 %v2816
    %v2849 = vunpack.c.l.b16 %v2817
    %v2850 = vunpack.c.l.b16 %v2818
    %v2851 = vunpack.c.l.b16 %v2819
    %v2852 = vunpack.c.l.b16 %v2820
    %v2853 = vunpack.c.l.b16 %v2821
    %v2854 = vpack.c.b16 %v2839, %v2838
    %v2855 = vpack.c.b16 %v2841, %v2840
    %v2856 = vpack.c.b16 %v2843, %v2842
    %v2857 = vpack.c.b16 %v2845, %v2844
    %v2858 = vpack.c.b16 %v2847, %v2846
    %v2859 = vpack.c.b16 %v2849, %v2848
    %v2860 = vpack.c.b16 %v2851, %v2850
    %v2861 = vpack.c.b16 %v2853, %v2852
    %2870 = vmatprep.subr.bf16.mxu0 0
    %2871 = vmatpush1.bf16.msra.mxu0 %v2861
    %2872 = vmatprep.subr.bf16.mxu0 0
    %2873 = vmatpush1.bf16.msra.mxu0 %v2860
    %2874 = vmatprep.subr.bf16.mxu0 0
    %2875 = vmatpush1.bf16.msra.mxu0 %v2859
    %2876 = vmatprep.subr.bf16.mxu0 0
    %2877 = vmatpush1.bf16.msra.mxu0 %v2858
    %2878 = vmatprep.subr.bf16.mxu0 0
    %2879 = vmatpush1.bf16.msra.mxu0 %v2857
    %2880 = vmatprep.subr.bf16.mxu0 0
    %2881 = vmatpush1.bf16.msra.mxu0 %v2856
    %2882 = vmatprep.subr.bf16.mxu0 0
    %2883 = vmatpush1.bf16.msra.mxu0 %v2855
    %2884 = vmatprep.subr.bf16.mxu0 0
    %2885 = vmatpush1.bf16.msra.mxu0 %v2854
    %2886 = vmatprep.subr.bf16.mxu0 0
    %2887 = vmatpush2.bf16.msra.mxu0 0
    %2888 = vmatprep.subr.bf16.mxu0 0
    %2889 = vmatpush2.bf16.msra.mxu0 0
    %2890 = vmatprep.subr.bf16.mxu0 0
    %2891 = vmatpush2.bf16.msra.mxu0 0
    %2892 = vmatprep.subr.bf16.mxu0 0
    %2893 = vmatpush2.bf16.msra.mxu0 0
    %2894 = vmatprep.subr.bf16.mxu0 0
    %2895 = vmatpush2.bf16.msra.mxu0 0
    %2896 = vmatprep.subr.bf16.mxu0 0
    %2897 = vmatpush2.bf16.msra.mxu0 0
    %2898 = vmatprep.subr.bf16.mxu0 0
    %2899 = vmatpush2.bf16.msra.mxu0 0
    %2900 = vmatprep.subr.bf16.mxu0 0
    %2901 = vmatpush2.bf16.msra.mxu0 0
    %2902 = vmatprep.mubr.bf16.mxu0 0
    %2903 = vmatmul.mubr.bf16.gmra.mxu0 %v2798
    %v2904 = vpop.f32.mrf.mxu0
    %v2905 = vadd.f32 0.0, %v2904
    %v2906 = vpop.f32.mrf.mxu0
    %v2907 = vpop.f32.mrf.mxu0
    %v2908 = vadd.f32 0.0, %v2907
    %v2909 = vpop.f32.mrf.mxu0
    %2910 = vmatprep.mubr.bf16.mxu0 0
    %2911 = vmatmul.mubr.bf16.gmra.mxu0 %v2799
    %v2912 = vpop.f32.mrf.mxu0
    %v2913 = vadd.f32 0.0, %v2912
    %v2914 = vpop.f32.mrf.mxu0
    %v2915 = vpop.f32.mrf.mxu0
    %v2916 = vadd.f32 0.0, %v2915
    %v2917 = vpop.f32.mrf.mxu0
    %2918 = vmatprep.mubr.bf16.mxu0 0
    %2919 = vmatmul.mubr.bf16.gmra.mxu0 %v2800
    %v2920 = vpop.f32.mrf.mxu0
    %v2921 = vadd.f32 0.0, %v2920
    %v2922 = vpop.f32.mrf.mxu0
    %v2923 = vpop.f32.mrf.mxu0
    %v2924 = vadd.f32 0.0, %v2923
    %v2925 = vpop.f32.mrf.mxu0
    %2926 = vmatprep.mubr.bf16.mxu0 0
    %2927 = vmatmul.mubr.bf16.gmra.mxu0 %v2801
    %v2928 = vpop.f32.mrf.mxu0
    %v2929 = vadd.f32 0.0, %v2928
    %v2930 = vpop.f32.mrf.mxu0
    %v2931 = vpop.f32.mrf.mxu0
    %v2932 = vadd.f32 0.0, %v2931
    %v2933 = vpop.f32.mrf.mxu0
    %2934 = vmatprep.mubr.bf16.mxu0 0
    %2935 = vmatmul.mubr.bf16.gmra.mxu0 %v2802
    %v2936 = vpop.f32.mrf.mxu0
    %v2937 = vadd.f32 0.0, %v2936
    %v2938 = vpop.f32.mrf.mxu0
    %v2939 = vpop.f32.mrf.mxu0
    %v2940 = vadd.f32 0.0, %v2939
    %v2941 = vpop.f32.mrf.mxu0
    %2942 = vmatprep.mubr.bf16.mxu0 0
    %2943 = vmatmul.mubr.bf16.gmra.mxu0 %v2803
    %v2944 = vpop.f32.mrf.mxu0
    %v2945 = vadd.f32 0.0, %v2944
    %v2946 = vpop.f32.mrf.mxu0
    %v2947 = vpop.f32.mrf.mxu0
    %v2948 = vadd.f32 0.0, %v2947
    %v2949 = vpop.f32.mrf.mxu0
    %2950 = vmatprep.mubr.bf16.mxu0 0
    %2951 = vmatmul.mubr.bf16.gmra.mxu0 %v2804
    %v2952 = vpop.f32.mrf.mxu0
    %v2953 = vadd.f32 0.0, %v2952
    %v2954 = vpop.f32.mrf.mxu0
    %v2955 = vpop.f32.mrf.mxu0
    %v2956 = vadd.f32 0.0, %v2955
    %v2957 = vpop.f32.mrf.mxu0
    %2958 = vmatprep.mubr.bf16.mxu0 0
    %2959 = vmatmul.mubr.bf16.gmra.mxu0 %v2805
    %v2960 = vpop.f32.mrf.mxu0
    %v2961 = vadd.f32 0.0, %v2960
    %v2962 = vpop.f32.mrf.mxu0
    %v2963 = vpop.f32.mrf.mxu0
    %v2964 = vadd.f32 0.0, %v2963
    %v2965 = vpop.f32.mrf.mxu0
    %2966 = vdwg.mxu0
    %v2967 = vld [vmem:[#allocation2] sm:$0xff]
    %v2968 = vld [vmem:[#allocation2 + $0x8] sm:$0xff]
    %v2969 = vld [vmem:[#allocation2 + $0x10] sm:$0xff]
    %v2970 = vld [vmem:[#allocation2 + $0x18] sm:$0xff]
    %v2971 = vld [vmem:[#allocation2 + $0x20] sm:$0xff]
    %v2972 = vld [vmem:[#allocation2 + $0x28] sm:$0xff]
    %v2973 = vld [vmem:[#allocation2 + $0x30] sm:$0xff]
    %v2974 = vld [vmem:[#allocation2 + $0x38] sm:$0xff]
    %v2975 = vld [vmem:[#allocation2 + $0x40] sm:$0xff]
    %v2976 = vld [vmem:[#allocation2 + $0x48] sm:$0xff]
    %v2977 = vld [vmem:[#allocation2 + $0x50] sm:$0xff]
    %v2978 = vld [vmem:[#allocation2 + $0x58] sm:$0xff]
    %v2979 = vld [vmem:[#allocation2 + $0x60] sm:$0xff]
    %v2980 = vld [vmem:[#allocation2 + $0x68] sm:$0xff]
    %v2981 = vld [vmem:[#allocation2 + $0x70] sm:$0xff]
    %v2982 = vld [vmem:[#allocation2 + $0x78] sm:$0xff]
    %v2983 = vadd.f32 %v2967, %v2905
    %v2984 = vadd.f32 %v2968, %v2908
    %v2985 = vadd.f32 %v2969, %v2913
    %v2986 = vadd.f32 %v2970, %v2916
    %v2987 = vadd.f32 %v2971, %v2921
    %v2988 = vadd.f32 %v2972, %v2924
    %v2989 = vadd.f32 %v2973, %v2929
    %v2990 = vadd.f32 %v2974, %v2932
    %v2991 = vadd.f32 %v2975, %v2937
    %v2992 = vadd.f32 %v2976, %v2940
    %v2993 = vadd.f32 %v2977, %v2945
    %v2994 = vadd.f32 %v2978, %v2948
    %v2995 = vadd.f32 %v2979, %v2953
    %v2996 = vadd.f32 %v2980, %v2956
    %v2997 = vadd.f32 %v2981, %v2961
    %v2998 = vadd.f32 %v2982, %v2964
    %2999 = vst [vmem:[#allocation2] sm:$0xff] %v2983
    %3000 = vst [vmem:[#allocation2 + $0x8] sm:$0xff] %v2984
    %3001 = vst [vmem:[#allocation2 + $0x10] sm:$0xff] %v2985
    %3002 = vst [vmem:[#allocation2 + $0x18] sm:$0xff] %v2986
    %3003 = vst [vmem:[#allocation2 + $0x20] sm:$0xff] %v2987
    %3004 = vst [vmem:[#allocation2 + $0x28] sm:$0xff] %v2988
    %3005 = vst [vmem:[#allocation2 + $0x30] sm:$0xff] %v2989
    %3006 = vst [vmem:[#allocation2 + $0x38] sm:$0xff] %v2990
    %3007 = vst [vmem:[#allocation2 + $0x40] sm:$0xff] %v2991
    %3008 = vst [vmem:[#allocation2 + $0x48] sm:$0xff] %v2992
    %3009 = vst [vmem:[#allocation2 + $0x50] sm:$0xff] %v2993
    %3010 = vst [vmem:[#allocation2 + $0x58] sm:$0xff] %v2994
    %3011 = vst [vmem:[#allocation2 + $0x60] sm:$0xff] %v2995
    %3012 = vst [vmem:[#allocation2 + $0x68] sm:$0xff] %v2996
    %3013 = vst [vmem:[#allocation2 + $0x70] sm:$0xff] %v2997
    %3014 = vst [vmem:[#allocation2 + $0x78] sm:$0xff] %v2998
    %v3015 = vld [vmem:[%s2372 + $0x3] sm:$0xff]
    %v3016 = vld [vmem:[%s2372 + $0x13] sm:$0xff]
    %v3017 = vld [vmem:[%s2372 + $0x23] sm:$0xff]
    %v3018 = vld [vmem:[%s2372 + $0x33] sm:$0xff]
    %v3019 = vld [vmem:[%s2372 + $0x43] sm:$0xff]
    %v3020 = vld [vmem:[%s2372 + $0x53] sm:$0xff]
    %v3021 = vld [vmem:[%s2372 + $0x63] sm:$0xff]
    %v3022 = vld [vmem:[%s2372 + $0x73] sm:$0xff]
    %v3023 = vld [vmem:[%s2372 + $0xc3] sm:$0xff]
    %v3024 = vld [vmem:[%s2372 + $0xd3] sm:$0xff]
    %v3025 = vld [vmem:[%s2372 + $0xe3] sm:$0xff]
    %v3026 = vld [vmem:[%s2372 + $0xf3] sm:$0xff]
    %v3027 = vld [vmem:[%s2372 + $0x103] sm:$0xff]
    %v3028 = vld [vmem:[%s2372 + $0x113] sm:$0xff]
    %v3029 = vld [vmem:[%s2372 + $0x123] sm:$0xff]
    %v3030 = vld [vmem:[%s2372 + $0x133] sm:$0xff]
    %v3031 = vld [vmem:[%s2372 + $0x4] sm:$0xff]
    %v3032 = vld [vmem:[%s2372 + $0x14] sm:$0xff]
    %v3033 = vld [vmem:[%s2372 + $0x24] sm:$0xff]
    %v3034 = vld [vmem:[%s2372 + $0x34] sm:$0xff]
    %v3035 = vld [vmem:[%s2372 + $0x44] sm:$0xff]
    %v3036 = vld [vmem:[%s2372 + $0x54] sm:$0xff]
    %v3037 = vld [vmem:[%s2372 + $0x64] sm:$0xff]
    %v3038 = vld [vmem:[%s2372 + $0x74] sm:$0xff]
    %v3039 = vld [vmem:[%s2372 + $0xc4] sm:$0xff]
    %v3040 = vld [vmem:[%s2372 + $0xd4] sm:$0xff]
    %v3041 = vld [vmem:[%s2372 + $0xe4] sm:$0xff]
    %v3042 = vld [vmem:[%s2372 + $0xf4] sm:$0xff]
    %v3043 = vld [vmem:[%s2372 + $0x104] sm:$0xff]
    %v3044 = vld [vmem:[%s2372 + $0x114] sm:$0xff]
    %v3045 = vld [vmem:[%s2372 + $0x124] sm:$0xff]
    %v3046 = vld [vmem:[%s2372 + $0x134] sm:$0xff]
    %3063 = vrot.lane.b32.xlu0 %v3031, 64
    %v3064 = vpop.permute.xlu0 %3063
    %3065 = vrot.lane.b32.xlu0 %v3032, 64
    %v3066 = vpop.permute.xlu0 %3065
    %3067 = vrot.lane.b32.xlu0 %v3033, 64
    %v3068 = vpop.permute.xlu0 %3067
    %3069 = vrot.lane.b32.xlu0 %v3034, 64
    %v3070 = vpop.permute.xlu0 %3069
    %3071 = vrot.lane.b32.xlu0 %v3035, 64
    %v3072 = vpop.permute.xlu0 %3071
    %3073 = vrot.lane.b32.xlu0 %v3036, 64
    %v3074 = vpop.permute.xlu0 %3073
    %3075 = vrot.lane.b32.xlu0 %v3037, 64
    %v3076 = vpop.permute.xlu0 %3075
    %3077 = vrot.lane.b32.xlu0 %v3038, 64
    %v3078 = vpop.permute.xlu0 %3077
    %3079 = vrot.lane.b32.xlu0 %v3039, 64
    %v3080 = vpop.permute.xlu0 %3079
    %3081 = vrot.lane.b32.xlu0 %v3040, 64
    %v3082 = vpop.permute.xlu0 %3081
    %3083 = vrot.lane.b32.xlu0 %v3041, 64
    %v3084 = vpop.permute.xlu0 %3083
    %3085 = vrot.lane.b32.xlu0 %v3042, 64
    %v3086 = vpop.permute.xlu0 %3085
    %3087 = vrot.lane.b32.xlu0 %v3043, 64
    %v3088 = vpop.permute.xlu0 %3087
    %3089 = vrot.lane.b32.xlu0 %v3044, 64
    %v3090 = vpop.permute.xlu0 %3089
    %3091 = vrot.lane.b32.xlu0 %v3045, 64
    %v3092 = vpop.permute.xlu0 %3091
    %3093 = vrot.lane.b32.xlu0 %v3046, 64
    %v3094 = vpop.permute.xlu0 %3093
    %v3111 = vsel %vm146, %v3015, %v3064
    %v3112 = vsel %vm146, %v3016, %v3066
    %v3113 = vsel %vm146, %v3017, %v3068
    %v3114 = vsel %vm146, %v3018, %v3070
    %v3115 = vsel %vm146, %v3019, %v3072
    %v3116 = vsel %vm146, %v3020, %v3074
    %v3117 = vsel %vm146, %v3021, %v3076
    %v3118 = vsel %vm146, %v3022, %v3078
    %v3119 = vsel %vm146, %v3023, %v3080
    %v3120 = vsel %vm146, %v3024, %v3082
    %v3121 = vsel %vm146, %v3025, %v3084
    %v3122 = vsel %vm146, %v3026, %v3086
    %v3123 = vsel %vm146, %v3027, %v3088
    %v3124 = vsel %vm146, %v3028, %v3090
    %v3125 = vsel %vm146, %v3029, %v3092
    %v3126 = vsel %vm146, %v3030, %v3094
    %v3127 = vpack.c.bf16 %v3112, %v3111
    %v3128 = vpack.c.bf16 %v3114, %v3113
    %v3129 = vpack.c.bf16 %v3116, %v3115
    %v3130 = vpack.c.bf16 %v3118, %v3117
    %v3131 = vpack.c.bf16 %v3120, %v3119
    %v3132 = vpack.c.bf16 %v3122, %v3121
    %v3133 = vpack.c.bf16 %v3124, %v3123
    %v3134 = vpack.c.bf16 %v3126, %v3125
    %v3135 = vld [vmem:[%s1 + $0x240] sm:$0xf]
    %v3136 = vld [vmem:[%s1 + $0x244] sm:$0xf]
    %v3137 = vld [vmem:[%s1 + $0x248] sm:$0xf]
    %v3138 = vld [vmem:[%s1 + $0x24c] sm:$0xf]
    %v3139 = vld [vmem:[%s1 + $0x250] sm:$0xf]
    %v3140 = vld [vmem:[%s1 + $0x254] sm:$0xf]
    %v3141 = vld [vmem:[%s1 + $0x258] sm:$0xf]
    %v3142 = vld [vmem:[%s1 + $0x25c] sm:$0xf]
    %v3143 = vld [vmem:[%s1 + $0x260] sm:$0xf]
    %v3144 = vld [vmem:[%s1 + $0x264] sm:$0xf]
    %v3145 = vld [vmem:[%s1 + $0x268] sm:$0xf]
    %v3146 = vld [vmem:[%s1 + $0x26c] sm:$0xf]
    %v3147 = vld [vmem:[%s1 + $0x270] sm:$0xf]
    %v3148 = vld [vmem:[%s1 + $0x274] sm:$0xf]
    %v3149 = vld [vmem:[%s1 + $0x278] sm:$0xf]
    %v3150 = vld [vmem:[%s1 + $0x27c] sm:$0xf]
    %v3167 = vunpack.c.l.b16 %v3135
    %v3168 = vunpack.c.l.b16 %v3136
    %v3169 = vunpack.c.l.b16 %v3137
    %v3170 = vunpack.c.l.b16 %v3138
    %v3171 = vunpack.c.l.b16 %v3139
    %v3172 = vunpack.c.l.b16 %v3140
    %v3173 = vunpack.c.l.b16 %v3141
    %v3174 = vunpack.c.l.b16 %v3142
    %v3175 = vunpack.c.l.b16 %v3143
    %v3176 = vunpack.c.l.b16 %v3144
    %v3177 = vunpack.c.l.b16 %v3145
    %v3178 = vunpack.c.l.b16 %v3146
    %v3179 = vunpack.c.l.b16 %v3147
    %v3180 = vunpack.c.l.b16 %v3148
    %v3181 = vunpack.c.l.b16 %v3149
    %v3182 = vunpack.c.l.b16 %v3150
    %v3183 = vpack.c.b16 %v3168, %v3167
    %v3184 = vpack.c.b16 %v3170, %v3169
    %v3185 = vpack.c.b16 %v3172, %v3171
    %v3186 = vpack.c.b16 %v3174, %v3173
    %v3187 = vpack.c.b16 %v3176, %v3175
    %v3188 = vpack.c.b16 %v3178, %v3177
    %v3189 = vpack.c.b16 %v3180, %v3179
    %v3190 = vpack.c.b16 %v3182, %v3181
    %3199 = vmatprep.subr.bf16.mxu0 0
    %3200 = vmatpush1.bf16.msra.mxu0 %v3190
    %3201 = vmatprep.subr.bf16.mxu0 0
    %3202 = vmatpush1.bf16.msra.mxu0 %v3189
    %3203 = vmatprep.subr.bf16.mxu0 0
    %3204 = vmatpush1.bf16.msra.mxu0 %v3188
    %3205 = vmatprep.subr.bf16.mxu0 0
    %3206 = vmatpush1.bf16.msra.mxu0 %v3187
    %3207 = vmatprep.subr.bf16.mxu0 0
    %3208 = vmatpush1.bf16.msra.mxu0 %v3186
    %3209 = vmatprep.subr.bf16.mxu0 0
    %3210 = vmatpush1.bf16.msra.mxu0 %v3185
    %3211 = vmatprep.subr.bf16.mxu0 0
    %3212 = vmatpush1.bf16.msra.mxu0 %v3184
    %3213 = vmatprep.subr.bf16.mxu0 0
    %3214 = vmatpush1.bf16.msra.mxu0 %v3183
    %3215 = vmatprep.subr.bf16.mxu0 0
    %3216 = vmatpush2.bf16.msra.mxu0 0
    %3217 = vmatprep.subr.bf16.mxu0 0
    %3218 = vmatpush2.bf16.msra.mxu0 0
    %3219 = vmatprep.subr.bf16.mxu0 0
    %3220 = vmatpush2.bf16.msra.mxu0 0
    %3221 = vmatprep.subr.bf16.mxu0 0
    %3222 = vmatpush2.bf16.msra.mxu0 0
    %3223 = vmatprep.subr.bf16.mxu0 0
    %3224 = vmatpush2.bf16.msra.mxu0 0
    %3225 = vmatprep.subr.bf16.mxu0 0
    %3226 = vmatpush2.bf16.msra.mxu0 0
    %3227 = vmatprep.subr.bf16.mxu0 0
    %3228 = vmatpush2.bf16.msra.mxu0 0
    %3229 = vmatprep.subr.bf16.mxu0 0
    %3230 = vmatpush2.bf16.msra.mxu0 0
    %3231 = vmatprep.mubr.bf16.mxu0 0
    %3232 = vmatmul.mubr.bf16.gmra.mxu0 %v3127
    %v3233 = vpop.f32.mrf.mxu0
    %v3234 = vadd.f32 0.0, %v3233
    %v3235 = vpop.f32.mrf.mxu0
    %v3236 = vpop.f32.mrf.mxu0
    %v3237 = vadd.f32 0.0, %v3236
    %v3238 = vpop.f32.mrf.mxu0
    %3239 = vmatprep.mubr.bf16.mxu0 0
    %3240 = vmatmul.mubr.bf16.gmra.mxu0 %v3128
    %v3241 = vpop.f32.mrf.mxu0
    %v3242 = vadd.f32 0.0, %v3241
    %v3243 = vpop.f32.mrf.mxu0
    %v3244 = vpop.f32.mrf.mxu0
    %v3245 = vadd.f32 0.0, %v3244
    %v3246 = vpop.f32.mrf.mxu0
    %3247 = vmatprep.mubr.bf16.mxu0 0
    %3248 = vmatmul.mubr.bf16.gmra.mxu0 %v3129
    %v3249 = vpop.f32.mrf.mxu0
    %v3250 = vadd.f32 0.0, %v3249
    %v3251 = vpop.f32.mrf.mxu0
    %v3252 = vpop.f32.mrf.mxu0
    %v3253 = vadd.f32 0.0, %v3252
    %v3254 = vpop.f32.mrf.mxu0
    %3255 = vmatprep.mubr.bf16.mxu0 0
    %3256 = vmatmul.mubr.bf16.gmra.mxu0 %v3130
    %v3257 = vpop.f32.mrf.mxu0
    %v3258 = vadd.f32 0.0, %v3257
    %v3259 = vpop.f32.mrf.mxu0
    %v3260 = vpop.f32.mrf.mxu0
    %v3261 = vadd.f32 0.0, %v3260
    %v3262 = vpop.f32.mrf.mxu0
    %3263 = vmatprep.mubr.bf16.mxu0 0
    %3264 = vmatmul.mubr.bf16.gmra.mxu0 %v3131
    %v3265 = vpop.f32.mrf.mxu0
    %v3266 = vadd.f32 0.0, %v3265
    %v3267 = vpop.f32.mrf.mxu0
    %v3268 = vpop.f32.mrf.mxu0
    %v3269 = vadd.f32 0.0, %v3268
    %v3270 = vpop.f32.mrf.mxu0
    %3271 = vmatprep.mubr.bf16.mxu0 0
    %3272 = vmatmul.mubr.bf16.gmra.mxu0 %v3132
    %v3273 = vpop.f32.mrf.mxu0
    %v3274 = vadd.f32 0.0, %v3273
    %v3275 = vpop.f32.mrf.mxu0
    %v3276 = vpop.f32.mrf.mxu0
    %v3277 = vadd.f32 0.0, %v3276
    %v3278 = vpop.f32.mrf.mxu0
    %3279 = vmatprep.mubr.bf16.mxu0 0
    %3280 = vmatmul.mubr.bf16.gmra.mxu0 %v3133
    %v3281 = vpop.f32.mrf.mxu0
    %v3282 = vadd.f32 0.0, %v3281
    %v3283 = vpop.f32.mrf.mxu0
    %v3284 = vpop.f32.mrf.mxu0
    %v3285 = vadd.f32 0.0, %v3284
    %v3286 = vpop.f32.mrf.mxu0
    %3287 = vmatprep.mubr.bf16.mxu0 0
    %3288 = vmatmul.mubr.bf16.gmra.mxu0 %v3134
    %v3289 = vpop.f32.mrf.mxu0
    %v3290 = vadd.f32 0.0, %v3289
    %v3291 = vpop.f32.mrf.mxu0
    %v3292 = vpop.f32.mrf.mxu0
    %v3293 = vadd.f32 0.0, %v3292
    %v3294 = vpop.f32.mrf.mxu0
    %3295 = vdwg.mxu0
    %v3296 = vld [vmem:[#allocation2] sm:$0xff]
    %v3297 = vld [vmem:[#allocation2 + $0x8] sm:$0xff]
    %v3298 = vld [vmem:[#allocation2 + $0x10] sm:$0xff]
    %v3299 = vld [vmem:[#allocation2 + $0x18] sm:$0xff]
    %v3300 = vld [vmem:[#allocation2 + $0x20] sm:$0xff]
    %v3301 = vld [vmem:[#allocation2 + $0x28] sm:$0xff]
    %v3302 = vld [vmem:[#allocation2 + $0x30] sm:$0xff]
    %v3303 = vld [vmem:[#allocation2 + $0x38] sm:$0xff]
    %v3304 = vld [vmem:[#allocation2 + $0x40] sm:$0xff]
    %v3305 = vld [vmem:[#allocation2 + $0x48] sm:$0xff]
    %v3306 = vld [vmem:[#allocation2 + $0x50] sm:$0xff]
    %v3307 = vld [vmem:[#allocation2 + $0x58] sm:$0xff]
    %v3308 = vld [vmem:[#allocation2 + $0x60] sm:$0xff]
    %v3309 = vld [vmem:[#allocation2 + $0x68] sm:$0xff]
    %v3310 = vld [vmem:[#allocation2 + $0x70] sm:$0xff]
    %v3311 = vld [vmem:[#allocation2 + $0x78] sm:$0xff]
    %v3312 = vadd.f32 %v3296, %v3234
    %v3313 = vadd.f32 %v3297, %v3237
    %v3314 = vadd.f32 %v3298, %v3242
    %v3315 = vadd.f32 %v3299, %v3245
    %v3316 = vadd.f32 %v3300, %v3250
    %v3317 = vadd.f32 %v3301, %v3253
    %v3318 = vadd.f32 %v3302, %v3258
    %v3319 = vadd.f32 %v3303, %v3261
    %v3320 = vadd.f32 %v3304, %v3266
    %v3321 = vadd.f32 %v3305, %v3269
    %v3322 = vadd.f32 %v3306, %v3274
    %v3323 = vadd.f32 %v3307, %v3277
    %v3324 = vadd.f32 %v3308, %v3282
    %v3325 = vadd.f32 %v3309, %v3285
    %v3326 = vadd.f32 %v3310, %v3290
    %v3327 = vadd.f32 %v3311, %v3293
    %3328 = vst [vmem:[#allocation2] sm:$0xff] %v3312
    %3329 = vst [vmem:[#allocation2 + $0x8] sm:$0xff] %v3313
    %3330 = vst [vmem:[#allocation2 + $0x10] sm:$0xff] %v3314
    %3331 = vst [vmem:[#allocation2 + $0x18] sm:$0xff] %v3315
    %3332 = vst [vmem:[#allocation2 + $0x20] sm:$0xff] %v3316
    %3333 = vst [vmem:[#allocation2 + $0x28] sm:$0xff] %v3317
    %3334 = vst [vmem:[#allocation2 + $0x30] sm:$0xff] %v3318
    %3335 = vst [vmem:[#allocation2 + $0x38] sm:$0xff] %v3319
    %3336 = vst [vmem:[#allocation2 + $0x40] sm:$0xff] %v3320
    %3337 = vst [vmem:[#allocation2 + $0x48] sm:$0xff] %v3321
    %3338 = vst [vmem:[#allocation2 + $0x50] sm:$0xff] %v3322
    %3339 = vst [vmem:[#allocation2 + $0x58] sm:$0xff] %v3323
    %3340 = vst [vmem:[#allocation2 + $0x60] sm:$0xff] %v3324
    %3341 = vst [vmem:[#allocation2 + $0x68] sm:$0xff] %v3325
    %3342 = vst [vmem:[#allocation2 + $0x70] sm:$0xff] %v3326
    %3343 = vst [vmem:[#allocation2 + $0x78] sm:$0xff] %v3327
    %s3344 = scalar_lea.vmem %s0, 64
    %v3345 = vld [vmem:[%s3344] sm:$0xff]
    %v3346 = vld [vmem:[%s3344 + $0x10] sm:$0xff]
    %v3347 = vld [vmem:[%s3344 + $0x20] sm:$0xff]
    %v3348 = vld [vmem:[%s3344 + $0x30] sm:$0xff]
    %v3349 = vld [vmem:[%s3344 + $0x40] sm:$0xff]
    %v3350 = vld [vmem:[%s3344 + $0x50] sm:$0xff]
    %v3351 = vld [vmem:[%s3344 + $0x60] sm:$0xff]
    %v3352 = vld [vmem:[%s3344 + $0x70] sm:$0xff]
    %v3353 = vld [vmem:[%s3344 + $0xc0] sm:$0xff]
    %v3354 = vld [vmem:[%s3344 + $0xd0] sm:$0xff]
    %v3355 = vld [vmem:[%s3344 + $0xe0] sm:$0xff]
    %v3356 = vld [vmem:[%s3344 + $0xf0] sm:$0xff]
    %v3357 = vld [vmem:[%s3344 + $0x100] sm:$0xff]
    %v3358 = vld [vmem:[%s3344 + $0x110] sm:$0xff]
    %v3359 = vld [vmem:[%s3344 + $0x120] sm:$0xff]
    %v3360 = vld [vmem:[%s3344 + $0x130] sm:$0xff]
    %v3361 = vld [vmem:[%s3344 + $0x1] sm:$0xff]
    %v3362 = vld [vmem:[%s3344 + $0x11] sm:$0xff]
    %v3363 = vld [vmem:[%s3344 + $0x21] sm:$0xff]
    %v3364 = vld [vmem:[%s3344 + $0x31] sm:$0xff]
    %v3365 = vld [vmem:[%s3344 + $0x41] sm:$0xff]
    %v3366 = vld [vmem:[%s3344 + $0x51] sm:$0xff]
    %v3367 = vld [vmem:[%s3344 + $0x61] sm:$0xff]
    %v3368 = vld [vmem:[%s3344 + $0x71] sm:$0xff]
    %v3369 = vld [vmem:[%s3344 + $0xc1] sm:$0xff]
    %v3370 = vld [vmem:[%s3344 + $0xd1] sm:$0xff]
    %v3371 = vld [vmem:[%s3344 + $0xe1] sm:$0xff]
    %v3372 = vld [vmem:[%s3344 + $0xf1] sm:$0xff]
    %v3373 = vld [vmem:[%s3344 + $0x101] sm:$0xff]
    %v3374 = vld [vmem:[%s3344 + $0x111] sm:$0xff]
    %v3375 = vld [vmem:[%s3344 + $0x121] sm:$0xff]
    %v3376 = vld [vmem:[%s3344 + $0x131] sm:$0xff]
    %3393 = vrot.lane.b32.xlu0 %v3361, 64
    %v3394 = vpop.permute.xlu0 %3393
    %3395 = vrot.lane.b32.xlu0 %v3362, 64
    %v3396 = vpop.permute.xlu0 %3395
    %3397 = vrot.lane.b32.xlu0 %v3363, 64
    %v3398 = vpop.permute.xlu0 %3397
    %3399 = vrot.lane.b32.xlu0 %v3364, 64
    %v3400 = vpop.permute.xlu0 %3399
    %3401 = vrot.lane.b32.xlu0 %v3365, 64
    %v3402 = vpop.permute.xlu0 %3401
    %3403 = vrot.lane.b32.xlu0 %v3366, 64
    %v3404 = vpop.permute.xlu0 %3403
    %3405 = vrot.lane.b32.xlu0 %v3367, 64
    %v3406 = vpop.permute.xlu0 %3405
    %3407 = vrot.lane.b32.xlu0 %v3368, 64
    %v3408 = vpop.permute.xlu0 %3407
    %3409 = vrot.lane.b32.xlu0 %v3369, 64
    %v3410 = vpop.permute.xlu0 %3409
    %3411 = vrot.lane.b32.xlu0 %v3370, 64
    %v3412 = vpop.permute.xlu0 %3411
    %3413 = vrot.lane.b32.xlu0 %v3371, 64
    %v3414 = vpop.permute.xlu0 %3413
    %3415 = vrot.lane.b32.xlu0 %v3372, 64
    %v3416 = vpop.permute.xlu0 %3415
    %3417 = vrot.lane.b32.xlu0 %v3373, 64
    %v3418 = vpop.permute.xlu0 %3417
    %3419 = vrot.lane.b32.xlu0 %v3374, 64
    %v3420 = vpop.permute.xlu0 %3419
    %3421 = vrot.lane.b32.xlu0 %v3375, 64
    %v3422 = vpop.permute.xlu0 %3421
    %3423 = vrot.lane.b32.xlu0 %v3376, 64
    %v3424 = vpop.permute.xlu0 %3423
    %v3441 = vsel %vm146, %v3345, %v3394
    %v3442 = vsel %vm146, %v3346, %v3396
    %v3443 = vsel %vm146, %v3347, %v3398
    %v3444 = vsel %vm146, %v3348, %v3400
    %v3445 = vsel %vm146, %v3349, %v3402
    %v3446 = vsel %vm146, %v3350, %v3404
    %v3447 = vsel %vm146, %v3351, %v3406
    %v3448 = vsel %vm146, %v3352, %v3408
    %v3449 = vsel %vm146, %v3353, %v3410
    %v3450 = vsel %vm146, %v3354, %v3412
    %v3451 = vsel %vm146, %v3355, %v3414
    %v3452 = vsel %vm146, %v3356, %v3416
    %v3453 = vsel %vm146, %v3357, %v3418
    %v3454 = vsel %vm146, %v3358, %v3420
    %v3455 = vsel %vm146, %v3359, %v3422
    %v3456 = vsel %vm146, %v3360, %v3424
    %v3457 = vpack.c.bf16 %v3442, %v3441
    %v3458 = vpack.c.bf16 %v3444, %v3443
    %v3459 = vpack.c.bf16 %v3446, %v3445
    %v3460 = vpack.c.bf16 %v3448, %v3447
    %v3461 = vpack.c.bf16 %v3450, %v3449
    %v3462 = vpack.c.bf16 %v3452, %v3451
    %v3463 = vpack.c.bf16 %v3454, %v3453
    %v3464 = vpack.c.bf16 %v3456, %v3455
    %v3465 = vld [vmem:[%s1 + $0x280] sm:$0xf]
    %v3466 = vld [vmem:[%s1 + $0x284] sm:$0xf]
    %v3467 = vld [vmem:[%s1 + $0x288] sm:$0xf]
    %v3468 = vld [vmem:[%s1 + $0x28c] sm:$0xf]
    %v3469 = vld [vmem:[%s1 + $0x290] sm:$0xf]
    %v3470 = vld [vmem:[%s1 + $0x294] sm:$0xf]
    %v3471 = vld [vmem:[%s1 + $0x298] sm:$0xf]
    %v3472 = vld [vmem:[%s1 + $0x29c] sm:$0xf]
    %v3473 = vld [vmem:[%s1 + $0x2a0] sm:$0xf]
    %v3474 = vld [vmem:[%s1 + $0x2a4] sm:$0xf]
    %v3475 = vld [vmem:[%s1 + $0x2a8] sm:$0xf]
    %v3476 = vld [vmem:[%s1 + $0x2ac] sm:$0xf]
    %v3477 = vld [vmem:[%s1 + $0x2b0] sm:$0xf]
    %v3478 = vld [vmem:[%s1 + $0x2b4] sm:$0xf]
    %v3479 = vld [vmem:[%s1 + $0x2b8] sm:$0xf]
    %v3480 = vld [vmem:[%s1 + $0x2bc] sm:$0xf]
    %v3497 = vunpack.c.l.b16 %v3465
    %v3498 = vunpack.c.l.b16 %v3466
    %v3499 = vunpack.c.l.b16 %v3467
    %v3500 = vunpack.c.l.b16 %v3468
    %v3501 = vunpack.c.l.b16 %v3469
    %v3502 = vunpack.c.l.b16 %v3470
    %v3503 = vunpack.c.l.b16 %v3471
    %v3504 = vunpack.c.l.b16 %v3472
    %v3505 = vunpack.c.l.b16 %v3473
    %v3506 = vunpack.c.l.b16 %v3474
    %v3507 = vunpack.c.l.b16 %v3475
    %v3508 = vunpack.c.l.b16 %v3476
    %v3509 = vunpack.c.l.b16 %v3477
    %v3510 = vunpack.c.l.b16 %v3478
    %v3511 = vunpack.c.l.b16 %v3479
    %v3512 = vunpack.c.l.b16 %v3480
    %v3513 = vpack.c.b16 %v3498, %v3497
    %v3514 = vpack.c.b16 %v3500, %v3499
    %v3515 = vpack.c.b16 %v3502, %v3501
    %v3516 = vpack.c.b16 %v3504, %v3503
    %v3517 = vpack.c.b16 %v3506, %v3505
    %v3518 = vpack.c.b16 %v3508, %v3507
    %v3519 = vpack.c.b16 %v3510, %v3509
    %v3520 = vpack.c.b16 %v3512, %v3511
    %3529 = vmatprep.subr.bf16.mxu0 0
    %3530 = vmatpush1.bf16.msra.mxu0 %v3520
    %3531 = vmatprep.subr.bf16.mxu0 0
    %3532 = vmatpush1.bf16.msra.mxu0 %v3519
    %3533 = vmatprep.subr.bf16.mxu0 0
    %3534 = vmatpush1.bf16.msra.mxu0 %v3518
    %3535 = vmatprep.subr.bf16.mxu0 0
    %3536 = vmatpush1.bf16.msra.mxu0 %v3517
    %3537 = vmatprep.subr.bf16.mxu0 0
    %3538 = vmatpush1.bf16.msra.mxu0 %v3516
    %3539 = vmatprep.subr.bf16.mxu0 0
    %3540 = vmatpush1.bf16.msra.mxu0 %v3515
    %3541 = vmatprep.subr.bf16.mxu0 0
    %3542 = vmatpush1.bf16.msra.mxu0 %v3514
    %3543 = vmatprep.subr.bf16.mxu0 0
    %3544 = vmatpush1.bf16.msra.mxu0 %v3513
    %3545 = vmatprep.subr.bf16.mxu0 0
    %3546 = vmatpush2.bf16.msra.mxu0 0
    %3547 = vmatprep.subr.bf16.mxu0 0
    %3548 = vmatpush2.bf16.msra.mxu0 0
    %3549 = vmatprep.subr.bf16.mxu0 0
    %3550 = vmatpush2.bf16.msra.mxu0 0
    %3551 = vmatprep.subr.bf16.mxu0 0
    %3552 = vmatpush2.bf16.msra.mxu0 0
    %3553 = vmatprep.subr.bf16.mxu0 0
    %3554 = vmatpush2.bf16.msra.mxu0 0
    %3555 = vmatprep.subr.bf16.mxu0 0
    %3556 = vmatpush2.bf16.msra.mxu0 0
    %3557 = vmatprep.subr.bf16.mxu0 0
    %3558 = vmatpush2.bf16.msra.mxu0 0
    %3559 = vmatprep.subr.bf16.mxu0 0
    %3560 = vmatpush2.bf16.msra.mxu0 0
    %3561 = vmatprep.mubr.bf16.mxu0 0
    %3562 = vmatmul.mubr.bf16.gmra.mxu0 %v3457
    %v3563 = vpop.f32.mrf.mxu0
    %v3564 = vadd.f32 0.0, %v3563
    %v3565 = vpop.f32.mrf.mxu0
    %v3566 = vpop.f32.mrf.mxu0
    %v3567 = vadd.f32 0.0, %v3566
    %v3568 = vpop.f32.mrf.mxu0
    %3569 = vmatprep.mubr.bf16.mxu0 0
    %3570 = vmatmul.mubr.bf16.gmra.mxu0 %v3458
    %v3571 = vpop.f32.mrf.mxu0
    %v3572 = vadd.f32 0.0, %v3571
    %v3573 = vpop.f32.mrf.mxu0
    %v3574 = vpop.f32.mrf.mxu0
    %v3575 = vadd.f32 0.0, %v3574
    %v3576 = vpop.f32.mrf.mxu0
    %3577 = vmatprep.mubr.bf16.mxu0 0
    %3578 = vmatmul.mubr.bf16.gmra.mxu0 %v3459
    %v3579 = vpop.f32.mrf.mxu0
    %v3580 = vadd.f32 0.0, %v3579
    %v3581 = vpop.f32.mrf.mxu0
    %v3582 = vpop.f32.mrf.mxu0
    %v3583 = vadd.f32 0.0, %v3582
    %v3584 = vpop.f32.mrf.mxu0
    %3585 = vmatprep.mubr.bf16.mxu0 0
    %3586 = vmatmul.mubr.bf16.gmra.mxu0 %v3460
    %v3587 = vpop.f32.mrf.mxu0
    %v3588 = vadd.f32 0.0, %v3587
    %v3589 = vpop.f32.mrf.mxu0
    %v3590 = vpop.f32.mrf.mxu0
    %v3591 = vadd.f32 0.0, %v3590
    %v3592 = vpop.f32.mrf.mxu0
    %3593 = vmatprep.mubr.bf16.mxu0 0
    %3594 = vmatmul.mubr.bf16.gmra.mxu0 %v3461
    %v3595 = vpop.f32.mrf.mxu0
    %v3596 = vadd.f32 0.0, %v3595
    %v3597 = vpop.f32.mrf.mxu0
    %v3598 = vpop.f32.mrf.mxu0
    %v3599 = vadd.f32 0.0, %v3598
    %v3600 = vpop.f32.mrf.mxu0
    %3601 = vmatprep.mubr.bf16.mxu0 0
    %3602 = vmatmul.mubr.bf16.gmra.mxu0 %v3462
    %v3603 = vpop.f32.mrf.mxu0
    %v3604 = vadd.f32 0.0, %v3603
    %v3605 = vpop.f32.mrf.mxu0
    %v3606 = vpop.f32.mrf.mxu0
    %v3607 = vadd.f32 0.0, %v3606
    %v3608 = vpop.f32.mrf.mxu0
    %3609 = vmatprep.mubr.bf16.mxu0 0
    %3610 = vmatmul.mubr.bf16.gmra.mxu0 %v3463
    %v3611 = vpop.f32.mrf.mxu0
    %v3612 = vadd.f32 0.0, %v3611
    %v3613 = vpop.f32.mrf.mxu0
    %v3614 = vpop.f32.mrf.mxu0
    %v3615 = vadd.f32 0.0, %v3614
    %v3616 = vpop.f32.mrf.mxu0
    %3617 = vmatprep.mubr.bf16.mxu0 0
    %3618 = vmatmul.mubr.bf16.gmra.mxu0 %v3464
    %v3619 = vpop.f32.mrf.mxu0
    %v3620 = vadd.f32 0.0, %v3619
    %v3621 = vpop.f32.mrf.mxu0
    %v3622 = vpop.f32.mrf.mxu0
    %v3623 = vadd.f32 0.0, %v3622
    %v3624 = vpop.f32.mrf.mxu0
    %3625 = vdwg.mxu0
    %v3626 = vld [vmem:[#allocation2] sm:$0xff]
    %v3627 = vld [vmem:[#allocation2 + $0x8] sm:$0xff]
    %v3628 = vld [vmem:[#allocation2 + $0x10] sm:$0xff]
    %v3629 = vld [vmem:[#allocation2 + $0x18] sm:$0xff]
    %v3630 = vld [vmem:[#allocation2 + $0x20] sm:$0xff]
    %v3631 = vld [vmem:[#allocation2 + $0x28] sm:$0xff]
    %v3632 = vld [vmem:[#allocation2 + $0x30] sm:$0xff]
    %v3633 = vld [vmem:[#allocation2 + $0x38] sm:$0xff]
    %v3634 = vld [vmem:[#allocation2 + $0x40] sm:$0xff]
    %v3635 = vld [vmem:[#allocation2 + $0x48] sm:$0xff]
    %v3636 = vld [vmem:[#allocation2 + $0x50] sm:$0xff]
    %v3637 = vld [vmem:[#allocation2 + $0x58] sm:$0xff]
    %v3638 = vld [vmem:[#allocation2 + $0x60] sm:$0xff]
    %v3639 = vld [vmem:[#allocation2 + $0x68] sm:$0xff]
    %v3640 = vld [vmem:[#allocation2 + $0x70] sm:$0xff]
    %v3641 = vld [vmem:[#allocation2 + $0x78] sm:$0xff]
    %v3642 = vadd.f32 %v3626, %v3564
    %v3643 = vadd.f32 %v3627, %v3567
    %v3644 = vadd.f32 %v3628, %v3572
    %v3645 = vadd.f32 %v3629, %v3575
    %v3646 = vadd.f32 %v3630, %v3580
    %v3647 = vadd.f32 %v3631, %v3583
    %v3648 = vadd.f32 %v3632, %v3588
    %v3649 = vadd.f32 %v3633, %v3591
    %v3650 = vadd.f32 %v3634, %v3596
    %v3651 = vadd.f32 %v3635, %v3599
    %v3652 = vadd.f32 %v3636, %v3604
    %v3653 = vadd.f32 %v3637, %v3607
    %v3654 = vadd.f32 %v3638, %v3612
    %v3655 = vadd.f32 %v3639, %v3615
    %v3656 = vadd.f32 %v3640, %v3620
    %v3657 = vadd.f32 %v3641, %v3623
    %3658 = vst [vmem:[#allocation2] sm:$0xff] %v3642
    %3659 = vst [vmem:[#allocation2 + $0x8] sm:$0xff] %v3643
    %3660 = vst [vmem:[#allocation2 + $0x10] sm:$0xff] %v3644
    %3661 = vst [vmem:[#allocation2 + $0x18] sm:$0xff] %v3645
    %3662 = vst [vmem:[#allocation2 + $0x20] sm:$0xff] %v3646
    %3663 = vst [vmem:[#allocation2 + $0x28] sm:$0xff] %v3647
    %3664 = vst [vmem:[#allocation2 + $0x30] sm:$0xff] %v3648
    %3665 = vst [vmem:[#allocation2 + $0x38] sm:$0xff] %v3649
    %3666 = vst [vmem:[#allocation2 + $0x40] sm:$0xff] %v3650
    %3667 = vst [vmem:[#allocation2 + $0x48] sm:$0xff] %v3651
    %3668 = vst [vmem:[#allocation2 + $0x50] sm:$0xff] %v3652
    %3669 = vst [vmem:[#allocation2 + $0x58] sm:$0xff] %v3653
    %3670 = vst [vmem:[#allocation2 + $0x60] sm:$0xff] %v3654
    %3671 = vst [vmem:[#allocation2 + $0x68] sm:$0xff] %v3655
    %3672 = vst [vmem:[#allocation2 + $0x70] sm:$0xff] %v3656
    %3673 = vst [vmem:[#allocation2 + $0x78] sm:$0xff] %v3657
    %v3674 = vld [vmem:[%s3344 + $0x2] sm:$0xff]
    %v3675 = vld [vmem:[%s3344 + $0x12] sm:$0xff]
    %v3676 = vld [vmem:[%s3344 + $0x22] sm:$0xff]
    %v3677 = vld [vmem:[%s3344 + $0x32] sm:$0xff]
    %v3678 = vld [vmem:[%s3344 + $0x42] sm:$0xff]
    %v3679 = vld [vmem:[%s3344 + $0x52] sm:$0xff]
    %v3680 = vld [vmem:[%s3344 + $0x62] sm:$0xff]
    %v3681 = vld [vmem:[%s3344 + $0x72] sm:$0xff]
    %v3682 = vld [vmem:[%s3344 + $0xc2] sm:$0xff]
    %v3683 = vld [vmem:[%s3344 + $0xd2] sm:$0xff]
    %v3684 = vld [vmem:[%s3344 + $0xe2] sm:$0xff]
    %v3685 = vld [vmem:[%s3344 + $0xf2] sm:$0xff]
    %v3686 = vld [vmem:[%s3344 + $0x102] sm:$0xff]
    %v3687 = vld [vmem:[%s3344 + $0x112] sm:$0xff]
    %v3688 = vld [vmem:[%s3344 + $0x122] sm:$0xff]
    %v3689 = vld [vmem:[%s3344 + $0x132] sm:$0xff]
    %v3690 = vld [vmem:[%s3344 + $0x3] sm:$0xff]
    %v3691 = vld [vmem:[%s3344 + $0x13] sm:$0xff]
    %v3692 = vld [vmem:[%s3344 + $0x23] sm:$0xff]
    %v3693 = vld [vmem:[%s3344 + $0x33] sm:$0xff]
    %v3694 = vld [vmem:[%s3344 + $0x43] sm:$0xff]
    %v3695 = vld [vmem:[%s3344 + $0x53] sm:$0xff]
    %v3696 = vld [vmem:[%s3344 + $0x63] sm:$0xff]
    %v3697 = vld [vmem:[%s3344 + $0x73] sm:$0xff]
    %v3698 = vld [vmem:[%s3344 + $0xc3] sm:$0xff]
    %v3699 = vld [vmem:[%s3344 + $0xd3] sm:$0xff]
    %v3700 = vld [vmem:[%s3344 + $0xe3] sm:$0xff]
    %v3701 = vld [vmem:[%s3344 + $0xf3] sm:$0xff]
    %v3702 = vld [vmem:[%s3344 + $0x103] sm:$0xff]
    %v3703 = vld [vmem:[%s3344 + $0x113] sm:$0xff]
    %v3704 = vld [vmem:[%s3344 + $0x123] sm:$0xff]
    %v3705 = vld [vmem:[%s3344 + $0x133] sm:$0xff]
    %3722 = vrot.lane.b32.xlu0 %v3690, 64
    %v3723 = vpop.permute.xlu0 %3722
    %3724 = vrot.lane.b32.xlu0 %v3691, 64
    %v3725 = vpop.permute.xlu0 %3724
    %3726 = vrot.lane.b32.xlu0 %v3692, 64
    %v3727 = vpop.permute.xlu0 %3726
    %3728 = vrot.lane.b32.xlu0 %v3693, 64
    %v3729 = vpop.permute.xlu0 %3728
    %3730 = vrot.lane.b32.xlu0 %v3694, 64
    %v3731 = vpop.permute.xlu0 %3730
    %3732 = vrot.lane.b32.xlu0 %v3695, 64
    %v3733 = vpop.permute.xlu0 %3732
    %3734 = vrot.lane.b32.xlu0 %v3696, 64
    %v3735 = vpop.permute.xlu0 %3734
    %3736 = vrot.lane.b32.xlu0 %v3697, 64
    %v3737 = vpop.permute.xlu0 %3736
    %3738 = vrot.lane.b32.xlu0 %v3698, 64
    %v3739 = vpop.permute.xlu0 %3738
    %3740 = vrot.lane.b32.xlu0 %v3699, 64
    %v3741 = vpop.permute.xlu0 %3740
    %3742 = vrot.lane.b32.xlu0 %v3700, 64
    %v3743 = vpop.permute.xlu0 %3742
    %3744 = vrot.lane.b32.xlu0 %v3701, 64
    %v3745 = vpop.permute.xlu0 %3744
    %3746 = vrot.lane.b32.xlu0 %v3702, 64
    %v3747 = vpop.permute.xlu0 %3746
    %3748 = vrot.lane.b32.xlu0 %v3703, 64
    %v3749 = vpop.permute.xlu0 %3748
    %3750 = vrot.lane.b32.xlu0 %v3704, 64
    %v3751 = vpop.permute.xlu0 %3750
    %3752 = vrot.lane.b32.xlu0 %v3705, 64
    %v3753 = vpop.permute.xlu0 %3752
    %v3770 = vsel %vm146, %v3674, %v3723
    %v3771 = vsel %vm146, %v3675, %v3725
    %v3772 = vsel %vm146, %v3676, %v3727
    %v3773 = vsel %vm146, %v3677, %v3729
    %v3774 = vsel %vm146, %v3678, %v3731
    %v3775 = vsel %vm146, %v3679, %v3733
    %v3776 = vsel %vm146, %v3680, %v3735
    %v3777 = vsel %vm146, %v3681, %v3737
    %v3778 = vsel %vm146, %v3682, %v3739
    %v3779 = vsel %vm146, %v3683, %v3741
    %v3780 = vsel %vm146, %v3684, %v3743
    %v3781 = vsel %vm146, %v3685, %v3745
    %v3782 = vsel %vm146, %v3686, %v3747
    %v3783 = vsel %vm146, %v3687, %v3749
    %v3784 = vsel %vm146, %v3688, %v3751
    %v3785 = vsel %vm146, %v3689, %v3753
    %v3786 = vpack.c.bf16 %v3771, %v3770
    %v3787 = vpack.c.bf16 %v3773, %v3772
    %v3788 = vpack.c.bf16 %v3775, %v3774
    %v3789 = vpack.c.bf16 %v3777, %v3776
    %v3790 = vpack.c.bf16 %v3779, %v3778
    %v3791 = vpack.c.bf16 %v3781, %v3780
    %v3792 = vpack.c.bf16 %v3783, %v3782
    %v3793 = vpack.c.bf16 %v3785, %v3784
    %v3794 = vld [vmem:[%s1 + $0x2c0] sm:$0xf]
    %v3795 = vld [vmem:[%s1 + $0x2c4] sm:$0xf]
    %v3796 = vld [vmem:[%s1 + $0x2c8] sm:$0xf]
    %v3797 = vld [vmem:[%s1 + $0x2cc] sm:$0xf]
    %v3798 = vld [vmem:[%s1 + $0x2d0] sm:$0xf]
    %v3799 = vld [vmem:[%s1 + $0x2d4] sm:$0xf]
    %v3800 = vld [vmem:[%s1 + $0x2d8] sm:$0xf]
    %v3801 = vld [vmem:[%s1 + $0x2dc] sm:$0xf]
    %v3802 = vld [vmem:[%s1 + $0x2e0] sm:$0xf]
    %v3803 = vld [vmem:[%s1 + $0x2e4] sm:$0xf]
    %v3804 = vld [vmem:[%s1 + $0x2e8] sm:$0xf]
    %v3805 = vld [vmem:[%s1 + $0x2ec] sm:$0xf]
    %v3806 = vld [vmem:[%s1 + $0x2f0] sm:$0xf]
    %v3807 = vld [vmem:[%s1 + $0x2f4] sm:$0xf]
    %v3808 = vld [vmem:[%s1 + $0x2f8] sm:$0xf]
    %v3809 = vld [vmem:[%s1 + $0x2fc] sm:$0xf]
    %v3826 = vunpack.c.l.b16 %v3794
    %v3827 = vunpack.c.l.b16 %v3795
    %v3828 = vunpack.c.l.b16 %v3796
    %v3829 = vunpack.c.l.b16 %v3797
    %v3830 = vunpack.c.l.b16 %v3798
    %v3831 = vunpack.c.l.b16 %v3799
    %v3832 = vunpack.c.l.b16 %v3800
    %v3833 = vunpack.c.l.b16 %v3801
    %v3834 = vunpack.c.l.b16 %v3802
    %v3835 = vunpack.c.l.b16 %v3803
    %v3836 = vunpack.c.l.b16 %v3804
    %v3837 = vunpack.c.l.b16 %v3805
    %v3838 = vunpack.c.l.b16 %v3806
    %v3839 = vunpack.c.l.b16 %v3807
    %v3840 = vunpack.c.l.b16 %v3808
    %v3841 = vunpack.c.l.b16 %v3809
    %v3842 = vpack.c.b16 %v3827, %v3826
    %v3843 = vpack.c.b16 %v3829, %v3828
    %v3844 = vpack.c.b16 %v3831, %v3830
    %v3845 = vpack.c.b16 %v3833, %v3832
    %v3846 = vpack.c.b16 %v3835, %v3834
    %v3847 = vpack.c.b16 %v3837, %v3836
    %v3848 = vpack.c.b16 %v3839, %v3838
    %v3849 = vpack.c.b16 %v3841, %v3840
    %3858 = vmatprep.subr.bf16.mxu0 0
    %3859 = vmatpush1.bf16.msra.mxu0 %v3849
    %3860 = vmatprep.subr.bf16.mxu0 0
    %3861 = vmatpush1.bf16.msra.mxu0 %v3848
    %3862 = vmatprep.subr.bf16.mxu0 0
    %3863 = vmatpush1.bf16.msra.mxu0 %v3847
    %3864 = vmatprep.subr.bf16.mxu0 0
    %3865 = vmatpush1.bf16.msra.mxu0 %v3846
    %3866 = vmatprep.subr.bf16.mxu0 0
    %3867 = vmatpush1.bf16.msra.mxu0 %v3845
    %3868 = vmatprep.subr.bf16.mxu0 0
    %3869 = vmatpush1.bf16.msra.mxu0 %v3844
    %3870 = vmatprep.subr.bf16.mxu0 0
    %3871 = vmatpush1.bf16.msra.mxu0 %v3843
    %3872 = vmatprep.subr.bf16.mxu0 0
    %3873 = vmatpush1.bf16.msra.mxu0 %v3842
    %3874 = vmatprep.subr.bf16.mxu0 0
    %3875 = vmatpush2.bf16.msra.mxu0 0
    %3876 = vmatprep.subr.bf16.mxu0 0
    %3877 = vmatpush2.bf16.msra.mxu0 0
    %3878 = vmatprep.subr.bf16.mxu0 0
    %3879 = vmatpush2.bf16.msra.mxu0 0
    %3880 = vmatprep.subr.bf16.mxu0 0
    %3881 = vmatpush2.bf16.msra.mxu0 0
    %3882 = vmatprep.subr.bf16.mxu0 0
    %3883 = vmatpush2.bf16.msra.mxu0 0
    %3884 = vmatprep.subr.bf16.mxu0 0
    %3885 = vmatpush2.bf16.msra.mxu0 0
    %3886 = vmatprep.subr.bf16.mxu0 0
    %3887 = vmatpush2.bf16.msra.mxu0 0
    %3888 = vmatprep.subr.bf16.mxu0 0
    %3889 = vmatpush2.bf16.msra.mxu0 0
    %3890 = vmatprep.mubr.bf16.mxu0 0
    %3891 = vmatmul.mubr.bf16.gmra.mxu0 %v3786
    %v3892 = vpop.f32.mrf.mxu0
    %v3893 = vadd.f32 0.0, %v3892
    %v3894 = vpop.f32.mrf.mxu0
    %v3895 = vpop.f32.mrf.mxu0
    %v3896 = vadd.f32 0.0, %v3895
    %v3897 = vpop.f32.mrf.mxu0
    %3898 = vmatprep.mubr.bf16.mxu0 0
    %3899 = vmatmul.mubr.bf16.gmra.mxu0 %v3787
    %v3900 = vpop.f32.mrf.mxu0
    %v3901 = vadd.f32 0.0, %v3900
    %v3902 = vpop.f32.mrf.mxu0
    %v3903 = vpop.f32.mrf.mxu0
    %v3904 = vadd.f32 0.0, %v3903
    %v3905 = vpop.f32.mrf.mxu0
    %3906 = vmatprep.mubr.bf16.mxu0 0
    %3907 = vmatmul.mubr.bf16.gmra.mxu0 %v3788
    %v3908 = vpop.f32.mrf.mxu0
    %v3909 = vadd.f32 0.0, %v3908
    %v3910 = vpop.f32.mrf.mxu0
    %v3911 = vpop.f32.mrf.mxu0
    %v3912 = vadd.f32 0.0, %v3911
    %v3913 = vpop.f32.mrf.mxu0
    %3914 = vmatprep.mubr.bf16.mxu0 0
    %3915 = vmatmul.mubr.bf16.gmra.mxu0 %v3789
    %v3916 = vpop.f32.mrf.mxu0
    %v3917 = vadd.f32 0.0, %v3916
    %v3918 = vpop.f32.mrf.mxu0
    %v3919 = vpop.f32.mrf.mxu0
    %v3920 = vadd.f32 0.0, %v3919
    %v3921 = vpop.f32.mrf.mxu0
    %3922 = vmatprep.mubr.bf16.mxu0 0
    %3923 = vmatmul.mubr.bf16.gmra.mxu0 %v3790
    %v3924 = vpop.f32.mrf.mxu0
    %v3925 = vadd.f32 0.0, %v3924
    %v3926 = vpop.f32.mrf.mxu0
    %v3927 = vpop.f32.mrf.mxu0
    %v3928 = vadd.f32 0.0, %v3927
    %v3929 = vpop.f32.mrf.mxu0
    %3930 = vmatprep.mubr.bf16.mxu0 0
    %3931 = vmatmul.mubr.bf16.gmra.mxu0 %v3791
    %v3932 = vpop.f32.mrf.mxu0
    %v3933 = vadd.f32 0.0, %v3932
    %v3934 = vpop.f32.mrf.mxu0
    %v3935 = vpop.f32.mrf.mxu0
    %v3936 = vadd.f32 0.0, %v3935
    %v3937 = vpop.f32.mrf.mxu0
    %3938 = vmatprep.mubr.bf16.mxu0 0
    %3939 = vmatmul.mubr.bf16.gmra.mxu0 %v3792
    %v3940 = vpop.f32.mrf.mxu0
    %v3941 = vadd.f32 0.0, %v3940
    %v3942 = vpop.f32.mrf.mxu0
    %v3943 = vpop.f32.mrf.mxu0
    %v3944 = vadd.f32 0.0, %v3943
    %v3945 = vpop.f32.mrf.mxu0
    %3946 = vmatprep.mubr.bf16.mxu0 0
    %3947 = vmatmul.mubr.bf16.gmra.mxu0 %v3793
    %v3948 = vpop.f32.mrf.mxu0
    %v3949 = vadd.f32 0.0, %v3948
    %v3950 = vpop.f32.mrf.mxu0
    %v3951 = vpop.f32.mrf.mxu0
    %v3952 = vadd.f32 0.0, %v3951
    %v3953 = vpop.f32.mrf.mxu0
    %3954 = vdwg.mxu0
    %v3955 = vld [vmem:[#allocation2] sm:$0xff]
    %v3956 = vld [vmem:[#allocation2 + $0x8] sm:$0xff]
    %v3957 = vld [vmem:[#allocation2 + $0x10] sm:$0xff]
    %v3958 = vld [vmem:[#allocation2 + $0x18] sm:$0xff]
    %v3959 = vld [vmem:[#allocation2 + $0x20] sm:$0xff]
    %v3960 = vld [vmem:[#allocation2 + $0x28] sm:$0xff]
    %v3961 = vld [vmem:[#allocation2 + $0x30] sm:$0xff]
    %v3962 = vld [vmem:[#allocation2 + $0x38] sm:$0xff]
    %v3963 = vld [vmem:[#allocation2 + $0x40] sm:$0xff]
    %v3964 = vld [vmem:[#allocation2 + $0x48] sm:$0xff]
    %v3965 = vld [vmem:[#allocation2 + $0x50] sm:$0xff]
    %v3966 = vld [vmem:[#allocation2 + $0x58] sm:$0xff]
    %v3967 = vld [vmem:[#allocation2 + $0x60] sm:$0xff]
    %v3968 = vld [vmem:[#allocation2 + $0x68] sm:$0xff]
    %v3969 = vld [vmem:[#allocation2 + $0x70] sm:$0xff]
    %v3970 = vld [vmem:[#allocation2 + $0x78] sm:$0xff]
    %v3971 = vadd.f32 %v3955, %v3893
    %v3972 = vadd.f32 %v3956, %v3896
    %v3973 = vadd.f32 %v3957, %v3901
    %v3974 = vadd.f32 %v3958, %v3904
    %v3975 = vadd.f32 %v3959, %v3909
    %v3976 = vadd.f32 %v3960, %v3912
    %v3977 = vadd.f32 %v3961, %v3917
    %v3978 = vadd.f32 %v3962, %v3920
    %v3979 = vadd.f32 %v3963, %v3925
    %v3980 = vadd.f32 %v3964, %v3928
    %v3981 = vadd.f32 %v3965, %v3933
    %v3982 = vadd.f32 %v3966, %v3936
    %v3983 = vadd.f32 %v3967, %v3941
    %v3984 = vadd.f32 %v3968, %v3944
    %v3985 = vadd.f32 %v3969, %v3949
    %v3986 = vadd.f32 %v3970, %v3952
    %3987 = vst [vmem:[#allocation2] sm:$0xff] %v3971
    %3988 = vst [vmem:[#allocation2 + $0x8] sm:$0xff] %v3972
    %3989 = vst [vmem:[#allocation2 + $0x10] sm:$0xff] %v3973
    %3990 = vst [vmem:[#allocation2 + $0x18] sm:$0xff] %v3974
    %3991 = vst [vmem:[#allocation2 + $0x20] sm:$0xff] %v3975
    %3992 = vst [vmem:[#allocation2 + $0x28] sm:$0xff] %v3976
    %3993 = vst [vmem:[#allocation2 + $0x30] sm:$0xff] %v3977
    %3994 = vst [vmem:[#allocation2 + $0x38] sm:$0xff] %v3978
    %3995 = vst [vmem:[#allocation2 + $0x40] sm:$0xff] %v3979
    %3996 = vst [vmem:[#allocation2 + $0x48] sm:$0xff] %v3980
    %3997 = vst [vmem:[#allocation2 + $0x50] sm:$0xff] %v3981
    %3998 = vst [vmem:[#allocation2 + $0x58] sm:$0xff] %v3982
    %3999 = vst [vmem:[#allocation2 + $0x60] sm:$0xff] %v3983
    %4000 = vst [vmem:[#allocation2 + $0x68] sm:$0xff] %v3984
    %4001 = vst [vmem:[#allocation2 + $0x70] sm:$0xff] %v3985
    %4002 = vst [vmem:[#allocation2 + $0x78] sm:$0xff] %v3986
    %v4003 = vld [vmem:[%s3344 + $0x4] sm:$0xff]
    %v4004 = vld [vmem:[%s3344 + $0x14] sm:$0xff]
    %v4005 = vld [vmem:[%s3344 + $0x24] sm:$0xff]
    %v4006 = vld [vmem:[%s3344 + $0x34] sm:$0xff]
    %v4007 = vld [vmem:[%s3344 + $0x44] sm:$0xff]
    %v4008 = vld [vmem:[%s3344 + $0x54] sm:$0xff]
    %v4009 = vld [vmem:[%s3344 + $0x64] sm:$0xff]
    %v4010 = vld [vmem:[%s3344 + $0x74] sm:$0xff]
    %v4011 = vld [vmem:[%s3344 + $0xc4] sm:$0xff]
    %v4012 = vld [vmem:[%s3344 + $0xd4] sm:$0xff]
    %v4013 = vld [vmem:[%s3344 + $0xe4] sm:$0xff]
    %v4014 = vld [vmem:[%s3344 + $0xf4] sm:$0xff]
    %v4015 = vld [vmem:[%s3344 + $0x104] sm:$0xff]
    %v4016 = vld [vmem:[%s3344 + $0x114] sm:$0xff]
    %v4017 = vld [vmem:[%s3344 + $0x124] sm:$0xff]
    %v4018 = vld [vmem:[%s3344 + $0x134] sm:$0xff]
    %4035 = vrot.lane.b32.xlu0 %v4003, 64
    %v4036 = vpop.permute.xlu0 %4035
    %4037 = vrot.lane.b32.xlu0 %v4004, 64
    %v4038 = vpop.permute.xlu0 %4037
    %4039 = vrot.lane.b32.xlu0 %v4005, 64
    %v4040 = vpop.permute.xlu0 %4039
    %4041 = vrot.lane.b32.xlu0 %v4006, 64
    %v4042 = vpop.permute.xlu0 %4041
    %4043 = vrot.lane.b32.xlu0 %v4007, 64
    %v4044 = vpop.permute.xlu0 %4043
    %4045 = vrot.lane.b32.xlu0 %v4008, 64
    %v4046 = vpop.permute.xlu0 %4045
    %4047 = vrot.lane.b32.xlu0 %v4009, 64
    %v4048 = vpop.permute.xlu0 %4047
    %4049 = vrot.lane.b32.xlu0 %v4010, 64
    %v4050 = vpop.permute.xlu0 %4049
    %4051 = vrot.lane.b32.xlu0 %v4011, 64
    %v4052 = vpop.permute.xlu0 %4051
    %4053 = vrot.lane.b32.xlu0 %v4012, 64
    %v4054 = vpop.permute.xlu0 %4053
    %4055 = vrot.lane.b32.xlu0 %v4013, 64
    %v4056 = vpop.permute.xlu0 %4055
    %4057 = vrot.lane.b32.xlu0 %v4014, 64
    %v4058 = vpop.permute.xlu0 %4057
    %4059 = vrot.lane.b32.xlu0 %v4015, 64
    %v4060 = vpop.permute.xlu0 %4059
    %4061 = vrot.lane.b32.xlu0 %v4016, 64
    %v4062 = vpop.permute.xlu0 %4061
    %4063 = vrot.lane.b32.xlu0 %v4017, 64
    %v4064 = vpop.permute.xlu0 %4063
    %4065 = vrot.lane.b32.xlu0 %v4018, 64
    %v4066 = vpop.permute.xlu0 %4065
    %v4083 = vsel %vm146, %v4003, %v4036
    %v4084 = vsel %vm146, %v4004, %v4038
    %v4085 = vsel %vm146, %v4005, %v4040
    %v4086 = vsel %vm146, %v4006, %v4042
    %v4087 = vsel %vm146, %v4007, %v4044
    %v4088 = vsel %vm146, %v4008, %v4046
    %v4089 = vsel %vm146, %v4009, %v4048
    %v4090 = vsel %vm146, %v4010, %v4050
    %v4091 = vsel %vm146, %v4011, %v4052
    %v4092 = vsel %vm146, %v4012, %v4054
    %v4093 = vsel %vm146, %v4013, %v4056
    %v4094 = vsel %vm146, %v4014, %v4058
    %v4095 = vsel %vm146, %v4015, %v4060
    %v4096 = vsel %vm146, %v4016, %v4062
    %v4097 = vsel %vm146, %v4017, %v4064
    %v4098 = vsel %vm146, %v4018, %v4066
    %v4099 = vpack.c.bf16 %v4084, %v4083
    %v4100 = vpack.c.bf16 %v4086, %v4085
    %v4101 = vpack.c.bf16 %v4088, %v4087
    %v4102 = vpack.c.bf16 %v4090, %v4089
    %v4103 = vpack.c.bf16 %v4092, %v4091
    %v4104 = vpack.c.bf16 %v4094, %v4093
    %v4105 = vpack.c.bf16 %v4096, %v4095
    %v4106 = vpack.c.bf16 %v4098, %v4097
    %v4107 = vld [vmem:[%s1 + $0x300] sm:$0xf]
    %v4108 = vld [vmem:[%s1 + $0x304] sm:$0xf]
    %v4109 = vld [vmem:[%s1 + $0x308] sm:$0xf]
    %v4110 = vld [vmem:[%s1 + $0x30c] sm:$0xf]
    %v4111 = vld [vmem:[%s1 + $0x310] sm:$0xf]
    %v4112 = vld [vmem:[%s1 + $0x314] sm:$0xf]
    %v4113 = vld [vmem:[%s1 + $0x318] sm:$0xf]
    %v4114 = vld [vmem:[%s1 + $0x31c] sm:$0xf]
    %v4115 = vld [vmem:[%s1 + $0x320] sm:$0xf]
    %v4116 = vld [vmem:[%s1 + $0x324] sm:$0xf]
    %v4117 = vld [vmem:[%s1 + $0x328] sm:$0xf]
    %v4118 = vld [vmem:[%s1 + $0x32c] sm:$0xf]
    %v4119 = vld [vmem:[%s1 + $0x330] sm:$0xf]
    %v4120 = vld [vmem:[%s1 + $0x334] sm:$0xf]
    %v4121 = vld [vmem:[%s1 + $0x338] sm:$0xf]
    %v4122 = vld [vmem:[%s1 + $0x33c] sm:$0xf]
    %v4139 = vunpack.c.l.b16 %v4107
    %v4140 = vunpack.c.l.b16 %v4108
    %v4141 = vunpack.c.l.b16 %v4109
    %v4142 = vunpack.c.l.b16 %v4110
    %v4143 = vunpack.c.l.b16 %v4111
    %v4144 = vunpack.c.l.b16 %v4112
    %v4145 = vunpack.c.l.b16 %v4113
    %v4146 = vunpack.c.l.b16 %v4114
    %v4147 = vunpack.c.l.b16 %v4115
    %v4148 = vunpack.c.l.b16 %v4116
    %v4149 = vunpack.c.l.b16 %v4117
    %v4150 = vunpack.c.l.b16 %v4118
    %v4151 = vunpack.c.l.b16 %v4119
    %v4152 = vunpack.c.l.b16 %v4120
    %v4153 = vunpack.c.l.b16 %v4121
    %v4154 = vunpack.c.l.b16 %v4122
    %v4155 = vpack.c.b16 %v4140, %v4139
    %v4156 = vpack.c.b16 %v4142, %v4141
    %v4157 = vpack.c.b16 %v4144, %v4143
    %v4158 = vpack.c.b16 %v4146, %v4145
    %v4159 = vpack.c.b16 %v4148, %v4147
    %v4160 = vpack.c.b16 %v4150, %v4149
    %v4161 = vpack.c.b16 %v4152, %v4151
    %v4162 = vpack.c.b16 %v4154, %v4153
    %4171 = vmatprep.subr.bf16.mxu0 0
    %4172 = vmatpush1.bf16.msra.mxu0 %v4162
    %4173 = vmatprep.subr.bf16.mxu0 0
    %4174 = vmatpush1.bf16.msra.mxu0 %v4161
    %4175 = vmatprep.subr.bf16.mxu0 0
    %4176 = vmatpush1.bf16.msra.mxu0 %v4160
    %4177 = vmatprep.subr.bf16.mxu0 0
    %4178 = vmatpush1.bf16.msra.mxu0 %v4159
    %4179 = vmatprep.subr.bf16.mxu0 0
    %4180 = vmatpush1.bf16.msra.mxu0 %v4158
    %4181 = vmatprep.subr.bf16.mxu0 0
    %4182 = vmatpush1.bf16.msra.mxu0 %v4157
    %4183 = vmatprep.subr.bf16.mxu0 0
    %4184 = vmatpush1.bf16.msra.mxu0 %v4156
    %4185 = vmatprep.subr.bf16.mxu0 0
    %4186 = vmatpush1.bf16.msra.mxu0 %v4155
    %4187 = vmatprep.subr.bf16.mxu0 0
    %4188 = vmatpush2.bf16.msra.mxu0 0
    %4189 = vmatprep.subr.bf16.mxu0 0
    %4190 = vmatpush2.bf16.msra.mxu0 0
    %4191 = vmatprep.subr.bf16.mxu0 0
    %4192 = vmatpush2.bf16.msra.mxu0 0
    %4193 = vmatprep.subr.bf16.mxu0 0
    %4194 = vmatpush2.bf16.msra.mxu0 0
    %4195 = vmatprep.subr.bf16.mxu0 0
    %4196 = vmatpush2.bf16.msra.mxu0 0
    %4197 = vmatprep.subr.bf16.mxu0 0
    %4198 = vmatpush2.bf16.msra.mxu0 0
    %4199 = vmatprep.subr.bf16.mxu0 0
    %4200 = vmatpush2.bf16.msra.mxu0 0
    %4201 = vmatprep.subr.bf16.mxu0 0
    %4202 = vmatpush2.bf16.msra.mxu0 0
    %4203 = vmatprep.mubr.bf16.mxu0 0
    %4204 = vmatmul.mubr.bf16.gmra.mxu0 %v4099
    %v4205 = vpop.f32.mrf.mxu0
    %v4206 = vadd.f32 0.0, %v4205
    %v4207 = vpop.f32.mrf.mxu0
    %v4208 = vpop.f32.mrf.mxu0
    %v4209 = vadd.f32 0.0, %v4208
    %v4210 = vpop.f32.mrf.mxu0
    %4211 = vmatprep.mubr.bf16.mxu0 0
    %4212 = vmatmul.mubr.bf16.gmra.mxu0 %v4100
    %v4213 = vpop.f32.mrf.mxu0
    %v4214 = vadd.f32 0.0, %v4213
    %v4215 = vpop.f32.mrf.mxu0
    %v4216 = vpop.f32.mrf.mxu0
    %v4217 = vadd.f32 0.0, %v4216
    %v4218 = vpop.f32.mrf.mxu0
    %4219 = vmatprep.mubr.bf16.mxu0 0
    %4220 = vmatmul.mubr.bf16.gmra.mxu0 %v4101
    %v4221 = vpop.f32.mrf.mxu0
    %v4222 = vadd.f32 0.0, %v4221
    %v4223 = vpop.f32.mrf.mxu0
    %v4224 = vpop.f32.mrf.mxu0
    %v4225 = vadd.f32 0.0, %v4224
    %v4226 = vpop.f32.mrf.mxu0
    %4227 = vmatprep.mubr.bf16.mxu0 0
    %4228 = vmatmul.mubr.bf16.gmra.mxu0 %v4102
    %v4229 = vpop.f32.mrf.mxu0
    %v4230 = vadd.f32 0.0, %v4229
    %v4231 = vpop.f32.mrf.mxu0
    %v4232 = vpop.f32.mrf.mxu0
    %v4233 = vadd.f32 0.0, %v4232
    %v4234 = vpop.f32.mrf.mxu0
    %4235 = vmatprep.mubr.bf16.mxu0 0
    %4236 = vmatmul.mubr.bf16.gmra.mxu0 %v4103
    %v4237 = vpop.f32.mrf.mxu0
    %v4238 = vadd.f32 0.0, %v4237
    %v4239 = vpop.f32.mrf.mxu0
    %v4240 = vpop.f32.mrf.mxu0
    %v4241 = vadd.f32 0.0, %v4240
    %v4242 = vpop.f32.mrf.mxu0
    %4243 = vmatprep.mubr.bf16.mxu0 0
    %4244 = vmatmul.mubr.bf16.gmra.mxu0 %v4104
    %v4245 = vpop.f32.mrf.mxu0
    %v4246 = vadd.f32 0.0, %v4245
    %v4247 = vpop.f32.mrf.mxu0
    %v4248 = vpop.f32.mrf.mxu0
    %v4249 = vadd.f32 0.0, %v4248
    %v4250 = vpop.f32.mrf.mxu0
    %4251 = vmatprep.mubr.bf16.mxu0 0
    %4252 = vmatmul.mubr.bf16.gmra.mxu0 %v4105
    %v4253 = vpop.f32.mrf.mxu0
    %v4254 = vadd.f32 0.0, %v4253
    %v4255 = vpop.f32.mrf.mxu0
    %v4256 = vpop.f32.mrf.mxu0
    %v4257 = vadd.f32 0.0, %v4256
    %v4258 = vpop.f32.mrf.mxu0
    %4259 = vmatprep.mubr.bf16.mxu0 0
    %4260 = vmatmul.mubr.bf16.gmra.mxu0 %v4106
    %v4261 = vpop.f32.mrf.mxu0
    %v4262 = vadd.f32 0.0, %v4261
    %v4263 = vpop.f32.mrf.mxu0
    %v4264 = vpop.f32.mrf.mxu0
    %v4265 = vadd.f32 0.0, %v4264
    %v4266 = vpop.f32.mrf.mxu0
    %4267 = vdwg.mxu0
    %v4268 = vld [vmem:[#allocation2] sm:$0xff]
    %v4269 = vld [vmem:[#allocation2 + $0x8] sm:$0xff]
    %v4270 = vld [vmem:[#allocation2 + $0x10] sm:$0xff]
    %v4271 = vld [vmem:[#allocation2 + $0x18] sm:$0xff]
    %v4272 = vld [vmem:[#allocation2 + $0x20] sm:$0xff]
    %v4273 = vld [vmem:[#allocation2 + $0x28] sm:$0xff]
    %v4274 = vld [vmem:[#allocation2 + $0x30] sm:$0xff]
    %v4275 = vld [vmem:[#allocation2 + $0x38] sm:$0xff]
    %v4276 = vld [vmem:[#allocation2 + $0x40] sm:$0xff]
    %v4277 = vld [vmem:[#allocation2 + $0x48] sm:$0xff]
    %v4278 = vld [vmem:[#allocation2 + $0x50] sm:$0xff]
    %v4279 = vld [vmem:[#allocation2 + $0x58] sm:$0xff]
    %v4280 = vld [vmem:[#allocation2 + $0x60] sm:$0xff]
    %v4281 = vld [vmem:[#allocation2 + $0x68] sm:$0xff]
    %v4282 = vld [vmem:[#allocation2 + $0x70] sm:$0xff]
    %v4283 = vld [vmem:[#allocation2 + $0x78] sm:$0xff]
    %v4284 = vadd.f32 %v4268, %v4206
    %v4285 = vadd.f32 %v4269, %v4209
    %v4286 = vadd.f32 %v4270, %v4214
    %v4287 = vadd.f32 %v4271, %v4217
    %v4288 = vadd.f32 %v4272, %v4222
    %v4289 = vadd.f32 %v4273, %v4225
    %v4290 = vadd.f32 %v4274, %v4230
    %v4291 = vadd.f32 %v4275, %v4233
    %v4292 = vadd.f32 %v4276, %v4238
    %v4293 = vadd.f32 %v4277, %v4241
    %v4294 = vadd.f32 %v4278, %v4246
    %v4295 = vadd.f32 %v4279, %v4249
    %v4296 = vadd.f32 %v4280, %v4254
    %v4297 = vadd.f32 %v4281, %v4257
    %v4298 = vadd.f32 %v4282, %v4262
    %v4299 = vadd.f32 %v4283, %v4265
    %4300 = vst [vmem:[#allocation2] sm:$0xff] %v4284
    %4301 = vst [vmem:[#allocation2 + $0x8] sm:$0xff] %v4285
    %4302 = vst [vmem:[#allocation2 + $0x10] sm:$0xff] %v4286
    %4303 = vst [vmem:[#allocation2 + $0x18] sm:$0xff] %v4287
    %4304 = vst [vmem:[#allocation2 + $0x20] sm:$0xff] %v4288
    %4305 = vst [vmem:[#allocation2 + $0x28] sm:$0xff] %v4289
    %4306 = vst [vmem:[#allocation2 + $0x30] sm:$0xff] %v4290
    %4307 = vst [vmem:[#allocation2 + $0x38] sm:$0xff] %v4291
    %4308 = vst [vmem:[#allocation2 + $0x40] sm:$0xff] %v4292
    %4309 = vst [vmem:[#allocation2 + $0x48] sm:$0xff] %v4293
    %4310 = vst [vmem:[#allocation2 + $0x50] sm:$0xff] %v4294
    %4311 = vst [vmem:[#allocation2 + $0x58] sm:$0xff] %v4295
    %4312 = vst [vmem:[#allocation2 + $0x60] sm:$0xff] %v4296
    %4313 = vst [vmem:[#allocation2 + $0x68] sm:$0xff] %v4297
    %4314 = vst [vmem:[#allocation2 + $0x70] sm:$0xff] %v4298
    %4315 = vst [vmem:[#allocation2 + $0x78] sm:$0xff] %v4299
    %v4316 = vld [vmem:[%s2] sm:$0x1]
    %v4317 = vld [vmem:[#allocation2] sm:$0x1]
    %v4318 = vld [vmem:[#allocation2 + $0x40] sm:$0x1]
    %v4319 = vld [vmem:[#allocation2 + $0x1] sm:$0x1]
    %v4320 = vld [vmem:[#allocation2 + $0x41] sm:$0x1]
    %v4321 = vmax.f32 %v4317, %v4319
    %v4322 = vmax.f32 %v4318, %v4320
    %s4323 = scalar_lea.vmem [#allocation2], 8
    %v4324 = vld [vmem:[%s4323] sm:$0x1]
    %v4325 = vld [vmem:[%s4323 + $0x40] sm:$0x1]
    %v4326 = vld [vmem:[%s4323 + $0x1] sm:$0x1]
    %v4327 = vld [vmem:[%s4323 + $0x41] sm:$0x1]
    %v4328 = vmax.f32 %v4324, %v4326
    %v4329 = vmax.f32 %v4325, %v4327
    %v4330 = vmax.f32 %v4321, %v4328
    %v4331 = vmax.f32 %v4322, %v4329
    %v4333 = vlaneseq
    %v4334 = vshrl.u32 %v4333, 7
    %v4335 = vsub.s32 0, %v4334
    %v4336 = vrot.slane %v4316, %v4335
    %v4338 = vadd.f32 %v4330, %v4336
    %v4339 = vadd.f32 %v4331, %v4336
    %v4340 = vmax.f32 %v4338, 0.0
    %v4341 = vmax.f32 %v4339, 0.0
    %v4342 = vld [vmem:[#allocation2 + $0x2] sm:$0x1]
    %v4343 = vld [vmem:[#allocation2 + $0x42] sm:$0x1]
    %v4344 = vld [vmem:[#allocation2 + $0x3] sm:$0x1]
    %v4345 = vld [vmem:[#allocation2 + $0x43] sm:$0x1]
    %v4346 = vmax.f32 %v4342, %v4344
    %v4347 = vmax.f32 %v4343, %v4345
    %v4348 = vld [vmem:[%s4323 + $0x2] sm:$0x1]
    %v4349 = vld [vmem:[%s4323 + $0x42] sm:$0x1]
    %v4350 = vld [vmem:[%s4323 + $0x3] sm:$0x1]
    %v4351 = vld [vmem:[%s4323 + $0x43] sm:$0x1]
    %v4352 = vmax.f32 %v4348, %v4350
    %v4353 = vmax.f32 %v4349, %v4351
    %v4354 = vmax.f32 %v4346, %v4352
    %v4355 = vmax.f32 %v4347, %v4353
    %v4356 = vadd.f32 %v4354, %v4336
    %v4357 = vadd.f32 %v4355, %v4336
    %v4358 = vmax.f32 %v4356, 0.0
    %v4359 = vmax.f32 %v4357, 0.0
    %v4360 = vld [vmem:[#allocation2 + $0x4] sm:$0x1]
    %v4361 = vld [vmem:[#allocation2 + $0x44] sm:$0x1]
    %v4362 = vld [vmem:[#allocation2 + $0x5] sm:$0x1]
    %v4363 = vld [vmem:[#allocation2 + $0x45] sm:$0x1]
    %v4364 = vmax.f32 %v4360, %v4362
    %v4365 = vmax.f32 %v4361, %v4363
    %v4366 = vld [vmem:[%s4323 + $0x4] sm:$0x1]
    %v4367 = vld [vmem:[%s4323 + $0x44] sm:$0x1]
    %v4368 = vld [vmem:[%s4323 + $0x5] sm:$0x1]
    %v4369 = vld [vmem:[%s4323 + $0x45] sm:$0x1]
    %v4370 = vmax.f32 %v4366, %v4368
    %v4371 = vmax.f32 %v4367, %v4369
    %v4372 = vmax.f32 %v4364, %v4370
    %v4373 = vmax.f32 %v4365, %v4371
    %v4374 = vadd.f32 %v4372, %v4336
    %v4375 = vadd.f32 %v4373, %v4336
    %v4376 = vmax.f32 %v4374, 0.0
    %v4377 = vmax.f32 %v4375, 0.0
    %v4378 = vld [vmem:[#allocation2 + $0x6] sm:$0x1]
    %v4379 = vld [vmem:[#allocation2 + $0x46] sm:$0x1]
    %v4380 = vld [vmem:[#allocation2 + $0x7] sm:$0x1]
    %v4381 = vld [vmem:[#allocation2 + $0x47] sm:$0x1]
    %v4382 = vmax.f32 %v4378, %v4380
    %v4383 = vmax.f32 %v4379, %v4381
    %v4384 = vld [vmem:[%s4323 + $0x6] sm:$0x1]
    %v4385 = vld [vmem:[%s4323 + $0x46] sm:$0x1]
    %v4386 = vld [vmem:[%s4323 + $0x7] sm:$0x1]
    %v4387 = vld [vmem:[%s4323 + $0x47] sm:$0x1]
    %v4388 = vmax.f32 %v4384, %v4386
    %v4389 = vmax.f32 %v4385, %v4387
    %v4390 = vmax.f32 %v4382, %v4388
    %v4391 = vmax.f32 %v4383, %v4389
    %v4392 = vadd.f32 %v4390, %v4336
    %v4393 = vadd.f32 %v4391, %v4336
    %v4394 = vmax.f32 %v4392, 0.0
    %v4395 = vmax.f32 %v4393, 0.0
    %s4396 = scalar_lea.vmem [#allocation2], 16
    %v4397 = vld [vmem:[%s4396] sm:$0x1]
    %v4398 = vld [vmem:[%s4396 + $0x40] sm:$0x1]
    %v4399 = vld [vmem:[%s4396 + $0x1] sm:$0x1]
    %v4400 = vld [vmem:[%s4396 + $0x41] sm:$0x1]
    %v4401 = vmax.f32 %v4397, %v4399
    %v4402 = vmax.f32 %v4398, %v4400
    %s4403 = scalar_lea.vmem [#allocation2], 24
    %v4404 = vld [vmem:[%s4403] sm:$0x1]
    %v4405 = vld [vmem:[%s4403 + $0x40] sm:$0x1]
    %v4406 = vld [vmem:[%s4403 + $0x1] sm:$0x1]
    %v4407 = vld [vmem:[%s4403 + $0x41] sm:$0x1]
    %v4408 = vmax.f32 %v4404, %v4406
    %v4409 = vmax.f32 %v4405, %v4407
    %v4410 = vmax.f32 %v4401, %v4408
    %v4411 = vmax.f32 %v4402, %v4409
    %v4412 = vadd.f32 %v4410, %v4336
    %v4413 = vadd.f32 %v4411, %v4336
    %v4414 = vmax.f32 %v4412, 0.0
    %v4415 = vmax.f32 %v4413, 0.0
    %v4416 = vld [vmem:[%s4396 + $0x2] sm:$0x1]
    %v4417 = vld [vmem:[%s4396 + $0x42] sm:$0x1]
    %v4418 = vld [vmem:[%s4396 + $0x3] sm:$0x1]
    %v4419 = vld [vmem:[%s4396 + $0x43] sm:$0x1]
    %v4420 = vmax.f32 %v4416, %v4418
    %v4421 = vmax.f32 %v4417, %v4419
    %v4422 = vld [vmem:[%s4403 + $0x2] sm:$0x1]
    %v4423 = vld [vmem:[%s4403 + $0x42] sm:$0x1]
    %v4424 = vld [vmem:[%s4403 + $0x3] sm:$0x1]
    %v4425 = vld [vmem:[%s4403 + $0x43] sm:$0x1]
    %v4426 = vmax.f32 %v4422, %v4424
    %v4427 = vmax.f32 %v4423, %v4425
    %v4428 = vmax.f32 %v4420, %v4426
    %v4429 = vmax.f32 %v4421, %v4427
    %v4430 = vadd.f32 %v4428, %v4336
    %v4431 = vadd.f32 %v4429, %v4336
    %v4432 = vmax.f32 %v4430, 0.0
    %v4433 = vmax.f32 %v4431, 0.0
    %v4434 = vld [vmem:[%s4396 + $0x4] sm:$0x1]
    %v4435 = vld [vmem:[%s4396 + $0x44] sm:$0x1]
    %v4436 = vld [vmem:[%s4396 + $0x5] sm:$0x1]
    %v4437 = vld [vmem:[%s4396 + $0x45] sm:$0x1]
    %v4438 = vmax.f32 %v4434, %v4436
    %v4439 = vmax.f32 %v4435, %v4437
    %v4440 = vld [vmem:[%s4403 + $0x4] sm:$0x1]
    %v4441 = vld [vmem:[%s4403 + $0x44] sm:$0x1]
    %v4442 = vld [vmem:[%s4403 + $0x5] sm:$0x1]
    %v4443 = vld [vmem:[%s4403 + $0x45] sm:$0x1]
    %v4444 = vmax.f32 %v4440, %v4442
    %v4445 = vmax.f32 %v4441, %v4443
    %v4446 = vmax.f32 %v4438, %v4444
    %v4447 = vmax.f32 %v4439, %v4445
    %v4448 = vadd.f32 %v4446, %v4336
    %v4449 = vadd.f32 %v4447, %v4336
    %v4450 = vmax.f32 %v4448, 0.0
    %v4451 = vmax.f32 %v4449, 0.0
    %v4452 = vld [vmem:[%s4396 + $0x6] sm:$0x1]
    %v4453 = vld [vmem:[%s4396 + $0x46] sm:$0x1]
    %v4454 = vld [vmem:[%s4396 + $0x7] sm:$0x1]
    %v4455 = vld [vmem:[%s4396 + $0x47] sm:$0x1]
    %v4456 = vmax.f32 %v4452, %v4454
    %v4457 = vmax.f32 %v4453, %v4455
    %v4458 = vld [vmem:[%s4403 + $0x6] sm:$0x1]
    %v4459 = vld [vmem:[%s4403 + $0x46] sm:$0x1]
    %v4460 = vld [vmem:[%s4403 + $0x7] sm:$0x1]
    %v4461 = vld [vmem:[%s4403 + $0x47] sm:$0x1]
    %v4462 = vmax.f32 %v4458, %v4460
    %v4463 = vmax.f32 %v4459, %v4461
    %v4464 = vmax.f32 %v4456, %v4462
    %v4465 = vmax.f32 %v4457, %v4463
    %v4466 = vadd.f32 %v4464, %v4336
    %v4467 = vadd.f32 %v4465, %v4336
    %v4468 = vmax.f32 %v4466, 0.0
    %v4469 = vmax.f32 %v4467, 0.0
    %s4470 = scalar_lea.vmem [#allocation2], 32
    %v4471 = vld [vmem:[%s4470] sm:$0x1]
    %v4472 = vld [vmem:[%s4470 + $0x40] sm:$0x1]
    %v4473 = vld [vmem:[%s4470 + $0x1] sm:$0x1]
    %v4474 = vld [vmem:[%s4470 + $0x41] sm:$0x1]
    %v4475 = vmax.f32 %v4471, %v4473
    %v4476 = vmax.f32 %v4472, %v4474
    %s4477 = scalar_lea.vmem [#allocation2], 40
    %v4478 = vld [vmem:[%s4477] sm:$0x1]
    %v4479 = vld [vmem:[%s4477 + $0x40] sm:$0x1]
    %v4480 = vld [vmem:[%s4477 + $0x1] sm:$0x1]
    %v4481 = vld [vmem:[%s4477 + $0x41] sm:$0x1]
    %v4482 = vmax.f32 %v4478, %v4480
    %v4483 = vmax.f32 %v4479, %v4481
    %v4484 = vmax.f32 %v4475, %v4482
    %v4485 = vmax.f32 %v4476, %v4483
    %v4486 = vadd.f32 %v4484, %v4336
    %v4487 = vadd.f32 %v4485, %v4336
    %v4488 = vmax.f32 %v4486, 0.0
    %v4489 = vmax.f32 %v4487, 0.0
    %v4490 = vld [vmem:[%s4470 + $0x2] sm:$0x1]
    %v4491 = vld [vmem:[%s4470 + $0x42] sm:$0x1]
    %v4492 = vld [vmem:[%s4470 + $0x3] sm:$0x1]
    %v4493 = vld [vmem:[%s4470 + $0x43] sm:$0x1]
    %v4494 = vmax.f32 %v4490, %v4492
    %v4495 = vmax.f32 %v4491, %v4493
    %v4496 = vld [vmem:[%s4477 + $0x2] sm:$0x1]
    %v4497 = vld [vmem:[%s4477 + $0x42] sm:$0x1]
    %v4498 = vld [vmem:[%s4477 + $0x3] sm:$0x1]
    %v4499 = vld [vmem:[%s4477 + $0x43] sm:$0x1]
    %v4500 = vmax.f32 %v4496, %v4498
    %v4501 = vmax.f32 %v4497, %v4499
    %v4502 = vmax.f32 %v4494, %v4500
    %v4503 = vmax.f32 %v4495, %v4501
    %v4504 = vadd.f32 %v4502, %v4336
    %v4505 = vadd.f32 %v4503, %v4336
    %v4506 = vmax.f32 %v4504, 0.0
    %v4507 = vmax.f32 %v4505, 0.0
    %v4508 = vld [vmem:[%s4470 + $0x4] sm:$0x1]
    %v4509 = vld [vmem:[%s4470 + $0x44] sm:$0x1]
    %v4510 = vld [vmem:[%s4470 + $0x5] sm:$0x1]
    %v4511 = vld [vmem:[%s4470 + $0x45] sm:$0x1]
    %v4512 = vmax.f32 %v4508, %v4510
    %v4513 = vmax.f32 %v4509, %v4511
    %v4514 = vld [vmem:[%s4477 + $0x4] sm:$0x1]
    %v4515 = vld [vmem:[%s4477 + $0x44] sm:$0x1]
    %v4516 = vld [vmem:[%s4477 + $0x5] sm:$0x1]
    %v4517 = vld [vmem:[%s4477 + $0x45] sm:$0x1]
    %v4518 = vmax.f32 %v4514, %v4516
    %v4519 = vmax.f32 %v4515, %v4517
    %v4520 = vmax.f32 %v4512, %v4518
    %v4521 = vmax.f32 %v4513, %v4519
    %v4522 = vadd.f32 %v4520, %v4336
    %v4523 = vadd.f32 %v4521, %v4336
    %v4524 = vmax.f32 %v4522, 0.0
    %v4525 = vmax.f32 %v4523, 0.0
    %v4526 = vld [vmem:[%s4470 + $0x6] sm:$0x1]
    %v4527 = vld [vmem:[%s4470 + $0x46] sm:$0x1]
    %v4528 = vld [vmem:[%s4470 + $0x7] sm:$0x1]
    %v4529 = vld [vmem:[%s4470 + $0x47] sm:$0x1]
    %v4530 = vmax.f32 %v4526, %v4528
    %v4531 = vmax.f32 %v4527, %v4529
    %v4532 = vld [vmem:[%s4477 + $0x6] sm:$0x1]
    %v4533 = vld [vmem:[%s4477 + $0x46] sm:$0x1]
    %v4534 = vld [vmem:[%s4477 + $0x7] sm:$0x1]
    %v4535 = vld [vmem:[%s4477 + $0x47] sm:$0x1]
    %v4536 = vmax.f32 %v4532, %v4534
    %v4537 = vmax.f32 %v4533, %v4535
    %v4538 = vmax.f32 %v4530, %v4536
    %v4539 = vmax.f32 %v4531, %v4537
    %v4540 = vadd.f32 %v4538, %v4336
    %v4541 = vadd.f32 %v4539, %v4336
    %v4542 = vmax.f32 %v4540, 0.0
    %v4543 = vmax.f32 %v4541, 0.0
    %s4544 = scalar_lea.vmem [#allocation2], 48
    %v4545 = vld [vmem:[%s4544] sm:$0x1]
    %v4546 = vld [vmem:[%s4544 + $0x40] sm:$0x1]
    %v4547 = vld [vmem:[%s4544 + $0x1] sm:$0x1]
    %v4548 = vld [vmem:[%s4544 + $0x41] sm:$0x1]
    %v4549 = vmax.f32 %v4545, %v4547
    %v4550 = vmax.f32 %v4546, %v4548
    %s4551 = scalar_lea.vmem [#allocation2], 56
    %v4552 = vld [vmem:[%s4551] sm:$0x1]
    %v4553 = vld [vmem:[%s4551 + $0x40] sm:$0x1]
    %v4554 = vld [vmem:[%s4551 + $0x1] sm:$0x1]
    %v4555 = vld [vmem:[%s4551 + $0x41] sm:$0x1]
    %v4556 = vmax.f32 %v4552, %v4554
    %v4557 = vmax.f32 %v4553, %v4555
    %v4558 = vmax.f32 %v4549, %v4556
    %v4559 = vmax.f32 %v4550, %v4557
    %v4560 = vadd.f32 %v4558, %v4336
    %v4561 = vadd.f32 %v4559, %v4336
    %v4562 = vmax.f32 %v4560, 0.0
    %v4563 = vmax.f32 %v4561, 0.0
    %v4564 = vld [vmem:[%s4544 + $0x2] sm:$0x1]
    %v4565 = vld [vmem:[%s4544 + $0x42] sm:$0x1]
    %v4566 = vld [vmem:[%s4544 + $0x3] sm:$0x1]
    %v4567 = vld [vmem:[%s4544 + $0x43] sm:$0x1]
    %v4568 = vmax.f32 %v4564, %v4566
    %v4569 = vmax.f32 %v4565, %v4567
    %v4570 = vld [vmem:[%s4551 + $0x2] sm:$0x1]
    %v4571 = vld [vmem:[%s4551 + $0x42] sm:$0x1]
    %v4572 = vld [vmem:[%s4551 + $0x3] sm:$0x1]
    %v4573 = vld [vmem:[%s4551 + $0x43] sm:$0x1]
    %v4574 = vmax.f32 %v4570, %v4572
    %v4575 = vmax.f32 %v4571, %v4573
    %v4576 = vmax.f32 %v4568, %v4574
    %v4577 = vmax.f32 %v4569, %v4575
    %v4578 = vadd.f32 %v4576, %v4336
    %v4579 = vadd.f32 %v4577, %v4336
    %v4580 = vmax.f32 %v4578, 0.0
    %v4581 = vmax.f32 %v4579, 0.0
    %v4582 = vld [vmem:[%s4544 + $0x4] sm:$0x1]
    %v4583 = vld [vmem:[%s4544 + $0x44] sm:$0x1]
    %v4584 = vld [vmem:[%s4544 + $0x5] sm:$0x1]
    %v4585 = vld [vmem:[%s4544 + $0x45] sm:$0x1]
    %v4586 = vmax.f32 %v4582, %v4584
    %v4587 = vmax.f32 %v4583, %v4585
    %v4588 = vld [vmem:[%s4551 + $0x4] sm:$0x1]
    %v4589 = vld [vmem:[%s4551 + $0x44] sm:$0x1]
    %v4590 = vld [vmem:[%s4551 + $0x5] sm:$0x1]
    %v4591 = vld [vmem:[%s4551 + $0x45] sm:$0x1]
    %v4592 = vmax.f32 %v4588, %v4590
    %v4593 = vmax.f32 %v4589, %v4591
    %v4594 = vmax.f32 %v4586, %v4592
    %v4595 = vmax.f32 %v4587, %v4593
    %v4596 = vadd.f32 %v4594, %v4336
    %v4597 = vadd.f32 %v4595, %v4336
    %v4598 = vmax.f32 %v4596, 0.0
    %v4599 = vmax.f32 %v4597, 0.0
    %v4600 = vld [vmem:[%s4544 + $0x6] sm:$0x1]
    %v4601 = vld [vmem:[%s4544 + $0x46] sm:$0x1]
    %v4602 = vld [vmem:[%s4544 + $0x7] sm:$0x1]
    %v4603 = vld [vmem:[%s4544 + $0x47] sm:$0x1]
    %v4604 = vmax.f32 %v4600, %v4602
    %v4605 = vmax.f32 %v4601, %v4603
    %v4606 = vld [vmem:[%s4551 + $0x6] sm:$0x1]
    %v4607 = vld [vmem:[%s4551 + $0x46] sm:$0x1]
    %v4608 = vld [vmem:[%s4551 + $0x7] sm:$0x1]
    %v4609 = vld [vmem:[%s4551 + $0x47] sm:$0x1]
    %v4610 = vmax.f32 %v4606, %v4608
    %v4611 = vmax.f32 %v4607, %v4609
    %v4612 = vmax.f32 %v4604, %v4610
    %v4613 = vmax.f32 %v4605, %v4611
    %v4614 = vadd.f32 %v4612, %v4336
    %v4615 = vadd.f32 %v4613, %v4336
    %v4616 = vmax.f32 %v4614, 0.0
    %v4617 = vmax.f32 %v4615, 0.0
    %v4620 = vrot.slane %v4341, 7
    %vm4621 = vcmask 1041409
    %v4622 = vsel %vm4621, %v4620, %v4340
    %v4626 = vrot.slane %v4359, 7
    %v4627 = vsel %vm4621, %v4626, %v4358
    %v4631 = vrot.slane %v4377, 7
    %v4632 = vsel %vm4621, %v4631, %v4376
    %v4636 = vrot.slane %v4395, 7
    %v4637 = vsel %vm4621, %v4636, %v4394
    %v4641 = vrot.slane %v4415, 7
    %v4642 = vsel %vm4621, %v4641, %v4414
    %v4646 = vrot.slane %v4433, 7
    %v4647 = vsel %vm4621, %v4646, %v4432
    %v4651 = vrot.slane %v4451, 7
    %v4652 = vsel %vm4621, %v4651, %v4450
    %v4656 = vrot.slane %v4469, 7
    %v4657 = vsel %vm4621, %v4656, %v4468
    %v4661 = vrot.slane %v4489, 7
    %v4662 = vsel %vm4621, %v4661, %v4488
    %v4666 = vrot.slane %v4507, 7
    %v4667 = vsel %vm4621, %v4666, %v4506
    %v4671 = vrot.slane %v4525, 7
    %v4672 = vsel %vm4621, %v4671, %v4524
    %v4676 = vrot.slane %v4543, 7
    %v4677 = vsel %vm4621, %v4676, %v4542
    %v4681 = vrot.slane %v4563, 7
    %v4682 = vsel %vm4621, %v4681, %v4562
    %v4686 = vrot.slane %v4581, 7
    %v4687 = vsel %vm4621, %v4686, %v4580
    %v4691 = vrot.slane %v4599, 7
    %v4692 = vsel %vm4621, %v4691, %v4598
    %v4696 = vrot.slane %v4617, 7
    %v4697 = vsel %vm4621, %v4696, %v4616
    %v4699 = vpack.c.bf16 %v4622, %v4622
    %v4700 = vpack.c.bf16 %v4627, %v4627
    %v4701 = vpack.c.bf16 %v4632, %v4632
    %v4702 = vpack.c.bf16 %v4637, %v4637
    %v4703 = vpack.c.bf16 %v4642, %v4642
    %v4704 = vpack.c.bf16 %v4647, %v4647
    %v4705 = vpack.c.bf16 %v4652, %v4652
    %v4706 = vpack.c.bf16 %v4657, %v4657
    %v4707 = vpack.c.bf16 %v4662, %v4662
    %v4708 = vpack.c.bf16 %v4667, %v4667
    %v4709 = vpack.c.bf16 %v4672, %v4672
    %v4710 = vpack.c.bf16 %v4677, %v4677
    %v4711 = vpack.c.bf16 %v4682, %v4682
    %v4712 = vpack.c.bf16 %v4687, %v4687
    %v4713 = vpack.c.bf16 %v4692, %v4692
    %v4714 = vpack.c.bf16 %v4697, %v4697
    %v4715 = vld [vmem:[%s3] sm:$0xf]
    %v4716 = vld [vmem:[%s3 + $0x4] sm:$0xf]
    %v4717 = vld [vmem:[%s3 + $0x8] sm:$0xf]
    %v4718 = vld [vmem:[%s3 + $0xc] sm:$0xf]
    %v4719 = vld [vmem:[%s3 + $0x10] sm:$0xf]
    %v4720 = vld [vmem:[%s3 + $0x14] sm:$0xf]
    %v4721 = vld [vmem:[%s3 + $0x18] sm:$0xf]
    %v4722 = vld [vmem:[%s3 + $0x1c] sm:$0xf]
    %v4723 = vld [vmem:[%s3 + $0x20] sm:$0xf]
    %v4724 = vld [vmem:[%s3 + $0x24] sm:$0xf]
    %v4725 = vld [vmem:[%s3 + $0x28] sm:$0xf]
    %v4726 = vld [vmem:[%s3 + $0x2c] sm:$0xf]
    %v4727 = vld [vmem:[%s3 + $0x30] sm:$0xf]
    %v4728 = vld [vmem:[%s3 + $0x34] sm:$0xf]
    %v4729 = vld [vmem:[%s3 + $0x38] sm:$0xf]
    %v4730 = vld [vmem:[%s3 + $0x3c] sm:$0xf]
    %v4731 = vld [vmem:[%s3 + $0x40] sm:$0xf]
    %v4732 = vld [vmem:[%s3 + $0x44] sm:$0xf]
    %v4733 = vld [vmem:[%s3 + $0x48] sm:$0xf]
    %v4734 = vld [vmem:[%s3 + $0x4c] sm:$0xf]
    %v4735 = vld [vmem:[%s3 + $0x50] sm:$0xf]
    %v4736 = vld [vmem:[%s3 + $0x54] sm:$0xf]
    %v4737 = vld [vmem:[%s3 + $0x58] sm:$0xf]
    %v4738 = vld [vmem:[%s3 + $0x5c] sm:$0xf]
    %v4739 = vld [vmem:[%s3 + $0x60] sm:$0xf]
    %v4740 = vld [vmem:[%s3 + $0x64] sm:$0xf]
    %v4741 = vld [vmem:[%s3 + $0x68] sm:$0xf]
    %v4742 = vld [vmem:[%s3 + $0x6c] sm:$0xf]
    %v4743 = vld [vmem:[%s3 + $0x70] sm:$0xf]
    %v4744 = vld [vmem:[%s3 + $0x74] sm:$0xf]
    %v4745 = vld [vmem:[%s3 + $0x78] sm:$0xf]
    %v4746 = vld [vmem:[%s3 + $0x7c] sm:$0xf]
    %v4747 = vld [vmem:[%s3 + $0x80] sm:$0xf]
    %v4748 = vld [vmem:[%s3 + $0x84] sm:$0xf]
    %v4749 = vld [vmem:[%s3 + $0x88] sm:$0xf]
    %v4750 = vld [vmem:[%s3 + $0x8c] sm:$0xf]
    %v4751 = vld [vmem:[%s3 + $0x90] sm:$0xf]
    %v4752 = vld [vmem:[%s3 + $0x94] sm:$0xf]
    %v4753 = vld [vmem:[%s3 + $0x98] sm:$0xf]
    %v4754 = vld [vmem:[%s3 + $0x9c] sm:$0xf]
    %v4755 = vld [vmem:[%s3 + $0xa0] sm:$0xf]
    %v4756 = vld [vmem:[%s3 + $0xa4] sm:$0xf]
    %v4757 = vld [vmem:[%s3 + $0xa8] sm:$0xf]
    %v4758 = vld [vmem:[%s3 + $0xac] sm:$0xf]
    %v4759 = vld [vmem:[%s3 + $0xb0] sm:$0xf]
    %v4760 = vld [vmem:[%s3 + $0xb4] sm:$0xf]
    %v4761 = vld [vmem:[%s3 + $0xb8] sm:$0xf]
    %v4762 = vld [vmem:[%s3 + $0xbc] sm:$0xf]
    %v4763 = vld [vmem:[%s3 + $0xc0] sm:$0xf]
    %v4764 = vld [vmem:[%s3 + $0xc4] sm:$0xf]
    %v4765 = vld [vmem:[%s3 + $0xc8] sm:$0xf]
    %v4766 = vld [vmem:[%s3 + $0xcc] sm:$0xf]
    %v4767 = vld [vmem:[%s3 + $0xd0] sm:$0xf]
    %v4768 = vld [vmem:[%s3 + $0xd4] sm:$0xf]
    %v4769 = vld [vmem:[%s3 + $0xd8] sm:$0xf]
    %v4770 = vld [vmem:[%s3 + $0xdc] sm:$0xf]
    %v4771 = vld [vmem:[%s3 + $0xe0] sm:$0xf]
    %v4772 = vld [vmem:[%s3 + $0xe4] sm:$0xf]
    %v4773 = vld [vmem:[%s3 + $0xe8] sm:$0xf]
    %v4774 = vld [vmem:[%s3 + $0xec] sm:$0xf]
    %v4775 = vld [vmem:[%s3 + $0xf0] sm:$0xf]
    %v4776 = vld [vmem:[%s3 + $0xf4] sm:$0xf]
    %v4777 = vld [vmem:[%s3 + $0xf8] sm:$0xf]
    %v4778 = vld [vmem:[%s3 + $0xfc] sm:$0xf]
    %v4779 = vld [vmem:[%s3 + $0x100] sm:$0xf]
    %v4780 = vld [vmem:[%s3 + $0x104] sm:$0xf]
    %v4781 = vld [vmem:[%s3 + $0x108] sm:$0xf]
    %v4782 = vld [vmem:[%s3 + $0x10c] sm:$0xf]
    %v4783 = vld [vmem:[%s3 + $0x110] sm:$0xf]
    %v4784 = vld [vmem:[%s3 + $0x114] sm:$0xf]
    %v4785 = vld [vmem:[%s3 + $0x118] sm:$0xf]
    %v4786 = vld [vmem:[%s3 + $0x11c] sm:$0xf]
    %v4787 = vld [vmem:[%s3 + $0x120] sm:$0xf]
    %v4788 = vld [vmem:[%s3 + $0x124] sm:$0xf]
    %v4789 = vld [vmem:[%s3 + $0x128] sm:$0xf]
    %v4790 = vld [vmem:[%s3 + $0x12c] sm:$0xf]
    %v4791 = vld [vmem:[%s3 + $0x130] sm:$0xf]
    %v4792 = vld [vmem:[%s3 + $0x134] sm:$0xf]
    %v4793 = vld [vmem:[%s3 + $0x138] sm:$0xf]
    %v4794 = vld [vmem:[%s3 + $0x13c] sm:$0xf]
    %v4795 = vld [vmem:[%s3 + $0x140] sm:$0xf]
    %v4796 = vld [vmem:[%s3 + $0x144] sm:$0xf]
    %v4797 = vld [vmem:[%s3 + $0x148] sm:$0xf]
    %v4798 = vld [vmem:[%s3 + $0x14c] sm:$0xf]
    %v4799 = vld [vmem:[%s3 + $0x150] sm:$0xf]
    %v4800 = vld [vmem:[%s3 + $0x154] sm:$0xf]
    %v4801 = vld [vmem:[%s3 + $0x158] sm:$0xf]
    %v4802 = vld [vmem:[%s3 + $0x15c] sm:$0xf]
    %v4803 = vld [vmem:[%s3 + $0x160] sm:$0xf]
    %v4804 = vld [vmem:[%s3 + $0x164] sm:$0xf]
    %v4805 = vld [vmem:[%s3 + $0x168] sm:$0xf]
    %v4806 = vld [vmem:[%s3 + $0x16c] sm:$0xf]
    %v4807 = vld [vmem:[%s3 + $0x170] sm:$0xf]
    %v4808 = vld [vmem:[%s3 + $0x174] sm:$0xf]
    %v4809 = vld [vmem:[%s3 + $0x178] sm:$0xf]
    %v4810 = vld [vmem:[%s3 + $0x17c] sm:$0xf]
    %v4811 = vld [vmem:[%s3 + $0x180] sm:$0xf]
    %v4812 = vld [vmem:[%s3 + $0x184] sm:$0xf]
    %v4813 = vld [vmem:[%s3 + $0x188] sm:$0xf]
    %v4814 = vld [vmem:[%s3 + $0x18c] sm:$0xf]
    %v4815 = vld [vmem:[%s3 + $0x190] sm:$0xf]
    %v4816 = vld [vmem:[%s3 + $0x194] sm:$0xf]
    %v4817 = vld [vmem:[%s3 + $0x198] sm:$0xf]
    %v4818 = vld [vmem:[%s3 + $0x19c] sm:$0xf]
    %v4819 = vld [vmem:[%s3 + $0x1a0] sm:$0xf]
    %v4820 = vld [vmem:[%s3 + $0x1a4] sm:$0xf]
    %v4821 = vld [vmem:[%s3 + $0x1a8] sm:$0xf]
    %v4822 = vld [vmem:[%s3 + $0x1ac] sm:$0xf]
    %v4823 = vld [vmem:[%s3 + $0x1b0] sm:$0xf]
    %v4824 = vld [vmem:[%s3 + $0x1b4] sm:$0xf]
    %v4825 = vld [vmem:[%s3 + $0x1b8] sm:$0xf]
    %v4826 = vld [vmem:[%s3 + $0x1bc] sm:$0xf]
    %v4827 = vld [vmem:[%s3 + $0x1c0] sm:$0xf]
    %v4828 = vld [vmem:[%s3 + $0x1c4] sm:$0xf]
    %v4829 = vld [vmem:[%s3 + $0x1c8] sm:$0xf]
    %v4830 = vld [vmem:[%s3 + $0x1cc] sm:$0xf]
    %v4831 = vld [vmem:[%s3 + $0x1d0] sm:$0xf]
    %v4832 = vld [vmem:[%s3 + $0x1d4] sm:$0xf]
    %v4833 = vld [vmem:[%s3 + $0x1d8] sm:$0xf]
    %v4834 = vld [vmem:[%s3 + $0x1dc] sm:$0xf]
    %v4835 = vld [vmem:[%s3 + $0x1e0] sm:$0xf]
    %v4836 = vld [vmem:[%s3 + $0x1e4] sm:$0xf]
    %v4837 = vld [vmem:[%s3 + $0x1e8] sm:$0xf]
    %v4838 = vld [vmem:[%s3 + $0x1ec] sm:$0xf]
    %v4839 = vld [vmem:[%s3 + $0x1f0] sm:$0xf]
    %v4840 = vld [vmem:[%s3 + $0x1f4] sm:$0xf]
    %v4841 = vld [vmem:[%s3 + $0x1f8] sm:$0xf]
    %v4842 = vld [vmem:[%s3 + $0x1fc] sm:$0xf]
    %v4843 = vld [vmem:[%s3 + $0x200] sm:$0xf]
    %v4844 = vld [vmem:[%s3 + $0x204] sm:$0xf]
    %v4845 = vld [vmem:[%s3 + $0x208] sm:$0xf]
    %v4846 = vld [vmem:[%s3 + $0x20c] sm:$0xf]
    %v4847 = vld [vmem:[%s3 + $0x210] sm:$0xf]
    %v4848 = vld [vmem:[%s3 + $0x214] sm:$0xf]
    %v4849 = vld [vmem:[%s3 + $0x218] sm:$0xf]
    %v4850 = vld [vmem:[%s3 + $0x21c] sm:$0xf]
    %v4851 = vld [vmem:[%s3 + $0x220] sm:$0xf]
    %v4852 = vld [vmem:[%s3 + $0x224] sm:$0xf]
    %v4853 = vld [vmem:[%s3 + $0x228] sm:$0xf]
    %v4854 = vld [vmem:[%s3 + $0x22c] sm:$0xf]
    %v4855 = vld [vmem:[%s3 + $0x230] sm:$0xf]
    %v4856 = vld [vmem:[%s3 + $0x234] sm:$0xf]
    %v4857 = vld [vmem:[%s3 + $0x238] sm:$0xf]
    %v4858 = vld [vmem:[%s3 + $0x23c] sm:$0xf]
    %v4859 = vld [vmem:[%s3 + $0x240] sm:$0xf]
    %v4860 = vld [vmem:[%s3 + $0x244] sm:$0xf]
    %v4861 = vld [vmem:[%s3 + $0x248] sm:$0xf]
    %v4862 = vld [vmem:[%s3 + $0x24c] sm:$0xf]
    %v4863 = vld [vmem:[%s3 + $0x250] sm:$0xf]
    %v4864 = vld [vmem:[%s3 + $0x254] sm:$0xf]
    %v4865 = vld [vmem:[%s3 + $0x258] sm:$0xf]
    %v4866 = vld [vmem:[%s3 + $0x25c] sm:$0xf]
    %v4867 = vld [vmem:[%s3 + $0x260] sm:$0xf]
    %v4868 = vld [vmem:[%s3 + $0x264] sm:$0xf]
    %v4869 = vld [vmem:[%s3 + $0x268] sm:$0xf]
    %v4870 = vld [vmem:[%s3 + $0x26c] sm:$0xf]
    %v4871 = vld [vmem:[%s3 + $0x270] sm:$0xf]
    %v4872 = vld [vmem:[%s3 + $0x274] sm:$0xf]
    %v4873 = vld [vmem:[%s3 + $0x278] sm:$0xf]
    %v4874 = vld [vmem:[%s3 + $0x27c] sm:$0xf]
    %v4875 = vld [vmem:[%s3 + $0x280] sm:$0xf]
    %v4876 = vld [vmem:[%s3 + $0x284] sm:$0xf]
    %v4877 = vld [vmem:[%s3 + $0x288] sm:$0xf]
    %v4878 = vld [vmem:[%s3 + $0x28c] sm:$0xf]
    %v4879 = vld [vmem:[%s3 + $0x290] sm:$0xf]
    %v4880 = vld [vmem:[%s3 + $0x294] sm:$0xf]
    %v4881 = vld [vmem:[%s3 + $0x298] sm:$0xf]
    %v4882 = vld [vmem:[%s3 + $0x29c] sm:$0xf]
    %v4883 = vld [vmem:[%s3 + $0x2a0] sm:$0xf]
    %v4884 = vld [vmem:[%s3 + $0x2a4] sm:$0xf]
    %v4885 = vld [vmem:[%s3 + $0x2a8] sm:$0xf]
    %v4886 = vld [vmem:[%s3 + $0x2ac] sm:$0xf]
    %v4887 = vld [vmem:[%s3 + $0x2b0] sm:$0xf]
    %v4888 = vld [vmem:[%s3 + $0x2b4] sm:$0xf]
    %v4889 = vld [vmem:[%s3 + $0x2b8] sm:$0xf]
    %v4890 = vld [vmem:[%s3 + $0x2bc] sm:$0xf]
    %v4891 = vld [vmem:[%s3 + $0x2c0] sm:$0xf]
    %v4892 = vld [vmem:[%s3 + $0x2c4] sm:$0xf]
    %v4893 = vld [vmem:[%s3 + $0x2c8] sm:$0xf]
    %v4894 = vld [vmem:[%s3 + $0x2cc] sm:$0xf]
    %v4895 = vld [vmem:[%s3 + $0x2d0] sm:$0xf]
    %v4896 = vld [vmem:[%s3 + $0x2d4] sm:$0xf]
    %v4897 = vld [vmem:[%s3 + $0x2d8] sm:$0xf]
    %v4898 = vld [vmem:[%s3 + $0x2dc] sm:$0xf]
    %v4899 = vld [vmem:[%s3 + $0x2e0] sm:$0xf]
    %v4900 = vld [vmem:[%s3 + $0x2e4] sm:$0xf]
    %v4901 = vld [vmem:[%s3 + $0x2e8] sm:$0xf]
    %v4902 = vld [vmem:[%s3 + $0x2ec] sm:$0xf]
    %v4903 = vld [vmem:[%s3 + $0x2f0] sm:$0xf]
    %v4904 = vld [vmem:[%s3 + $0x2f4] sm:$0xf]
    %v4905 = vld [vmem:[%s3 + $0x2f8] sm:$0xf]
    %v4906 = vld [vmem:[%s3 + $0x2fc] sm:$0xf]
    %v4907 = vld [vmem:[%s3 + $0x300] sm:$0xf]
    %v4908 = vld [vmem:[%s3 + $0x304] sm:$0xf]
    %v4909 = vld [vmem:[%s3 + $0x308] sm:$0xf]
    %v4910 = vld [vmem:[%s3 + $0x30c] sm:$0xf]
    %v4911 = vld [vmem:[%s3 + $0x310] sm:$0xf]
    %v4912 = vld [vmem:[%s3 + $0x314] sm:$0xf]
    %v4913 = vld [vmem:[%s3 + $0x318] sm:$0xf]
    %v4914 = vld [vmem:[%s3 + $0x31c] sm:$0xf]
    %v4915 = vld [vmem:[%s3 + $0x320] sm:$0xf]
    %v4916 = vld [vmem:[%s3 + $0x324] sm:$0xf]
    %v4917 = vld [vmem:[%s3 + $0x328] sm:$0xf]
    %v4918 = vld [vmem:[%s3 + $0x32c] sm:$0xf]
    %v4919 = vld [vmem:[%s3 + $0x330] sm:$0xf]
    %v4920 = vld [vmem:[%s3 + $0x334] sm:$0xf]
    %v4921 = vld [vmem:[%s3 + $0x338] sm:$0xf]
    %v4922 = vld [vmem:[%s3 + $0x33c] sm:$0xf]
    %v4923 = vld [vmem:[%s3 + $0x340] sm:$0xf]
    %v4924 = vld [vmem:[%s3 + $0x344] sm:$0xf]
    %v4925 = vld [vmem:[%s3 + $0x348] sm:$0xf]
    %v4926 = vld [vmem:[%s3 + $0x34c] sm:$0xf]
    %v4927 = vld [vmem:[%s3 + $0x350] sm:$0xf]
    %v4928 = vld [vmem:[%s3 + $0x354] sm:$0xf]
    %v4929 = vld [vmem:[%s3 + $0x358] sm:$0xf]
    %v4930 = vld [vmem:[%s3 + $0x35c] sm:$0xf]
    %v4931 = vld [vmem:[%s3 + $0x360] sm:$0xf]
    %v4932 = vld [vmem:[%s3 + $0x364] sm:$0xf]
    %v4933 = vld [vmem:[%s3 + $0x368] sm:$0xf]
    %v4934 = vld [vmem:[%s3 + $0x36c] sm:$0xf]
    %v4935 = vld [vmem:[%s3 + $0x370] sm:$0xf]
    %v4936 = vld [vmem:[%s3 + $0x374] sm:$0xf]
    %v4937 = vld [vmem:[%s3 + $0x378] sm:$0xf]
    %v4938 = vld [vmem:[%s3 + $0x37c] sm:$0xf]
    %v4939 = vld [vmem:[%s3 + $0x380] sm:$0xf]
    %v4940 = vld [vmem:[%s3 + $0x384] sm:$0xf]
    %v4941 = vld [vmem:[%s3 + $0x388] sm:$0xf]
    %v4942 = vld [vmem:[%s3 + $0x38c] sm:$0xf]
    %v4943 = vld [vmem:[%s3 + $0x390] sm:$0xf]
    %v4944 = vld [vmem:[%s3 + $0x394] sm:$0xf]
    %v4945 = vld [vmem:[%s3 + $0x398] sm:$0xf]
    %v4946 = vld [vmem:[%s3 + $0x39c] sm:$0xf]
    %v4947 = vld [vmem:[%s3 + $0x3a0] sm:$0xf]
    %v4948 = vld [vmem:[%s3 + $0x3a4] sm:$0xf]
    %v4949 = vld [vmem:[%s3 + $0x3a8] sm:$0xf]
    %v4950 = vld [vmem:[%s3 + $0x3ac] sm:$0xf]
    %v4951 = vld [vmem:[%s3 + $0x3b0] sm:$0xf]
    %v4952 = vld [vmem:[%s3 + $0x3b4] sm:$0xf]
    %v4953 = vld [vmem:[%s3 + $0x3b8] sm:$0xf]
    %v4954 = vld [vmem:[%s3 + $0x3bc] sm:$0xf]
    %v4955 = vld [vmem:[%s3 + $0x3c0] sm:$0xf]
    %v4956 = vld [vmem:[%s3 + $0x3c4] sm:$0xf]
    %v4957 = vld [vmem:[%s3 + $0x3c8] sm:$0xf]
    %v4958 = vld [vmem:[%s3 + $0x3cc] sm:$0xf]
    %v4959 = vld [vmem:[%s3 + $0x3d0] sm:$0xf]
    %v4960 = vld [vmem:[%s3 + $0x3d4] sm:$0xf]
    %v4961 = vld [vmem:[%s3 + $0x3d8] sm:$0xf]
    %v4962 = vld [vmem:[%s3 + $0x3dc] sm:$0xf]
    %v4963 = vld [vmem:[%s3 + $0x3e0] sm:$0xf]
    %v4964 = vld [vmem:[%s3 + $0x3e4] sm:$0xf]
    %v4965 = vld [vmem:[%s3 + $0x3e8] sm:$0xf]
    %v4966 = vld [vmem:[%s3 + $0x3ec] sm:$0xf]
    %v4967 = vld [vmem:[%s3 + $0x3f0] sm:$0xf]
    %v4968 = vld [vmem:[%s3 + $0x3f4] sm:$0xf]
    %v4969 = vld [vmem:[%s3 + $0x3f8] sm:$0xf]
    %v4970 = vld [vmem:[%s3 + $0x3fc] sm:$0xf]
    %v4971 = vld [vmem:[%s4] sm:$0x1]
    %v4973 = vlaneseq
    %v4974 = vshrl.u32 %v4973, 7
    %v4975 = vsub.s32 0, %v4974
    %v4976 = vrot.slane %v4971, %v4975
    %v5234 = vunpack.c.l.b16 %v4715
    %v5235 = vunpack.c.l.b16 %v4716
    %v5236 = vunpack.c.l.b16 %v4717
    %v5237 = vunpack.c.l.b16 %v4718
    %v5238 = vunpack.c.l.b16 %v4719
    %v5239 = vunpack.c.l.b16 %v4720
    %v5240 = vunpack.c.l.b16 %v4721
    %v5241 = vunpack.c.l.b16 %v4722
    %v5242 = vunpack.c.l.b16 %v4723
    %v5243 = vunpack.c.l.b16 %v4724
    %v5244 = vunpack.c.l.b16 %v4725
    %v5245 = vunpack.c.l.b16 %v4726
    %v5246 = vunpack.c.l.b16 %v4727
    %v5247 = vunpack.c.l.b16 %v4728
    %v5248 = vunpack.c.l.b16 %v4729
    %v5249 = vunpack.c.l.b16 %v4730
    %v5250 = vunpack.c.l.b16 %v4731
    %v5251 = vunpack.c.l.b16 %v4732
    %v5252 = vunpack.c.l.b16 %v4733
    %v5253 = vunpack.c.l.b16 %v4734
    %v5254 = vunpack.c.l.b16 %v4735
    %v5255 = vunpack.c.l.b16 %v4736
    %v5256 = vunpack.c.l.b16 %v4737
    %v5257 = vunpack.c.l.b16 %v4738
    %v5258 = vunpack.c.l.b16 %v4739
    %v5259 = vunpack.c.l.b16 %v4740
    %v5260 = vunpack.c.l.b16 %v4741
    %v5261 = vunpack.c.l.b16 %v4742
    %v5262 = vunpack.c.l.b16 %v4743
    %v5263 = vunpack.c.l.b16 %v4744
    %v5264 = vunpack.c.l.b16 %v4745
    %v5265 = vunpack.c.l.b16 %v4746
    %v5266 = vunpack.c.l.b16 %v4747
    %v5267 = vunpack.c.l.b16 %v4748
    %v5268 = vunpack.c.l.b16 %v4749
    %v5269 = vunpack.c.l.b16 %v4750
    %v5270 = vunpack.c.l.b16 %v4751
    %v5271 = vunpack.c.l.b16 %v4752
    %v5272 = vunpack.c.l.b16 %v4753
    %v5273 = vunpack.c.l.b16 %v4754
    %v5274 = vunpack.c.l.b16 %v4755
    %v5275 = vunpack.c.l.b16 %v4756
    %v5276 = vunpack.c.l.b16 %v4757
    %v5277 = vunpack.c.l.b16 %v4758
    %v5278 = vunpack.c.l.b16 %v4759
    %v5279 = vunpack.c.l.b16 %v4760
    %v5280 = vunpack.c.l.b16 %v4761
    %v5281 = vunpack.c.l.b16 %v4762
    %v5282 = vunpack.c.l.b16 %v4763
    %v5283 = vunpack.c.l.b16 %v4764
    %v5284 = vunpack.c.l.b16 %v4765
    %v5285 = vunpack.c.l.b16 %v4766
    %v5286 = vunpack.c.l.b16 %v4767
    %v5287 = vunpack.c.l.b16 %v4768
    %v5288 = vunpack.c.l.b16 %v4769
    %v5289 = vunpack.c.l.b16 %v4770
    %v5290 = vunpack.c.l.b16 %v4771
    %v5291 = vunpack.c.l.b16 %v4772
    %v5292 = vunpack.c.l.b16 %v4773
    %v5293 = vunpack.c.l.b16 %v4774
    %v5294 = vunpack.c.l.b16 %v4775
    %v5295 = vunpack.c.l.b16 %v4776
    %v5296 = vunpack.c.l.b16 %v4777
    %v5297 = vunpack.c.l.b16 %v4778
    %v5298 = vunpack.c.l.b16 %v4779
    %v5299 = vunpack.c.l.b16 %v4780
    %v5300 = vunpack.c.l.b16 %v4781
    %v5301 = vunpack.c.l.b16 %v4782
    %v5302 = vunpack.c.l.b16 %v4783
    %v5303 = vunpack.c.l.b16 %v4784
    %v5304 = vunpack.c.l.b16 %v4785
    %v5305 = vunpack.c.l.b16 %v4786
    %v5306 = vunpack.c.l.b16 %v4787
    %v5307 = vunpack.c.l.b16 %v4788
    %v5308 = vunpack.c.l.b16 %v4789
    %v5309 = vunpack.c.l.b16 %v4790
    %v5310 = vunpack.c.l.b16 %v4791
    %v5311 = vunpack.c.l.b16 %v4792
    %v5312 = vunpack.c.l.b16 %v4793
    %v5313 = vunpack.c.l.b16 %v4794
    %v5314 = vunpack.c.l.b16 %v4795
    %v5315 = vunpack.c.l.b16 %v4796
    %v5316 = vunpack.c.l.b16 %v4797
    %v5317 = vunpack.c.l.b16 %v4798
    %v5318 = vunpack.c.l.b16 %v4799
    %v5319 = vunpack.c.l.b16 %v4800
    %v5320 = vunpack.c.l.b16 %v4801
    %v5321 = vunpack.c.l.b16 %v4802
    %v5322 = vunpack.c.l.b16 %v4803
    %v5323 = vunpack.c.l.b16 %v4804
    %v5324 = vunpack.c.l.b16 %v4805
    %v5325 = vunpack.c.l.b16 %v4806
    %v5326 = vunpack.c.l.b16 %v4807
    %v5327 = vunpack.c.l.b16 %v4808
    %v5328 = vunpack.c.l.b16 %v4809
    %v5329 = vunpack.c.l.b16 %v4810
    %v5330 = vunpack.c.l.b16 %v4811
    %v5331 = vunpack.c.l.b16 %v4812
    %v5332 = vunpack.c.l.b16 %v4813
    %v5333 = vunpack.c.l.b16 %v4814
    %v5334 = vunpack.c.l.b16 %v4815
    %v5335 = vunpack.c.l.b16 %v4816
    %v5336 = vunpack.c.l.b16 %v4817
    %v5337 = vunpack.c.l.b16 %v4818
    %v5338 = vunpack.c.l.b16 %v4819
    %v5339 = vunpack.c.l.b16 %v4820
    %v5340 = vunpack.c.l.b16 %v4821
    %v5341 = vunpack.c.l.b16 %v4822
    %v5342 = vunpack.c.l.b16 %v4823
    %v5343 = vunpack.c.l.b16 %v4824
    %v5344 = vunpack.c.l.b16 %v4825
    %v5345 = vunpack.c.l.b16 %v4826
    %v5346 = vunpack.c.l.b16 %v4827
    %v5347 = vunpack.c.l.b16 %v4828
    %v5348 = vunpack.c.l.b16 %v4829
    %v5349 = vunpack.c.l.b16 %v4830
    %v5350 = vunpack.c.l.b16 %v4831
    %v5351 = vunpack.c.l.b16 %v4832
    %v5352 = vunpack.c.l.b16 %v4833
    %v5353 = vunpack.c.l.b16 %v4834
    %v5354 = vunpack.c.l.b16 %v4835
    %v5355 = vunpack.c.l.b16 %v4836
    %v5356 = vunpack.c.l.b16 %v4837
    %v5357 = vunpack.c.l.b16 %v4838
    %v5358 = vunpack.c.l.b16 %v4839
    %v5359 = vunpack.c.l.b16 %v4840
    %v5360 = vunpack.c.l.b16 %v4841
    %v5361 = vunpack.c.l.b16 %v4842
    %v5362 = vunpack.c.l.b16 %v4843
    %v5363 = vunpack.c.l.b16 %v4844
    %v5364 = vunpack.c.l.b16 %v4845
    %v5365 = vunpack.c.l.b16 %v4846
    %v5366 = vunpack.c.l.b16 %v4847
    %v5367 = vunpack.c.l.b16 %v4848
    %v5368 = vunpack.c.l.b16 %v4849
    %v5369 = vunpack.c.l.b16 %v4850
    %v5370 = vunpack.c.l.b16 %v4851
    %v5371 = vunpack.c.l.b16 %v4852
    %v5372 = vunpack.c.l.b16 %v4853
    %v5373 = vunpack.c.l.b16 %v4854
    %v5374 = vunpack.c.l.b16 %v4855
    %v5375 = vunpack.c.l.b16 %v4856
    %v5376 = vunpack.c.l.b16 %v4857
    %v5377 = vunpack.c.l.b16 %v4858
    %v5378 = vunpack.c.l.b16 %v4859
    %v5379 = vunpack.c.l.b16 %v4860
    %v5380 = vunpack.c.l.b16 %v4861
    %v5381 = vunpack.c.l.b16 %v4862
    %v5382 = vunpack.c.l.b16 %v4863
    %v5383 = vunpack.c.l.b16 %v4864
    %v5384 = vunpack.c.l.b16 %v4865
    %v5385 = vunpack.c.l.b16 %v4866
    %v5386 = vunpack.c.l.b16 %v4867
    %v5387 = vunpack.c.l.b16 %v4868
    %v5388 = vunpack.c.l.b16 %v4869
    %v5389 = vunpack.c.l.b16 %v4870
    %v5390 = vunpack.c.l.b16 %v4871
    %v5391 = vunpack.c.l.b16 %v4872
    %v5392 = vunpack.c.l.b16 %v4873
    %v5393 = vunpack.c.l.b16 %v4874
    %v5394 = vunpack.c.l.b16 %v4875
    %v5395 = vunpack.c.l.b16 %v4876
    %v5396 = vunpack.c.l.b16 %v4877
    %v5397 = vunpack.c.l.b16 %v4878
    %v5398 = vunpack.c.l.b16 %v4879
    %v5399 = vunpack.c.l.b16 %v4880
    %v5400 = vunpack.c.l.b16 %v4881
    %v5401 = vunpack.c.l.b16 %v4882
    %v5402 = vunpack.c.l.b16 %v4883
    %v5403 = vunpack.c.l.b16 %v4884
    %v5404 = vunpack.c.l.b16 %v4885
    %v5405 = vunpack.c.l.b16 %v4886
    %v5406 = vunpack.c.l.b16 %v4887
    %v5407 = vunpack.c.l.b16 %v4888
    %v5408 = vunpack.c.l.b16 %v4889
    %v5409 = vunpack.c.l.b16 %v4890
    %v5410 = vunpack.c.l.b16 %v4891
    %v5411 = vunpack.c.l.b16 %v4892
    %v5412 = vunpack.c.l.b16 %v4893
    %v5413 = vunpack.c.l.b16 %v4894
    %v5414 = vunpack.c.l.b16 %v4895
    %v5415 = vunpack.c.l.b16 %v4896
    %v5416 = vunpack.c.l.b16 %v4897
    %v5417 = vunpack.c.l.b16 %v4898
    %v5418 = vunpack.c.l.b16 %v4899
    %v5419 = vunpack.c.l.b16 %v4900
    %v5420 = vunpack.c.l.b16 %v4901
    %v5421 = vunpack.c.l.b16 %v4902
    %v5422 = vunpack.c.l.b16 %v4903
    %v5423 = vunpack.c.l.b16 %v4904
    %v5424 = vunpack.c.l.b16 %v4905
    %v5425 = vunpack.c.l.b16 %v4906
    %v5426 = vunpack.c.l.b16 %v4907
    %v5427 = vunpack.c.l.b16 %v4908
    %v5428 = vunpack.c.l.b16 %v4909
    %v5429 = vunpack.c.l.b16 %v4910
    %v5430 = vunpack.c.l.b16 %v4911
    %v5431 = vunpack.c.l.b16 %v4912
    %v5432 = vunpack.c.l.b16 %v4913
    %v5433 = vunpack.c.l.b16 %v4914
    %v5434 = vunpack.c.l.b16 %v4915
    %v5435 = vunpack.c.l.b16 %v4916
    %v5436 = vunpack.c.l.b16 %v4917
    %v5437 = vunpack.c.l.b16 %v4918
    %v5438 = vunpack.c.l.b16 %v4919
    %v5439 = vunpack.c.l.b16 %v4920
    %v5440 = vunpack.c.l.b16 %v4921
    %v5441 = vunpack.c.l.b16 %v4922
    %v5442 = vunpack.c.l.b16 %v4923
    %v5443 = vunpack.c.l.b16 %v4924
    %v5444 = vunpack.c.l.b16 %v4925
    %v5445 = vunpack.c.l.b16 %v4926
    %v5446 = vunpack.c.l.b16 %v4927
    %v5447 = vunpack.c.l.b16 %v4928
    %v5448 = vunpack.c.l.b16 %v4929
    %v5449 = vunpack.c.l.b16 %v4930
    %v5450 = vunpack.c.l.b16 %v4931
    %v5451 = vunpack.c.l.b16 %v4932
    %v5452 = vunpack.c.l.b16 %v4933
    %v5453 = vunpack.c.l.b16 %v4934
    %v5454 = vunpack.c.l.b16 %v4935
    %v5455 = vunpack.c.l.b16 %v4936
    %v5456 = vunpack.c.l.b16 %v4937
    %v5457 = vunpack.c.l.b16 %v4938
    %v5458 = vunpack.c.l.b16 %v4939
    %v5459 = vunpack.c.l.b16 %v4940
    %v5460 = vunpack.c.l.b16 %v4941
    %v5461 = vunpack.c.l.b16 %v4942
    %v5462 = vunpack.c.l.b16 %v4943
    %v5463 = vunpack.c.l.b16 %v4944
    %v5464 = vunpack.c.l.b16 %v4945
    %v5465 = vunpack.c.l.b16 %v4946
    %v5466 = vunpack.c.l.b16 %v4947
    %v5467 = vunpack.c.l.b16 %v4948
    %v5468 = vunpack.c.l.b16 %v4949
    %v5469 = vunpack.c.l.b16 %v4950
    %v5470 = vunpack.c.l.b16 %v4951
    %v5471 = vunpack.c.l.b16 %v4952
    %v5472 = vunpack.c.l.b16 %v4953
    %v5473 = vunpack.c.l.b16 %v4954
    %v5474 = vunpack.c.l.b16 %v4955
    %v5475 = vunpack.c.l.b16 %v4956
    %v5476 = vunpack.c.l.b16 %v4957
    %v5477 = vunpack.c.l.b16 %v4958
    %v5478 = vunpack.c.l.b16 %v4959
    %v5479 = vunpack.c.l.b16 %v4960
    %v5480 = vunpack.c.l.b16 %v4961
    %v5481 = vunpack.c.l.b16 %v4962
    %v5482 = vunpack.c.l.b16 %v4963
    %v5483 = vunpack.c.l.b16 %v4964
    %v5484 = vunpack.c.l.b16 %v4965
    %v5485 = vunpack.c.l.b16 %v4966
    %v5486 = vunpack.c.l.b16 %v4967
    %v5487 = vunpack.c.l.b16 %v4968
    %v5488 = vunpack.c.l.b16 %v4969
    %v5489 = vunpack.c.l.b16 %v4970
    %v5490 = vpack.c.b16 %v5235, %v5234
    %v5491 = vpack.c.b16 %v5237, %v5236
    %v5492 = vpack.c.b16 %v5239, %v5238
    %v5493 = vpack.c.b16 %v5241, %v5240
    %v5494 = vpack.c.b16 %v5243, %v5242
    %v5495 = vpack.c.b16 %v5245, %v5244
    %v5496 = vpack.c.b16 %v5247, %v5246
    %v5497 = vpack.c.b16 %v5249, %v5248
    %v5498 = vpack.c.b16 %v5251, %v5250
    %v5499 = vpack.c.b16 %v5253, %v5252
    %v5500 = vpack.c.b16 %v5255, %v5254
    %v5501 = vpack.c.b16 %v5257, %v5256
    %v5502 = vpack.c.b16 %v5259, %v5258
    %v5503 = vpack.c.b16 %v5261, %v5260
    %v5504 = vpack.c.b16 %v5263, %v5262
    %v5505 = vpack.c.b16 %v5265, %v5264
    %v5506 = vpack.c.b16 %v5267, %v5266
    %v5507 = vpack.c.b16 %v5269, %v5268
    %v5508 = vpack.c.b16 %v5271, %v5270
    %v5509 = vpack.c.b16 %v5273, %v5272
    %v5510 = vpack.c.b16 %v5275, %v5274
    %v5511 = vpack.c.b16 %v5277, %v5276
    %v5512 = vpack.c.b16 %v5279, %v5278
    %v5513 = vpack.c.b16 %v5281, %v5280
    %v5514 = vpack.c.b16 %v5283, %v5282
    %v5515 = vpack.c.b16 %v5285, %v5284
    %v5516 = vpack.c.b16 %v5287, %v5286
    %v5517 = vpack.c.b16 %v5289, %v5288
    %v5518 = vpack.c.b16 %v5291, %v5290
    %v5519 = vpack.c.b16 %v5293, %v5292
    %v5520 = vpack.c.b16 %v5295, %v5294
    %v5521 = vpack.c.b16 %v5297, %v5296
    %v5522 = vpack.c.b16 %v5299, %v5298
    %v5523 = vpack.c.b16 %v5301, %v5300
    %v5524 = vpack.c.b16 %v5303, %v5302
    %v5525 = vpack.c.b16 %v5305, %v5304
    %v5526 = vpack.c.b16 %v5307, %v5306
    %v5527 = vpack.c.b16 %v5309, %v5308
    %v5528 = vpack.c.b16 %v5311, %v5310
    %v5529 = vpack.c.b16 %v5313, %v5312
    %v5530 = vpack.c.b16 %v5315, %v5314
    %v5531 = vpack.c.b16 %v5317, %v5316
    %v5532 = vpack.c.b16 %v5319, %v5318
    %v5533 = vpack.c.b16 %v5321, %v5320
    %v5534 = vpack.c.b16 %v5323, %v5322
    %v5535 = vpack.c.b16 %v5325, %v5324
    %v5536 = vpack.c.b16 %v5327, %v5326
    %v5537 = vpack.c.b16 %v5329, %v5328
    %v5538 = vpack.c.b16 %v5331, %v5330
    %v5539 = vpack.c.b16 %v5333, %v5332
    %v5540 = vpack.c.b16 %v5335, %v5334
    %v5541 = vpack.c.b16 %v5337, %v5336
    %v5542 = vpack.c.b16 %v5339, %v5338
    %v5543 = vpack.c.b16 %v5341, %v5340
    %v5544 = vpack.c.b16 %v5343, %v5342
    %v5545 = vpack.c.b16 %v5345, %v5344
    %v5546 = vpack.c.b16 %v5347, %v5346
    %v5547 = vpack.c.b16 %v5349, %v5348
    %v5548 = vpack.c.b16 %v5351, %v5350
    %v5549 = vpack.c.b16 %v5353, %v5352
    %v5550 = vpack.c.b16 %v5355, %v5354
    %v5551 = vpack.c.b16 %v5357, %v5356
    %v5552 = vpack.c.b16 %v5359, %v5358
    %v5553 = vpack.c.b16 %v5361, %v5360
    %v5554 = vpack.c.b16 %v5363, %v5362
    %v5555 = vpack.c.b16 %v5365, %v5364
    %v5556 = vpack.c.b16 %v5367, %v5366
    %v5557 = vpack.c.b16 %v5369, %v5368
    %v5558 = vpack.c.b16 %v5371, %v5370
    %v5559 = vpack.c.b16 %v5373, %v5372
    %v5560 = vpack.c.b16 %v5375, %v5374
    %v5561 = vpack.c.b16 %v5377, %v5376
    %v5562 = vpack.c.b16 %v5379, %v5378
    %v5563 = vpack.c.b16 %v5381, %v5380
    %v5564 = vpack.c.b16 %v5383, %v5382
    %v5565 = vpack.c.b16 %v5385, %v5384
    %v5566 = vpack.c.b16 %v5387, %v5386
    %v5567 = vpack.c.b16 %v5389, %v5388
    %v5568 = vpack.c.b16 %v5391, %v5390
    %v5569 = vpack.c.b16 %v5393, %v5392
    %v5570 = vpack.c.b16 %v5395, %v5394
    %v5571 = vpack.c.b16 %v5397, %v5396
    %v5572 = vpack.c.b16 %v5399, %v5398
    %v5573 = vpack.c.b16 %v5401, %v5400
    %v5574 = vpack.c.b16 %v5403, %v5402
    %v5575 = vpack.c.b16 %v5405, %v5404
    %v5576 = vpack.c.b16 %v5407, %v5406
    %v5577 = vpack.c.b16 %v5409, %v5408
    %v5578 = vpack.c.b16 %v5411, %v5410
    %v5579 = vpack.c.b16 %v5413, %v5412
    %v5580 = vpack.c.b16 %v5415, %v5414
    %v5581 = vpack.c.b16 %v5417, %v5416
    %v5582 = vpack.c.b16 %v5419, %v5418
    %v5583 = vpack.c.b16 %v5421, %v5420
    %v5584 = vpack.c.b16 %v5423, %v5422
    %v5585 = vpack.c.b16 %v5425, %v5424
    %v5586 = vpack.c.b16 %v5427, %v5426
    %v5587 = vpack.c.b16 %v5429, %v5428
    %v5588 = vpack.c.b16 %v5431, %v5430
    %v5589 = vpack.c.b16 %v5433, %v5432
    %v5590 = vpack.c.b16 %v5435, %v5434
    %v5591 = vpack.c.b16 %v5437, %v5436
    %v5592 = vpack.c.b16 %v5439, %v5438
    %v5593 = vpack.c.b16 %v5441, %v5440
    %v5594 = vpack.c.b16 %v5443, %v5442
    %v5595 = vpack.c.b16 %v5445, %v5444
    %v5596 = vpack.c.b16 %v5447, %v5446
    %v5597 = vpack.c.b16 %v5449, %v5448
    %v5598 = vpack.c.b16 %v5451, %v5450
    %v5599 = vpack.c.b16 %v5453, %v5452
    %v5600 = vpack.c.b16 %v5455, %v5454
    %v5601 = vpack.c.b16 %v5457, %v5456
    %v5602 = vpack.c.b16 %v5459, %v5458
    %v5603 = vpack.c.b16 %v5461, %v5460
    %v5604 = vpack.c.b16 %v5463, %v5462
    %v5605 = vpack.c.b16 %v5465, %v5464
    %v5606 = vpack.c.b16 %v5467, %v5466
    %v5607 = vpack.c.b16 %v5469, %v5468
    %v5608 = vpack.c.b16 %v5471, %v5470
    %v5609 = vpack.c.b16 %v5473, %v5472
    %v5610 = vpack.c.b16 %v5475, %v5474
    %v5611 = vpack.c.b16 %v5477, %v5476
    %v5612 = vpack.c.b16 %v5479, %v5478
    %v5613 = vpack.c.b16 %v5481, %v5480
    %v5614 = vpack.c.b16 %v5483, %v5482
    %v5615 = vpack.c.b16 %v5485, %v5484
    %v5616 = vpack.c.b16 %v5487, %v5486
    %v5617 = vpack.c.b16 %v5489, %v5488
    %5746 = vmatprep.subr.bf16.mxu0 0
    %5747 = vmatpush1.bf16.msra.mxu0 %v5497
    %5748 = vmatprep.subr.bf16.mxu0 0
    %5749 = vmatpush1.bf16.msra.mxu0 %v5496
    %5750 = vmatprep.subr.bf16.mxu0 0
    %5751 = vmatpush1.bf16.msra.mxu0 %v5495
    %5752 = vmatprep.subr.bf16.mxu0 0
    %5753 = vmatpush1.bf16.msra.mxu0 %v5494
    %5754 = vmatprep.subr.bf16.mxu0 0
    %5755 = vmatpush1.bf16.msra.mxu0 %v5493
    %5756 = vmatprep.subr.bf16.mxu0 0
    %5757 = vmatpush1.bf16.msra.mxu0 %v5492
    %5758 = vmatprep.subr.bf16.mxu0 0
    %5759 = vmatpush1.bf16.msra.mxu0 %v5491
    %5760 = vmatprep.subr.bf16.mxu0 0
    %5761 = vmatpush1.bf16.msra.mxu0 %v5490
    %5762 = vmatprep.subr.bf16.mxu0 0
    %5763 = vmatpush2.bf16.msra.mxu0 %v5505
    %5764 = vmatprep.subr.bf16.mxu0 0
    %5765 = vmatpush2.bf16.msra.mxu0 %v5504
    %5766 = vmatprep.subr.bf16.mxu0 0
    %5767 = vmatpush2.bf16.msra.mxu0 %v5503
    %5768 = vmatprep.subr.bf16.mxu0 0
    %5769 = vmatpush2.bf16.msra.mxu0 %v5502
    %5770 = vmatprep.subr.bf16.mxu0 0
    %5771 = vmatpush2.bf16.msra.mxu0 %v5501
    %5772 = vmatprep.subr.bf16.mxu0 0
    %5773 = vmatpush2.bf16.msra.mxu0 %v5500
    %5774 = vmatprep.subr.bf16.mxu0 0
    %5775 = vmatpush2.bf16.msra.mxu0 %v5499
    %5776 = vmatprep.subr.bf16.mxu0 0
    %5777 = vmatpush2.bf16.msra.mxu0 %v5498
    %5778 = vmatprep.mubr.bf16.mxu0 %v4700
    %5779 = vmatmul.mubr.bf16.gmra.mxu0 %v4699
    %v5780 = vpop.f32.mrf.mxu0
    %v5781 = vadd.f32 %v4976, %v5780
    %v5782 = vpop.f32.mrf.mxu0
    %v5783 = vpop.f32.mrf.mxu0
    %v5784 = vpop.f32.mrf.mxu0
    %5785 = vdwg.mxu0
    %5786 = vmatprep.subr.bf16.mxu0 0
    %5787 = vmatpush1.bf16.msra.mxu0 %v5513
    %5788 = vmatprep.subr.bf16.mxu0 0
    %5789 = vmatpush1.bf16.msra.mxu0 %v5512
    %5790 = vmatprep.subr.bf16.mxu0 0
    %5791 = vmatpush1.bf16.msra.mxu0 %v5511
    %5792 = vmatprep.subr.bf16.mxu0 0
    %5793 = vmatpush1.bf16.msra.mxu0 %v5510
    %5794 = vmatprep.subr.bf16.mxu0 0
    %5795 = vmatpush1.bf16.msra.mxu0 %v5509
    %5796 = vmatprep.subr.bf16.mxu0 0
    %5797 = vmatpush1.bf16.msra.mxu0 %v5508
    %5798 = vmatprep.subr.bf16.mxu0 0
    %5799 = vmatpush1.bf16.msra.mxu0 %v5507
    %5800 = vmatprep.subr.bf16.mxu0 0
    %5801 = vmatpush1.bf16.msra.mxu0 %v5506
    %5802 = vmatprep.subr.bf16.mxu0 0
    %5803 = vmatpush2.bf16.msra.mxu0 %v5521
    %5804 = vmatprep.subr.bf16.mxu0 0
    %5805 = vmatpush2.bf16.msra.mxu0 %v5520
    %5806 = vmatprep.subr.bf16.mxu0 0
    %5807 = vmatpush2.bf16.msra.mxu0 %v5519
    %5808 = vmatprep.subr.bf16.mxu0 0
    %5809 = vmatpush2.bf16.msra.mxu0 %v5518
    %5810 = vmatprep.subr.bf16.mxu0 0
    %5811 = vmatpush2.bf16.msra.mxu0 %v5517
    %5812 = vmatprep.subr.bf16.mxu0 0
    %5813 = vmatpush2.bf16.msra.mxu0 %v5516
    %5814 = vmatprep.subr.bf16.mxu0 0
    %5815 = vmatpush2.bf16.msra.mxu0 %v5515
    %5816 = vmatprep.subr.bf16.mxu0 0
    %5817 = vmatpush2.bf16.msra.mxu0 %v5514
    %5818 = vmatprep.mubr.bf16.mxu0 %v4702
    %5819 = vmatmul.mubr.bf16.gmra.mxu0 %v4701
    %v5820 = vpop.f32.mrf.mxu0
    %v5821 = vadd.f32 %v5781, %v5820
    %v5822 = vpop.f32.mrf.mxu0
    %v5823 = vpop.f32.mrf.mxu0
    %v5824 = vpop.f32.mrf.mxu0
    %5825 = vdwg.mxu0
    %5826 = vmatprep.subr.bf16.mxu0 0
    %5827 = vmatpush1.bf16.msra.mxu0 %v5529
    %5828 = vmatprep.subr.bf16.mxu0 0
    %5829 = vmatpush1.bf16.msra.mxu0 %v5528
    %5830 = vmatprep.subr.bf16.mxu0 0
    %5831 = vmatpush1.bf16.msra.mxu0 %v5527
    %5832 = vmatprep.subr.bf16.mxu0 0
    %5833 = vmatpush1.bf16.msra.mxu0 %v5526
    %5834 = vmatprep.subr.bf16.mxu0 0
    %5835 = vmatpush1.bf16.msra.mxu0 %v5525
    %5836 = vmatprep.subr.bf16.mxu0 0
    %5837 = vmatpush1.bf16.msra.mxu0 %v5524
    %5838 = vmatprep.subr.bf16.mxu0 0
    %5839 = vmatpush1.bf16.msra.mxu0 %v5523
    %5840 = vmatprep.subr.bf16.mxu0 0
    %5841 = vmatpush1.bf16.msra.mxu0 %v5522
    %5842 = vmatprep.subr.bf16.mxu0 0
    %5843 = vmatpush2.bf16.msra.mxu0 %v5537
    %5844 = vmatprep.subr.bf16.mxu0 0
    %5845 = vmatpush2.bf16.msra.mxu0 %v5536
    %5846 = vmatprep.subr.bf16.mxu0 0
    %5847 = vmatpush2.bf16.msra.mxu0 %v5535
    %5848 = vmatprep.subr.bf16.mxu0 0
    %5849 = vmatpush2.bf16.msra.mxu0 %v5534
    %5850 = vmatprep.subr.bf16.mxu0 0
    %5851 = vmatpush2.bf16.msra.mxu0 %v5533
    %5852 = vmatprep.subr.bf16.mxu0 0
    %5853 = vmatpush2.bf16.msra.mxu0 %v5532
    %5854 = vmatprep.subr.bf16.mxu0 0
    %5855 = vmatpush2.bf16.msra.mxu0 %v5531
    %5856 = vmatprep.subr.bf16.mxu0 0
    %5857 = vmatpush2.bf16.msra.mxu0 %v5530
    %5858 = vmatprep.mubr.bf16.mxu0 %v4704
    %5859 = vmatmul.mubr.bf16.gmra.mxu0 %v4703
    %v5860 = vpop.f32.mrf.mxu0
    %v5861 = vadd.f32 %v5821, %v5860
    %v5862 = vpop.f32.mrf.mxu0
    %v5863 = vpop.f32.mrf.mxu0
    %v5864 = vpop.f32.mrf.mxu0
    %5865 = vdwg.mxu0
    %5866 = vmatprep.subr.bf16.mxu0 0
    %5867 = vmatpush1.bf16.msra.mxu0 %v5545
    %5868 = vmatprep.subr.bf16.mxu0 0
    %5869 = vmatpush1.bf16.msra.mxu0 %v5544
    %5870 = vmatprep.subr.bf16.mxu0 0
    %5871 = vmatpush1.bf16.msra.mxu0 %v5543
    %5872 = vmatprep.subr.bf16.mxu0 0
    %5873 = vmatpush1.bf16.msra.mxu0 %v5542
    %5874 = vmatprep.subr.bf16.mxu0 0
    %5875 = vmatpush1.bf16.msra.mxu0 %v5541
    %5876 = vmatprep.subr.bf16.mxu0 0
    %5877 = vmatpush1.bf16.msra.mxu0 %v5540
    %5878 = vmatprep.subr.bf16.mxu0 0
    %5879 = vmatpush1.bf16.msra.mxu0 %v5539
    %5880 = vmatprep.subr.bf16.mxu0 0
    %5881 = vmatpush1.bf16.msra.mxu0 %v5538
    %5882 = vmatprep.subr.bf16.mxu0 0
    %5883 = vmatpush2.bf16.msra.mxu0 %v5553
    %5884 = vmatprep.subr.bf16.mxu0 0
    %5885 = vmatpush2.bf16.msra.mxu0 %v5552
    %5886 = vmatprep.subr.bf16.mxu0 0
    %5887 = vmatpush2.bf16.msra.mxu0 %v5551
    %5888 = vmatprep.subr.bf16.mxu0 0
    %5889 = vmatpush2.bf16.msra.mxu0 %v5550
    %5890 = vmatprep.subr.bf16.mxu0 0
    %5891 = vmatpush2.bf16.msra.mxu0 %v5549
    %5892 = vmatprep.subr.bf16.mxu0 0
    %5893 = vmatpush2.bf16.msra.mxu0 %v5548
    %5894 = vmatprep.subr.bf16.mxu0 0
    %5895 = vmatpush2.bf16.msra.mxu0 %v5547
    %5896 = vmatprep.subr.bf16.mxu0 0
    %5897 = vmatpush2.bf16.msra.mxu0 %v5546
    %5898 = vmatprep.mubr.bf16.mxu0 %v4706
    %5899 = vmatmul.mubr.bf16.gmra.mxu0 %v4705
    %v5900 = vpop.f32.mrf.mxu0
    %v5901 = vadd.f32 %v5861, %v5900
    %v5902 = vpop.f32.mrf.mxu0
    %v5903 = vpop.f32.mrf.mxu0
    %v5904 = vpop.f32.mrf.mxu0
    %5905 = vdwg.mxu0
    %5906 = vmatprep.subr.bf16.mxu0 0
    %5907 = vmatpush1.bf16.msra.mxu0 %v5561
    %5908 = vmatprep.subr.bf16.mxu0 0
    %5909 = vmatpush1.bf16.msra.mxu0 %v5560
    %5910 = vmatprep.subr.bf16.mxu0 0
    %5911 = vmatpush1.bf16.msra.mxu0 %v5559
    %5912 = vmatprep.subr.bf16.mxu0 0
    %5913 = vmatpush1.bf16.msra.mxu0 %v5558
    %5914 = vmatprep.subr.bf16.mxu0 0
    %5915 = vmatpush1.bf16.msra.mxu0 %v5557
    %5916 = vmatprep.subr.bf16.mxu0 0
    %5917 = vmatpush1.bf16.msra.mxu0 %v5556
    %5918 = vmatprep.subr.bf16.mxu0 0
    %5919 = vmatpush1.bf16.msra.mxu0 %v5555
    %5920 = vmatprep.subr.bf16.mxu0 0
    %5921 = vmatpush1.bf16.msra.mxu0 %v5554
    %5922 = vmatprep.subr.bf16.mxu0 0
    %5923 = vmatpush2.bf16.msra.mxu0 %v5569
    %5924 = vmatprep.subr.bf16.mxu0 0
    %5925 = vmatpush2.bf16.msra.mxu0 %v5568
    %5926 = vmatprep.subr.bf16.mxu0 0
    %5927 = vmatpush2.bf16.msra.mxu0 %v5567
    %5928 = vmatprep.subr.bf16.mxu0 0
    %5929 = vmatpush2.bf16.msra.mxu0 %v5566
    %5930 = vmatprep.subr.bf16.mxu0 0
    %5931 = vmatpush2.bf16.msra.mxu0 %v5565
    %5932 = vmatprep.subr.bf16.mxu0 0
    %5933 = vmatpush2.bf16.msra.mxu0 %v5564
    %5934 = vmatprep.subr.bf16.mxu0 0
    %5935 = vmatpush2.bf16.msra.mxu0 %v5563
    %5936 = vmatprep.subr.bf16.mxu0 0
    %5937 = vmatpush2.bf16.msra.mxu0 %v5562
    %5938 = vmatprep.mubr.bf16.mxu0 %v4708
    %5939 = vmatmul.mubr.bf16.gmra.mxu0 %v4707
    %v5940 = vpop.f32.mrf.mxu0
    %v5941 = vadd.f32 %v5901, %v5940
    %v5942 = vpop.f32.mrf.mxu0
    %v5943 = vpop.f32.mrf.mxu0
    %v5944 = vpop.f32.mrf.mxu0
    %5945 = vdwg.mxu0
    %5946 = vmatprep.subr.bf16.mxu0 0
    %5947 = vmatpush1.bf16.msra.mxu0 %v5577
    %5948 = vmatprep.subr.bf16.mxu0 0
    %5949 = vmatpush1.bf16.msra.mxu0 %v5576
    %5950 = vmatprep.subr.bf16.mxu0 0
    %5951 = vmatpush1.bf16.msra.mxu0 %v5575
    %5952 = vmatprep.subr.bf16.mxu0 0
    %5953 = vmatpush1.bf16.msra.mxu0 %v5574
    %5954 = vmatprep.subr.bf16.mxu0 0
    %5955 = vmatpush1.bf16.msra.mxu0 %v5573
    %5956 = vmatprep.subr.bf16.mxu0 0
    %5957 = vmatpush1.bf16.msra.mxu0 %v5572
    %5958 = vmatprep.subr.bf16.mxu0 0
    %5959 = vmatpush1.bf16.msra.mxu0 %v5571
    %5960 = vmatprep.subr.bf16.mxu0 0
    %5961 = vmatpush1.bf16.msra.mxu0 %v5570
    %5962 = vmatprep.subr.bf16.mxu0 0
    %5963 = vmatpush2.bf16.msra.mxu0 %v5585
    %5964 = vmatprep.subr.bf16.mxu0 0
    %5965 = vmatpush2.bf16.msra.mxu0 %v5584
    %5966 = vmatprep.subr.bf16.mxu0 0
    %5967 = vmatpush2.bf16.msra.mxu0 %v5583
    %5968 = vmatprep.subr.bf16.mxu0 0
    %5969 = vmatpush2.bf16.msra.mxu0 %v5582
    %5970 = vmatprep.subr.bf16.mxu0 0
    %5971 = vmatpush2.bf16.msra.mxu0 %v5581
    %5972 = vmatprep.subr.bf16.mxu0 0
    %5973 = vmatpush2.bf16.msra.mxu0 %v5580
    %5974 = vmatprep.subr.bf16.mxu0 0
    %5975 = vmatpush2.bf16.msra.mxu0 %v5579
    %5976 = vmatprep.subr.bf16.mxu0 0
    %5977 = vmatpush2.bf16.msra.mxu0 %v5578
    %5978 = vmatprep.mubr.bf16.mxu0 %v4710
    %5979 = vmatmul.mubr.bf16.gmra.mxu0 %v4709
    %v5980 = vpop.f32.mrf.mxu0
    %v5981 = vadd.f32 %v5941, %v5980
    %v5982 = vpop.f32.mrf.mxu0
    %v5983 = vpop.f32.mrf.mxu0
    %v5984 = vpop.f32.mrf.mxu0
    %5985 = vdwg.mxu0
    %5986 = vmatprep.subr.bf16.mxu0 0
    %5987 = vmatpush1.bf16.msra.mxu0 %v5593
    %5988 = vmatprep.subr.bf16.mxu0 0
    %5989 = vmatpush1.bf16.msra.mxu0 %v5592
    %5990 = vmatprep.subr.bf16.mxu0 0
    %5991 = vmatpush1.bf16.msra.mxu0 %v5591
    %5992 = vmatprep.subr.bf16.mxu0 0
    %5993 = vmatpush1.bf16.msra.mxu0 %v5590
    %5994 = vmatprep.subr.bf16.mxu0 0
    %5995 = vmatpush1.bf16.msra.mxu0 %v5589
    %5996 = vmatprep.subr.bf16.mxu0 0
    %5997 = vmatpush1.bf16.msra.mxu0 %v5588
    %5998 = vmatprep.subr.bf16.mxu0 0
    %5999 = vmatpush1.bf16.msra.mxu0 %v5587
    %6000 = vmatprep.subr.bf16.mxu0 0
    %6001 = vmatpush1.bf16.msra.mxu0 %v5586
    %6002 = vmatprep.subr.bf16.mxu0 0
    %6003 = vmatpush2.bf16.msra.mxu0 %v5601
    %6004 = vmatprep.subr.bf16.mxu0 0
    %6005 = vmatpush2.bf16.msra.mxu0 %v5600
    %6006 = vmatprep.subr.bf16.mxu0 0
    %6007 = vmatpush2.bf16.msra.mxu0 %v5599
    %6008 = vmatprep.subr.bf16.mxu0 0
    %6009 = vmatpush2.bf16.msra.mxu0 %v5598
    %6010 = vmatprep.subr.bf16.mxu0 0
    %6011 = vmatpush2.bf16.msra.mxu0 %v5597
    %6012 = vmatprep.subr.bf16.mxu0 0
    %6013 = vmatpush2.bf16.msra.mxu0 %v5596
    %6014 = vmatprep.subr.bf16.mxu0 0
    %6015 = vmatpush2.bf16.msra.mxu0 %v5595
    %6016 = vmatprep.subr.bf16.mxu0 0
    %6017 = vmatpush2.bf16.msra.mxu0 %v5594
    %6018 = vmatprep.mubr.bf16.mxu0 %v4712
    %6019 = vmatmul.mubr.bf16.gmra.mxu0 %v4711
    %v6020 = vpop.f32.mrf.mxu0
    %v6021 = vadd.f32 %v5981, %v6020
    %v6022 = vpop.f32.mrf.mxu0
    %v6023 = vpop.f32.mrf.mxu0
    %v6024 = vpop.f32.mrf.mxu0
    %6025 = vdwg.mxu0
    %6026 = vmatprep.subr.bf16.mxu0 0
    %6027 = vmatpush1.bf16.msra.mxu0 %v5609
    %6028 = vmatprep.subr.bf16.mxu0 0
    %6029 = vmatpush1.bf16.msra.mxu0 %v5608
    %6030 = vmatprep.subr.bf16.mxu0 0
    %6031 = vmatpush1.bf16.msra.mxu0 %v5607
    %6032 = vmatprep.subr.bf16.mxu0 0
    %6033 = vmatpush1.bf16.msra.mxu0 %v5606
    %6034 = vmatprep.subr.bf16.mxu0 0
    %6035 = vmatpush1.bf16.msra.mxu0 %v5605
    %6036 = vmatprep.subr.bf16.mxu0 0
    %6037 = vmatpush1.bf16.msra.mxu0 %v5604
    %6038 = vmatprep.subr.bf16.mxu0 0
    %6039 = vmatpush1.bf16.msra.mxu0 %v5603
    %6040 = vmatprep.subr.bf16.mxu0 0
    %6041 = vmatpush1.bf16.msra.mxu0 %v5602
    %6042 = vmatprep.subr.bf16.mxu0 0
    %6043 = vmatpush2.bf16.msra.mxu0 %v5617
    %6044 = vmatprep.subr.bf16.mxu0 0
    %6045 = vmatpush2.bf16.msra.mxu0 %v5616
    %6046 = vmatprep.subr.bf16.mxu0 0
    %6047 = vmatpush2.bf16.msra.mxu0 %v5615
    %6048 = vmatprep.subr.bf16.mxu0 0
    %6049 = vmatpush2.bf16.msra.mxu0 %v5614
    %6050 = vmatprep.subr.bf16.mxu0 0
    %6051 = vmatpush2.bf16.msra.mxu0 %v5613
    %6052 = vmatprep.subr.bf16.mxu0 0
    %6053 = vmatpush2.bf16.msra.mxu0 %v5612
    %6054 = vmatprep.subr.bf16.mxu0 0
    %6055 = vmatpush2.bf16.msra.mxu0 %v5611
    %6056 = vmatprep.subr.bf16.mxu0 0
    %6057 = vmatpush2.bf16.msra.mxu0 %v5610
    %6058 = vmatprep.mubr.bf16.mxu0 %v4714
    %6059 = vmatmul.mubr.bf16.gmra.mxu0 %v4713
    %v6060 = vpop.f32.mrf.mxu0
    %v6061 = vadd.f32 %v6021, %v6060
    %v6062 = vpop.f32.mrf.mxu0
    %v6063 = vpop.f32.mrf.mxu0
    %v6064 = vpop.f32.mrf.mxu0
    %6065 = vdwg.mxu0
    %v6066 = vmax.f32 %v6061, 0.0
    %v6067 = vpack.c.bf16 %v6066, %v6066
    %v6068 = vld [vmem:[%s5] sm:$0xf]
    %v6069 = vld [vmem:[%s5 + $0x4] sm:$0xf]
    %v6070 = vld [vmem:[%s5 + $0x8] sm:$0xf]
    %v6071 = vld [vmem:[%s5 + $0xc] sm:$0xf]
    %v6072 = vld [vmem:[%s5 + $0x10] sm:$0xf]
    %v6073 = vld [vmem:[%s5 + $0x14] sm:$0xf]
    %v6074 = vld [vmem:[%s5 + $0x18] sm:$0xf]
    %v6075 = vld [vmem:[%s5 + $0x1c] sm:$0xf]
    %v6076 = vld [vmem:[%s5 + $0x20] sm:$0xf]
    %v6077 = vld [vmem:[%s5 + $0x24] sm:$0xf]
    %v6078 = vld [vmem:[%s5 + $0x28] sm:$0xf]
    %v6079 = vld [vmem:[%s5 + $0x2c] sm:$0xf]
    %v6080 = vld [vmem:[%s5 + $0x30] sm:$0xf]
    %v6081 = vld [vmem:[%s5 + $0x34] sm:$0xf]
    %v6082 = vld [vmem:[%s5 + $0x38] sm:$0xf]
    %v6083 = vld [vmem:[%s5 + $0x3c] sm:$0xf]
    %v6084 = vld [vmem:[%s6] sm:$0x1]
    %v6086 = vlaneseq
    %v6087 = vshrl.u32 %v6086, 7
    %v6088 = vsub.s32 0, %v6087
    %v6089 = vrot.slane %v6084, %v6088
    %v6107 = vunpack.c.l.b16 %v6068
    %v6108 = vunpack.c.l.b16 %v6069
    %v6109 = vunpack.c.l.b16 %v6070
    %v6110 = vunpack.c.l.b16 %v6071
    %v6111 = vunpack.c.l.b16 %v6072
    %v6112 = vunpack.c.l.b16 %v6073
    %v6113 = vunpack.c.l.b16 %v6074
    %v6114 = vunpack.c.l.b16 %v6075
    %v6115 = vunpack.c.l.b16 %v6076
    %v6116 = vunpack.c.l.b16 %v6077
    %v6117 = vunpack.c.l.b16 %v6078
    %v6118 = vunpack.c.l.b16 %v6079
    %v6119 = vunpack.c.l.b16 %v6080
    %v6120 = vunpack.c.l.b16 %v6081
    %v6121 = vunpack.c.l.b16 %v6082
    %v6122 = vunpack.c.l.b16 %v6083
    %v6123 = vpack.c.b16 %v6108, %v6107
    %v6124 = vpack.c.b16 %v6110, %v6109
    %v6125 = vpack.c.b16 %v6112, %v6111
    %v6126 = vpack.c.b16 %v6114, %v6113
    %v6127 = vpack.c.b16 %v6116, %v6115
    %v6128 = vpack.c.b16 %v6118, %v6117
    %v6129 = vpack.c.b16 %v6120, %v6119
    %v6130 = vpack.c.b16 %v6122, %v6121
    %6139 = vmatprep.subr.bf16.mxu0 0
    %6140 = vmatpush1.bf16.msra.mxu0 %v6130
    %6141 = vmatprep.subr.bf16.mxu0 0
    %6142 = vmatpush1.bf16.msra.mxu0 %v6129
    %6143 = vmatprep.subr.bf16.mxu0 0
    %6144 = vmatpush1.bf16.msra.mxu0 %v6128
    %6145 = vmatprep.subr.bf16.mxu0 0
    %6146 = vmatpush1.bf16.msra.mxu0 %v6127
    %6147 = vmatprep.subr.bf16.mxu0 0
    %6148 = vmatpush1.bf16.msra.mxu0 %v6126
    %6149 = vmatprep.subr.bf16.mxu0 0
    %6150 = vmatpush1.bf16.msra.mxu0 %v6125
    %6151 = vmatprep.subr.bf16.mxu0 0
    %6152 = vmatpush1.bf16.msra.mxu0 %v6124
    %6153 = vmatprep.subr.bf16.mxu0 0
    %6154 = vmatpush1.bf16.msra.mxu0 %v6123
    %6155 = vmatprep.subr.bf16.mxu0 0
    %6156 = vmatpush2.bf16.msra.mxu0 0
    %6157 = vmatprep.subr.bf16.mxu0 0
    %6158 = vmatpush2.bf16.msra.mxu0 0
    %6159 = vmatprep.subr.bf16.mxu0 0
    %6160 = vmatpush2.bf16.msra.mxu0 0
    %6161 = vmatprep.subr.bf16.mxu0 0
    %6162 = vmatpush2.bf16.msra.mxu0 0
    %6163 = vmatprep.subr.bf16.mxu0 0
    %6164 = vmatpush2.bf16.msra.mxu0 0
    %6165 = vmatprep.subr.bf16.mxu0 0
    %6166 = vmatpush2.bf16.msra.mxu0 0
    %6167 = vmatprep.subr.bf16.mxu0 0
    %6168 = vmatpush2.bf16.msra.mxu0 0
    %6169 = vmatprep.subr.bf16.mxu0 0
    %6170 = vmatpush2.bf16.msra.mxu0 0
    %6171 = vmatprep.mubr.bf16.mxu0 0
    %6172 = vmatmul.mubr.bf16.gmra.mxu0 %v6067
    %v6173 = vpop.f32.mrf.mxu0
    %v6174 = vadd.f32 %v6089, %v6173
    %v6175 = vpop.f32.mrf.mxu0
    %v6176 = vpop.f32.mrf.mxu0
    %v6177 = vpop.f32.mrf.mxu0
    %6178 = vdwg.mxu0
    %v6179 = vmax.f32 %v6174, 0.0
    %v6180 = vpack.c.bf16 %v6179, %v6179
    %v6181 = vld [vmem:[%s7] sm:$0xf]
    %v6182 = vld [vmem:[%s7 + $0x4] sm:$0xf]
    %v6183 = vld [vmem:[%s7 + $0x8] sm:$0xf]
    %v6184 = vld [vmem:[%s7 + $0xc] sm:$0xf]
    %v6185 = vld [vmem:[%s7 + $0x10] sm:$0xf]
    %v6186 = vld [vmem:[%s7 + $0x14] sm:$0xf]
    %v6187 = vld [vmem:[%s7 + $0x18] sm:$0xf]
    %v6188 = vld [vmem:[%s7 + $0x1c] sm:$0xf]
    %v6189 = vld [vmem:[%s7 + $0x20] sm:$0xf]
    %v6190 = vld [vmem:[%s7 + $0x24] sm:$0xf]
    %v6191 = vld [vmem:[%s7 + $0x28] sm:$0xf]
    %v6192 = vld [vmem:[%s7 + $0x2c] sm:$0xf]
    %v6193 = vld [vmem:[%s7 + $0x30] sm:$0xf]
    %v6194 = vld [vmem:[%s7 + $0x34] sm:$0xf]
    %v6195 = vld [vmem:[%s7 + $0x38] sm:$0xf]
    %v6196 = vld [vmem:[%s7 + $0x3c] sm:$0xf]
    %v6197 = vld [vmem:[%s8] sm:$0x1]
    %v6199 = vlaneseq
    %v6200 = vshrl.u32 %v6199, 7
    %v6201 = vsub.s32 0, %v6200
    %v6202 = vrot.slane %v6197, %v6201
    %v6220 = vunpack.c.l.b16 %v6181
    %v6221 = vunpack.c.l.b16 %v6182
    %v6222 = vunpack.c.l.b16 %v6183
    %v6223 = vunpack.c.l.b16 %v6184
    %v6224 = vunpack.c.l.b16 %v6185
    %v6225 = vunpack.c.l.b16 %v6186
    %v6226 = vunpack.c.l.b16 %v6187
    %v6227 = vunpack.c.l.b16 %v6188
    %v6228 = vunpack.c.l.b16 %v6189
    %v6229 = vunpack.c.l.b16 %v6190
    %v6230 = vunpack.c.l.b16 %v6191
    %v6231 = vunpack.c.l.b16 %v6192
    %v6232 = vunpack.c.l.b16 %v6193
    %v6233 = vunpack.c.l.b16 %v6194
    %v6234 = vunpack.c.l.b16 %v6195
    %v6235 = vunpack.c.l.b16 %v6196
    %v6236 = vpack.c.b16 %v6221, %v6220
    %v6237 = vpack.c.b16 %v6223, %v6222
    %v6238 = vpack.c.b16 %v6225, %v6224
    %v6239 = vpack.c.b16 %v6227, %v6226
    %v6240 = vpack.c.b16 %v6229, %v6228
    %v6241 = vpack.c.b16 %v6231, %v6230
    %v6242 = vpack.c.b16 %v6233, %v6232
    %v6243 = vpack.c.b16 %v6235, %v6234
    %6252 = vmatprep.subr.bf16.mxu0 0
    %6253 = vmatpush1.bf16.msra.mxu0 %v6243
    %6254 = vmatprep.subr.bf16.mxu0 0
    %6255 = vmatpush1.bf16.msra.mxu0 %v6242
    %6256 = vmatprep.subr.bf16.mxu0 0
    %6257 = vmatpush1.bf16.msra.mxu0 %v6241
    %6258 = vmatprep.subr.bf16.mxu0 0
    %6259 = vmatpush1.bf16.msra.mxu0 %v6240
    %6260 = vmatprep.subr.bf16.mxu0 0
    %6261 = vmatpush1.bf16.msra.mxu0 %v6239
    %6262 = vmatprep.subr.bf16.mxu0 0
    %6263 = vmatpush1.bf16.msra.mxu0 %v6238
    %6264 = vmatprep.subr.bf16.mxu0 0
    %6265 = vmatpush1.bf16.msra.mxu0 %v6237
    %6266 = vmatprep.subr.bf16.mxu0 0
    %6267 = vmatpush1.bf16.msra.mxu0 %v6236
    %6268 = vmatprep.subr.bf16.mxu0 0
    %6269 = vmatpush2.bf16.msra.mxu0 0
    %6270 = vmatprep.subr.bf16.mxu0 0
    %6271 = vmatpush2.bf16.msra.mxu0 0
    %6272 = vmatprep.subr.bf16.mxu0 0
    %6273 = vmatpush2.bf16.msra.mxu0 0
    %6274 = vmatprep.subr.bf16.mxu0 0
    %6275 = vmatpush2.bf16.msra.mxu0 0
    %6276 = vmatprep.subr.bf16.mxu0 0
    %6277 = vmatpush2.bf16.msra.mxu0 0
    %6278 = vmatprep.subr.bf16.mxu0 0
    %6279 = vmatpush2.bf16.msra.mxu0 0
    %6280 = vmatprep.subr.bf16.mxu0 0
    %6281 = vmatpush2.bf16.msra.mxu0 0
    %6282 = vmatprep.subr.bf16.mxu0 0
    %6283 = vmatpush2.bf16.msra.mxu0 0
    %6284 = vmatprep.mubr.bf16.mxu0 0
    %6285 = vmatmul.mubr.bf16.gmra.mxu0 %v6180
    %v6286 = vpop.f32.mrf.mxu0
    %v6287 = vadd.f32 %v6202, %v6286
    %v6288 = vpop.f32.mrf.mxu0
    %v6289 = vpop.f32.mrf.mxu0
    %v6290 = vpop.f32.mrf.mxu0
    %6291 = vdwg.mxu0
    %6292 = vst [vmem:[#allocation3] sm:$0x3] %v6287
    // Predicated region
    $region38: #{forward.3} parent=1 // pred_check
      _
    $region39: #{forward.3} parent=1 // pred_check_branch
      %6294 = sbr.rel (0) target = $region41
    $region40: #{forward.3} parent=1 // pred_region
      %s6296 = ssub.s32 32, 32
      %6297 = vsyncadd [#allocation4], %s6296
      %s6299 = sshll.u32 [#allocation3], 4
      %s6300 = int_to_ptr.vmem [resolvable:$true] %s6299
      %6302 = dma.vmem_to_hbm [thread:$0]  %s6300, 32, %s9, [#allocation4]
    $region41: #{forward.3} parent=1 // pred_fallthru
      _
    // Predicated region
    $region42: #{forward.3} parent=1 // pred_check
      _
    $region43: #{forward.3} parent=1 // pred_check_branch
      %6304 = sbr.rel (0) target = $region45
    $region44: #{forward.3} parent=1 // pred_region
      %6305 = dma.done [#allocation4], 32
    $region45: #{forward.3} parent=1 // pred_fallthru
      _
    %6306 = vsyncpa [#allocation4], 1

</llo_original>
